<compile_context>
chip_gen: v7x
topology: tpu7x:2x2x1
jax: 0.10.0
libtpu: 0.0.40
codegen_flags: <defaults>
</compile_context>

<pallas_src>
import functools

import jax
import jax.numpy as jnp
from jax.experimental import pallas as pl
from jax.experimental.pallas import tpu as pltpu

_C = 50                       # GCN hidden width
_DEEP = [(2, 2), (3, 2), (3, 3), (4, 2), (4, 3), (4, 4),
         (5, 2), (5, 3), (5, 4), (5, 5)]   # (tower, depth) for layers d >= 2


def _vmem():
    return pl.BlockSpec(memory_space=pltpu.MemorySpace.VMEM)


# ---------------------------------------------------------------------------
# Single fused kernel for the whole forward pass
# ---------------------------------------------------------------------------
def _net_kernel(*refs, mode):
    (x46_ref, ea_ref, grow_ref, gcol_ref, adj_ref,
     w1r_ref, w1c_ref, w1e_ref, b1_ref, bn1g_ref, bn1b_ref,
     wdr_ref, wdc_ref, wde_ref, bd_ref, bndg_ref, bndb_ref) = refs[:17]
    head = refs[17:-1]
    out_ref = refs[-1]

    def dot(a, b):
        return jnp.dot(a, b, preferred_element_type=jnp.float32)

    def elu(v):
        # TODO(synk): expm1 variant skipped (Mosaic lowering support for
        # lax.expm1 is uncertain); exp(v)-1 only differs for |v| << 1.
        return jnp.where(v > 0, v, jnp.exp(v) - 1.0)

    def bn(v, g, b, eps=1e-5):
        # BatchNorm1d with batch statistics over the node dimension.
        mean = jnp.mean(v, axis=0, keepdims=True)
        var = jnp.mean((v - mean) ** 2, axis=0, keepdims=True)
        return (v - mean) * jax.lax.rsqrt(var + eps) * g + b

    x46 = x46_ref[...]        # [N, 46]
    ea0 = ea_ref[...]         # [E, 345]
    grow = grow_ref[...]      # [E, N] one-hot gather of row endpoints
    gcol = gcol_ref[...]      # [E, N] one-hot gather of col endpoints
    adj = adj_ref[...]        # [N, E] scatter-mean matrix

    # ---- first GCN layer of all five towers (shared message m), one MXU pass
    xr = dot(grow, x46)                                        # x46[row]  [E, 46]
    xc = dot(gcol, x46)                                        # x46[col]  [E, 46]
    out1 = (dot(xr, w1r_ref[...]) + dot(xc, w1c_ref[...])
            + dot(ea0, w1e_ref[...]) + b1_ref[...])            # [E, 500]
    eo_all = elu(out1[:, 5 * _C:])                             # [E, 250] edge outs
    xall = dot(adj, out1[:, :5 * _C])                          # [N, 250] scatter-mean
    xall = elu(bn(xall, bn1g_ref[...], bn1b_ref[...]))         # fused BN+ELU (5 towers)

    h = {t: xall[:, (t - 1) * _C: t * _C] for t in range(1, 6)}
    ea = {t: eo_all[:, (t - 1) * _C: t * _C] for t in range(1, 6)}

    def gcn50(hn, ean, wr, wc, we, bcat, g, bt):
        hr = dot(grow, hn)                                     # hn[row]
        hc = dot(gcol, hn)                                     # hn[col]
        out = dot(hr, wr) + dot(hc, wc) + dot(ean, we) + bcat  # [E, 100] (msg|edge)
        eo = elu(out[:, _C:])
        xn = dot(adj, out[:, :_C])
        return elu(bn(xn, g, bt)), eo

    # ---- remaining per-tower layers (depth 2..t), fully fused in this kernel
    for i, (t, _) in enumerate(_DEEP):
        h[t], ea[t] = gcn50(h[t], ea[t],
                            wdr_ref[i], wdc_ref[i], wde_ref[i],
                            bd_ref[i:i + 1, :],
                            bndg_ref[i:i + 1, :], bndb_ref[i:i + 1, :])

    # o = concat(x1_1..x5_5) is realised via row-split head weights (no concat).
    # Dropout(0.5) -> identity (eval semantics).
    if mode == "main":
        wlr_ref, blr_ref, gR_ref, bR_ref = head
        acc = blr_ref[...]
        for t in range(1, 6):
            acc = acc + dot(h[t], wlr_ref[t - 1])              # linR
        out_ref[...] = bn(acc, gR_ref[...], bR_ref[...])       # BNR (no ELU)
    elif mode == "distalP":
        wdp_ref, bdp_ref = head
        acc = bdp_ref[...]
        for t in range(1, 6):
            acc = acc + dot(h[t], wdp_ref[t - 1])              # distalP linear
        out_ref[...] = acc
    else:  # refine branch
        (xcat_ref, wr1r_ref, wr1c_ref, wr1e_ref, br1_ref, gr1_ref, btr1_ref,
         wr2r_ref, wr2c_ref, wr2e_ref, br2_ref, gr2_ref, btr2_ref,
         wpc_ref, bpc_ref, gpc_ref, btpc_ref, wl_ref, bl_ref) = head
        xcat = xcat_ref[...]                                   # [N, 136]
        hr = dot(grow, xcat)
        hc = dot(gcol, xcat)
        out = (dot(hr, wr1r_ref[...]) + dot(hc, wr1c_ref[...])
               + dot(ea0, wr1e_ref[...]) + br1_ref[...])       # gnnrefine1 [E, 100]
        ea_r1 = elu(out[:, _C:])
        x_r1 = elu(bn(dot(adj, out[:, :_C]), gr1_ref[...], btr1_ref[...]))
        x_r, _ = gcn50(x_r1, ea_r1,
                       wr2r_ref[...], wr2c_ref[...], wr2e_ref[...],
                       br2_ref[...], gr2_ref[...], btr2_ref[...])
        # distalPconcat: Linear(concat(o, x_r)) + BN + ELU, via row-split weights
        acc = bpc_ref[...]
        for t in range(1, 6):
            acc = acc + dot(h[t], wpc_ref[t - 1])
        acc = acc + dot(x_r, wpc_ref[5])
        oc = elu(bn(acc, gpc_ref[...], btpc_ref[...]))
        out_ref[...] = dot(oc, wl_ref[...]) + bl_ref[...]      # ditalPconcatL


# ---------------------------------------------------------------------------
# Parameter packing (done once per jit trace, XLA-side)
# ---------------------------------------------------------------------------
def _pack_common(params):
    # First layer of all five towers: concat columns [Wn_1..Wn_5 | We_1..We_5]
    wn1 = jnp.concatenate([params[f"conv{t}_1"]["wn"] for t in range(1, 6)], axis=1)
    we1 = jnp.concatenate([params[f"conv{t}_1"]["we"] for t in range(1, 6)], axis=1)
    w1 = jnp.concatenate([wn1, we1], axis=1)                   # [437, 500]
    b1 = jnp.concatenate(
        [params[f"conv{t}_1"]["bn"] for t in range(1, 6)]
        + [params[f"conv{t}_1"]["be"] for t in range(1, 6)]).reshape(1, 10 * _C)
    w1r, w1c, w1e = w1[:46], w1[46:92], w1[92:]                # row / col / edge blocks
    bn1g = jnp.concatenate([params[f"BN{t}_1"][0] for t in range(1, 6)]).reshape(1, 5 * _C)
    bn1b = jnp.concatenate([params[f"BN{t}_1"][1] for t in range(1, 6)]).reshape(1, 5 * _C)

    wdr, wdc, wde, bd, bndg, bndb = [], [], [], [], [], []
    for (t, d) in _DEEP:
        p = params[f"conv{t}_{d}"]
        wcat = jnp.concatenate([p["wn"], p["we"]], axis=1)     # [150, 100]
        wdr.append(wcat[:_C])
        wdc.append(wcat[_C:2 * _C])
        wde.append(wcat[2 * _C:])
        bd.append(jnp.concatenate([p["bn"], p["be"]]))
        g, b = params[f"BN{t}_{d}"]
        bndg.append(g)
        bndb.append(b)

    return [w1r, w1c, w1e, b1, bn1g, bn1b,
            jnp.stack(wdr), jnp.stack(wdc), jnp.stack(wde),
            jnp.stack(bd), jnp.stack(bndg), jnp.stack(bndb)]


def _glue(x_in, edge_index, condition):
    """edge_index-derived structures, computed once per forward pass."""
    row, col = edge_index[0], edge_index[1]
    n = x_in.shape[0]
    x46 = jnp.concatenate([x_in, condition], axis=1)           # [N, 46]
    grow = jax.nn.one_hot(row, n, dtype=jnp.float32)           # [E, N]
    gcol = jax.nn.one_hot(col, n, dtype=jnp.float32)           # [E, N]
    deg = jnp.maximum(jnp.sum(grow, axis=0), 1.0)              # [N]
    adj = grow.T / deg[:, None]                                # [N, E] scatter-mean
    return x46, grow, gcol, adj


@functools.partial(jax.jit, static_argnames=("mode",))
def _forward_impl(params, x_in, edge_index, edge_attr, condition, distalP_arr, *, mode):
    n = x_in.shape[0]
    x46, grow, gcol, adj = _glue(x_in, edge_index, condition)
    inputs = [x46, edge_attr, grow, gcol, adj] + _pack_common(params)

    if mode == "main":
        wlr, blr = params["linR"]
        gR, bR = params["BNR"]
        head = [jnp.stack(jnp.split(wlr, 5, axis=0)), blr.reshape(1, -1),
                gR.reshape(1, -1), bR.reshape(1, -1)]
        out_dim = 49 * 4
    elif mode == "distalP":
        wdp, bdp = params["distalP"]
        head = [jnp.stack(jnp.split(wdp, 5, axis=0)), bdp.reshape(1, -1)]
        out_dim = 30 * 3
    else:
        xcat = jnp.concatenate([x46, distalP_arr.reshape(n, -1)], axis=1)   # [N, 136]
        pr1 = params["gnnrefine1"]
        wr1 = jnp.concatenate([pr1["wn"], pr1["we"]], axis=1)  # [617, 100]
        br1 = jnp.concatenate([pr1["bn"], pr1["be"]]).reshape(1, -1)
        gr1, btr1 = params["gnnrefine1_bn"]
        pr2 = params["gnnrefine2"]
        wr2 = jnp.concatenate([pr2["wn"], pr2["we"]], axis=1)  # [150, 100]
        br2 = jnp.concatenate([pr2["bn"], pr2["be"]]).reshape(1, -1)
        gr2, btr2 = params["gnnrefine2_bn"]
        wpc, bpc = params["distalPconcat"]
        gpc, btpc = params["distalPconcat_bn"]
        wl, bl = params["ditalPconcatL"]
        head = [xcat,
                wr1[:136], wr1[136:272], wr1[272:], br1,
                gr1.reshape(1, -1), btr1.reshape(1, -1),
                wr2[:_C], wr2[_C:2 * _C], wr2[2 * _C:], br2,
                gr2.reshape(1, -1), btr2.reshape(1, -1),
                jnp.stack(jnp.split(wpc, 6, axis=0)), bpc.reshape(1, -1),
                gpc.reshape(1, -1), btpc.reshape(1, -1),
                wl, bl.reshape(1, -1)]
        out_dim = 49 * 4

    inputs = inputs + head
    out = pl.pallas_call(
        functools.partial(_net_kernel, mode=mode),
        out_shape=jax.ShapeDtypeStruct((n, out_dim), jnp.float32),
        in_specs=[_vmem()] * len(inputs),
        out_specs=_vmem(),
    )(*inputs)
    return out


def net_forward(params, x, edge_index, edge_attr, condition, distalP=False):
    if distalP is True:
        out = _forward_impl(params, x, edge_index, edge_attr, condition, None,
                            mode="distalP")
        return out.reshape(-1, 30, 3)
    elif distalP is False:
        out = _forward_impl(params, x, edge_index, edge_attr, condition, None,
                            mode="main")
        return out.reshape(-1, 49, 4)
    else:
        out = _forward_impl(params, x, edge_index, edge_attr, condition, distalP,
                            mode="refine")
        return out.reshape(-1, 49, 4)


# ---------------------------------------------------------------------------
# Parameters (deterministic, in-script)
# ---------------------------------------------------------------------------
def make_params(key):
    params = {}
    keys = iter(jax.random.split(key, 256))

    def lin_p(fin, fout):
        w = jax.random.normal(next(keys), (fin, fout), jnp.float32) / jnp.sqrt(fin)
        b = 0.01 * jax.random.normal(next(keys), (fout,), jnp.float32)
        return (w, b)

    def gcn_p(ic, oc, el):
        f = 2 * ic + el
        wn, bn = lin_p(f, oc)
        we, be = lin_p(f, oc)
        return dict(wn=wn, bn=bn, we=we, be=be)

    def bn_p(c):
        return (jnp.ones((c,), jnp.float32), jnp.zeros((c,), jnp.float32))

    # five GCN towers of depth 1..5
    for t in range(1, 6):
        for d in range(1, t + 1):
            if d == 1:
                params[f"conv{t}_{d}"] = gcn_p(46, 50, 345)   # edge_length=345
            else:
                params[f"conv{t}_{d}"] = gcn_p(50, 50, 50)    # default edge_length=50
            params[f"BN{t}_{d}"] = bn_p(50)

    # refinement GNN
    params["gnnrefine1"] = gcn_p(46 + 30 * 3, 50, 345)
    params["gnnrefine1_bn"] = bn_p(50)
    params["gnnrefine2"] = gcn_p(50, 50, 50)
    params["gnnrefine2_bn"] = bn_p(50)

    # heads
    params["linR"] = lin_p(50 * 5, 49 * 4)
    params["BNR"] = bn_p(49 * 4)
    params["distalP"] = lin_p(50 * 5, 30 * 3)
    params["distalPconcat"] = lin_p(50 * 5 + 50, 300)
    params["distalPconcat_bn"] = bn_p(300)
    params["ditalPconcatL"] = lin_p(300, 49 * 4)
    return params


# ---------------------------------------------------------------------------
# Main
# ---------------------------------------------------------------------------
if __name__ == "__main__":
    key = jax.random.PRNGKey(0)
    k_p, k_x, k_c, k_e, k_r, k_col = jax.random.split(key, 6)

    N_NODES, N_EDGES = 16, 48
    params = make_params(k_p)

    x = jax.random.normal(k_x, (N_NODES, 26), jnp.float32)
    condition = jax.random.normal(k_c, (N_NODES, 20), jnp.float32)
    edge_attr = jax.random.normal(k_e, (N_EDGES, 345), jnp.float32)
    row = jax.random.randint(k_r, (N_EDGES,), 0, N_NODES, jnp.int32)
    col = jax.random.randint(k_col, (N_EDGES,), 0, N_NODES, jnp.int32)
    edge_index = jnp.stack([row, col], axis=0)                 # [2, E]

    # default branch (distalP=False): returns [N, 49, 4]
    out_main = net_forward(params, x, edge_index, edge_attr, condition,
                           distalP=False)
    out_main = jax.block_until_ready(out_main)
    assert out_main.shape == (N_NODES, 49, 4)

    # distalP=True branch: returns [N, 30, 3]
    out_dp = net_forward(params, x, edge_index, edge_attr, condition,
                         distalP=True)
    out_dp = jax.block_until_ready(out_dp)
    assert out_dp.shape == (N_NODES, 30, 3)

    # refinement branch (distalP is an array): returns [N, 49, 4]
    out_ref = net_forward(params, x, edge_index, edge_attr, condition,
                          distalP=out_dp)
    out_ref = jax.block_until_ready(out_ref)
    assert out_ref.shape == (N_NODES, 49, 4)

    print("KERNEL_OK")
</pallas_src>

<mosaic_0001>
module attributes {stable_mosaic.version = 11 : i64} {
  func.func @_net_kernel(%arg0: memref<16x46xf32, #tpu.memory_space<vmem>>, %arg1: memref<48x345xf32, #tpu.memory_space<vmem>>, %arg2: memref<48x16xf32, #tpu.memory_space<vmem>>, %arg3: memref<48x16xf32, #tpu.memory_space<vmem>>, %arg4: memref<16x48xf32, #tpu.memory_space<vmem>>, %arg5: memref<46x500xf32, #tpu.memory_space<vmem>>, %arg6: memref<46x500xf32, #tpu.memory_space<vmem>>, %arg7: memref<345x500xf32, #tpu.memory_space<vmem>>, %arg8: memref<1x500xf32, #tpu.memory_space<vmem>>, %arg9: memref<1x250xf32, #tpu.memory_space<vmem>>, %arg10: memref<1x250xf32, #tpu.memory_space<vmem>>, %arg11: memref<10x50x100xf32, #tpu.memory_space<vmem>>, %arg12: memref<10x50x100xf32, #tpu.memory_space<vmem>>, %arg13: memref<10x50x100xf32, #tpu.memory_space<vmem>>, %arg14: memref<10x100xf32, #tpu.memory_space<vmem>>, %arg15: memref<10x50xf32, #tpu.memory_space<vmem>>, %arg16: memref<10x50xf32, #tpu.memory_space<vmem>>, %arg17: memref<5x50x196xf32, #tpu.memory_space<vmem>>, %arg18: memref<1x196xf32, #tpu.memory_space<vmem>>, %arg19: memref<1x196xf32, #tpu.memory_space<vmem>>, %arg20: memref<1x196xf32, #tpu.memory_space<vmem>>, %arg21: memref<16x196xf32, #tpu.memory_space<vmem>>) attributes {dimension_semantics = [], scalar_prefetch = 0 : i64, scratch_operands = 0 : i64, tpu.core_type = #tpu.core_type<tc>} {
    %c0 = arith.constant 0 : index
    %c0_0 = arith.constant 0 : index
    %0 = vector.load %arg0[%c0, %c0_0] : memref<16x46xf32, #tpu.memory_space<vmem>>, vector<16x46xf32>
    %c0_1 = arith.constant 0 : index
    %c0_2 = arith.constant 0 : index
    %1 = vector.load %arg1[%c0_1, %c0_2] : memref<48x345xf32, #tpu.memory_space<vmem>>, vector<48x345xf32>
    %c0_3 = arith.constant 0 : index
    %c0_4 = arith.constant 0 : index
    %2 = vector.load %arg2[%c0_3, %c0_4] : memref<48x16xf32, #tpu.memory_space<vmem>>, vector<48x16xf32>
    %c0_5 = arith.constant 0 : index
    %c0_6 = arith.constant 0 : index
    %3 = vector.load %arg3[%c0_5, %c0_6] : memref<48x16xf32, #tpu.memory_space<vmem>>, vector<48x16xf32>
    %c0_7 = arith.constant 0 : index
    %c0_8 = arith.constant 0 : index
    %4 = vector.load %arg4[%c0_7, %c0_8] : memref<16x48xf32, #tpu.memory_space<vmem>>, vector<16x48xf32>
    %cst = arith.constant dense<0.000000e+00> : vector<48x46xf32>
    %5 = tpu.matmul %2, %0, %cst {dimension_numbers = #tpu.dot_dimension_numbers<[1], [0], [0], [1], [0, 0, 1, 1], [], []>} : vector<48x16xf32>, vector<16x46xf32>, vector<48x46xf32> -> vector<48x46xf32>
    %cst_9 = arith.constant dense<0.000000e+00> : vector<48x46xf32>
    %6 = tpu.matmul %3, %0, %cst_9 {dimension_numbers = #tpu.dot_dimension_numbers<[1], [0], [0], [1], [0, 0, 1, 1], [], []>} : vector<48x16xf32>, vector<16x46xf32>, vector<48x46xf32> -> vector<48x46xf32>
    %c0_10 = arith.constant 0 : index
    %c0_11 = arith.constant 0 : index
    %7 = vector.load %arg5[%c0_10, %c0_11] : memref<46x500xf32, #tpu.memory_space<vmem>>, vector<46x500xf32>
    %cst_12 = arith.constant dense<0.000000e+00> : vector<48x500xf32>
    %8 = tpu.matmul %5, %7, %cst_12 {dimension_numbers = #tpu.dot_dimension_numbers<[1], [0], [0], [1], [0, 0, 1, 1], [], []>} : vector<48x46xf32>, vector<46x500xf32>, vector<48x500xf32> -> vector<48x500xf32>
    %c0_13 = arith.constant 0 : index
    %c0_14 = arith.constant 0 : index
    %9 = vector.load %arg6[%c0_13, %c0_14] : memref<46x500xf32, #tpu.memory_space<vmem>>, vector<46x500xf32>
    %cst_15 = arith.constant dense<0.000000e+00> : vector<48x500xf32>
    %10 = tpu.matmul %6, %9, %cst_15 {dimension_numbers = #tpu.dot_dimension_numbers<[1], [0], [0], [1], [0, 0, 1, 1], [], []>} : vector<48x46xf32>, vector<46x500xf32>, vector<48x500xf32> -> vector<48x500xf32>
    %11 = arith.addf %8, %10 : vector<48x500xf32>
    %c0_16 = arith.constant 0 : index
    %c0_17 = arith.constant 0 : index
    %12 = vector.load %arg7[%c0_16, %c0_17] : memref<345x500xf32, #tpu.memory_space<vmem>>, vector<345x500xf32>
    %cst_18 = arith.constant dense<0.000000e+00> : vector<48x500xf32>
    %13 = tpu.matmul %1, %12, %cst_18 {dimension_numbers = #tpu.dot_dimension_numbers<[1], [0], [0], [1], [0, 0, 1, 1], [], []>} : vector<48x345xf32>, vector<345x500xf32>, vector<48x500xf32> -> vector<48x500xf32>
    %14 = arith.addf %11, %13 : vector<48x500xf32>
    %c0_19 = arith.constant 0 : index
    %c0_20 = arith.constant 0 : index
    %15 = vector.load %arg8[%c0_19, %c0_20] : memref<1x500xf32, #tpu.memory_space<vmem>>, vector<1x500xf32>
    %16 = vector.broadcast %15 : vector<1x500xf32> to vector<48x500xf32>
    %17 = arith.addf %14, %16 : vector<48x500xf32>
    %18 = vector.extract_strided_slice %17 {offsets = [0, 250], sizes = [48, 250], strides = [1, 1]} : vector<48x500xf32> to vector<48x250xf32>
    %cst_21 = arith.constant 0.000000e+00 : f32
    %19 = vector.broadcast %cst_21 : f32 to vector<48x250xf32>
    %20 = arith.cmpf ogt, %18, %19 : vector<48x250xf32>
    %21 = math.exp %18 : vector<48x250xf32>
    %cst_22 = arith.constant 1.000000e+00 : f32
    %22 = vector.broadcast %cst_22 : f32 to vector<48x250xf32>
    %23 = arith.subf %21, %22 : vector<48x250xf32>
    %24 = arith.select %20, %18, %23 : vector<48x250xi1>, vector<48x250xf32>
    %25 = vector.extract_strided_slice %17 {offsets = [0, 0], sizes = [48, 250], strides = [1, 1]} : vector<48x500xf32> to vector<48x250xf32>
    %cst_23 = arith.constant dense<0.000000e+00> : vector<16x250xf32>
    %26 = tpu.matmul %4, %25, %cst_23 {dimension_numbers = #tpu.dot_dimension_numbers<[1], [0], [0], [1], [0, 0, 1, 1], [], []>} : vector<16x48xf32>, vector<48x250xf32>, vector<16x250xf32> -> vector<16x250xf32>
    %c0_24 = arith.constant 0 : index
    %c0_25 = arith.constant 0 : index
    %27 = vector.load %arg9[%c0_24, %c0_25] : memref<1x250xf32, #tpu.memory_space<vmem>>, vector<1x250xf32>
    %c0_26 = arith.constant 0 : index
    %c0_27 = arith.constant 0 : index
    %28 = vector.load %arg10[%c0_26, %c0_27] : memref<1x250xf32, #tpu.memory_space<vmem>>, vector<1x250xf32>
    %cst_28 = arith.constant dense<0.000000e+00> : vector<250xf32>
    %29 = vector.multi_reduction <add>, %26, %cst_28 [0] : vector<16x250xf32> to vector<250xf32>
    %30 = vector.shape_cast %29 : vector<250xf32> to vector<1x250xf32>
    %cst_29 = arith.constant 1.600000e+01 : f32
    %31 = vector.broadcast %cst_29 : f32 to vector<1x250xf32>
    %32 = arith.divf %30, %31 : vector<1x250xf32>
    %33 = vector.broadcast %32 : vector<1x250xf32> to vector<16x250xf32>
    %34 = arith.subf %26, %33 : vector<16x250xf32>
    %35 = arith.mulf %34, %34 : vector<16x250xf32>
    %cst_30 = arith.constant dense<0.000000e+00> : vector<250xf32>
    %36 = vector.multi_reduction <add>, %35, %cst_30 [0] : vector<16x250xf32> to vector<250xf32>
    %37 = vector.shape_cast %36 : vector<250xf32> to vector<1x250xf32>
    %cst_31 = arith.constant 1.600000e+01 : f32
    %38 = vector.broadcast %cst_31 : f32 to vector<1x250xf32>
    %39 = arith.divf %37, %38 : vector<1x250xf32>
    %40 = vector.broadcast %32 : vector<1x250xf32> to vector<16x250xf32>
    %41 = arith.subf %26, %40 : vector<16x250xf32>
    %cst_32 = arith.constant 9.99999974E-6 : f32
    %42 = vector.broadcast %cst_32 : f32 to vector<1x250xf32>
    %43 = arith.addf %39, %42 : vector<1x250xf32>
    %44 = math.rsqrt %43 : vector<1x250xf32>
    %45 = vector.broadcast %44 : vector<1x250xf32> to vector<16x250xf32>
    %46 = arith.mulf %41, %45 : vector<16x250xf32>
    %47 = vector.broadcast %27 : vector<1x250xf32> to vector<16x250xf32>
    %48 = arith.mulf %46, %47 : vector<16x250xf32>
    %49 = vector.broadcast %28 : vector<1x250xf32> to vector<16x250xf32>
    %50 = arith.addf %48, %49 : vector<16x250xf32>
    %cst_33 = arith.constant 0.000000e+00 : f32
    %51 = vector.broadcast %cst_33 : f32 to vector<16x250xf32>
    %52 = arith.cmpf ogt, %50, %51 : vector<16x250xf32>
    %53 = math.exp %50 : vector<16x250xf32>
    %cst_34 = arith.constant 1.000000e+00 : f32
    %54 = vector.broadcast %cst_34 : f32 to vector<16x250xf32>
    %55 = arith.subf %53, %54 : vector<16x250xf32>
    %56 = arith.select %52, %50, %55 : vector<16x250xi1>, vector<16x250xf32>
    %57 = vector.extract_strided_slice %56 {offsets = [0, 0], sizes = [16, 50], strides = [1, 1]} : vector<16x250xf32> to vector<16x50xf32>
    %58 = vector.extract_strided_slice %56 {offsets = [0, 50], sizes = [16, 50], strides = [1, 1]} : vector<16x250xf32> to vector<16x50xf32>
    %59 = vector.extract_strided_slice %56 {offsets = [0, 100], sizes = [16, 50], strides = [1, 1]} : vector<16x250xf32> to vector<16x50xf32>
    %60 = vector.extract_strided_slice %56 {offsets = [0, 150], sizes = [16, 50], strides = [1, 1]} : vector<16x250xf32> to vector<16x50xf32>
    %61 = vector.extract_strided_slice %56 {offsets = [0, 200], sizes = [16, 50], strides = [1, 1]} : vector<16x250xf32> to vector<16x50xf32>
    %62 = vector.extract_strided_slice %24 {offsets = [0, 50], sizes = [48, 50], strides = [1, 1]} : vector<48x250xf32> to vector<48x50xf32>
    %63 = vector.extract_strided_slice %24 {offsets = [0, 100], sizes = [48, 50], strides = [1, 1]} : vector<48x250xf32> to vector<48x50xf32>
    %64 = vector.extract_strided_slice %24 {offsets = [0, 150], sizes = [48, 50], strides = [1, 1]} : vector<48x250xf32> to vector<48x50xf32>
    %65 = vector.extract_strided_slice %24 {offsets = [0, 200], sizes = [48, 50], strides = [1, 1]} : vector<48x250xf32> to vector<48x50xf32>
    %c0_35 = arith.constant 0 : index
    %c0_36 = arith.constant 0 : index
    %c0_37 = arith.constant 0 : index
    %66 = vector.load %arg11[%c0_35, %c0_36, %c0_37] : memref<10x50x100xf32, #tpu.memory_space<vmem>>, vector<1x50x100xf32>
    %67 = vector.shape_cast %66 : vector<1x50x100xf32> to vector<50x100xf32>
    %c0_38 = arith.constant 0 : index
    %c0_39 = arith.constant 0 : index
    %c0_40 = arith.constant 0 : index
    %68 = vector.load %arg12[%c0_38, %c0_39, %c0_40] : memref<10x50x100xf32, #tpu.memory_space<vmem>>, vector<1x50x100xf32>
    %69 = vector.shape_cast %68 : vector<1x50x100xf32> to vector<50x100xf32>
    %c0_41 = arith.constant 0 : index
    %c0_42 = arith.constant 0 : index
    %c0_43 = arith.constant 0 : index
    %70 = vector.load %arg13[%c0_41, %c0_42, %c0_43] : memref<10x50x100xf32, #tpu.memory_space<vmem>>, vector<1x50x100xf32>
    %71 = vector.shape_cast %70 : vector<1x50x100xf32> to vector<50x100xf32>
    %c0_44 = arith.constant 0 : index
    %c0_45 = arith.constant 0 : index
    %72 = vector.load %arg14[%c0_44, %c0_45] : memref<10x100xf32, #tpu.memory_space<vmem>>, vector<1x100xf32>
    %c0_46 = arith.constant 0 : index
    %c0_47 = arith.constant 0 : index
    %73 = vector.load %arg15[%c0_46, %c0_47] : memref<10x50xf32, #tpu.memory_space<vmem>>, vector<1x50xf32>
    %c0_48 = arith.constant 0 : index
    %c0_49 = arith.constant 0 : index
    %74 = vector.load %arg16[%c0_48, %c0_49] : memref<10x50xf32, #tpu.memory_space<vmem>>, vector<1x50xf32>
    %cst_50 = arith.constant dense<0.000000e+00> : vector<48x50xf32>
    %75 = tpu.matmul %2, %58, %cst_50 {dimension_numbers = #tpu.dot_dimension_numbers<[1], [0], [0], [1], [0, 0, 1, 1], [], []>} : vector<48x16xf32>, vector<16x50xf32>, vector<48x50xf32> -> vector<48x50xf32>
    %cst_51 = arith.constant dense<0.000000e+00> : vector<48x50xf32>
    %76 = tpu.matmul %3, %58, %cst_51 {dimension_numbers = #tpu.dot_dimension_numbers<[1], [0], [0], [1], [0, 0, 1, 1], [], []>} : vector<48x16xf32>, vector<16x50xf32>, vector<48x50xf32> -> vector<48x50xf32>
    %cst_52 = arith.constant dense<0.000000e+00> : vector<48x100xf32>
    %77 = tpu.matmul %75, %67, %cst_52 {dimension_numbers = #tpu.dot_dimension_numbers<[1], [0], [0], [1], [0, 0, 1, 1], [], []>} : vector<48x50xf32>, vector<50x100xf32>, vector<48x100xf32> -> vector<48x100xf32>
    %cst_53 = arith.constant dense<0.000000e+00> : vector<48x100xf32>
    %78 = tpu.matmul %76, %69, %cst_53 {dimension_numbers = #tpu.dot_dimension_numbers<[1], [0], [0], [1], [0, 0, 1, 1], [], []>} : vector<48x50xf32>, vector<50x100xf32>, vector<48x100xf32> -> vector<48x100xf32>
    %79 = arith.addf %77, %78 : vector<48x100xf32>
    %cst_54 = arith.constant dense<0.000000e+00> : vector<48x100xf32>
    %80 = tpu.matmul %62, %71, %cst_54 {dimension_numbers = #tpu.dot_dimension_numbers<[1], [0], [0], [1], [0, 0, 1, 1], [], []>} : vector<48x50xf32>, vector<50x100xf32>, vector<48x100xf32> -> vector<48x100xf32>
    %81 = arith.addf %79, %80 : vector<48x100xf32>
    %82 = vector.broadcast %72 : vector<1x100xf32> to vector<48x100xf32>
    %83 = arith.addf %81, %82 : vector<48x100xf32>
    %84 = vector.extract_strided_slice %83 {offsets = [0, 0], sizes = [48, 50], strides = [1, 1]} : vector<48x100xf32> to vector<48x50xf32>
    %cst_55 = arith.constant dense<0.000000e+00> : vector<16x50xf32>
    %85 = tpu.matmul %4, %84, %cst_55 {dimension_numbers = #tpu.dot_dimension_numbers<[1], [0], [0], [1], [0, 0, 1, 1], [], []>} : vector<16x48xf32>, vector<48x50xf32>, vector<16x50xf32> -> vector<16x50xf32>
    %cst_56 = arith.constant dense<0.000000e+00> : vector<50xf32>
    %86 = vector.multi_reduction <add>, %85, %cst_56 [0] : vector<16x50xf32> to vector<50xf32>
    %87 = vector.shape_cast %86 : vector<50xf32> to vector<1x50xf32>
    %cst_57 = arith.constant 1.600000e+01 : f32
    %88 = vector.broadcast %cst_57 : f32 to vector<1x50xf32>
    %89 = arith.divf %87, %88 : vector<1x50xf32>
    %90 = vector.broadcast %89 : vector<1x50xf32> to vector<16x50xf32>
    %91 = arith.subf %85, %90 : vector<16x50xf32>
    %92 = arith.mulf %91, %91 : vector<16x50xf32>
    %cst_58 = arith.constant dense<0.000000e+00> : vector<50xf32>
    %93 = vector.multi_reduction <add>, %92, %cst_58 [0] : vector<16x50xf32> to vector<50xf32>
    %94 = vector.shape_cast %93 : vector<50xf32> to vector<1x50xf32>
    %cst_59 = arith.constant 1.600000e+01 : f32
    %95 = vector.broadcast %cst_59 : f32 to vector<1x50xf32>
    %96 = arith.divf %94, %95 : vector<1x50xf32>
    %97 = vector.broadcast %89 : vector<1x50xf32> to vector<16x50xf32>
    %98 = arith.subf %85, %97 : vector<16x50xf32>
    %cst_60 = arith.constant 9.99999974E-6 : f32
    %99 = vector.broadcast %cst_60 : f32 to vector<1x50xf32>
    %100 = arith.addf %96, %99 : vector<1x50xf32>
    %101 = math.rsqrt %100 : vector<1x50xf32>
    %102 = vector.broadcast %101 : vector<1x50xf32> to vector<16x50xf32>
    %103 = arith.mulf %98, %102 : vector<16x50xf32>
    %104 = vector.broadcast %73 : vector<1x50xf32> to vector<16x50xf32>
    %105 = arith.mulf %103, %104 : vector<16x50xf32>
    %106 = vector.broadcast %74 : vector<1x50xf32> to vector<16x50xf32>
    %107 = arith.addf %105, %106 : vector<16x50xf32>
    %cst_61 = arith.constant 0.000000e+00 : f32
    %108 = vector.broadcast %cst_61 : f32 to vector<16x50xf32>
    %109 = arith.cmpf ogt, %107, %108 : vector<16x50xf32>
    %110 = math.exp %107 : vector<16x50xf32>
    %cst_62 = arith.constant 1.000000e+00 : f32
    %111 = vector.broadcast %cst_62 : f32 to vector<16x50xf32>
    %112 = arith.subf %110, %111 : vector<16x50xf32>
    %113 = arith.select %109, %107, %112 : vector<16x50xi1>, vector<16x50xf32>
    %c1 = arith.constant 1 : index
    %c0_63 = arith.constant 0 : index
    %c0_64 = arith.constant 0 : index
    %114 = vector.load %arg11[%c1, %c0_63, %c0_64] : memref<10x50x100xf32, #tpu.memory_space<vmem>>, vector<1x50x100xf32>
    %115 = vector.shape_cast %114 : vector<1x50x100xf32> to vector<50x100xf32>
    %c1_65 = arith.constant 1 : index
    %c0_66 = arith.constant 0 : index
    %c0_67 = arith.constant 0 : index
    %116 = vector.load %arg12[%c1_65, %c0_66, %c0_67] : memref<10x50x100xf32, #tpu.memory_space<vmem>>, vector<1x50x100xf32>
    %117 = vector.shape_cast %116 : vector<1x50x100xf32> to vector<50x100xf32>
    %c1_68 = arith.constant 1 : index
    %c0_69 = arith.constant 0 : index
    %c0_70 = arith.constant 0 : index
    %118 = vector.load %arg13[%c1_68, %c0_69, %c0_70] : memref<10x50x100xf32, #tpu.memory_space<vmem>>, vector<1x50x100xf32>
    %119 = vector.shape_cast %118 : vector<1x50x100xf32> to vector<50x100xf32>
    %c1_71 = arith.constant 1 : index
    %c0_72 = arith.constant 0 : index
    %120 = vector.load %arg14[%c1_71, %c0_72] : memref<10x100xf32, #tpu.memory_space<vmem>>, vector<1x100xf32>
    %c1_73 = arith.constant 1 : index
    %c0_74 = arith.constant 0 : index
    %121 = vector.load %arg15[%c1_73, %c0_74] : memref<10x50xf32, #tpu.memory_space<vmem>>, vector<1x50xf32>
    %c1_75 = arith.constant 1 : index
    %c0_76 = arith.constant 0 : index
    %122 = vector.load %arg16[%c1_75, %c0_76] : memref<10x50xf32, #tpu.memory_space<vmem>>, vector<1x50xf32>
    %cst_77 = arith.constant dense<0.000000e+00> : vector<48x50xf32>
    %123 = tpu.matmul %2, %59, %cst_77 {dimension_numbers = #tpu.dot_dimension_numbers<[1], [0], [0], [1], [0, 0, 1, 1], [], []>} : vector<48x16xf32>, vector<16x50xf32>, vector<48x50xf32> -> vector<48x50xf32>
    %cst_78 = arith.constant dense<0.000000e+00> : vector<48x50xf32>
    %124 = tpu.matmul %3, %59, %cst_78 {dimension_numbers = #tpu.dot_dimension_numbers<[1], [0], [0], [1], [0, 0, 1, 1], [], []>} : vector<48x16xf32>, vector<16x50xf32>, vector<48x50xf32> -> vector<48x50xf32>
    %cst_79 = arith.constant dense<0.000000e+00> : vector<48x100xf32>
    %125 = tpu.matmul %123, %115, %cst_79 {dimension_numbers = #tpu.dot_dimension_numbers<[1], [0], [0], [1], [0, 0, 1, 1], [], []>} : vector<48x50xf32>, vector<50x100xf32>, vector<48x100xf32> -> vector<48x100xf32>
    %cst_80 = arith.constant dense<0.000000e+00> : vector<48x100xf32>
    %126 = tpu.matmul %124, %117, %cst_80 {dimension_numbers = #tpu.dot_dimension_numbers<[1], [0], [0], [1], [0, 0, 1, 1], [], []>} : vector<48x50xf32>, vector<50x100xf32>, vector<48x100xf32> -> vector<48x100xf32>
    %127 = arith.addf %125, %126 : vector<48x100xf32>
    %cst_81 = arith.constant dense<0.000000e+00> : vector<48x100xf32>
    %128 = tpu.matmul %63, %119, %cst_81 {dimension_numbers = #tpu.dot_dimension_numbers<[1], [0], [0], [1], [0, 0, 1, 1], [], []>} : vector<48x50xf32>, vector<50x100xf32>, vector<48x100xf32> -> vector<48x100xf32>
    %129 = arith.addf %127, %128 : vector<48x100xf32>
    %130 = vector.broadcast %120 : vector<1x100xf32> to vector<48x100xf32>
    %131 = arith.addf %129, %130 : vector<48x100xf32>
    %132 = vector.extract_strided_slice %131 {offsets = [0, 50], sizes = [48, 50], strides = [1, 1]} : vector<48x100xf32> to vector<48x50xf32>
    %cst_82 = arith.constant 0.000000e+00 : f32
    %133 = vector.broadcast %cst_82 : f32 to vector<48x50xf32>
    %134 = arith.cmpf ogt, %132, %133 : vector<48x50xf32>
    %135 = math.exp %132 : vector<48x50xf32>
    %cst_83 = arith.constant 1.000000e+00 : f32
    %136 = vector.broadcast %cst_83 : f32 to vector<48x50xf32>
    %137 = arith.subf %135, %136 : vector<48x50xf32>
    %138 = arith.select %134, %132, %137 : vector<48x50xi1>, vector<48x50xf32>
    %139 = vector.extract_strided_slice %131 {offsets = [0, 0], sizes = [48, 50], strides = [1, 1]} : vector<48x100xf32> to vector<48x50xf32>
    %cst_84 = arith.constant dense<0.000000e+00> : vector<16x50xf32>
    %140 = tpu.matmul %4, %139, %cst_84 {dimension_numbers = #tpu.dot_dimension_numbers<[1], [0], [0], [1], [0, 0, 1, 1], [], []>} : vector<16x48xf32>, vector<48x50xf32>, vector<16x50xf32> -> vector<16x50xf32>
    %cst_85 = arith.constant dense<0.000000e+00> : vector<50xf32>
    %141 = vector.multi_reduction <add>, %140, %cst_85 [0] : vector<16x50xf32> to vector<50xf32>
    %142 = vector.shape_cast %141 : vector<50xf32> to vector<1x50xf32>
    %cst_86 = arith.constant 1.600000e+01 : f32
    %143 = vector.broadcast %cst_86 : f32 to vector<1x50xf32>
    %144 = arith.divf %142, %143 : vector<1x50xf32>
    %145 = vector.broadcast %144 : vector<1x50xf32> to vector<16x50xf32>
    %146 = arith.subf %140, %145 : vector<16x50xf32>
    %147 = arith.mulf %146, %146 : vector<16x50xf32>
    %cst_87 = arith.constant dense<0.000000e+00> : vector<50xf32>
    %148 = vector.multi_reduction <add>, %147, %cst_87 [0] : vector<16x50xf32> to vector<50xf32>
    %149 = vector.shape_cast %148 : vector<50xf32> to vector<1x50xf32>
    %cst_88 = arith.constant 1.600000e+01 : f32
    %150 = vector.broadcast %cst_88 : f32 to vector<1x50xf32>
    %151 = arith.divf %149, %150 : vector<1x50xf32>
    %152 = vector.broadcast %144 : vector<1x50xf32> to vector<16x50xf32>
    %153 = arith.subf %140, %152 : vector<16x50xf32>
    %cst_89 = arith.constant 9.99999974E-6 : f32
    %154 = vector.broadcast %cst_89 : f32 to vector<1x50xf32>
    %155 = arith.addf %151, %154 : vector<1x50xf32>
    %156 = math.rsqrt %155 : vector<1x50xf32>
    %157 = vector.broadcast %156 : vector<1x50xf32> to vector<16x50xf32>
    %158 = arith.mulf %153, %157 : vector<16x50xf32>
    %159 = vector.broadcast %121 : vector<1x50xf32> to vector<16x50xf32>
    %160 = arith.mulf %158, %159 : vector<16x50xf32>
    %161 = vector.broadcast %122 : vector<1x50xf32> to vector<16x50xf32>
    %162 = arith.addf %160, %161 : vector<16x50xf32>
    %cst_90 = arith.constant 0.000000e+00 : f32
    %163 = vector.broadcast %cst_90 : f32 to vector<16x50xf32>
    %164 = arith.cmpf ogt, %162, %163 : vector<16x50xf32>
    %165 = math.exp %162 : vector<16x50xf32>
    %cst_91 = arith.constant 1.000000e+00 : f32
    %166 = vector.broadcast %cst_91 : f32 to vector<16x50xf32>
    %167 = arith.subf %165, %166 : vector<16x50xf32>
    %168 = arith.select %164, %162, %167 : vector<16x50xi1>, vector<16x50xf32>
    %c2 = arith.constant 2 : index
    %c0_92 = arith.constant 0 : index
    %c0_93 = arith.constant 0 : index
    %169 = vector.load %arg11[%c2, %c0_92, %c0_93] : memref<10x50x100xf32, #tpu.memory_space<vmem>>, vector<1x50x100xf32>
    %170 = vector.shape_cast %169 : vector<1x50x100xf32> to vector<50x100xf32>
    %c2_94 = arith.constant 2 : index
    %c0_95 = arith.constant 0 : index
    %c0_96 = arith.constant 0 : index
    %171 = vector.load %arg12[%c2_94, %c0_95, %c0_96] : memref<10x50x100xf32, #tpu.memory_space<vmem>>, vector<1x50x100xf32>
    %172 = vector.shape_cast %171 : vector<1x50x100xf32> to vector<50x100xf32>
    %c2_97 = arith.constant 2 : index
    %c0_98 = arith.constant 0 : index
    %c0_99 = arith.constant 0 : index
    %173 = vector.load %arg13[%c2_97, %c0_98, %c0_99] : memref<10x50x100xf32, #tpu.memory_space<vmem>>, vector<1x50x100xf32>
    %174 = vector.shape_cast %173 : vector<1x50x100xf32> to vector<50x100xf32>
    %c2_100 = arith.constant 2 : index
    %c0_101 = arith.constant 0 : index
    %175 = vector.load %arg14[%c2_100, %c0_101] : memref<10x100xf32, #tpu.memory_space<vmem>>, vector<1x100xf32>
    %c2_102 = arith.constant 2 : index
    %c0_103 = arith.constant 0 : index
    %176 = vector.load %arg15[%c2_102, %c0_103] : memref<10x50xf32, #tpu.memory_space<vmem>>, vector<1x50xf32>
    %c2_104 = arith.constant 2 : index
    %c0_105 = arith.constant 0 : index
    %177 = vector.load %arg16[%c2_104, %c0_105] : memref<10x50xf32, #tpu.memory_space<vmem>>, vector<1x50xf32>
    %cst_106 = arith.constant dense<0.000000e+00> : vector<48x50xf32>
    %178 = tpu.matmul %2, %168, %cst_106 {dimension_numbers = #tpu.dot_dimension_numbers<[1], [0], [0], [1], [0, 0, 1, 1], [], []>} : vector<48x16xf32>, vector<16x50xf32>, vector<48x50xf32> -> vector<48x50xf32>
    %cst_107 = arith.constant dense<0.000000e+00> : vector<48x50xf32>
    %179 = tpu.matmul %3, %168, %cst_107 {dimension_numbers = #tpu.dot_dimension_numbers<[1], [0], [0], [1], [0, 0, 1, 1], [], []>} : vector<48x16xf32>, vector<16x50xf32>, vector<48x50xf32> -> vector<48x50xf32>
    %cst_108 = arith.constant dense<0.000000e+00> : vector<48x100xf32>
    %180 = tpu.matmul %178, %170, %cst_108 {dimension_numbers = #tpu.dot_dimension_numbers<[1], [0], [0], [1], [0, 0, 1, 1], [], []>} : vector<48x50xf32>, vector<50x100xf32>, vector<48x100xf32> -> vector<48x100xf32>
    %cst_109 = arith.constant dense<0.000000e+00> : vector<48x100xf32>
    %181 = tpu.matmul %179, %172, %cst_109 {dimension_numbers = #tpu.dot_dimension_numbers<[1], [0], [0], [1], [0, 0, 1, 1], [], []>} : vector<48x50xf32>, vector<50x100xf32>, vector<48x100xf32> -> vector<48x100xf32>
    %182 = arith.addf %180, %181 : vector<48x100xf32>
    %cst_110 = arith.constant dense<0.000000e+00> : vector<48x100xf32>
    %183 = tpu.matmul %138, %174, %cst_110 {dimension_numbers = #tpu.dot_dimension_numbers<[1], [0], [0], [1], [0, 0, 1, 1], [], []>} : vector<48x50xf32>, vector<50x100xf32>, vector<48x100xf32> -> vector<48x100xf32>
    %184 = arith.addf %182, %183 : vector<48x100xf32>
    %185 = vector.broadcast %175 : vector<1x100xf32> to vector<48x100xf32>
    %186 = arith.addf %184, %185 : vector<48x100xf32>
    %187 = vector.extract_strided_slice %186 {offsets = [0, 0], sizes = [48, 50], strides = [1, 1]} : vector<48x100xf32> to vector<48x50xf32>
    %cst_111 = arith.constant dense<0.000000e+00> : vector<16x50xf32>
    %188 = tpu.matmul %4, %187, %cst_111 {dimension_numbers = #tpu.dot_dimension_numbers<[1], [0], [0], [1], [0, 0, 1, 1], [], []>} : vector<16x48xf32>, vector<48x50xf32>, vector<16x50xf32> -> vector<16x50xf32>
    %cst_112 = arith.constant dense<0.000000e+00> : vector<50xf32>
    %189 = vector.multi_reduction <add>, %188, %cst_112 [0] : vector<16x50xf32> to vector<50xf32>
    %190 = vector.shape_cast %189 : vector<50xf32> to vector<1x50xf32>
    %cst_113 = arith.constant 1.600000e+01 : f32
    %191 = vector.broadcast %cst_113 : f32 to vector<1x50xf32>
    %192 = arith.divf %190, %191 : vector<1x50xf32>
    %193 = vector.broadcast %192 : vector<1x50xf32> to vector<16x50xf32>
    %194 = arith.subf %188, %193 : vector<16x50xf32>
    %195 = arith.mulf %194, %194 : vector<16x50xf32>
    %cst_114 = arith.constant dense<0.000000e+00> : vector<50xf32>
    %196 = vector.multi_reduction <add>, %195, %cst_114 [0] : vector<16x50xf32> to vector<50xf32>
    %197 = vector.shape_cast %196 : vector<50xf32> to vector<1x50xf32>
    %cst_115 = arith.constant 1.600000e+01 : f32
    %198 = vector.broadcast %cst_115 : f32 to vector<1x50xf32>
    %199 = arith.divf %197, %198 : vector<1x50xf32>
    %200 = vector.broadcast %192 : vector<1x50xf32> to vector<16x50xf32>
    %201 = arith.subf %188, %200 : vector<16x50xf32>
    %cst_116 = arith.constant 9.99999974E-6 : f32
    %202 = vector.broadcast %cst_116 : f32 to vector<1x50xf32>
    %203 = arith.addf %199, %202 : vector<1x50xf32>
    %204 = math.rsqrt %203 : vector<1x50xf32>
    %205 = vector.broadcast %204 : vector<1x50xf32> to vector<16x50xf32>
    %206 = arith.mulf %201, %205 : vector<16x50xf32>
    %207 = vector.broadcast %176 : vector<1x50xf32> to vector<16x50xf32>
    %208 = arith.mulf %206, %207 : vector<16x50xf32>
    %209 = vector.broadcast %177 : vector<1x50xf32> to vector<16x50xf32>
    %210 = arith.addf %208, %209 : vector<16x50xf32>
    %cst_117 = arith.constant 0.000000e+00 : f32
    %211 = vector.broadcast %cst_117 : f32 to vector<16x50xf32>
    %212 = arith.cmpf ogt, %210, %211 : vector<16x50xf32>
    %213 = math.exp %210 : vector<16x50xf32>
    %cst_118 = arith.constant 1.000000e+00 : f32
    %214 = vector.broadcast %cst_118 : f32 to vector<16x50xf32>
    %215 = arith.subf %213, %214 : vector<16x50xf32>
    %216 = arith.select %212, %210, %215 : vector<16x50xi1>, vector<16x50xf32>
    %c3 = arith.constant 3 : index
    %c0_119 = arith.constant 0 : index
    %c0_120 = arith.constant 0 : index
    %217 = vector.load %arg11[%c3, %c0_119, %c0_120] : memref<10x50x100xf32, #tpu.memory_space<vmem>>, vector<1x50x100xf32>
    %218 = vector.shape_cast %217 : vector<1x50x100xf32> to vector<50x100xf32>
    %c3_121 = arith.constant 3 : index
    %c0_122 = arith.constant 0 : index
    %c0_123 = arith.constant 0 : index
    %219 = vector.load %arg12[%c3_121, %c0_122, %c0_123] : memref<10x50x100xf32, #tpu.memory_space<vmem>>, vector<1x50x100xf32>
    %220 = vector.shape_cast %219 : vector<1x50x100xf32> to vector<50x100xf32>
    %c3_124 = arith.constant 3 : index
    %c0_125 = arith.constant 0 : index
    %c0_126 = arith.constant 0 : index
    %221 = vector.load %arg13[%c3_124, %c0_125, %c0_126] : memref<10x50x100xf32, #tpu.memory_space<vmem>>, vector<1x50x100xf32>
    %222 = vector.shape_cast %221 : vector<1x50x100xf32> to vector<50x100xf32>
    %c3_127 = arith.constant 3 : index
    %c0_128 = arith.constant 0 : index
    %223 = vector.load %arg14[%c3_127, %c0_128] : memref<10x100xf32, #tpu.memory_space<vmem>>, vector<1x100xf32>
    %c3_129 = arith.constant 3 : index
    %c0_130 = arith.constant 0 : index
    %224 = vector.load %arg15[%c3_129, %c0_130] : memref<10x50xf32, #tpu.memory_space<vmem>>, vector<1x50xf32>
    %c3_131 = arith.constant 3 : index
    %c0_132 = arith.constant 0 : index
    %225 = vector.load %arg16[%c3_131, %c0_132] : memref<10x50xf32, #tpu.memory_space<vmem>>, vector<1x50xf32>
    %cst_133 = arith.constant dense<0.000000e+00> : vector<48x50xf32>
    %226 = tpu.matmul %2, %60, %cst_133 {dimension_numbers = #tpu.dot_dimension_numbers<[1], [0], [0], [1], [0, 0, 1, 1], [], []>} : vector<48x16xf32>, vector<16x50xf32>, vector<48x50xf32> -> vector<48x50xf32>
    %cst_134 = arith.constant dense<0.000000e+00> : vector<48x50xf32>
    %227 = tpu.matmul %3, %60, %cst_134 {dimension_numbers = #tpu.dot_dimension_numbers<[1], [0], [0], [1], [0, 0, 1, 1], [], []>} : vector<48x16xf32>, vector<16x50xf32>, vector<48x50xf32> -> vector<48x50xf32>
    %cst_135 = arith.constant dense<0.000000e+00> : vector<48x100xf32>
    %228 = tpu.matmul %226, %218, %cst_135 {dimension_numbers = #tpu.dot_dimension_numbers<[1], [0], [0], [1], [0, 0, 1, 1], [], []>} : vector<48x50xf32>, vector<50x100xf32>, vector<48x100xf32> -> vector<48x100xf32>
    %cst_136 = arith.constant dense<0.000000e+00> : vector<48x100xf32>
    %229 = tpu.matmul %227, %220, %cst_136 {dimension_numbers = #tpu.dot_dimension_numbers<[1], [0], [0], [1], [0, 0, 1, 1], [], []>} : vector<48x50xf32>, vector<50x100xf32>, vector<48x100xf32> -> vector<48x100xf32>
    %230 = arith.addf %228, %229 : vector<48x100xf32>
    %cst_137 = arith.constant dense<0.000000e+00> : vector<48x100xf32>
    %231 = tpu.matmul %64, %222, %cst_137 {dimension_numbers = #tpu.dot_dimension_numbers<[1], [0], [0], [1], [0, 0, 1, 1], [], []>} : vector<48x50xf32>, vector<50x100xf32>, vector<48x100xf32> -> vector<48x100xf32>
    %232 = arith.addf %230, %231 : vector<48x100xf32>
    %233 = vector.broadcast %223 : vector<1x100xf32> to vector<48x100xf32>
    %234 = arith.addf %232, %233 : vector<48x100xf32>
    %235 = vector.extract_strided_slice %234 {offsets = [0, 50], sizes = [48, 50], strides = [1, 1]} : vector<48x100xf32> to vector<48x50xf32>
    %cst_138 = arith.constant 0.000000e+00 : f32
    %236 = vector.broadcast %cst_138 : f32 to vector<48x50xf32>
    %237 = arith.cmpf ogt, %235, %236 : vector<48x50xf32>
    %238 = math.exp %235 : vector<48x50xf32>
    %cst_139 = arith.constant 1.000000e+00 : f32
    %239 = vector.broadcast %cst_139 : f32 to vector<48x50xf32>
    %240 = arith.subf %238, %239 : vector<48x50xf32>
    %241 = arith.select %237, %235, %240 : vector<48x50xi1>, vector<48x50xf32>
    %242 = vector.extract_strided_slice %234 {offsets = [0, 0], sizes = [48, 50], strides = [1, 1]} : vector<48x100xf32> to vector<48x50xf32>
    %cst_140 = arith.constant dense<0.000000e+00> : vector<16x50xf32>
    %243 = tpu.matmul %4, %242, %cst_140 {dimension_numbers = #tpu.dot_dimension_numbers<[1], [0], [0], [1], [0, 0, 1, 1], [], []>} : vector<16x48xf32>, vector<48x50xf32>, vector<16x50xf32> -> vector<16x50xf32>
    %cst_141 = arith.constant dense<0.000000e+00> : vector<50xf32>
    %244 = vector.multi_reduction <add>, %243, %cst_141 [0] : vector<16x50xf32> to vector<50xf32>
    %245 = vector.shape_cast %244 : vector<50xf32> to vector<1x50xf32>
    %cst_142 = arith.constant 1.600000e+01 : f32
    %246 = vector.broadcast %cst_142 : f32 to vector<1x50xf32>
    %247 = arith.divf %245, %246 : vector<1x50xf32>
    %248 = vector.broadcast %247 : vector<1x50xf32> to vector<16x50xf32>
    %249 = arith.subf %243, %248 : vector<16x50xf32>
    %250 = arith.mulf %249, %249 : vector<16x50xf32>
    %cst_143 = arith.constant dense<0.000000e+00> : vector<50xf32>
    %251 = vector.multi_reduction <add>, %250, %cst_143 [0] : vector<16x50xf32> to vector<50xf32>
    %252 = vector.shape_cast %251 : vector<50xf32> to vector<1x50xf32>
    %cst_144 = arith.constant 1.600000e+01 : f32
    %253 = vector.broadcast %cst_144 : f32 to vector<1x50xf32>
    %254 = arith.divf %252, %253 : vector<1x50xf32>
    %255 = vector.broadcast %247 : vector<1x50xf32> to vector<16x50xf32>
    %256 = arith.subf %243, %255 : vector<16x50xf32>
    %cst_145 = arith.constant 9.99999974E-6 : f32
    %257 = vector.broadcast %cst_145 : f32 to vector<1x50xf32>
    %258 = arith.addf %254, %257 : vector<1x50xf32>
    %259 = math.rsqrt %258 : vector<1x50xf32>
    %260 = vector.broadcast %259 : vector<1x50xf32> to vector<16x50xf32>
    %261 = arith.mulf %256, %260 : vector<16x50xf32>
    %262 = vector.broadcast %224 : vector<1x50xf32> to vector<16x50xf32>
    %263 = arith.mulf %261, %262 : vector<16x50xf32>
    %264 = vector.broadcast %225 : vector<1x50xf32> to vector<16x50xf32>
    %265 = arith.addf %263, %264 : vector<16x50xf32>
    %cst_146 = arith.constant 0.000000e+00 : f32
    %266 = vector.broadcast %cst_146 : f32 to vector<16x50xf32>
    %267 = arith.cmpf ogt, %265, %266 : vector<16x50xf32>
    %268 = math.exp %265 : vector<16x50xf32>
    %cst_147 = arith.constant 1.000000e+00 : f32
    %269 = vector.broadcast %cst_147 : f32 to vector<16x50xf32>
    %270 = arith.subf %268, %269 : vector<16x50xf32>
    %271 = arith.select %267, %265, %270 : vector<16x50xi1>, vector<16x50xf32>
    %c4 = arith.constant 4 : index
    %c0_148 = arith.constant 0 : index
    %c0_149 = arith.constant 0 : index
    %272 = vector.load %arg11[%c4, %c0_148, %c0_149] : memref<10x50x100xf32, #tpu.memory_space<vmem>>, vector<1x50x100xf32>
    %273 = vector.shape_cast %272 : vector<1x50x100xf32> to vector<50x100xf32>
    %c4_150 = arith.constant 4 : index
    %c0_151 = arith.constant 0 : index
    %c0_152 = arith.constant 0 : index
    %274 = vector.load %arg12[%c4_150, %c0_151, %c0_152] : memref<10x50x100xf32, #tpu.memory_space<vmem>>, vector<1x50x100xf32>
    %275 = vector.shape_cast %274 : vector<1x50x100xf32> to vector<50x100xf32>
    %c4_153 = arith.constant 4 : index
    %c0_154 = arith.constant 0 : index
    %c0_155 = arith.constant 0 : index
    %276 = vector.load %arg13[%c4_153, %c0_154, %c0_155] : memref<10x50x100xf32, #tpu.memory_space<vmem>>, vector<1x50x100xf32>
    %277 = vector.shape_cast %276 : vector<1x50x100xf32> to vector<50x100xf32>
    %c4_156 = arith.constant 4 : index
    %c0_157 = arith.constant 0 : index
    %278 = vector.load %arg14[%c4_156, %c0_157] : memref<10x100xf32, #tpu.memory_space<vmem>>, vector<1x100xf32>
    %c4_158 = arith.constant 4 : index
    %c0_159 = arith.constant 0 : index
    %279 = vector.load %arg15[%c4_158, %c0_159] : memref<10x50xf32, #tpu.memory_space<vmem>>, vector<1x50xf32>
    %c4_160 = arith.constant 4 : index
    %c0_161 = arith.constant 0 : index
    %280 = vector.load %arg16[%c4_160, %c0_161] : memref<10x50xf32, #tpu.memory_space<vmem>>, vector<1x50xf32>
    %cst_162 = arith.constant dense<0.000000e+00> : vector<48x50xf32>
    %281 = tpu.matmul %2, %271, %cst_162 {dimension_numbers = #tpu.dot_dimension_numbers<[1], [0], [0], [1], [0, 0, 1, 1], [], []>} : vector<48x16xf32>, vector<16x50xf32>, vector<48x50xf32> -> vector<48x50xf32>
    %cst_163 = arith.constant dense<0.000000e+00> : vector<48x50xf32>
    %282 = tpu.matmul %3, %271, %cst_163 {dimension_numbers = #tpu.dot_dimension_numbers<[1], [0], [0], [1], [0, 0, 1, 1], [], []>} : vector<48x16xf32>, vector<16x50xf32>, vector<48x50xf32> -> vector<48x50xf32>
    %cst_164 = arith.constant dense<0.000000e+00> : vector<48x100xf32>
    %283 = tpu.matmul %281, %273, %cst_164 {dimension_numbers = #tpu.dot_dimension_numbers<[1], [0], [0], [1], [0, 0, 1, 1], [], []>} : vector<48x50xf32>, vector<50x100xf32>, vector<48x100xf32> -> vector<48x100xf32>
    %cst_165 = arith.constant dense<0.000000e+00> : vector<48x100xf32>
    %284 = tpu.matmul %282, %275, %cst_165 {dimension_numbers = #tpu.dot_dimension_numbers<[1], [0], [0], [1], [0, 0, 1, 1], [], []>} : vector<48x50xf32>, vector<50x100xf32>, vector<48x100xf32> -> vector<48x100xf32>
    %285 = arith.addf %283, %284 : vector<48x100xf32>
    %cst_166 = arith.constant dense<0.000000e+00> : vector<48x100xf32>
    %286 = tpu.matmul %241, %277, %cst_166 {dimension_numbers = #tpu.dot_dimension_numbers<[1], [0], [0], [1], [0, 0, 1, 1], [], []>} : vector<48x50xf32>, vector<50x100xf32>, vector<48x100xf32> -> vector<48x100xf32>
    %287 = arith.addf %285, %286 : vector<48x100xf32>
    %288 = vector.broadcast %278 : vector<1x100xf32> to vector<48x100xf32>
    %289 = arith.addf %287, %288 : vector<48x100xf32>
    %290 = vector.extract_strided_slice %289 {offsets = [0, 50], sizes = [48, 50], strides = [1, 1]} : vector<48x100xf32> to vector<48x50xf32>
    %cst_167 = arith.constant 0.000000e+00 : f32
    %291 = vector.broadcast %cst_167 : f32 to vector<48x50xf32>
    %292 = arith.cmpf ogt, %290, %291 : vector<48x50xf32>
    %293 = math.exp %290 : vector<48x50xf32>
    %cst_168 = arith.constant 1.000000e+00 : f32
    %294 = vector.broadcast %cst_168 : f32 to vector<48x50xf32>
    %295 = arith.subf %293, %294 : vector<48x50xf32>
    %296 = arith.select %292, %290, %295 : vector<48x50xi1>, vector<48x50xf32>
    %297 = vector.extract_strided_slice %289 {offsets = [0, 0], sizes = [48, 50], strides = [1, 1]} : vector<48x100xf32> to vector<48x50xf32>
    %cst_169 = arith.constant dense<0.000000e+00> : vector<16x50xf32>
    %298 = tpu.matmul %4, %297, %cst_169 {dimension_numbers = #tpu.dot_dimension_numbers<[1], [0], [0], [1], [0, 0, 1, 1], [], []>} : vector<16x48xf32>, vector<48x50xf32>, vector<16x50xf32> -> vector<16x50xf32>
    %cst_170 = arith.constant dense<0.000000e+00> : vector<50xf32>
    %299 = vector.multi_reduction <add>, %298, %cst_170 [0] : vector<16x50xf32> to vector<50xf32>
    %300 = vector.shape_cast %299 : vector<50xf32> to vector<1x50xf32>
    %cst_171 = arith.constant 1.600000e+01 : f32
    %301 = vector.broadcast %cst_171 : f32 to vector<1x50xf32>
    %302 = arith.divf %300, %301 : vector<1x50xf32>
    %303 = vector.broadcast %302 : vector<1x50xf32> to vector<16x50xf32>
    %304 = arith.subf %298, %303 : vector<16x50xf32>
    %305 = arith.mulf %304, %304 : vector<16x50xf32>
    %cst_172 = arith.constant dense<0.000000e+00> : vector<50xf32>
    %306 = vector.multi_reduction <add>, %305, %cst_172 [0] : vector<16x50xf32> to vector<50xf32>
    %307 = vector.shape_cast %306 : vector<50xf32> to vector<1x50xf32>
    %cst_173 = arith.constant 1.600000e+01 : f32
    %308 = vector.broadcast %cst_173 : f32 to vector<1x50xf32>
    %309 = arith.divf %307, %308 : vector<1x50xf32>
    %310 = vector.broadcast %302 : vector<1x50xf32> to vector<16x50xf32>
    %311 = arith.subf %298, %310 : vector<16x50xf32>
    %cst_174 = arith.constant 9.99999974E-6 : f32
    %312 = vector.broadcast %cst_174 : f32 to vector<1x50xf32>
    %313 = arith.addf %309, %312 : vector<1x50xf32>
    %314 = math.rsqrt %313 : vector<1x50xf32>
    %315 = vector.broadcast %314 : vector<1x50xf32> to vector<16x50xf32>
    %316 = arith.mulf %311, %315 : vector<16x50xf32>
    %317 = vector.broadcast %279 : vector<1x50xf32> to vector<16x50xf32>
    %318 = arith.mulf %316, %317 : vector<16x50xf32>
    %319 = vector.broadcast %280 : vector<1x50xf32> to vector<16x50xf32>
    %320 = arith.addf %318, %319 : vector<16x50xf32>
    %cst_175 = arith.constant 0.000000e+00 : f32
    %321 = vector.broadcast %cst_175 : f32 to vector<16x50xf32>
    %322 = arith.cmpf ogt, %320, %321 : vector<16x50xf32>
    %323 = math.exp %320 : vector<16x50xf32>
    %cst_176 = arith.constant 1.000000e+00 : f32
    %324 = vector.broadcast %cst_176 : f32 to vector<16x50xf32>
    %325 = arith.subf %323, %324 : vector<16x50xf32>
    %326 = arith.select %322, %320, %325 : vector<16x50xi1>, vector<16x50xf32>
    %c5 = arith.constant 5 : index
    %c0_177 = arith.constant 0 : index
    %c0_178 = arith.constant 0 : index
    %327 = vector.load %arg11[%c5, %c0_177, %c0_178] : memref<10x50x100xf32, #tpu.memory_space<vmem>>, vector<1x50x100xf32>
    %328 = vector.shape_cast %327 : vector<1x50x100xf32> to vector<50x100xf32>
    %c5_179 = arith.constant 5 : index
    %c0_180 = arith.constant 0 : index
    %c0_181 = arith.constant 0 : index
    %329 = vector.load %arg12[%c5_179, %c0_180, %c0_181] : memref<10x50x100xf32, #tpu.memory_space<vmem>>, vector<1x50x100xf32>
    %330 = vector.shape_cast %329 : vector<1x50x100xf32> to vector<50x100xf32>
    %c5_182 = arith.constant 5 : index
    %c0_183 = arith.constant 0 : index
    %c0_184 = arith.constant 0 : index
    %331 = vector.load %arg13[%c5_182, %c0_183, %c0_184] : memref<10x50x100xf32, #tpu.memory_space<vmem>>, vector<1x50x100xf32>
    %332 = vector.shape_cast %331 : vector<1x50x100xf32> to vector<50x100xf32>
    %c5_185 = arith.constant 5 : index
    %c0_186 = arith.constant 0 : index
    %333 = vector.load %arg14[%c5_185, %c0_186] : memref<10x100xf32, #tpu.memory_space<vmem>>, vector<1x100xf32>
    %c5_187 = arith.constant 5 : index
    %c0_188 = arith.constant 0 : index
    %334 = vector.load %arg15[%c5_187, %c0_188] : memref<10x50xf32, #tpu.memory_space<vmem>>, vector<1x50xf32>
    %c5_189 = arith.constant 5 : index
    %c0_190 = arith.constant 0 : index
    %335 = vector.load %arg16[%c5_189, %c0_190] : memref<10x50xf32, #tpu.memory_space<vmem>>, vector<1x50xf32>
    %cst_191 = arith.constant dense<0.000000e+00> : vector<48x50xf32>
    %336 = tpu.matmul %2, %326, %cst_191 {dimension_numbers = #tpu.dot_dimension_numbers<[1], [0], [0], [1], [0, 0, 1, 1], [], []>} : vector<48x16xf32>, vector<16x50xf32>, vector<48x50xf32> -> vector<48x50xf32>
    %cst_192 = arith.constant dense<0.000000e+00> : vector<48x50xf32>
    %337 = tpu.matmul %3, %326, %cst_192 {dimension_numbers = #tpu.dot_dimension_numbers<[1], [0], [0], [1], [0, 0, 1, 1], [], []>} : vector<48x16xf32>, vector<16x50xf32>, vector<48x50xf32> -> vector<48x50xf32>
    %cst_193 = arith.constant dense<0.000000e+00> : vector<48x100xf32>
    %338 = tpu.matmul %336, %328, %cst_193 {dimension_numbers = #tpu.dot_dimension_numbers<[1], [0], [0], [1], [0, 0, 1, 1], [], []>} : vector<48x50xf32>, vector<50x100xf32>, vector<48x100xf32> -> vector<48x100xf32>
    %cst_194 = arith.constant dense<0.000000e+00> : vector<48x100xf32>
    %339 = tpu.matmul %337, %330, %cst_194 {dimension_numbers = #tpu.dot_dimension_numbers<[1], [0], [0], [1], [0, 0, 1, 1], [], []>} : vector<48x50xf32>, vector<50x100xf32>, vector<48x100xf32> -> vector<48x100xf32>
    %340 = arith.addf %338, %339 : vector<48x100xf32>
    %cst_195 = arith.constant dense<0.000000e+00> : vector<48x100xf32>
    %341 = tpu.matmul %296, %332, %cst_195 {dimension_numbers = #tpu.dot_dimension_numbers<[1], [0], [0], [1], [0, 0, 1, 1], [], []>} : vector<48x50xf32>, vector<50x100xf32>, vector<48x100xf32> -> vector<48x100xf32>
    %342 = arith.addf %340, %341 : vector<48x100xf32>
    %343 = vector.broadcast %333 : vector<1x100xf32> to vector<48x100xf32>
    %344 = arith.addf %342, %343 : vector<48x100xf32>
    %345 = vector.extract_strided_slice %344 {offsets = [0, 0], sizes = [48, 50], strides = [1, 1]} : vector<48x100xf32> to vector<48x50xf32>
    %cst_196 = arith.constant dense<0.000000e+00> : vector<16x50xf32>
    %346 = tpu.matmul %4, %345, %cst_196 {dimension_numbers = #tpu.dot_dimension_numbers<[1], [0], [0], [1], [0, 0, 1, 1], [], []>} : vector<16x48xf32>, vector<48x50xf32>, vector<16x50xf32> -> vector<16x50xf32>
    %cst_197 = arith.constant dense<0.000000e+00> : vector<50xf32>
    %347 = vector.multi_reduction <add>, %346, %cst_197 [0] : vector<16x50xf32> to vector<50xf32>
    %348 = vector.shape_cast %347 : vector<50xf32> to vector<1x50xf32>
    %cst_198 = arith.constant 1.600000e+01 : f32
    %349 = vector.broadcast %cst_198 : f32 to vector<1x50xf32>
    %350 = arith.divf %348, %349 : vector<1x50xf32>
    %351 = vector.broadcast %350 : vector<1x50xf32> to vector<16x50xf32>
    %352 = arith.subf %346, %351 : vector<16x50xf32>
    %353 = arith.mulf %352, %352 : vector<16x50xf32>
    %cst_199 = arith.constant dense<0.000000e+00> : vector<50xf32>
    %354 = vector.multi_reduction <add>, %353, %cst_199 [0] : vector<16x50xf32> to vector<50xf32>
    %355 = vector.shape_cast %354 : vector<50xf32> to vector<1x50xf32>
    %cst_200 = arith.constant 1.600000e+01 : f32
    %356 = vector.broadcast %cst_200 : f32 to vector<1x50xf32>
    %357 = arith.divf %355, %356 : vector<1x50xf32>
    %358 = vector.broadcast %350 : vector<1x50xf32> to vector<16x50xf32>
    %359 = arith.subf %346, %358 : vector<16x50xf32>
    %cst_201 = arith.constant 9.99999974E-6 : f32
    %360 = vector.broadcast %cst_201 : f32 to vector<1x50xf32>
    %361 = arith.addf %357, %360 : vector<1x50xf32>
    %362 = math.rsqrt %361 : vector<1x50xf32>
    %363 = vector.broadcast %362 : vector<1x50xf32> to vector<16x50xf32>
    %364 = arith.mulf %359, %363 : vector<16x50xf32>
    %365 = vector.broadcast %334 : vector<1x50xf32> to vector<16x50xf32>
    %366 = arith.mulf %364, %365 : vector<16x50xf32>
    %367 = vector.broadcast %335 : vector<1x50xf32> to vector<16x50xf32>
    %368 = arith.addf %366, %367 : vector<16x50xf32>
    %cst_202 = arith.constant 0.000000e+00 : f32
    %369 = vector.broadcast %cst_202 : f32 to vector<16x50xf32>
    %370 = arith.cmpf ogt, %368, %369 : vector<16x50xf32>
    %371 = math.exp %368 : vector<16x50xf32>
    %cst_203 = arith.constant 1.000000e+00 : f32
    %372 = vector.broadcast %cst_203 : f32 to vector<16x50xf32>
    %373 = arith.subf %371, %372 : vector<16x50xf32>
    %374 = arith.select %370, %368, %373 : vector<16x50xi1>, vector<16x50xf32>
    %c6 = arith.constant 6 : index
    %c0_204 = arith.constant 0 : index
    %c0_205 = arith.constant 0 : index
    %375 = vector.load %arg11[%c6, %c0_204, %c0_205] : memref<10x50x100xf32, #tpu.memory_space<vmem>>, vector<1x50x100xf32>
    %376 = vector.shape_cast %375 : vector<1x50x100xf32> to vector<50x100xf32>
    %c6_206 = arith.constant 6 : index
    %c0_207 = arith.constant 0 : index
    %c0_208 = arith.constant 0 : index
    %377 = vector.load %arg12[%c6_206, %c0_207, %c0_208] : memref<10x50x100xf32, #tpu.memory_space<vmem>>, vector<1x50x100xf32>
    %378 = vector.shape_cast %377 : vector<1x50x100xf32> to vector<50x100xf32>
    %c6_209 = arith.constant 6 : index
    %c0_210 = arith.constant 0 : index
    %c0_211 = arith.constant 0 : index
    %379 = vector.load %arg13[%c6_209, %c0_210, %c0_211] : memref<10x50x100xf32, #tpu.memory_space<vmem>>, vector<1x50x100xf32>
    %380 = vector.shape_cast %379 : vector<1x50x100xf32> to vector<50x100xf32>
    %c6_212 = arith.constant 6 : index
    %c0_213 = arith.constant 0 : index
    %381 = vector.load %arg14[%c6_212, %c0_213] : memref<10x100xf32, #tpu.memory_space<vmem>>, vector<1x100xf32>
    %c6_214 = arith.constant 6 : index
    %c0_215 = arith.constant 0 : index
    %382 = vector.load %arg15[%c6_214, %c0_215] : memref<10x50xf32, #tpu.memory_space<vmem>>, vector<1x50xf32>
    %c6_216 = arith.constant 6 : index
    %c0_217 = arith.constant 0 : index
    %383 = vector.load %arg16[%c6_216, %c0_217] : memref<10x50xf32, #tpu.memory_space<vmem>>, vector<1x50xf32>
    %cst_218 = arith.constant dense<0.000000e+00> : vector<48x50xf32>
    %384 = tpu.matmul %2, %61, %cst_218 {dimension_numbers = #tpu.dot_dimension_numbers<[1], [0], [0], [1], [0, 0, 1, 1], [], []>} : vector<48x16xf32>, vector<16x50xf32>, vector<48x50xf32> -> vector<48x50xf32>
    %cst_219 = arith.constant dense<0.000000e+00> : vector<48x50xf32>
    %385 = tpu.matmul %3, %61, %cst_219 {dimension_numbers = #tpu.dot_dimension_numbers<[1], [0], [0], [1], [0, 0, 1, 1], [], []>} : vector<48x16xf32>, vector<16x50xf32>, vector<48x50xf32> -> vector<48x50xf32>
    %cst_220 = arith.constant dense<0.000000e+00> : vector<48x100xf32>
    %386 = tpu.matmul %384, %376, %cst_220 {dimension_numbers = #tpu.dot_dimension_numbers<[1], [0], [0], [1], [0, 0, 1, 1], [], []>} : vector<48x50xf32>, vector<50x100xf32>, vector<48x100xf32> -> vector<48x100xf32>
    %cst_221 = arith.constant dense<0.000000e+00> : vector<48x100xf32>
    %387 = tpu.matmul %385, %378, %cst_221 {dimension_numbers = #tpu.dot_dimension_numbers<[1], [0], [0], [1], [0, 0, 1, 1], [], []>} : vector<48x50xf32>, vector<50x100xf32>, vector<48x100xf32> -> vector<48x100xf32>
    %388 = arith.addf %386, %387 : vector<48x100xf32>
    %cst_222 = arith.constant dense<0.000000e+00> : vector<48x100xf32>
    %389 = tpu.matmul %65, %380, %cst_222 {dimension_numbers = #tpu.dot_dimension_numbers<[1], [0], [0], [1], [0, 0, 1, 1], [], []>} : vector<48x50xf32>, vector<50x100xf32>, vector<48x100xf32> -> vector<48x100xf32>
    %390 = arith.addf %388, %389 : vector<48x100xf32>
    %391 = vector.broadcast %381 : vector<1x100xf32> to vector<48x100xf32>
    %392 = arith.addf %390, %391 : vector<48x100xf32>
    %393 = vector.extract_strided_slice %392 {offsets = [0, 50], sizes = [48, 50], strides = [1, 1]} : vector<48x100xf32> to vector<48x50xf32>
    %cst_223 = arith.constant 0.000000e+00 : f32
    %394 = vector.broadcast %cst_223 : f32 to vector<48x50xf32>
    %395 = arith.cmpf ogt, %393, %394 : vector<48x50xf32>
    %396 = math.exp %393 : vector<48x50xf32>
    %cst_224 = arith.constant 1.000000e+00 : f32
    %397 = vector.broadcast %cst_224 : f32 to vector<48x50xf32>
    %398 = arith.subf %396, %397 : vector<48x50xf32>
    %399 = arith.select %395, %393, %398 : vector<48x50xi1>, vector<48x50xf32>
    %400 = vector.extract_strided_slice %392 {offsets = [0, 0], sizes = [48, 50], strides = [1, 1]} : vector<48x100xf32> to vector<48x50xf32>
    %cst_225 = arith.constant dense<0.000000e+00> : vector<16x50xf32>
    %401 = tpu.matmul %4, %400, %cst_225 {dimension_numbers = #tpu.dot_dimension_numbers<[1], [0], [0], [1], [0, 0, 1, 1], [], []>} : vector<16x48xf32>, vector<48x50xf32>, vector<16x50xf32> -> vector<16x50xf32>
    %cst_226 = arith.constant dense<0.000000e+00> : vector<50xf32>
    %402 = vector.multi_reduction <add>, %401, %cst_226 [0] : vector<16x50xf32> to vector<50xf32>
    %403 = vector.shape_cast %402 : vector<50xf32> to vector<1x50xf32>
    %cst_227 = arith.constant 1.600000e+01 : f32
    %404 = vector.broadcast %cst_227 : f32 to vector<1x50xf32>
    %405 = arith.divf %403, %404 : vector<1x50xf32>
    %406 = vector.broadcast %405 : vector<1x50xf32> to vector<16x50xf32>
    %407 = arith.subf %401, %406 : vector<16x50xf32>
    %408 = arith.mulf %407, %407 : vector<16x50xf32>
    %cst_228 = arith.constant dense<0.000000e+00> : vector<50xf32>
    %409 = vector.multi_reduction <add>, %408, %cst_228 [0] : vector<16x50xf32> to vector<50xf32>
    %410 = vector.shape_cast %409 : vector<50xf32> to vector<1x50xf32>
    %cst_229 = arith.constant 1.600000e+01 : f32
    %411 = vector.broadcast %cst_229 : f32 to vector<1x50xf32>
    %412 = arith.divf %410, %411 : vector<1x50xf32>
    %413 = vector.broadcast %405 : vector<1x50xf32> to vector<16x50xf32>
    %414 = arith.subf %401, %413 : vector<16x50xf32>
    %cst_230 = arith.constant 9.99999974E-6 : f32
    %415 = vector.broadcast %cst_230 : f32 to vector<1x50xf32>
    %416 = arith.addf %412, %415 : vector<1x50xf32>
    %417 = math.rsqrt %416 : vector<1x50xf32>
    %418 = vector.broadcast %417 : vector<1x50xf32> to vector<16x50xf32>
    %419 = arith.mulf %414, %418 : vector<16x50xf32>
    %420 = vector.broadcast %382 : vector<1x50xf32> to vector<16x50xf32>
    %421 = arith.mulf %419, %420 : vector<16x50xf32>
    %422 = vector.broadcast %383 : vector<1x50xf32> to vector<16x50xf32>
    %423 = arith.addf %421, %422 : vector<16x50xf32>
    %cst_231 = arith.constant 0.000000e+00 : f32
    %424 = vector.broadcast %cst_231 : f32 to vector<16x50xf32>
    %425 = arith.cmpf ogt, %423, %424 : vector<16x50xf32>
    %426 = math.exp %423 : vector<16x50xf32>
    %cst_232 = arith.constant 1.000000e+00 : f32
    %427 = vector.broadcast %cst_232 : f32 to vector<16x50xf32>
    %428 = arith.subf %426, %427 : vector<16x50xf32>
    %429 = arith.select %425, %423, %428 : vector<16x50xi1>, vector<16x50xf32>
    %c7 = arith.constant 7 : index
    %c0_233 = arith.constant 0 : index
    %c0_234 = arith.constant 0 : index
    %430 = vector.load %arg11[%c7, %c0_233, %c0_234] : memref<10x50x100xf32, #tpu.memory_space<vmem>>, vector<1x50x100xf32>
    %431 = vector.shape_cast %430 : vector<1x50x100xf32> to vector<50x100xf32>
    %c7_235 = arith.constant 7 : index
    %c0_236 = arith.constant 0 : index
    %c0_237 = arith.constant 0 : index
    %432 = vector.load %arg12[%c7_235, %c0_236, %c0_237] : memref<10x50x100xf32, #tpu.memory_space<vmem>>, vector<1x50x100xf32>
    %433 = vector.shape_cast %432 : vector<1x50x100xf32> to vector<50x100xf32>
    %c7_238 = arith.constant 7 : index
    %c0_239 = arith.constant 0 : index
    %c0_240 = arith.constant 0 : index
    %434 = vector.load %arg13[%c7_238, %c0_239, %c0_240] : memref<10x50x100xf32, #tpu.memory_space<vmem>>, vector<1x50x100xf32>
    %435 = vector.shape_cast %434 : vector<1x50x100xf32> to vector<50x100xf32>
    %c7_241 = arith.constant 7 : index
    %c0_242 = arith.constant 0 : index
    %436 = vector.load %arg14[%c7_241, %c0_242] : memref<10x100xf32, #tpu.memory_space<vmem>>, vector<1x100xf32>
    %c7_243 = arith.constant 7 : index
    %c0_244 = arith.constant 0 : index
    %437 = vector.load %arg15[%c7_243, %c0_244] : memref<10x50xf32, #tpu.memory_space<vmem>>, vector<1x50xf32>
    %c7_245 = arith.constant 7 : index
    %c0_246 = arith.constant 0 : index
    %438 = vector.load %arg16[%c7_245, %c0_246] : memref<10x50xf32, #tpu.memory_space<vmem>>, vector<1x50xf32>
    %cst_247 = arith.constant dense<0.000000e+00> : vector<48x50xf32>
    %439 = tpu.matmul %2, %429, %cst_247 {dimension_numbers = #tpu.dot_dimension_numbers<[1], [0], [0], [1], [0, 0, 1, 1], [], []>} : vector<48x16xf32>, vector<16x50xf32>, vector<48x50xf32> -> vector<48x50xf32>
    %cst_248 = arith.constant dense<0.000000e+00> : vector<48x50xf32>
    %440 = tpu.matmul %3, %429, %cst_248 {dimension_numbers = #tpu.dot_dimension_numbers<[1], [0], [0], [1], [0, 0, 1, 1], [], []>} : vector<48x16xf32>, vector<16x50xf32>, vector<48x50xf32> -> vector<48x50xf32>
    %cst_249 = arith.constant dense<0.000000e+00> : vector<48x100xf32>
    %441 = tpu.matmul %439, %431, %cst_249 {dimension_numbers = #tpu.dot_dimension_numbers<[1], [0], [0], [1], [0, 0, 1, 1], [], []>} : vector<48x50xf32>, vector<50x100xf32>, vector<48x100xf32> -> vector<48x100xf32>
    %cst_250 = arith.constant dense<0.000000e+00> : vector<48x100xf32>
    %442 = tpu.matmul %440, %433, %cst_250 {dimension_numbers = #tpu.dot_dimension_numbers<[1], [0], [0], [1], [0, 0, 1, 1], [], []>} : vector<48x50xf32>, vector<50x100xf32>, vector<48x100xf32> -> vector<48x100xf32>
    %443 = arith.addf %441, %442 : vector<48x100xf32>
    %cst_251 = arith.constant dense<0.000000e+00> : vector<48x100xf32>
    %444 = tpu.matmul %399, %435, %cst_251 {dimension_numbers = #tpu.dot_dimension_numbers<[1], [0], [0], [1], [0, 0, 1, 1], [], []>} : vector<48x50xf32>, vector<50x100xf32>, vector<48x100xf32> -> vector<48x100xf32>
    %445 = arith.addf %443, %444 : vector<48x100xf32>
    %446 = vector.broadcast %436 : vector<1x100xf32> to vector<48x100xf32>
    %447 = arith.addf %445, %446 : vector<48x100xf32>
    %448 = vector.extract_strided_slice %447 {offsets = [0, 50], sizes = [48, 50], strides = [1, 1]} : vector<48x100xf32> to vector<48x50xf32>
    %cst_252 = arith.constant 0.000000e+00 : f32
    %449 = vector.broadcast %cst_252 : f32 to vector<48x50xf32>
    %450 = arith.cmpf ogt, %448, %449 : vector<48x50xf32>
    %451 = math.exp %448 : vector<48x50xf32>
    %cst_253 = arith.constant 1.000000e+00 : f32
    %452 = vector.broadcast %cst_253 : f32 to vector<48x50xf32>
    %453 = arith.subf %451, %452 : vector<48x50xf32>
    %454 = arith.select %450, %448, %453 : vector<48x50xi1>, vector<48x50xf32>
    %455 = vector.extract_strided_slice %447 {offsets = [0, 0], sizes = [48, 50], strides = [1, 1]} : vector<48x100xf32> to vector<48x50xf32>
    %cst_254 = arith.constant dense<0.000000e+00> : vector<16x50xf32>
    %456 = tpu.matmul %4, %455, %cst_254 {dimension_numbers = #tpu.dot_dimension_numbers<[1], [0], [0], [1], [0, 0, 1, 1], [], []>} : vector<16x48xf32>, vector<48x50xf32>, vector<16x50xf32> -> vector<16x50xf32>
    %cst_255 = arith.constant dense<0.000000e+00> : vector<50xf32>
    %457 = vector.multi_reduction <add>, %456, %cst_255 [0] : vector<16x50xf32> to vector<50xf32>
    %458 = vector.shape_cast %457 : vector<50xf32> to vector<1x50xf32>
    %cst_256 = arith.constant 1.600000e+01 : f32
    %459 = vector.broadcast %cst_256 : f32 to vector<1x50xf32>
    %460 = arith.divf %458, %459 : vector<1x50xf32>
    %461 = vector.broadcast %460 : vector<1x50xf32> to vector<16x50xf32>
    %462 = arith.subf %456, %461 : vector<16x50xf32>
    %463 = arith.mulf %462, %462 : vector<16x50xf32>
    %cst_257 = arith.constant dense<0.000000e+00> : vector<50xf32>
    %464 = vector.multi_reduction <add>, %463, %cst_257 [0] : vector<16x50xf32> to vector<50xf32>
    %465 = vector.shape_cast %464 : vector<50xf32> to vector<1x50xf32>
    %cst_258 = arith.constant 1.600000e+01 : f32
    %466 = vector.broadcast %cst_258 : f32 to vector<1x50xf32>
    %467 = arith.divf %465, %466 : vector<1x50xf32>
    %468 = vector.broadcast %460 : vector<1x50xf32> to vector<16x50xf32>
    %469 = arith.subf %456, %468 : vector<16x50xf32>
    %cst_259 = arith.constant 9.99999974E-6 : f32
    %470 = vector.broadcast %cst_259 : f32 to vector<1x50xf32>
    %471 = arith.addf %467, %470 : vector<1x50xf32>
    %472 = math.rsqrt %471 : vector<1x50xf32>
    %473 = vector.broadcast %472 : vector<1x50xf32> to vector<16x50xf32>
    %474 = arith.mulf %469, %473 : vector<16x50xf32>
    %475 = vector.broadcast %437 : vector<1x50xf32> to vector<16x50xf32>
    %476 = arith.mulf %474, %475 : vector<16x50xf32>
    %477 = vector.broadcast %438 : vector<1x50xf32> to vector<16x50xf32>
    %478 = arith.addf %476, %477 : vector<16x50xf32>
    %cst_260 = arith.constant 0.000000e+00 : f32
    %479 = vector.broadcast %cst_260 : f32 to vector<16x50xf32>
    %480 = arith.cmpf ogt, %478, %479 : vector<16x50xf32>
    %481 = math.exp %478 : vector<16x50xf32>
    %cst_261 = arith.constant 1.000000e+00 : f32
    %482 = vector.broadcast %cst_261 : f32 to vector<16x50xf32>
    %483 = arith.subf %481, %482 : vector<16x50xf32>
    %484 = arith.select %480, %478, %483 : vector<16x50xi1>, vector<16x50xf32>
    %c8 = arith.constant 8 : index
    %c0_262 = arith.constant 0 : index
    %c0_263 = arith.constant 0 : index
    %485 = vector.load %arg11[%c8, %c0_262, %c0_263] : memref<10x50x100xf32, #tpu.memory_space<vmem>>, vector<1x50x100xf32>
    %486 = vector.shape_cast %485 : vector<1x50x100xf32> to vector<50x100xf32>
    %c8_264 = arith.constant 8 : index
    %c0_265 = arith.constant 0 : index
    %c0_266 = arith.constant 0 : index
    %487 = vector.load %arg12[%c8_264, %c0_265, %c0_266] : memref<10x50x100xf32, #tpu.memory_space<vmem>>, vector<1x50x100xf32>
    %488 = vector.shape_cast %487 : vector<1x50x100xf32> to vector<50x100xf32>
    %c8_267 = arith.constant 8 : index
    %c0_268 = arith.constant 0 : index
    %c0_269 = arith.constant 0 : index
    %489 = vector.load %arg13[%c8_267, %c0_268, %c0_269] : memref<10x50x100xf32, #tpu.memory_space<vmem>>, vector<1x50x100xf32>
    %490 = vector.shape_cast %489 : vector<1x50x100xf32> to vector<50x100xf32>
    %c8_270 = arith.constant 8 : index
    %c0_271 = arith.constant 0 : index
    %491 = vector.load %arg14[%c8_270, %c0_271] : memref<10x100xf32, #tpu.memory_space<vmem>>, vector<1x100xf32>
    %c8_272 = arith.constant 8 : index
    %c0_273 = arith.constant 0 : index
    %492 = vector.load %arg15[%c8_272, %c0_273] : memref<10x50xf32, #tpu.memory_space<vmem>>, vector<1x50xf32>
    %c8_274 = arith.constant 8 : index
    %c0_275 = arith.constant 0 : index
    %493 = vector.load %arg16[%c8_274, %c0_275] : memref<10x50xf32, #tpu.memory_space<vmem>>, vector<1x50xf32>
    %cst_276 = arith.constant dense<0.000000e+00> : vector<48x50xf32>
    %494 = tpu.matmul %2, %484, %cst_276 {dimension_numbers = #tpu.dot_dimension_numbers<[1], [0], [0], [1], [0, 0, 1, 1], [], []>} : vector<48x16xf32>, vector<16x50xf32>, vector<48x50xf32> -> vector<48x50xf32>
    %cst_277 = arith.constant dense<0.000000e+00> : vector<48x50xf32>
    %495 = tpu.matmul %3, %484, %cst_277 {dimension_numbers = #tpu.dot_dimension_numbers<[1], [0], [0], [1], [0, 0, 1, 1], [], []>} : vector<48x16xf32>, vector<16x50xf32>, vector<48x50xf32> -> vector<48x50xf32>
    %cst_278 = arith.constant dense<0.000000e+00> : vector<48x100xf32>
    %496 = tpu.matmul %494, %486, %cst_278 {dimension_numbers = #tpu.dot_dimension_numbers<[1], [0], [0], [1], [0, 0, 1, 1], [], []>} : vector<48x50xf32>, vector<50x100xf32>, vector<48x100xf32> -> vector<48x100xf32>
    %cst_279 = arith.constant dense<0.000000e+00> : vector<48x100xf32>
    %497 = tpu.matmul %495, %488, %cst_279 {dimension_numbers = #tpu.dot_dimension_numbers<[1], [0], [0], [1], [0, 0, 1, 1], [], []>} : vector<48x50xf32>, vector<50x100xf32>, vector<48x100xf32> -> vector<48x100xf32>
    %498 = arith.addf %496, %497 : vector<48x100xf32>
    %cst_280 = arith.constant dense<0.000000e+00> : vector<48x100xf32>
    %499 = tpu.matmul %454, %490, %cst_280 {dimension_numbers = #tpu.dot_dimension_numbers<[1], [0], [0], [1], [0, 0, 1, 1], [], []>} : vector<48x50xf32>, vector<50x100xf32>, vector<48x100xf32> -> vector<48x100xf32>
    %500 = arith.addf %498, %499 : vector<48x100xf32>
    %501 = vector.broadcast %491 : vector<1x100xf32> to vector<48x100xf32>
    %502 = arith.addf %500, %501 : vector<48x100xf32>
    %503 = vector.extract_strided_slice %502 {offsets = [0, 50], sizes = [48, 50], strides = [1, 1]} : vector<48x100xf32> to vector<48x50xf32>
    %cst_281 = arith.constant 0.000000e+00 : f32
    %504 = vector.broadcast %cst_281 : f32 to vector<48x50xf32>
    %505 = arith.cmpf ogt, %503, %504 : vector<48x50xf32>
    %506 = math.exp %503 : vector<48x50xf32>
    %cst_282 = arith.constant 1.000000e+00 : f32
    %507 = vector.broadcast %cst_282 : f32 to vector<48x50xf32>
    %508 = arith.subf %506, %507 : vector<48x50xf32>
    %509 = arith.select %505, %503, %508 : vector<48x50xi1>, vector<48x50xf32>
    %510 = vector.extract_strided_slice %502 {offsets = [0, 0], sizes = [48, 50], strides = [1, 1]} : vector<48x100xf32> to vector<48x50xf32>
    %cst_283 = arith.constant dense<0.000000e+00> : vector<16x50xf32>
    %511 = tpu.matmul %4, %510, %cst_283 {dimension_numbers = #tpu.dot_dimension_numbers<[1], [0], [0], [1], [0, 0, 1, 1], [], []>} : vector<16x48xf32>, vector<48x50xf32>, vector<16x50xf32> -> vector<16x50xf32>
    %cst_284 = arith.constant dense<0.000000e+00> : vector<50xf32>
    %512 = vector.multi_reduction <add>, %511, %cst_284 [0] : vector<16x50xf32> to vector<50xf32>
    %513 = vector.shape_cast %512 : vector<50xf32> to vector<1x50xf32>
    %cst_285 = arith.constant 1.600000e+01 : f32
    %514 = vector.broadcast %cst_285 : f32 to vector<1x50xf32>
    %515 = arith.divf %513, %514 : vector<1x50xf32>
    %516 = vector.broadcast %515 : vector<1x50xf32> to vector<16x50xf32>
    %517 = arith.subf %511, %516 : vector<16x50xf32>
    %518 = arith.mulf %517, %517 : vector<16x50xf32>
    %cst_286 = arith.constant dense<0.000000e+00> : vector<50xf32>
    %519 = vector.multi_reduction <add>, %518, %cst_286 [0] : vector<16x50xf32> to vector<50xf32>
    %520 = vector.shape_cast %519 : vector<50xf32> to vector<1x50xf32>
    %cst_287 = arith.constant 1.600000e+01 : f32
    %521 = vector.broadcast %cst_287 : f32 to vector<1x50xf32>
    %522 = arith.divf %520, %521 : vector<1x50xf32>
    %523 = vector.broadcast %515 : vector<1x50xf32> to vector<16x50xf32>
    %524 = arith.subf %511, %523 : vector<16x50xf32>
    %cst_288 = arith.constant 9.99999974E-6 : f32
    %525 = vector.broadcast %cst_288 : f32 to vector<1x50xf32>
    %526 = arith.addf %522, %525 : vector<1x50xf32>
    %527 = math.rsqrt %526 : vector<1x50xf32>
    %528 = vector.broadcast %527 : vector<1x50xf32> to vector<16x50xf32>
    %529 = arith.mulf %524, %528 : vector<16x50xf32>
    %530 = vector.broadcast %492 : vector<1x50xf32> to vector<16x50xf32>
    %531 = arith.mulf %529, %530 : vector<16x50xf32>
    %532 = vector.broadcast %493 : vector<1x50xf32> to vector<16x50xf32>
    %533 = arith.addf %531, %532 : vector<16x50xf32>
    %cst_289 = arith.constant 0.000000e+00 : f32
    %534 = vector.broadcast %cst_289 : f32 to vector<16x50xf32>
    %535 = arith.cmpf ogt, %533, %534 : vector<16x50xf32>
    %536 = math.exp %533 : vector<16x50xf32>
    %cst_290 = arith.constant 1.000000e+00 : f32
    %537 = vector.broadcast %cst_290 : f32 to vector<16x50xf32>
    %538 = arith.subf %536, %537 : vector<16x50xf32>
    %539 = arith.select %535, %533, %538 : vector<16x50xi1>, vector<16x50xf32>
    %c9 = arith.constant 9 : index
    %c0_291 = arith.constant 0 : index
    %c0_292 = arith.constant 0 : index
    %540 = vector.load %arg11[%c9, %c0_291, %c0_292] : memref<10x50x100xf32, #tpu.memory_space<vmem>>, vector<1x50x100xf32>
    %541 = vector.shape_cast %540 : vector<1x50x100xf32> to vector<50x100xf32>
    %c9_293 = arith.constant 9 : index
    %c0_294 = arith.constant 0 : index
    %c0_295 = arith.constant 0 : index
    %542 = vector.load %arg12[%c9_293, %c0_294, %c0_295] : memref<10x50x100xf32, #tpu.memory_space<vmem>>, vector<1x50x100xf32>
    %543 = vector.shape_cast %542 : vector<1x50x100xf32> to vector<50x100xf32>
    %c9_296 = arith.constant 9 : index
    %c0_297 = arith.constant 0 : index
    %c0_298 = arith.constant 0 : index
    %544 = vector.load %arg13[%c9_296, %c0_297, %c0_298] : memref<10x50x100xf32, #tpu.memory_space<vmem>>, vector<1x50x100xf32>
    %545 = vector.shape_cast %544 : vector<1x50x100xf32> to vector<50x100xf32>
    %c9_299 = arith.constant 9 : index
    %c0_300 = arith.constant 0 : index
    %546 = vector.load %arg14[%c9_299, %c0_300] : memref<10x100xf32, #tpu.memory_space<vmem>>, vector<1x100xf32>
    %c9_301 = arith.constant 9 : index
    %c0_302 = arith.constant 0 : index
    %547 = vector.load %arg15[%c9_301, %c0_302] : memref<10x50xf32, #tpu.memory_space<vmem>>, vector<1x50xf32>
    %c9_303 = arith.constant 9 : index
    %c0_304 = arith.constant 0 : index
    %548 = vector.load %arg16[%c9_303, %c0_304] : memref<10x50xf32, #tpu.memory_space<vmem>>, vector<1x50xf32>
    %cst_305 = arith.constant dense<0.000000e+00> : vector<48x50xf32>
    %549 = tpu.matmul %2, %539, %cst_305 {dimension_numbers = #tpu.dot_dimension_numbers<[1], [0], [0], [1], [0, 0, 1, 1], [], []>} : vector<48x16xf32>, vector<16x50xf32>, vector<48x50xf32> -> vector<48x50xf32>
    %cst_306 = arith.constant dense<0.000000e+00> : vector<48x50xf32>
    %550 = tpu.matmul %3, %539, %cst_306 {dimension_numbers = #tpu.dot_dimension_numbers<[1], [0], [0], [1], [0, 0, 1, 1], [], []>} : vector<48x16xf32>, vector<16x50xf32>, vector<48x50xf32> -> vector<48x50xf32>
    %cst_307 = arith.constant dense<0.000000e+00> : vector<48x100xf32>
    %551 = tpu.matmul %549, %541, %cst_307 {dimension_numbers = #tpu.dot_dimension_numbers<[1], [0], [0], [1], [0, 0, 1, 1], [], []>} : vector<48x50xf32>, vector<50x100xf32>, vector<48x100xf32> -> vector<48x100xf32>
    %cst_308 = arith.constant dense<0.000000e+00> : vector<48x100xf32>
    %552 = tpu.matmul %550, %543, %cst_308 {dimension_numbers = #tpu.dot_dimension_numbers<[1], [0], [0], [1], [0, 0, 1, 1], [], []>} : vector<48x50xf32>, vector<50x100xf32>, vector<48x100xf32> -> vector<48x100xf32>
    %553 = arith.addf %551, %552 : vector<48x100xf32>
    %cst_309 = arith.constant dense<0.000000e+00> : vector<48x100xf32>
    %554 = tpu.matmul %509, %545, %cst_309 {dimension_numbers = #tpu.dot_dimension_numbers<[1], [0], [0], [1], [0, 0, 1, 1], [], []>} : vector<48x50xf32>, vector<50x100xf32>, vector<48x100xf32> -> vector<48x100xf32>
    %555 = arith.addf %553, %554 : vector<48x100xf32>
    %556 = vector.broadcast %546 : vector<1x100xf32> to vector<48x100xf32>
    %557 = arith.addf %555, %556 : vector<48x100xf32>
    %558 = vector.extract_strided_slice %557 {offsets = [0, 0], sizes = [48, 50], strides = [1, 1]} : vector<48x100xf32> to vector<48x50xf32>
    %cst_310 = arith.constant dense<0.000000e+00> : vector<16x50xf32>
    %559 = tpu.matmul %4, %558, %cst_310 {dimension_numbers = #tpu.dot_dimension_numbers<[1], [0], [0], [1], [0, 0, 1, 1], [], []>} : vector<16x48xf32>, vector<48x50xf32>, vector<16x50xf32> -> vector<16x50xf32>
    %cst_311 = arith.constant dense<0.000000e+00> : vector<50xf32>
    %560 = vector.multi_reduction <add>, %559, %cst_311 [0] : vector<16x50xf32> to vector<50xf32>
    %561 = vector.shape_cast %560 : vector<50xf32> to vector<1x50xf32>
    %cst_312 = arith.constant 1.600000e+01 : f32
    %562 = vector.broadcast %cst_312 : f32 to vector<1x50xf32>
    %563 = arith.divf %561, %562 : vector<1x50xf32>
    %564 = vector.broadcast %563 : vector<1x50xf32> to vector<16x50xf32>
    %565 = arith.subf %559, %564 : vector<16x50xf32>
    %566 = arith.mulf %565, %565 : vector<16x50xf32>
    %cst_313 = arith.constant dense<0.000000e+00> : vector<50xf32>
    %567 = vector.multi_reduction <add>, %566, %cst_313 [0] : vector<16x50xf32> to vector<50xf32>
    %568 = vector.shape_cast %567 : vector<50xf32> to vector<1x50xf32>
    %cst_314 = arith.constant 1.600000e+01 : f32
    %569 = vector.broadcast %cst_314 : f32 to vector<1x50xf32>
    %570 = arith.divf %568, %569 : vector<1x50xf32>
    %571 = vector.broadcast %563 : vector<1x50xf32> to vector<16x50xf32>
    %572 = arith.subf %559, %571 : vector<16x50xf32>
    %cst_315 = arith.constant 9.99999974E-6 : f32
    %573 = vector.broadcast %cst_315 : f32 to vector<1x50xf32>
    %574 = arith.addf %570, %573 : vector<1x50xf32>
    %575 = math.rsqrt %574 : vector<1x50xf32>
    %576 = vector.broadcast %575 : vector<1x50xf32> to vector<16x50xf32>
    %577 = arith.mulf %572, %576 : vector<16x50xf32>
    %578 = vector.broadcast %547 : vector<1x50xf32> to vector<16x50xf32>
    %579 = arith.mulf %577, %578 : vector<16x50xf32>
    %580 = vector.broadcast %548 : vector<1x50xf32> to vector<16x50xf32>
    %581 = arith.addf %579, %580 : vector<16x50xf32>
    %cst_316 = arith.constant 0.000000e+00 : f32
    %582 = vector.broadcast %cst_316 : f32 to vector<16x50xf32>
    %583 = arith.cmpf ogt, %581, %582 : vector<16x50xf32>
    %584 = math.exp %581 : vector<16x50xf32>
    %cst_317 = arith.constant 1.000000e+00 : f32
    %585 = vector.broadcast %cst_317 : f32 to vector<16x50xf32>
    %586 = arith.subf %584, %585 : vector<16x50xf32>
    %587 = arith.select %583, %581, %586 : vector<16x50xi1>, vector<16x50xf32>
    %c0_318 = arith.constant 0 : index
    %c0_319 = arith.constant 0 : index
    %588 = vector.load %arg18[%c0_318, %c0_319] : memref<1x196xf32, #tpu.memory_space<vmem>>, vector<1x196xf32>
    %c0_320 = arith.constant 0 : index
    %c0_321 = arith.constant 0 : index
    %c0_322 = arith.constant 0 : index
    %589 = vector.load %arg17[%c0_320, %c0_321, %c0_322] : memref<5x50x196xf32, #tpu.memory_space<vmem>>, vector<1x50x196xf32>
    %590 = vector.shape_cast %589 : vector<1x50x196xf32> to vector<50x196xf32>
    %cst_323 = arith.constant dense<0.000000e+00> : vector<16x196xf32>
    %591 = tpu.matmul %57, %590, %cst_323 {dimension_numbers = #tpu.dot_dimension_numbers<[1], [0], [0], [1], [0, 0, 1, 1], [], []>} : vector<16x50xf32>, vector<50x196xf32>, vector<16x196xf32> -> vector<16x196xf32>
    %592 = vector.broadcast %588 : vector<1x196xf32> to vector<16x196xf32>
    %593 = arith.addf %592, %591 : vector<16x196xf32>
    %c1_324 = arith.constant 1 : index
    %c0_325 = arith.constant 0 : index
    %c0_326 = arith.constant 0 : index
    %594 = vector.load %arg17[%c1_324, %c0_325, %c0_326] : memref<5x50x196xf32, #tpu.memory_space<vmem>>, vector<1x50x196xf32>
    %595 = vector.shape_cast %594 : vector<1x50x196xf32> to vector<50x196xf32>
    %cst_327 = arith.constant dense<0.000000e+00> : vector<16x196xf32>
    %596 = tpu.matmul %113, %595, %cst_327 {dimension_numbers = #tpu.dot_dimension_numbers<[1], [0], [0], [1], [0, 0, 1, 1], [], []>} : vector<16x50xf32>, vector<50x196xf32>, vector<16x196xf32> -> vector<16x196xf32>
    %597 = arith.addf %593, %596 : vector<16x196xf32>
    %c2_328 = arith.constant 2 : index
    %c0_329 = arith.constant 0 : index
    %c0_330 = arith.constant 0 : index
    %598 = vector.load %arg17[%c2_328, %c0_329, %c0_330] : memref<5x50x196xf32, #tpu.memory_space<vmem>>, vector<1x50x196xf32>
    %599 = vector.shape_cast %598 : vector<1x50x196xf32> to vector<50x196xf32>
    %cst_331 = arith.constant dense<0.000000e+00> : vector<16x196xf32>
    %600 = tpu.matmul %216, %599, %cst_331 {dimension_numbers = #tpu.dot_dimension_numbers<[1], [0], [0], [1], [0, 0, 1, 1], [], []>} : vector<16x50xf32>, vector<50x196xf32>, vector<16x196xf32> -> vector<16x196xf32>
    %601 = arith.addf %597, %600 : vector<16x196xf32>
    %c3_332 = arith.constant 3 : index
    %c0_333 = arith.constant 0 : index
    %c0_334 = arith.constant 0 : index
    %602 = vector.load %arg17[%c3_332, %c0_333, %c0_334] : memref<5x50x196xf32, #tpu.memory_space<vmem>>, vector<1x50x196xf32>
    %603 = vector.shape_cast %602 : vector<1x50x196xf32> to vector<50x196xf32>
    %cst_335 = arith.constant dense<0.000000e+00> : vector<16x196xf32>
    %604 = tpu.matmul %374, %603, %cst_335 {dimension_numbers = #tpu.dot_dimension_numbers<[1], [0], [0], [1], [0, 0, 1, 1], [], []>} : vector<16x50xf32>, vector<50x196xf32>, vector<16x196xf32> -> vector<16x196xf32>
    %605 = arith.addf %601, %604 : vector<16x196xf32>
    %c4_336 = arith.constant 4 : index
    %c0_337 = arith.constant 0 : index
    %c0_338 = arith.constant 0 : index
    %606 = vector.load %arg17[%c4_336, %c0_337, %c0_338] : memref<5x50x196xf32, #tpu.memory_space<vmem>>, vector<1x50x196xf32>
    %607 = vector.shape_cast %606 : vector<1x50x196xf32> to vector<50x196xf32>
    %cst_339 = arith.constant dense<0.000000e+00> : vector<16x196xf32>
    %608 = tpu.matmul %587, %607, %cst_339 {dimension_numbers = #tpu.dot_dimension_numbers<[1], [0], [0], [1], [0, 0, 1, 1], [], []>} : vector<16x50xf32>, vector<50x196xf32>, vector<16x196xf32> -> vector<16x196xf32>
    %609 = arith.addf %605, %608 : vector<16x196xf32>
    %c0_340 = arith.constant 0 : index
    %c0_341 = arith.constant 0 : index
    %610 = vector.load %arg19[%c0_340, %c0_341] : memref<1x196xf32, #tpu.memory_space<vmem>>, vector<1x196xf32>
    %c0_342 = arith.constant 0 : index
    %c0_343 = arith.constant 0 : index
    %611 = vector.load %arg20[%c0_342, %c0_343] : memref<1x196xf32, #tpu.memory_space<vmem>>, vector<1x196xf32>
    %cst_344 = arith.constant dense<0.000000e+00> : vector<196xf32>
    %612 = vector.multi_reduction <add>, %609, %cst_344 [0] : vector<16x196xf32> to vector<196xf32>
    %613 = vector.shape_cast %612 : vector<196xf32> to vector<1x196xf32>
    %cst_345 = arith.constant 1.600000e+01 : f32
    %614 = vector.broadcast %cst_345 : f32 to vector<1x196xf32>
    %615 = arith.divf %613, %614 : vector<1x196xf32>
    %616 = vector.broadcast %615 : vector<1x196xf32> to vector<16x196xf32>
    %617 = arith.subf %609, %616 : vector<16x196xf32>
    %618 = arith.mulf %617, %617 : vector<16x196xf32>
    %cst_346 = arith.constant dense<0.000000e+00> : vector<196xf32>
    %619 = vector.multi_reduction <add>, %618, %cst_346 [0] : vector<16x196xf32> to vector<196xf32>
    %620 = vector.shape_cast %619 : vector<196xf32> to vector<1x196xf32>
    %cst_347 = arith.constant 1.600000e+01 : f32
    %621 = vector.broadcast %cst_347 : f32 to vector<1x196xf32>
    %622 = arith.divf %620, %621 : vector<1x196xf32>
    %623 = vector.broadcast %615 : vector<1x196xf32> to vector<16x196xf32>
    %624 = arith.subf %609, %623 : vector<16x196xf32>
    %cst_348 = arith.constant 9.99999974E-6 : f32
    %625 = vector.broadcast %cst_348 : f32 to vector<1x196xf32>
    %626 = arith.addf %622, %625 : vector<1x196xf32>
    %627 = math.rsqrt %626 : vector<1x196xf32>
    %628 = vector.broadcast %627 : vector<1x196xf32> to vector<16x196xf32>
    %629 = arith.mulf %624, %628 : vector<16x196xf32>
    %630 = vector.broadcast %610 : vector<1x196xf32> to vector<16x196xf32>
    %631 = arith.mulf %629, %630 : vector<16x196xf32>
    %632 = vector.broadcast %611 : vector<1x196xf32> to vector<16x196xf32>
    %633 = arith.addf %631, %632 : vector<16x196xf32>
    %c0_349 = arith.constant 0 : index
    %c0_350 = arith.constant 0 : index
    %634 = vector.load %arg21[%c0_349, %c0_350] : memref<16x196xf32, #tpu.memory_space<vmem>>, vector<16x196xf32>
    tpu.vector_store %arg21[%c0_349, %c0_350], %633 {strides = array<i32>} : memref<16x196xf32, #tpu.memory_space<vmem>>, vector<16x196xf32>,
    return
  }
}

</mosaic_0001>

<llo_original>
// kernel: _forward_impl.1
$region0: #{_forward_impl.1}
  #allocation0 [shape = 'u32[]', space=smem, size = 0x4, offset = 0x4, fixed_abs, tag = 'smem constant byte address 0x4 - core index']
  #allocation1 [shape = 'u32[144,128]{1,0:T(1,128)}', space=vmem, size = 0x12000, scoped, tag = 'internal scratch']
  %s0 = inlined_call_operand.vmem [shape: f32[16,46], index: 0, kind: input, shape index: {}]
  %s1 = inlined_call_operand.vmem [shape: f32[48,345], index: 1, kind: input, shape index: {}]
  %s2 = inlined_call_operand.vmem [shape: f32[48,16], index: 2, kind: input, shape index: {}]
  %s3 = inlined_call_operand.vmem [shape: f32[48,16], index: 3, kind: input, shape index: {}]
  %s4 = inlined_call_operand.vmem [shape: f32[16,48], index: 4, kind: input, shape index: {}]
  %s5 = inlined_call_operand.vmem [shape: f32[46,500], index: 5, kind: input, shape index: {}]
  %s6 = inlined_call_operand.vmem [shape: f32[46,500], index: 6, kind: input, shape index: {}]
  %s7 = inlined_call_operand.vmem [shape: f32[345,500], index: 7, kind: input, shape index: {}]
  %s8 = inlined_call_operand.vmem [shape: f32[1,500], index: 8, kind: input, shape index: {}]
  %s9 = inlined_call_operand.vmem [shape: f32[1,250], index: 9, kind: input, shape index: {}]
  %s10 = inlined_call_operand.vmem [shape: f32[1,250], index: 10, kind: input, shape index: {}]
  %s11 = inlined_call_operand.vmem [shape: f32[10,50,100], index: 11, kind: input, shape index: {}]
  %s12 = inlined_call_operand.vmem [shape: f32[10,50,100], index: 12, kind: input, shape index: {}]
  %s13 = inlined_call_operand.vmem [shape: f32[10,50,100], index: 13, kind: input, shape index: {}]
  %s14 = inlined_call_operand.vmem [shape: f32[10,100], index: 14, kind: input, shape index: {}]
  %s15 = inlined_call_operand.vmem [shape: f32[10,50], index: 15, kind: input, shape index: {}]
  %s16 = inlined_call_operand.vmem [shape: f32[10,50], index: 16, kind: input, shape index: {}]
  %s17 = inlined_call_operand.vmem [shape: f32[5,50,196], index: 17, kind: input, shape index: {}]
  %s18 = inlined_call_operand.vmem [shape: f32[1,196], index: 18, kind: input, shape index: {}]
  %s19 = inlined_call_operand.vmem [shape: f32[1,196], index: 19, kind: input, shape index: {}]
  %s20 = inlined_call_operand.vmem [shape: f32[1,196], index: 20, kind: input, shape index: {}]
  %s21 = inlined_call_operand.hbm [shape: f32[16,196], index: 21, kind: output, shape index: {}]
  %s22 = sld [smem:[#allocation0]]
  $region94: #{_forward_impl.1} parent=0
    _
  %s24 = ssub.s32 1, %s22
  %s25 = scalar_select 0, %s24, %s22
  $region1: #{_forward_impl.1} parent=0
    #allocation2 [shape = 'u8[16384]{0}', space=vmem, size = 0x4000, scoped, tag = 'output window, operand 0, single buffered']
    #allocation3 [shape = 's32[1]{0}', space=sflag, size = 0x4, scoped, tag = 'scoped memory for _forward_impl.1']
    %26 = vsyncpa [#allocation3], 0
    // Predicated region
    $region2: #{_forward_impl.1} parent=1 // pred_check
      _
    $region3: #{_forward_impl.1} parent=1 // pred_check_branch
      %28 = sbr.rel (0) target = $region5
    $region4: #{_forward_impl.1} parent=1 // pred_region
      _
    $region5: #{_forward_impl.1} parent=1 // pred_fallthru
      _
    // Predicated region
    $region6: #{_forward_impl.1} parent=1 // pred_check
      _
    $region7: #{_forward_impl.1} parent=1 // pred_check_branch
      %30 = sbr.rel (0) target = $region9
    $region8: #{_forward_impl.1} parent=1 // pred_region
      _
    $region9: #{_forward_impl.1} parent=1 // pred_fallthru
      _
    // Predicated region
    $region10: #{_forward_impl.1} parent=1 // pred_check
      _
    $region11: #{_forward_impl.1} parent=1 // pred_check_branch
      %32 = sbr.rel (0) target = $region13
    $region12: #{_forward_impl.1} parent=1 // pred_region
      _
    $region13: #{_forward_impl.1} parent=1 // pred_fallthru
      _
    // Predicated region
    $region14: #{_forward_impl.1} parent=1 // pred_check
      _
    $region15: #{_forward_impl.1} parent=1 // pred_check_branch
      %34 = sbr.rel (0) target = $region17
    $region16: #{_forward_impl.1} parent=1 // pred_region
      _
    $region17: #{_forward_impl.1} parent=1 // pred_fallthru
      _
    // Predicated region
    $region18: #{_forward_impl.1} parent=1 // pred_check
      _
    $region19: #{_forward_impl.1} parent=1 // pred_check_branch
      %36 = sbr.rel (0) target = $region21
    $region20: #{_forward_impl.1} parent=1 // pred_region
      _
    $region21: #{_forward_impl.1} parent=1 // pred_fallthru
      _
    // Predicated region
    $region22: #{_forward_impl.1} parent=1 // pred_check
      _
    $region23: #{_forward_impl.1} parent=1 // pred_check_branch
      %38 = sbr.rel (0) target = $region25
    $region24: #{_forward_impl.1} parent=1 // pred_region
      _
    $region25: #{_forward_impl.1} parent=1 // pred_fallthru
      _
    // Predicated region
    $region26: #{_forward_impl.1} parent=1 // pred_check
      _
    $region27: #{_forward_impl.1} parent=1 // pred_check_branch
      %40 = sbr.rel (0) target = $region29
    $region28: #{_forward_impl.1} parent=1 // pred_region
      _
    $region29: #{_forward_impl.1} parent=1 // pred_fallthru
      _
    // Predicated region
    $region30: #{_forward_impl.1} parent=1 // pred_check
      _
    $region31: #{_forward_impl.1} parent=1 // pred_check_branch
      %42 = sbr.rel (0) target = $region33
    $region32: #{_forward_impl.1} parent=1 // pred_region
      _
    $region33: #{_forward_impl.1} parent=1 // pred_fallthru
      _
    // Predicated region
    $region34: #{_forward_impl.1} parent=1 // pred_check
      _
    $region35: #{_forward_impl.1} parent=1 // pred_check_branch
      %44 = sbr.rel (0) target = $region37
    $region36: #{_forward_impl.1} parent=1 // pred_region
      _
    $region37: #{_forward_impl.1} parent=1 // pred_fallthru
      _
    // Predicated region
    $region38: #{_forward_impl.1} parent=1 // pred_check
      _
    $region39: #{_forward_impl.1} parent=1 // pred_check_branch
      %46 = sbr.rel (0) target = $region41
    $region40: #{_forward_impl.1} parent=1 // pred_region
      _
    $region41: #{_forward_impl.1} parent=1 // pred_fallthru
      _
    // Predicated region
    $region42: #{_forward_impl.1} parent=1 // pred_check
      _
    $region43: #{_forward_impl.1} parent=1 // pred_check_branch
      %48 = sbr.rel (0) target = $region45
    $region44: #{_forward_impl.1} parent=1 // pred_region
      _
    $region45: #{_forward_impl.1} parent=1 // pred_fallthru
      _
    // Predicated region
    $region46: #{_forward_impl.1} parent=1 // pred_check
      _
    $region47: #{_forward_impl.1} parent=1 // pred_check_branch
      %50 = sbr.rel (0) target = $region49
    $region48: #{_forward_impl.1} parent=1 // pred_region
      _
    $region49: #{_forward_impl.1} parent=1 // pred_fallthru
      _
    // Predicated region
    $region50: #{_forward_impl.1} parent=1 // pred_check
      _
    $region51: #{_forward_impl.1} parent=1 // pred_check_branch
      %52 = sbr.rel (0) target = $region53
    $region52: #{_forward_impl.1} parent=1 // pred_region
      _
    $region53: #{_forward_impl.1} parent=1 // pred_fallthru
      _
    // Predicated region
    $region54: #{_forward_impl.1} parent=1 // pred_check
      _
    $region55: #{_forward_impl.1} parent=1 // pred_check_branch
      %54 = sbr.rel (0) target = $region57
    $region56: #{_forward_impl.1} parent=1 // pred_region
      _
    $region57: #{_forward_impl.1} parent=1 // pred_fallthru
      _
    // Predicated region
    $region58: #{_forward_impl.1} parent=1 // pred_check
      _
    $region59: #{_forward_impl.1} parent=1 // pred_check_branch
      %56 = sbr.rel (0) target = $region61
    $region60: #{_forward_impl.1} parent=1 // pred_region
      _
    $region61: #{_forward_impl.1} parent=1 // pred_fallthru
      _
    // Predicated region
    $region62: #{_forward_impl.1} parent=1 // pred_check
      _
    $region63: #{_forward_impl.1} parent=1 // pred_check_branch
      %58 = sbr.rel (0) target = $region65
    $region64: #{_forward_impl.1} parent=1 // pred_region
      _
    $region65: #{_forward_impl.1} parent=1 // pred_fallthru
      _
    // Predicated region
    $region66: #{_forward_impl.1} parent=1 // pred_check
      _
    $region67: #{_forward_impl.1} parent=1 // pred_check_branch
      %60 = sbr.rel (0) target = $region69
    $region68: #{_forward_impl.1} parent=1 // pred_region
      _
    $region69: #{_forward_impl.1} parent=1 // pred_fallthru
      _
    // Predicated region
    $region70: #{_forward_impl.1} parent=1 // pred_check
      _
    $region71: #{_forward_impl.1} parent=1 // pred_check_branch
      %62 = sbr.rel (0) target = $region73
    $region72: #{_forward_impl.1} parent=1 // pred_region
      _
    $region73: #{_forward_impl.1} parent=1 // pred_fallthru
      _
    // Predicated region
    $region74: #{_forward_impl.1} parent=1 // pred_check
      _
    $region75: #{_forward_impl.1} parent=1 // pred_check_branch
      %64 = sbr.rel (0) target = $region77
    $region76: #{_forward_impl.1} parent=1 // pred_region
      _
    $region77: #{_forward_impl.1} parent=1 // pred_fallthru
      _
    // Predicated region
    $region78: #{_forward_impl.1} parent=1 // pred_check
      _
    $region79: #{_forward_impl.1} parent=1 // pred_check_branch
      %66 = sbr.rel (0) target = $region81
    $region80: #{_forward_impl.1} parent=1 // pred_region
      _
    $region81: #{_forward_impl.1} parent=1 // pred_fallthru
      _
    // Predicated region
    $region82: #{_forward_impl.1} parent=1 // pred_check
      _
    $region83: #{_forward_impl.1} parent=1 // pred_check_branch
      %68 = sbr.rel (0) target = $region85
    $region84: #{_forward_impl.1} parent=1 // pred_region
      _
    $region85: #{_forward_impl.1} parent=1 // pred_fallthru
      _
    %v69 = vld [vmem:[%s0] sm:$0xff]
    %v70 = vld [vmem:[%s0 + $0x8] sm:$0xff]
    %v71 = vld [vmem:[%s1] sm:$0xff]
    %v72 = vld [vmem:[%s1 + $0x8] sm:$0xff]
    %v73 = vld [vmem:[%s1 + $0x10] sm:$0xff]
    %v74 = vld [vmem:[%s1 + $0x18] sm:$0xff]
    %v75 = vld [vmem:[%s1 + $0x20] sm:$0xff]
    %v76 = vld [vmem:[%s1 + $0x28] sm:$0xff]
    %v77 = vld [vmem:[%s1 + $0x30] sm:$0xff]
    %v78 = vld [vmem:[%s1 + $0x38] sm:$0xff]
    %v79 = vld [vmem:[%s1 + $0x40] sm:$0xff]
    %v80 = vld [vmem:[%s1 + $0x48] sm:$0xff]
    %v81 = vld [vmem:[%s1 + $0x50] sm:$0xff]
    %v82 = vld [vmem:[%s1 + $0x58] sm:$0xff]
    %v83 = vld [vmem:[%s1 + $0x60] sm:$0xff]
    %v84 = vld [vmem:[%s1 + $0x68] sm:$0xff]
    %v85 = vld [vmem:[%s1 + $0x70] sm:$0xff]
    %v86 = vld [vmem:[%s1 + $0x78] sm:$0xff]
    %v87 = vld [vmem:[%s1 + $0x80] sm:$0xff]
    %v88 = vld [vmem:[%s1 + $0x88] sm:$0xff]
    %v89 = vld [vmem:[%s2] sm:$0xff]
    %v90 = vld [vmem:[%s2 + $0x8] sm:$0xff]
    %v91 = vld [vmem:[%s2 + $0x10] sm:$0xff]
    %v92 = vld [vmem:[%s2 + $0x18] sm:$0xff]
    %v93 = vld [vmem:[%s2 + $0x20] sm:$0xff]
    %v94 = vld [vmem:[%s2 + $0x28] sm:$0xff]
    %v95 = vld [vmem:[%s3] sm:$0xff]
    %v96 = vld [vmem:[%s3 + $0x8] sm:$0xff]
    %v97 = vld [vmem:[%s3 + $0x10] sm:$0xff]
    %v98 = vld [vmem:[%s3 + $0x18] sm:$0xff]
    %v99 = vld [vmem:[%s3 + $0x20] sm:$0xff]
    %v100 = vld [vmem:[%s3 + $0x28] sm:$0xff]
    %v101 = vld [vmem:[%s4] sm:$0xff]
    %v102 = vld [vmem:[%s4 + $0x8] sm:$0xff]
    %vm103 = vcmask 130048
    %v105 = vsel %vm103, %v89, 0
    %v108 = vsel %vm103, %v90, 0
    %v111 = vsel %vm103, %v91, 0
    %v114 = vsel %vm103, %v92, 0
    %v117 = vsel %vm103, %v93, 0
    %v120 = vsel %vm103, %v94, 0
    %122 = vmatprep.subr.mxu0 0.0
    %123 = vmatpush1.msra.mxu0 %v69
    %124 = vmatprep.subr.mxu0 0.0
    %125 = vmatpush1.msra.mxu0 %v70
    %126 = vmatprep.subr.mxu0 0.0
    %127 = vmatpush1.msra.mxu0 0.0
    %128 = vmatprep.subr.mxu0 0.0
    %129 = vmatpush1.msra.mxu0 0.0
    %130 = vmatprep.subr.mxu0 0.0
    %131 = vmatpush1.msra.mxu0 0.0
    %132 = vmatprep.subr.mxu0 0.0
    %133 = vmatpush1.msra.mxu0 0.0
    %134 = vmatprep.subr.mxu0 0.0
    %135 = vmatpush1.msra.mxu0 0.0
    %136 = vmatprep.subr.mxu0 0.0
    %137 = vmatpush1.msra.mxu0 0.0
    %138 = vmatprep.subr.mxu0 0.0
    %139 = vmatpush1.msra.mxu0 0.0
    %140 = vmatprep.subr.mxu0 0.0
    %141 = vmatpush1.msra.mxu0 0.0
    %142 = vmatprep.subr.mxu0 0.0
    %143 = vmatpush1.msra.mxu0 0.0
    %144 = vmatprep.subr.mxu0 0.0
    %145 = vmatpush1.msra.mxu0 0.0
    %146 = vmatprep.subr.mxu0 0.0
    %147 = vmatpush1.msra.mxu0 0.0
    %148 = vmatprep.subr.mxu0 0.0
    %149 = vmatpush1.msra.mxu0 0.0
    %150 = vmatprep.subr.mxu0 0.0
    %151 = vmatpush1.msra.mxu0 0.0
    %152 = vmatprep.subr.mxu0 0.0
    %153 = vmatpush1.msra.mxu0 0.0
    %154 = vmatprep.subr.mxu0 0.0
    %155 = vmatpush1.msra.mxu0 0.0
    %156 = vmatprep.subr.mxu0 0.0
    %157 = vmatpush1.msra.mxu0 0.0
    %158 = vmatprep.subr.mxu0 0.0
    %159 = vmatpush1.msra.mxu0 0.0
    %160 = vmatprep.subr.mxu0 0.0
    %161 = vmatpush1.msra.mxu0 0.0
    %162 = vmatprep.subr.mxu0 0.0
    %163 = vmatpush1.msra.mxu0 0.0
    %164 = vmatprep.subr.mxu0 0.0
    %165 = vmatpush1.msra.mxu0 0.0
    %166 = vmatprep.subr.mxu0 0.0
    %167 = vmatpush1.msra.mxu0 0.0
    %168 = vmatprep.subr.mxu0 0.0
    %169 = vmatpush1.msra.mxu0 0.0
    %170 = vmatprep.subr.mxu0 0.0
    %171 = vmatpush1.msra.mxu0 0.0
    %172 = vmatprep.subr.mxu0 0.0
    %173 = vmatpush1.msra.mxu0 0.0
    %174 = vmatprep.subr.mxu0 0.0
    %175 = vmatpush1.msra.mxu0 0.0
    %176 = vmatprep.subr.mxu0 0.0
    %177 = vmatpush1.msra.mxu0 0.0
    %178 = vmatprep.subr.mxu0 0.0
    %179 = vmatpush1.msra.mxu0 0.0
    %180 = vmatprep.subr.mxu0 0.0
    %181 = vmatpush1.msra.mxu0 0.0
    %182 = vmatprep.subr.mxu0 0.0
    %183 = vmatpush1.msra.mxu0 0.0
    %184 = vmatprep.subr.mxu0 0.0
    %185 = vmatpush1.msra.mxu0 0.0
    %186 = vmatprep.mubr.f32.mxu0 0.0
    %187 = vmatmul.mubr.f32.gmra.mrb[0].mxu0 %v105
    %v188 = vpop.f32.mrb[0].mxu0
    %v189 = vadd.f32 0.0, %v188
    %v190 = vpop.f32.mrb[0].mxu0
    %191 = vmatprep.mubr.f32.mxu0 0.0
    %192 = vmatmul.mubr.f32.gmra.mrb[0].mxu0 %v108
    %v193 = vpop.f32.mrb[0].mxu0
    %v194 = vadd.f32 0.0, %v193
    %v195 = vpop.f32.mrb[0].mxu0
    %196 = vmatprep.mubr.f32.mxu0 0.0
    %197 = vmatmul.mubr.f32.gmra.mrb[0].mxu0 %v111
    %v198 = vpop.f32.mrb[0].mxu0
    %v199 = vadd.f32 0.0, %v198
    %v200 = vpop.f32.mrb[0].mxu0
    %201 = vmatprep.mubr.f32.mxu0 0.0
    %202 = vmatmul.mubr.f32.gmra.mrb[0].mxu0 %v114
    %v203 = vpop.f32.mrb[0].mxu0
    %v204 = vadd.f32 0.0, %v203
    %v205 = vpop.f32.mrb[0].mxu0
    %206 = vmatprep.mubr.f32.mxu0 0.0
    %207 = vmatmul.mubr.f32.gmra.mrb[0].mxu0 %v117
    %v208 = vpop.f32.mrb[0].mxu0
    %v209 = vadd.f32 0.0, %v208
    %v210 = vpop.f32.mrb[0].mxu0
    %211 = vmatprep.mubr.f32.mxu0 0.0
    %212 = vmatmul.mubr.f32.gmra.mrb[0].mxu0 %v120
    %v213 = vpop.f32.mrb[0].mxu0
    %v214 = vadd.f32 0.0, %v213
    %v215 = vpop.f32.mrb[0].mxu0
    %216 = vdwg.mxu0
    %v218 = vsel %vm103, %v95, 0
    %v221 = vsel %vm103, %v96, 0
    %v224 = vsel %vm103, %v97, 0
    %v227 = vsel %vm103, %v98, 0
    %v230 = vsel %vm103, %v99, 0
    %v233 = vsel %vm103, %v100, 0
    %235 = vmatprep.subr.mxu0 0.0
    %236 = vmatpush1.msra.mxu0 %v69
    %237 = vmatprep.subr.mxu0 0.0
    %238 = vmatpush1.msra.mxu0 %v70
    %239 = vmatprep.subr.mxu0 0.0
    %240 = vmatpush1.msra.mxu0 0.0
    %241 = vmatprep.subr.mxu0 0.0
    %242 = vmatpush1.msra.mxu0 0.0
    %243 = vmatprep.subr.mxu0 0.0
    %244 = vmatpush1.msra.mxu0 0.0
    %245 = vmatprep.subr.mxu0 0.0
    %246 = vmatpush1.msra.mxu0 0.0
    %247 = vmatprep.subr.mxu0 0.0
    %248 = vmatpush1.msra.mxu0 0.0
    %249 = vmatprep.subr.mxu0 0.0
    %250 = vmatpush1.msra.mxu0 0.0
    %251 = vmatprep.subr.mxu0 0.0
    %252 = vmatpush1.msra.mxu0 0.0
    %253 = vmatprep.subr.mxu0 0.0
    %254 = vmatpush1.msra.mxu0 0.0
    %255 = vmatprep.subr.mxu0 0.0
    %256 = vmatpush1.msra.mxu0 0.0
    %257 = vmatprep.subr.mxu0 0.0
    %258 = vmatpush1.msra.mxu0 0.0
    %259 = vmatprep.subr.mxu0 0.0
    %260 = vmatpush1.msra.mxu0 0.0
    %261 = vmatprep.subr.mxu0 0.0
    %262 = vmatpush1.msra.mxu0 0.0
    %263 = vmatprep.subr.mxu0 0.0
    %264 = vmatpush1.msra.mxu0 0.0
    %265 = vmatprep.subr.mxu0 0.0
    %266 = vmatpush1.msra.mxu0 0.0
    %267 = vmatprep.subr.mxu0 0.0
    %268 = vmatpush1.msra.mxu0 0.0
    %269 = vmatprep.subr.mxu0 0.0
    %270 = vmatpush1.msra.mxu0 0.0
    %271 = vmatprep.subr.mxu0 0.0
    %272 = vmatpush1.msra.mxu0 0.0
    %273 = vmatprep.subr.mxu0 0.0
    %274 = vmatpush1.msra.mxu0 0.0
    %275 = vmatprep.subr.mxu0 0.0
    %276 = vmatpush1.msra.mxu0 0.0
    %277 = vmatprep.subr.mxu0 0.0
    %278 = vmatpush1.msra.mxu0 0.0
    %279 = vmatprep.subr.mxu0 0.0
    %280 = vmatpush1.msra.mxu0 0.0
    %281 = vmatprep.subr.mxu0 0.0
    %282 = vmatpush1.msra.mxu0 0.0
    %283 = vmatprep.subr.mxu0 0.0
    %284 = vmatpush1.msra.mxu0 0.0
    %285 = vmatprep.subr.mxu0 0.0
    %286 = vmatpush1.msra.mxu0 0.0
    %287 = vmatprep.subr.mxu0 0.0
    %288 = vmatpush1.msra.mxu0 0.0
    %289 = vmatprep.subr.mxu0 0.0
    %290 = vmatpush1.msra.mxu0 0.0
    %291 = vmatprep.subr.mxu0 0.0
    %292 = vmatpush1.msra.mxu0 0.0
    %293 = vmatprep.subr.mxu0 0.0
    %294 = vmatpush1.msra.mxu0 0.0
    %295 = vmatprep.subr.mxu0 0.0
    %296 = vmatpush1.msra.mxu0 0.0
    %297 = vmatprep.subr.mxu0 0.0
    %298 = vmatpush1.msra.mxu0 0.0
    %299 = vmatprep.mubr.f32.mxu0 0.0
    %300 = vmatmul.mubr.f32.gmra.mrb[0].mxu0 %v218
    %v301 = vpop.f32.mrb[0].mxu0
    %v302 = vadd.f32 0.0, %v301
    %v303 = vpop.f32.mrb[0].mxu0
    %304 = vmatprep.mubr.f32.mxu0 0.0
    %305 = vmatmul.mubr.f32.gmra.mrb[0].mxu0 %v221
    %v306 = vpop.f32.mrb[0].mxu0
    %v307 = vadd.f32 0.0, %v306
    %v308 = vpop.f32.mrb[0].mxu0
    %309 = vmatprep.mubr.f32.mxu0 0.0
    %310 = vmatmul.mubr.f32.gmra.mrb[0].mxu0 %v224
    %v311 = vpop.f32.mrb[0].mxu0
    %v312 = vadd.f32 0.0, %v311
    %v313 = vpop.f32.mrb[0].mxu0
    %314 = vmatprep.mubr.f32.mxu0 0.0
    %315 = vmatmul.mubr.f32.gmra.mrb[0].mxu0 %v227
    %v316 = vpop.f32.mrb[0].mxu0
    %v317 = vadd.f32 0.0, %v316
    %v318 = vpop.f32.mrb[0].mxu0
    %319 = vmatprep.mubr.f32.mxu0 0.0
    %320 = vmatmul.mubr.f32.gmra.mrb[0].mxu0 %v230
    %v321 = vpop.f32.mrb[0].mxu0
    %v322 = vadd.f32 0.0, %v321
    %v323 = vpop.f32.mrb[0].mxu0
    %324 = vmatprep.mubr.f32.mxu0 0.0
    %325 = vmatmul.mubr.f32.gmra.mrb[0].mxu0 %v233
    %v326 = vpop.f32.mrb[0].mxu0
    %v327 = vadd.f32 0.0, %v326
    %v328 = vpop.f32.mrb[0].mxu0
    %329 = vdwg.mxu0
    %v330 = vld [vmem:[%s5] sm:$0xff]
    %v331 = vld [vmem:[%s5 + $0x8] sm:$0xff]
    %v332 = vld [vmem:[%s5 + $0x10] sm:$0xff]
    %v333 = vld [vmem:[%s5 + $0x18] sm:$0xff]
    %v334 = vld [vmem:[%s5 + $0x20] sm:$0xff]
    %v335 = vld [vmem:[%s5 + $0x28] sm:$0xff]
    %v336 = vld [vmem:[%s5 + $0x30] sm:$0xff]
    %v337 = vld [vmem:[%s5 + $0x38] sm:$0xff]
    %v338 = vld [vmem:[%s5 + $0x40] sm:$0xff]
    %v339 = vld [vmem:[%s5 + $0x48] sm:$0xff]
    %v340 = vld [vmem:[%s5 + $0x50] sm:$0xff]
    %v341 = vld [vmem:[%s5 + $0x58] sm:$0xff]
    %v342 = vld [vmem:[%s5 + $0x60] sm:$0xff]
    %v343 = vld [vmem:[%s5 + $0x68] sm:$0xff]
    %v344 = vld [vmem:[%s5 + $0x70] sm:$0xff]
    %v345 = vld [vmem:[%s5 + $0x78] sm:$0xff]
    %v346 = vld [vmem:[%s5 + $0x80] sm:$0xff]
    %v347 = vld [vmem:[%s5 + $0x88] sm:$0xff]
    %v348 = vld [vmem:[%s5 + $0x90] sm:$0xff]
    %v349 = vld [vmem:[%s5 + $0x98] sm:$0xff]
    %v350 = vld [vmem:[%s5 + $0xa0] sm:$0x3f]
    %v351 = vld [vmem:[%s5 + $0xa8] sm:$0x3f]
    %v352 = vld [vmem:[%s5 + $0xb0] sm:$0x3f]
    %v353 = vld [vmem:[%s5 + $0xb8] sm:$0x3f]
    %v354 = vld [vmem:[%s6] sm:$0xff]
    %v355 = vld [vmem:[%s6 + $0x8] sm:$0xff]
    %v356 = vld [vmem:[%s6 + $0x10] sm:$0xff]
    %v357 = vld [vmem:[%s6 + $0x18] sm:$0xff]
    %v358 = vld [vmem:[%s6 + $0x20] sm:$0xff]
    %v359 = vld [vmem:[%s6 + $0x28] sm:$0xff]
    %v360 = vld [vmem:[%s6 + $0x30] sm:$0xff]
    %v361 = vld [vmem:[%s6 + $0x38] sm:$0xff]
    %v362 = vld [vmem:[%s6 + $0x40] sm:$0xff]
    %v363 = vld [vmem:[%s6 + $0x48] sm:$0xff]
    %v364 = vld [vmem:[%s6 + $0x50] sm:$0xff]
    %v365 = vld [vmem:[%s6 + $0x58] sm:$0xff]
    %v366 = vld [vmem:[%s6 + $0x60] sm:$0xff]
    %v367 = vld [vmem:[%s6 + $0x68] sm:$0xff]
    %v368 = vld [vmem:[%s6 + $0x70] sm:$0xff]
    %v369 = vld [vmem:[%s6 + $0x78] sm:$0xff]
    %v370 = vld [vmem:[%s6 + $0x80] sm:$0xff]
    %v371 = vld [vmem:[%s6 + $0x88] sm:$0xff]
    %v372 = vld [vmem:[%s6 + $0x90] sm:$0xff]
    %v373 = vld [vmem:[%s6 + $0x98] sm:$0xff]
    %v374 = vld [vmem:[%s6 + $0xa0] sm:$0x3f]
    %v375 = vld [vmem:[%s6 + $0xa8] sm:$0x3f]
    %v376 = vld [vmem:[%s6 + $0xb0] sm:$0x3f]
    %v377 = vld [vmem:[%s6 + $0xb8] sm:$0x3f]
    %vm378 = vcmask 375808
    %v380 = vsel %vm378, %v302, 0
    %v383 = vsel %vm378, %v307, 0
    %v386 = vsel %vm378, %v312, 0
    %v389 = vsel %vm378, %v317, 0
    %v392 = vsel %vm378, %v322, 0
    %v395 = vsel %vm378, %v327, 0
    %vm397 = vcmask 1045504
    %v399 = vsel %vm397, %v374, 0
    %v402 = vsel %vm397, %v375, 0
    %v405 = vsel %vm397, %v376, 0
    %v408 = vsel %vm397, %v377, 0
    %410 = vmatprep.subr.mxu0 %v355
    %411 = vmatpush1.msra.mxu0 %v354
    %412 = vmatprep.subr.mxu0 %v359
    %413 = vmatpush1.msra.mxu0 %v358
    %414 = vmatprep.subr.mxu0 %v363
    %415 = vmatpush1.msra.mxu0 %v362
    %416 = vmatprep.subr.mxu0 %v367
    %417 = vmatpush1.msra.mxu0 %v366
    %418 = vmatprep.subr.mxu0 %v371
    %419 = vmatpush1.msra.mxu0 %v370
    %420 = vmatprep.subr.mxu0 %v402
    %421 = vmatpush1.msra.mxu0 %v399
    %422 = vmatprep.subr.mxu0 0.0
    %423 = vmatpush1.msra.mxu0 0.0
    %424 = vmatprep.subr.mxu0 0.0
    %425 = vmatpush1.msra.mxu0 0.0
    %426 = vmatprep.subr.mxu0 0.0
    %427 = vmatpush1.msra.mxu0 0.0
    %428 = vmatprep.subr.mxu0 0.0
    %429 = vmatpush1.msra.mxu0 0.0
    %430 = vmatprep.subr.mxu0 0.0
    %431 = vmatpush1.msra.mxu0 0.0
    %432 = vmatprep.subr.mxu0 0.0
    %433 = vmatpush1.msra.mxu0 0.0
    %434 = vmatprep.subr.mxu0 0.0
    %435 = vmatpush1.msra.mxu0 0.0
    %436 = vmatprep.subr.mxu0 0.0
    %437 = vmatpush1.msra.mxu0 0.0
    %438 = vmatprep.subr.mxu0 0.0
    %439 = vmatpush1.msra.mxu0 0.0
    %440 = vmatprep.subr.mxu0 0.0
    %441 = vmatpush1.msra.mxu0 0.0
    %442 = vmatprep.subr.mxu0 0.0
    %443 = vmatpush1.msra.mxu0 0.0
    %444 = vmatprep.subr.mxu0 0.0
    %445 = vmatpush1.msra.mxu0 0.0
    %446 = vmatprep.subr.mxu0 0.0
    %447 = vmatpush1.msra.mxu0 0.0
    %448 = vmatprep.subr.mxu0 0.0
    %449 = vmatpush1.msra.mxu0 0.0
    %450 = vmatprep.subr.mxu0 0.0
    %451 = vmatpush1.msra.mxu0 0.0
    %452 = vmatprep.subr.mxu0 0.0
    %453 = vmatpush1.msra.mxu0 0.0
    %454 = vmatprep.subr.mxu0 0.0
    %455 = vmatpush1.msra.mxu0 0.0
    %456 = vmatprep.subr.mxu0 0.0
    %457 = vmatpush1.msra.mxu0 0.0
    %458 = vmatprep.subr.mxu0 0.0
    %459 = vmatpush1.msra.mxu0 0.0
    %460 = vmatprep.subr.mxu0 0.0
    %461 = vmatpush1.msra.mxu0 0.0
    %462 = vmatprep.subr.mxu0 0.0
    %463 = vmatpush1.msra.mxu0 0.0
    %464 = vmatprep.subr.mxu0 0.0
    %465 = vmatpush1.msra.mxu0 0.0
    %466 = vmatprep.subr.mxu0 0.0
    %467 = vmatpush1.msra.mxu0 0.0
    %468 = vmatprep.subr.mxu0 0.0
    %469 = vmatpush1.msra.mxu0 0.0
    %470 = vmatprep.subr.mxu0 0.0
    %471 = vmatpush1.msra.mxu0 0.0
    %472 = vmatprep.subr.mxu0 0.0
    %473 = vmatpush1.msra.mxu0 0.0
    %474 = vmatprep.mubr.f32.mxu0 0.0
    %475 = vmatmul.mubr.f32.gmra.mrb[0].mxu0 %v380
    %v476 = vpop.f32.mrb[0].mxu0
    %v477 = vadd.f32 0.0, %v476
    %v478 = vpop.f32.mrb[0].mxu0
    %v479 = vadd.f32 0.0, %v478
    %480 = vmatprep.mubr.f32.mxu0 0.0
    %481 = vmatmul.mubr.f32.gmra.mrb[0].mxu0 %v383
    %v482 = vpop.f32.mrb[0].mxu0
    %v483 = vadd.f32 0.0, %v482
    %v484 = vpop.f32.mrb[0].mxu0
    %v485 = vadd.f32 0.0, %v484
    %486 = vmatprep.mubr.f32.mxu0 0.0
    %487 = vmatmul.mubr.f32.gmra.mrb[0].mxu0 %v386
    %v488 = vpop.f32.mrb[0].mxu0
    %v489 = vadd.f32 0.0, %v488
    %v490 = vpop.f32.mrb[0].mxu0
    %v491 = vadd.f32 0.0, %v490
    %492 = vmatprep.mubr.f32.mxu0 0.0
    %493 = vmatmul.mubr.f32.gmra.mrb[0].mxu0 %v389
    %v494 = vpop.f32.mrb[0].mxu0
    %v495 = vadd.f32 0.0, %v494
    %v496 = vpop.f32.mrb[0].mxu0
    %v497 = vadd.f32 0.0, %v496
    %498 = vmatprep.mubr.f32.mxu0 0.0
    %499 = vmatmul.mubr.f32.gmra.mrb[0].mxu0 %v392
    %v500 = vpop.f32.mrb[0].mxu0
    %v501 = vadd.f32 0.0, %v500
    %v502 = vpop.f32.mrb[0].mxu0
    %v503 = vadd.f32 0.0, %v502
    %504 = vmatprep.mubr.f32.mxu0 0.0
    %505 = vmatmul.mubr.f32.gmra.mrb[0].mxu0 %v395
    %v506 = vpop.f32.mrb[0].mxu0
    %v507 = vadd.f32 0.0, %v506
    %v508 = vpop.f32.mrb[0].mxu0
    %v509 = vadd.f32 0.0, %v508
    %510 = vdwg.mxu0
    %511 = vmatprep.subr.mxu0 %v357
    %512 = vmatpush1.msra.mxu0 %v356
    %513 = vmatprep.subr.mxu0 %v361
    %514 = vmatpush1.msra.mxu0 %v360
    %515 = vmatprep.subr.mxu0 %v365
    %516 = vmatpush1.msra.mxu0 %v364
    %517 = vmatprep.subr.mxu0 %v369
    %518 = vmatpush1.msra.mxu0 %v368
    %519 = vmatprep.subr.mxu0 %v373
    %520 = vmatpush1.msra.mxu0 %v372
    %521 = vmatprep.subr.mxu0 %v408
    %522 = vmatpush1.msra.mxu0 %v405
    %523 = vmatprep.subr.mxu0 0.0
    %524 = vmatpush1.msra.mxu0 0.0
    %525 = vmatprep.subr.mxu0 0.0
    %526 = vmatpush1.msra.mxu0 0.0
    %527 = vmatprep.subr.mxu0 0.0
    %528 = vmatpush1.msra.mxu0 0.0
    %529 = vmatprep.subr.mxu0 0.0
    %530 = vmatpush1.msra.mxu0 0.0
    %531 = vmatprep.subr.mxu0 0.0
    %532 = vmatpush1.msra.mxu0 0.0
    %533 = vmatprep.subr.mxu0 0.0
    %534 = vmatpush1.msra.mxu0 0.0
    %535 = vmatprep.subr.mxu0 0.0
    %536 = vmatpush1.msra.mxu0 0.0
    %537 = vmatprep.subr.mxu0 0.0
    %538 = vmatpush1.msra.mxu0 0.0
    %539 = vmatprep.subr.mxu0 0.0
    %540 = vmatpush1.msra.mxu0 0.0
    %541 = vmatprep.subr.mxu0 0.0
    %542 = vmatpush1.msra.mxu0 0.0
    %543 = vmatprep.subr.mxu0 0.0
    %544 = vmatpush1.msra.mxu0 0.0
    %545 = vmatprep.subr.mxu0 0.0
    %546 = vmatpush1.msra.mxu0 0.0
    %547 = vmatprep.subr.mxu0 0.0
    %548 = vmatpush1.msra.mxu0 0.0
    %549 = vmatprep.subr.mxu0 0.0
    %550 = vmatpush1.msra.mxu0 0.0
    %551 = vmatprep.subr.mxu0 0.0
    %552 = vmatpush1.msra.mxu0 0.0
    %553 = vmatprep.subr.mxu0 0.0
    %554 = vmatpush1.msra.mxu0 0.0
    %555 = vmatprep.subr.mxu0 0.0
    %556 = vmatpush1.msra.mxu0 0.0
    %557 = vmatprep.subr.mxu0 0.0
    %558 = vmatpush1.msra.mxu0 0.0
    %559 = vmatprep.subr.mxu0 0.0
    %560 = vmatpush1.msra.mxu0 0.0
    %561 = vmatprep.subr.mxu0 0.0
    %562 = vmatpush1.msra.mxu0 0.0
    %563 = vmatprep.subr.mxu0 0.0
    %564 = vmatpush1.msra.mxu0 0.0
    %565 = vmatprep.subr.mxu0 0.0
    %566 = vmatpush1.msra.mxu0 0.0
    %567 = vmatprep.subr.mxu0 0.0
    %568 = vmatpush1.msra.mxu0 0.0
    %569 = vmatprep.subr.mxu0 0.0
    %570 = vmatpush1.msra.mxu0 0.0
    %571 = vmatprep.subr.mxu0 0.0
    %572 = vmatpush1.msra.mxu0 0.0
    %573 = vmatprep.subr.mxu0 0.0
    %574 = vmatpush1.msra.mxu0 0.0
    %575 = vmatprep.mubr.f32.mxu0 0.0
    %576 = vmatmul.mubr.f32.gmra.mrb[0].mxu0 %v380
    %v577 = vpop.f32.mrb[0].mxu0
    %v578 = vadd.f32 0.0, %v577
    %v579 = vpop.f32.mrb[0].mxu0
    %v580 = vadd.f32 0.0, %v579
    %581 = vmatprep.mubr.f32.mxu0 0.0
    %582 = vmatmul.mubr.f32.gmra.mrb[0].mxu0 %v383
    %v583 = vpop.f32.mrb[0].mxu0
    %v584 = vadd.f32 0.0, %v583
    %v585 = vpop.f32.mrb[0].mxu0
    %v586 = vadd.f32 0.0, %v585
    %587 = vmatprep.mubr.f32.mxu0 0.0
    %588 = vmatmul.mubr.f32.gmra.mrb[0].mxu0 %v386
    %v589 = vpop.f32.mrb[0].mxu0
    %v590 = vadd.f32 0.0, %v589
    %v591 = vpop.f32.mrb[0].mxu0
    %v592 = vadd.f32 0.0, %v591
    %593 = vmatprep.mubr.f32.mxu0 0.0
    %594 = vmatmul.mubr.f32.gmra.mrb[0].mxu0 %v389
    %v595 = vpop.f32.mrb[0].mxu0
    %v596 = vadd.f32 0.0, %v595
    %v597 = vpop.f32.mrb[0].mxu0
    %v598 = vadd.f32 0.0, %v597
    %599 = vmatprep.mubr.f32.mxu0 0.0
    %600 = vmatmul.mubr.f32.gmra.mrb[0].mxu0 %v392
    %v601 = vpop.f32.mrb[0].mxu0
    %v602 = vadd.f32 0.0, %v601
    %v603 = vpop.f32.mrb[0].mxu0
    %v604 = vadd.f32 0.0, %v603
    %605 = vmatprep.mubr.f32.mxu0 0.0
    %606 = vmatmul.mubr.f32.gmra.mrb[0].mxu0 %v395
    %v607 = vpop.f32.mrb[0].mxu0
    %v608 = vadd.f32 0.0, %v607
    %v609 = vpop.f32.mrb[0].mxu0
    %v610 = vadd.f32 0.0, %v609
    %611 = vdwg.mxu0
    %v613 = vsel %vm378, %v189, 0
    %v616 = vsel %vm378, %v194, 0
    %v619 = vsel %vm378, %v199, 0
    %v622 = vsel %vm378, %v204, 0
    %v625 = vsel %vm378, %v209, 0
    %v628 = vsel %vm378, %v214, 0
    %v631 = vsel %vm397, %v350, 0
    %v634 = vsel %vm397, %v351, 0
    %v637 = vsel %vm397, %v352, 0
    %v640 = vsel %vm397, %v353, 0
    %642 = vmatprep.subr.mxu0 %v331
    %643 = vmatpush1.msra.mxu0 %v330
    %644 = vmatprep.subr.mxu0 %v335
    %645 = vmatpush1.msra.mxu0 %v334
    %646 = vmatprep.subr.mxu0 %v339
    %647 = vmatpush1.msra.mxu0 %v338
    %648 = vmatprep.subr.mxu0 %v343
    %649 = vmatpush1.msra.mxu0 %v342
    %650 = vmatprep.subr.mxu0 %v347
    %651 = vmatpush1.msra.mxu0 %v346
    %652 = vmatprep.subr.mxu0 %v634
    %653 = vmatpush1.msra.mxu0 %v631
    %654 = vmatprep.subr.mxu0 0.0
    %655 = vmatpush1.msra.mxu0 0.0
    %656 = vmatprep.subr.mxu0 0.0
    %657 = vmatpush1.msra.mxu0 0.0
    %658 = vmatprep.subr.mxu0 0.0
    %659 = vmatpush1.msra.mxu0 0.0
    %660 = vmatprep.subr.mxu0 0.0
    %661 = vmatpush1.msra.mxu0 0.0
    %662 = vmatprep.subr.mxu0 0.0
    %663 = vmatpush1.msra.mxu0 0.0
    %664 = vmatprep.subr.mxu0 0.0
    %665 = vmatpush1.msra.mxu0 0.0
    %666 = vmatprep.subr.mxu0 0.0
    %667 = vmatpush1.msra.mxu0 0.0
    %668 = vmatprep.subr.mxu0 0.0
    %669 = vmatpush1.msra.mxu0 0.0
    %670 = vmatprep.subr.mxu0 0.0
    %671 = vmatpush1.msra.mxu0 0.0
    %672 = vmatprep.subr.mxu0 0.0
    %673 = vmatpush1.msra.mxu0 0.0
    %674 = vmatprep.subr.mxu0 0.0
    %675 = vmatpush1.msra.mxu0 0.0
    %676 = vmatprep.subr.mxu0 0.0
    %677 = vmatpush1.msra.mxu0 0.0
    %678 = vmatprep.subr.mxu0 0.0
    %679 = vmatpush1.msra.mxu0 0.0
    %680 = vmatprep.subr.mxu0 0.0
    %681 = vmatpush1.msra.mxu0 0.0
    %682 = vmatprep.subr.mxu0 0.0
    %683 = vmatpush1.msra.mxu0 0.0
    %684 = vmatprep.subr.mxu0 0.0
    %685 = vmatpush1.msra.mxu0 0.0
    %686 = vmatprep.subr.mxu0 0.0
    %687 = vmatpush1.msra.mxu0 0.0
    %688 = vmatprep.subr.mxu0 0.0
    %689 = vmatpush1.msra.mxu0 0.0
    %690 = vmatprep.subr.mxu0 0.0
    %691 = vmatpush1.msra.mxu0 0.0
    %692 = vmatprep.subr.mxu0 0.0
    %693 = vmatpush1.msra.mxu0 0.0
    %694 = vmatprep.subr.mxu0 0.0
    %695 = vmatpush1.msra.mxu0 0.0
    %696 = vmatprep.subr.mxu0 0.0
    %697 = vmatpush1.msra.mxu0 0.0
    %698 = vmatprep.subr.mxu0 0.0
    %699 = vmatpush1.msra.mxu0 0.0
    %700 = vmatprep.subr.mxu0 0.0
    %701 = vmatpush1.msra.mxu0 0.0
    %702 = vmatprep.subr.mxu0 0.0
    %703 = vmatpush1.msra.mxu0 0.0
    %704 = vmatprep.subr.mxu0 0.0
    %705 = vmatpush1.msra.mxu0 0.0
    %706 = vmatprep.mubr.f32.mxu0 0.0
    %707 = vmatmul.mubr.f32.gmra.mrb[0].mxu0 %v613
    %v708 = vpop.f32.mrb[0].mxu0
    %v709 = vadd.f32 %v477, %v708
    %v710 = vpop.f32.mrb[0].mxu0
    %v711 = vadd.f32 %v479, %v710
    %712 = vmatprep.mubr.f32.mxu0 0.0
    %713 = vmatmul.mubr.f32.gmra.mrb[0].mxu0 %v616
    %v714 = vpop.f32.mrb[0].mxu0
    %v715 = vadd.f32 %v483, %v714
    %v716 = vpop.f32.mrb[0].mxu0
    %v717 = vadd.f32 %v485, %v716
    %718 = vmatprep.mubr.f32.mxu0 0.0
    %719 = vmatmul.mubr.f32.gmra.mrb[0].mxu0 %v619
    %v720 = vpop.f32.mrb[0].mxu0
    %v721 = vadd.f32 %v489, %v720
    %v722 = vpop.f32.mrb[0].mxu0
    %v723 = vadd.f32 %v491, %v722
    %724 = vmatprep.mubr.f32.mxu0 0.0
    %725 = vmatmul.mubr.f32.gmra.mrb[0].mxu0 %v622
    %v726 = vpop.f32.mrb[0].mxu0
    %v727 = vadd.f32 %v495, %v726
    %v728 = vpop.f32.mrb[0].mxu0
    %v729 = vadd.f32 %v497, %v728
    %730 = vmatprep.mubr.f32.mxu0 0.0
    %731 = vmatmul.mubr.f32.gmra.mrb[0].mxu0 %v625
    %v732 = vpop.f32.mrb[0].mxu0
    %v733 = vadd.f32 %v501, %v732
    %v734 = vpop.f32.mrb[0].mxu0
    %v735 = vadd.f32 %v503, %v734
    %736 = vmatprep.mubr.f32.mxu0 0.0
    %737 = vmatmul.mubr.f32.gmra.mrb[0].mxu0 %v628
    %v738 = vpop.f32.mrb[0].mxu0
    %v739 = vadd.f32 %v507, %v738
    %v740 = vpop.f32.mrb[0].mxu0
    %v741 = vadd.f32 %v509, %v740
    %742 = vdwg.mxu0
    %743 = vmatprep.subr.mxu0 %v333
    %744 = vmatpush1.msra.mxu0 %v332
    %745 = vmatprep.subr.mxu0 %v337
    %746 = vmatpush1.msra.mxu0 %v336
    %747 = vmatprep.subr.mxu0 %v341
    %748 = vmatpush1.msra.mxu0 %v340
    %749 = vmatprep.subr.mxu0 %v345
    %750 = vmatpush1.msra.mxu0 %v344
    %751 = vmatprep.subr.mxu0 %v349
    %752 = vmatpush1.msra.mxu0 %v348
    %753 = vmatprep.subr.mxu0 %v640
    %754 = vmatpush1.msra.mxu0 %v637
    %755 = vmatprep.subr.mxu0 0.0
    %756 = vmatpush1.msra.mxu0 0.0
    %757 = vmatprep.subr.mxu0 0.0
    %758 = vmatpush1.msra.mxu0 0.0
    %759 = vmatprep.subr.mxu0 0.0
    %760 = vmatpush1.msra.mxu0 0.0
    %761 = vmatprep.subr.mxu0 0.0
    %762 = vmatpush1.msra.mxu0 0.0
    %763 = vmatprep.subr.mxu0 0.0
    %764 = vmatpush1.msra.mxu0 0.0
    %765 = vmatprep.subr.mxu0 0.0
    %766 = vmatpush1.msra.mxu0 0.0
    %767 = vmatprep.subr.mxu0 0.0
    %768 = vmatpush1.msra.mxu0 0.0
    %769 = vmatprep.subr.mxu0 0.0
    %770 = vmatpush1.msra.mxu0 0.0
    %771 = vmatprep.subr.mxu0 0.0
    %772 = vmatpush1.msra.mxu0 0.0
    %773 = vmatprep.subr.mxu0 0.0
    %774 = vmatpush1.msra.mxu0 0.0
    %775 = vmatprep.subr.mxu0 0.0
    %776 = vmatpush1.msra.mxu0 0.0
    %777 = vmatprep.subr.mxu0 0.0
    %778 = vmatpush1.msra.mxu0 0.0
    %779 = vmatprep.subr.mxu0 0.0
    %780 = vmatpush1.msra.mxu0 0.0
    %781 = vmatprep.subr.mxu0 0.0
    %782 = vmatpush1.msra.mxu0 0.0
    %783 = vmatprep.subr.mxu0 0.0
    %784 = vmatpush1.msra.mxu0 0.0
    %785 = vmatprep.subr.mxu0 0.0
    %786 = vmatpush1.msra.mxu0 0.0
    %787 = vmatprep.subr.mxu0 0.0
    %788 = vmatpush1.msra.mxu0 0.0
    %789 = vmatprep.subr.mxu0 0.0
    %790 = vmatpush1.msra.mxu0 0.0
    %791 = vmatprep.subr.mxu0 0.0
    %792 = vmatpush1.msra.mxu0 0.0
    %793 = vmatprep.subr.mxu0 0.0
    %794 = vmatpush1.msra.mxu0 0.0
    %795 = vmatprep.subr.mxu0 0.0
    %796 = vmatpush1.msra.mxu0 0.0
    %797 = vmatprep.subr.mxu0 0.0
    %798 = vmatpush1.msra.mxu0 0.0
    %799 = vmatprep.subr.mxu0 0.0
    %800 = vmatpush1.msra.mxu0 0.0
    %801 = vmatprep.subr.mxu0 0.0
    %802 = vmatpush1.msra.mxu0 0.0
    %803 = vmatprep.subr.mxu0 0.0
    %804 = vmatpush1.msra.mxu0 0.0
    %805 = vmatprep.subr.mxu0 0.0
    %806 = vmatpush1.msra.mxu0 0.0
    %807 = vmatprep.mubr.f32.mxu0 0.0
    %808 = vmatmul.mubr.f32.gmra.mrb[0].mxu0 %v613
    %v809 = vpop.f32.mrb[0].mxu0
    %v810 = vadd.f32 %v578, %v809
    %v811 = vpop.f32.mrb[0].mxu0
    %v812 = vadd.f32 %v580, %v811
    %813 = vmatprep.mubr.f32.mxu0 0.0
    %814 = vmatmul.mubr.f32.gmra.mrb[0].mxu0 %v616
    %v815 = vpop.f32.mrb[0].mxu0
    %v816 = vadd.f32 %v584, %v815
    %v817 = vpop.f32.mrb[0].mxu0
    %v818 = vadd.f32 %v586, %v817
    %819 = vmatprep.mubr.f32.mxu0 0.0
    %820 = vmatmul.mubr.f32.gmra.mrb[0].mxu0 %v619
    %v821 = vpop.f32.mrb[0].mxu0
    %v822 = vadd.f32 %v590, %v821
    %v823 = vpop.f32.mrb[0].mxu0
    %v824 = vadd.f32 %v592, %v823
    %825 = vmatprep.mubr.f32.mxu0 0.0
    %826 = vmatmul.mubr.f32.gmra.mrb[0].mxu0 %v622
    %v827 = vpop.f32.mrb[0].mxu0
    %v828 = vadd.f32 %v596, %v827
    %v829 = vpop.f32.mrb[0].mxu0
    %v830 = vadd.f32 %v598, %v829
    %831 = vmatprep.mubr.f32.mxu0 0.0
    %832 = vmatmul.mubr.f32.gmra.mrb[0].mxu0 %v625
    %v833 = vpop.f32.mrb[0].mxu0
    %v834 = vadd.f32 %v602, %v833
    %v835 = vpop.f32.mrb[0].mxu0
    %v836 = vadd.f32 %v604, %v835
    %837 = vmatprep.mubr.f32.mxu0 0.0
    %838 = vmatmul.mubr.f32.gmra.mrb[0].mxu0 %v628
    %v839 = vpop.f32.mrb[0].mxu0
    %v840 = vadd.f32 %v608, %v839
    %v841 = vpop.f32.mrb[0].mxu0
    %v842 = vadd.f32 %v610, %v841
    %843 = vdwg.mxu0
    %v844 = vld [vmem:[%s7] sm:$0xff]
    %v845 = vld [vmem:[%s7 + $0x8] sm:$0xff]
    %v846 = vld [vmem:[%s7 + $0x10] sm:$0xff]
    %v847 = vld [vmem:[%s7 + $0x18] sm:$0xff]
    %v848 = vld [vmem:[%s7 + $0x20] sm:$0xff]
    %v849 = vld [vmem:[%s7 + $0x28] sm:$0xff]
    %v850 = vld [vmem:[%s7 + $0x30] sm:$0xff]
    %v851 = vld [vmem:[%s7 + $0x38] sm:$0xff]
    %v852 = vld [vmem:[%s7 + $0x40] sm:$0xff]
    %v853 = vld [vmem:[%s7 + $0x48] sm:$0xff]
    %v854 = vld [vmem:[%s7 + $0x50] sm:$0xff]
    %v855 = vld [vmem:[%s7 + $0x58] sm:$0xff]
    %v856 = vld [vmem:[%s7 + $0x60] sm:$0xff]
    %v857 = vld [vmem:[%s7 + $0x68] sm:$0xff]
    %v858 = vld [vmem:[%s7 + $0x70] sm:$0xff]
    %v859 = vld [vmem:[%s7 + $0x78] sm:$0xff]
    %v860 = vld [vmem:[%s7 + $0x80] sm:$0xff]
    %v861 = vld [vmem:[%s7 + $0x88] sm:$0xff]
    %v862 = vld [vmem:[%s7 + $0x90] sm:$0xff]
    %v863 = vld [vmem:[%s7 + $0x98] sm:$0xff]
    %v864 = vld [vmem:[%s7 + $0xa0] sm:$0xff]
    %v865 = vld [vmem:[%s7 + $0xa8] sm:$0xff]
    %v866 = vld [vmem:[%s7 + $0xb0] sm:$0xff]
    %v867 = vld [vmem:[%s7 + $0xb8] sm:$0xff]
    %v868 = vld [vmem:[%s7 + $0xc0] sm:$0xff]
    %v869 = vld [vmem:[%s7 + $0xc8] sm:$0xff]
    %v870 = vld [vmem:[%s7 + $0xd0] sm:$0xff]
    %v871 = vld [vmem:[%s7 + $0xd8] sm:$0xff]
    %v872 = vld [vmem:[%s7 + $0xe0] sm:$0xff]
    %v873 = vld [vmem:[%s7 + $0xe8] sm:$0xff]
    %v874 = vld [vmem:[%s7 + $0xf0] sm:$0xff]
    %v875 = vld [vmem:[%s7 + $0xf8] sm:$0xff]
    %v876 = vld [vmem:[%s7 + $0x100] sm:$0xff]
    %v877 = vld [vmem:[%s7 + $0x108] sm:$0xff]
    %v878 = vld [vmem:[%s7 + $0x110] sm:$0xff]
    %v879 = vld [vmem:[%s7 + $0x118] sm:$0xff]
    %v880 = vld [vmem:[%s7 + $0x120] sm:$0xff]
    %v881 = vld [vmem:[%s7 + $0x128] sm:$0xff]
    %v882 = vld [vmem:[%s7 + $0x130] sm:$0xff]
    %v883 = vld [vmem:[%s7 + $0x138] sm:$0xff]
    %v884 = vld [vmem:[%s7 + $0x140] sm:$0xff]
    %v885 = vld [vmem:[%s7 + $0x148] sm:$0xff]
    %v886 = vld [vmem:[%s7 + $0x150] sm:$0xff]
    %v887 = vld [vmem:[%s7 + $0x158] sm:$0xff]
    %v888 = vld [vmem:[%s7 + $0x160] sm:$0xff]
    %v889 = vld [vmem:[%s7 + $0x168] sm:$0xff]
    %v890 = vld [vmem:[%s7 + $0x170] sm:$0xff]
    %v891 = vld [vmem:[%s7 + $0x178] sm:$0xff]
    %v892 = vld [vmem:[%s7 + $0x180] sm:$0xff]
    %v893 = vld [vmem:[%s7 + $0x188] sm:$0xff]
    %v894 = vld [vmem:[%s7 + $0x190] sm:$0xff]
    %v895 = vld [vmem:[%s7 + $0x198] sm:$0xff]
    %v896 = vld [vmem:[%s7 + $0x1a0] sm:$0xff]
    %v897 = vld [vmem:[%s7 + $0x1a8] sm:$0xff]
    %v898 = vld [vmem:[%s7 + $0x1b0] sm:$0xff]
    %v899 = vld [vmem:[%s7 + $0x1b8] sm:$0xff]
    %v900 = vld [vmem:[%s7 + $0x1c0] sm:$0xff]
    %v901 = vld [vmem:[%s7 + $0x1c8] sm:$0xff]
    %v902 = vld [vmem:[%s7 + $0x1d0] sm:$0xff]
    %v903 = vld [vmem:[%s7 + $0x1d8] sm:$0xff]
    %v904 = vld [vmem:[%s7 + $0x1e0] sm:$0xff]
    %v905 = vld [vmem:[%s7 + $0x1e8] sm:$0xff]
    %v906 = vld [vmem:[%s7 + $0x1f0] sm:$0xff]
    %v907 = vld [vmem:[%s7 + $0x1f8] sm:$0xff]
    %v908 = vld [vmem:[%s7 + $0x200] sm:$0xff]
    %v909 = vld [vmem:[%s7 + $0x208] sm:$0xff]
    %v910 = vld [vmem:[%s7 + $0x210] sm:$0xff]
    %v911 = vld [vmem:[%s7 + $0x218] sm:$0xff]
    %v912 = vld [vmem:[%s7 + $0x220] sm:$0xff]
    %v913 = vld [vmem:[%s7 + $0x228] sm:$0xff]
    %v914 = vld [vmem:[%s7 + $0x230] sm:$0xff]
    %v915 = vld [vmem:[%s7 + $0x238] sm:$0xff]
    %v916 = vld [vmem:[%s7 + $0x240] sm:$0xff]
    %v917 = vld [vmem:[%s7 + $0x248] sm:$0xff]
    %v918 = vld [vmem:[%s7 + $0x250] sm:$0xff]
    %v919 = vld [vmem:[%s7 + $0x258] sm:$0xff]
    %v920 = vld [vmem:[%s7 + $0x260] sm:$0xff]
    %v921 = vld [vmem:[%s7 + $0x268] sm:$0xff]
    %v922 = vld [vmem:[%s7 + $0x270] sm:$0xff]
    %v923 = vld [vmem:[%s7 + $0x278] sm:$0xff]
    %v924 = vld [vmem:[%s7 + $0x280] sm:$0xff]
    %v925 = vld [vmem:[%s7 + $0x288] sm:$0xff]
    %v926 = vld [vmem:[%s7 + $0x290] sm:$0xff]
    %v927 = vld [vmem:[%s7 + $0x298] sm:$0xff]
    %v928 = vld [vmem:[%s7 + $0x2a0] sm:$0xff]
    %v929 = vld [vmem:[%s7 + $0x2a8] sm:$0xff]
    %v930 = vld [vmem:[%s7 + $0x2b0] sm:$0xff]
    %v931 = vld [vmem:[%s7 + $0x2b8] sm:$0xff]
    %v932 = vld [vmem:[%s7 + $0x2c0] sm:$0xff]
    %v933 = vld [vmem:[%s7 + $0x2c8] sm:$0xff]
    %v934 = vld [vmem:[%s7 + $0x2d0] sm:$0xff]
    %v935 = vld [vmem:[%s7 + $0x2d8] sm:$0xff]
    %v936 = vld [vmem:[%s7 + $0x2e0] sm:$0xff]
    %v937 = vld [vmem:[%s7 + $0x2e8] sm:$0xff]
    %v938 = vld [vmem:[%s7 + $0x2f0] sm:$0xff]
    %v939 = vld [vmem:[%s7 + $0x2f8] sm:$0xff]
    %v940 = vld [vmem:[%s7 + $0x300] sm:$0xff]
    %v941 = vld [vmem:[%s7 + $0x308] sm:$0xff]
    %v942 = vld [vmem:[%s7 + $0x310] sm:$0xff]
    %v943 = vld [vmem:[%s7 + $0x318] sm:$0xff]
    %v944 = vld [vmem:[%s7 + $0x320] sm:$0xff]
    %v945 = vld [vmem:[%s7 + $0x328] sm:$0xff]
    %v946 = vld [vmem:[%s7 + $0x330] sm:$0xff]
    %v947 = vld [vmem:[%s7 + $0x338] sm:$0xff]
    %v948 = vld [vmem:[%s7 + $0x340] sm:$0xff]
    %v949 = vld [vmem:[%s7 + $0x348] sm:$0xff]
    %v950 = vld [vmem:[%s7 + $0x350] sm:$0xff]
    %v951 = vld [vmem:[%s7 + $0x358] sm:$0xff]
    %v952 = vld [vmem:[%s7 + $0x360] sm:$0xff]
    %v953 = vld [vmem:[%s7 + $0x368] sm:$0xff]
    %v954 = vld [vmem:[%s7 + $0x370] sm:$0xff]
    %v955 = vld [vmem:[%s7 + $0x378] sm:$0xff]
    %v956 = vld [vmem:[%s7 + $0x380] sm:$0xff]
    %v957 = vld [vmem:[%s7 + $0x388] sm:$0xff]
    %v958 = vld [vmem:[%s7 + $0x390] sm:$0xff]
    %v959 = vld [vmem:[%s7 + $0x398] sm:$0xff]
    %v960 = vld [vmem:[%s7 + $0x3a0] sm:$0xff]
    %v961 = vld [vmem:[%s7 + $0x3a8] sm:$0xff]
    %v962 = vld [vmem:[%s7 + $0x3b0] sm:$0xff]
    %v963 = vld [vmem:[%s7 + $0x3b8] sm:$0xff]
    %v964 = vld [vmem:[%s7 + $0x3c0] sm:$0xff]
    %v965 = vld [vmem:[%s7 + $0x3c8] sm:$0xff]
    %v966 = vld [vmem:[%s7 + $0x3d0] sm:$0xff]
    %v967 = vld [vmem:[%s7 + $0x3d8] sm:$0xff]
    %v968 = vld [vmem:[%s7 + $0x3e0] sm:$0xff]
    %v969 = vld [vmem:[%s7 + $0x3e8] sm:$0xff]
    %v970 = vld [vmem:[%s7 + $0x3f0] sm:$0xff]
    %v971 = vld [vmem:[%s7 + $0x3f8] sm:$0xff]
    %v972 = vld [vmem:[%s7 + $0x400] sm:$0xff]
    %v973 = vld [vmem:[%s7 + $0x408] sm:$0xff]
    %v974 = vld [vmem:[%s7 + $0x410] sm:$0xff]
    %v975 = vld [vmem:[%s7 + $0x418] sm:$0xff]
    %v976 = vld [vmem:[%s7 + $0x420] sm:$0xff]
    %v977 = vld [vmem:[%s7 + $0x428] sm:$0xff]
    %v978 = vld [vmem:[%s7 + $0x430] sm:$0xff]
    %v979 = vld [vmem:[%s7 + $0x438] sm:$0xff]
    %v980 = vld [vmem:[%s7 + $0x440] sm:$0xff]
    %v981 = vld [vmem:[%s7 + $0x448] sm:$0xff]
    %v982 = vld [vmem:[%s7 + $0x450] sm:$0xff]
    %v983 = vld [vmem:[%s7 + $0x458] sm:$0xff]
    %v984 = vld [vmem:[%s7 + $0x460] sm:$0xff]
    %v985 = vld [vmem:[%s7 + $0x468] sm:$0xff]
    %v986 = vld [vmem:[%s7 + $0x470] sm:$0xff]
    %v987 = vld [vmem:[%s7 + $0x478] sm:$0xff]
    %v988 = vld [vmem:[%s7 + $0x480] sm:$0xff]
    %v989 = vld [vmem:[%s7 + $0x488] sm:$0xff]
    %v990 = vld [vmem:[%s7 + $0x490] sm:$0xff]
    %v991 = vld [vmem:[%s7 + $0x498] sm:$0xff]
    %v992 = vld [vmem:[%s7 + $0x4a0] sm:$0xff]
    %v993 = vld [vmem:[%s7 + $0x4a8] sm:$0xff]
    %v994 = vld [vmem:[%s7 + $0x4b0] sm:$0xff]
    %v995 = vld [vmem:[%s7 + $0x4b8] sm:$0xff]
    %v996 = vld [vmem:[%s7 + $0x4c0] sm:$0xff]
    %v997 = vld [vmem:[%s7 + $0x4c8] sm:$0xff]
    %v998 = vld [vmem:[%s7 + $0x4d0] sm:$0xff]
    %v999 = vld [vmem:[%s7 + $0x4d8] sm:$0xff]
    %v1000 = vld [vmem:[%s7 + $0x4e0] sm:$0xff]
    %v1001 = vld [vmem:[%s7 + $0x4e8] sm:$0xff]
    %v1002 = vld [vmem:[%s7 + $0x4f0] sm:$0xff]
    %v1003 = vld [vmem:[%s7 + $0x4f8] sm:$0xff]
    %v1004 = vld [vmem:[%s7 + $0x500] sm:$0xff]
    %v1005 = vld [vmem:[%s7 + $0x508] sm:$0xff]
    %v1006 = vld [vmem:[%s7 + $0x510] sm:$0xff]
    %v1007 = vld [vmem:[%s7 + $0x518] sm:$0xff]
    %v1008 = vld [vmem:[%s7 + $0x520] sm:$0xff]
    %v1009 = vld [vmem:[%s7 + $0x528] sm:$0xff]
    %v1010 = vld [vmem:[%s7 + $0x530] sm:$0xff]
    %v1011 = vld [vmem:[%s7 + $0x538] sm:$0xff]
    %v1012 = vld [vmem:[%s7 + $0x540] sm:$0xff]
    %v1013 = vld [vmem:[%s7 + $0x548] sm:$0xff]
    %v1014 = vld [vmem:[%s7 + $0x550] sm:$0xff]
    %v1015 = vld [vmem:[%s7 + $0x558] sm:$0xff]
    %v1016 = vld [vmem:[%s7 + $0x560] sm:$0x1]
    %v1017 = vld [vmem:[%s7 + $0x568] sm:$0x1]
    %v1018 = vld [vmem:[%s7 + $0x570] sm:$0x1]
    %v1019 = vld [vmem:[%s7 + $0x578] sm:$0x1]
    %vm1020 = vcmask 728064
    %v1022 = vsel %vm1020, %v73, 0
    %v1025 = vsel %vm1020, %v76, 0
    %v1028 = vsel %vm1020, %v79, 0
    %v1031 = vsel %vm1020, %v82, 0
    %v1034 = vsel %vm1020, %v85, 0
    %v1037 = vsel %vm1020, %v88, 0
    %vm1039 = vcmask 1040384
    %v1041 = vsel %vm1039, %v1016, 0
    %v1044 = vsel %vm1039, %v1017, 0
    %v1047 = vsel %vm1039, %v1018, 0
    %v1050 = vsel %vm1039, %v1019, 0
    %1052 = vmatprep.subr.mxu0 %v845
    %1053 = vmatpush1.msra.mxu0 %v844
    %1054 = vmatprep.subr.mxu0 %v849
    %1055 = vmatpush1.msra.mxu0 %v848
    %1056 = vmatprep.subr.mxu0 %v853
    %1057 = vmatpush1.msra.mxu0 %v852
    %1058 = vmatprep.subr.mxu0 %v857
    %1059 = vmatpush1.msra.mxu0 %v856
    %1060 = vmatprep.subr.mxu0 %v861
    %1061 = vmatpush1.msra.mxu0 %v860
    %1062 = vmatprep.subr.mxu0 %v865
    %1063 = vmatpush1.msra.mxu0 %v864
    %1064 = vmatprep.subr.mxu0 %v869
    %1065 = vmatpush1.msra.mxu0 %v868
    %1066 = vmatprep.subr.mxu0 %v873
    %1067 = vmatpush1.msra.mxu0 %v872
    %1068 = vmatprep.subr.mxu0 %v877
    %1069 = vmatpush1.msra.mxu0 %v876
    %1070 = vmatprep.subr.mxu0 %v881
    %1071 = vmatpush1.msra.mxu0 %v880
    %1072 = vmatprep.subr.mxu0 %v885
    %1073 = vmatpush1.msra.mxu0 %v884
    %1074 = vmatprep.subr.mxu0 %v889
    %1075 = vmatpush1.msra.mxu0 %v888
    %1076 = vmatprep.subr.mxu0 %v893
    %1077 = vmatpush1.msra.mxu0 %v892
    %1078 = vmatprep.subr.mxu0 %v897
    %1079 = vmatpush1.msra.mxu0 %v896
    %1080 = vmatprep.subr.mxu0 %v901
    %1081 = vmatpush1.msra.mxu0 %v900
    %1082 = vmatprep.subr.mxu0 %v905
    %1083 = vmatpush1.msra.mxu0 %v904
    %1084 = vmatprep.subr.mxu0 %v909
    %1085 = vmatpush1.msra.mxu0 %v908
    %1086 = vmatprep.subr.mxu0 %v913
    %1087 = vmatpush1.msra.mxu0 %v912
    %1088 = vmatprep.subr.mxu0 %v917
    %1089 = vmatpush1.msra.mxu0 %v916
    %1090 = vmatprep.subr.mxu0 %v921
    %1091 = vmatpush1.msra.mxu0 %v920
    %1092 = vmatprep.subr.mxu0 %v925
    %1093 = vmatpush1.msra.mxu0 %v924
    %1094 = vmatprep.subr.mxu0 %v929
    %1095 = vmatpush1.msra.mxu0 %v928
    %1096 = vmatprep.subr.mxu0 %v933
    %1097 = vmatpush1.msra.mxu0 %v932
    %1098 = vmatprep.subr.mxu0 %v937
    %1099 = vmatpush1.msra.mxu0 %v936
    %1100 = vmatprep.subr.mxu0 %v941
    %1101 = vmatpush1.msra.mxu0 %v940
    %1102 = vmatprep.subr.mxu0 %v945
    %1103 = vmatpush1.msra.mxu0 %v944
    %1104 = vmatprep.subr.mxu0 %v949
    %1105 = vmatpush1.msra.mxu0 %v948
    %1106 = vmatprep.subr.mxu0 %v953
    %1107 = vmatpush1.msra.mxu0 %v952
    %1108 = vmatprep.subr.mxu0 %v957
    %1109 = vmatpush1.msra.mxu0 %v956
    %1110 = vmatprep.subr.mxu0 %v961
    %1111 = vmatpush1.msra.mxu0 %v960
    %1112 = vmatprep.subr.mxu0 %v965
    %1113 = vmatpush1.msra.mxu0 %v964
    %1114 = vmatprep.subr.mxu0 %v969
    %1115 = vmatpush1.msra.mxu0 %v968
    %1116 = vmatprep.mubr.f32.mxu0 %v72
    %1117 = vmatmul.mubr.f32.gmra.mrb[0].mxu0 %v71
    %v1118 = vpop.f32.mrb[0].mxu0
    %v1119 = vadd.f32 0.0, %v1118
    %v1120 = vpop.f32.mrb[0].mxu0
    %v1121 = vadd.f32 0.0, %v1120
    %1122 = vmatprep.mubr.f32.mxu0 %v75
    %1123 = vmatmul.mubr.f32.gmra.mrb[0].mxu0 %v74
    %v1124 = vpop.f32.mrb[0].mxu0
    %v1125 = vadd.f32 0.0, %v1124
    %v1126 = vpop.f32.mrb[0].mxu0
    %v1127 = vadd.f32 0.0, %v1126
    %1128 = vmatprep.mubr.f32.mxu0 %v78
    %1129 = vmatmul.mubr.f32.gmra.mrb[0].mxu0 %v77
    %v1130 = vpop.f32.mrb[0].mxu0
    %v1131 = vadd.f32 0.0, %v1130
    %v1132 = vpop.f32.mrb[0].mxu0
    %v1133 = vadd.f32 0.0, %v1132
    %1134 = vmatprep.mubr.f32.mxu0 %v81
    %1135 = vmatmul.mubr.f32.gmra.mrb[0].mxu0 %v80
    %v1136 = vpop.f32.mrb[0].mxu0
    %v1137 = vadd.f32 0.0, %v1136
    %v1138 = vpop.f32.mrb[0].mxu0
    %v1139 = vadd.f32 0.0, %v1138
    %1140 = vmatprep.mubr.f32.mxu0 %v84
    %1141 = vmatmul.mubr.f32.gmra.mrb[0].mxu0 %v83
    %v1142 = vpop.f32.mrb[0].mxu0
    %v1143 = vadd.f32 0.0, %v1142
    %v1144 = vpop.f32.mrb[0].mxu0
    %v1145 = vadd.f32 0.0, %v1144
    %1146 = vmatprep.mubr.f32.mxu0 %v87
    %1147 = vmatmul.mubr.f32.gmra.mrb[0].mxu0 %v86
    %v1148 = vpop.f32.mrb[0].mxu0
    %v1149 = vadd.f32 0.0, %v1148
    %v1150 = vpop.f32.mrb[0].mxu0
    %v1151 = vadd.f32 0.0, %v1150
    %1152 = vdwg.mxu0
    %1153 = vmatprep.subr.mxu0 %v973
    %1154 = vmatpush1.msra.mxu0 %v972
    %1155 = vmatprep.subr.mxu0 %v977
    %1156 = vmatpush1.msra.mxu0 %v976
    %1157 = vmatprep.subr.mxu0 %v981
    %1158 = vmatpush1.msra.mxu0 %v980
    %1159 = vmatprep.subr.mxu0 %v985
    %1160 = vmatpush1.msra.mxu0 %v984
    %1161 = vmatprep.subr.mxu0 %v989
    %1162 = vmatpush1.msra.mxu0 %v988
    %1163 = vmatprep.subr.mxu0 %v993
    %1164 = vmatpush1.msra.mxu0 %v992
    %1165 = vmatprep.subr.mxu0 %v997
    %1166 = vmatpush1.msra.mxu0 %v996
    %1167 = vmatprep.subr.mxu0 %v1001
    %1168 = vmatpush1.msra.mxu0 %v1000
    %1169 = vmatprep.subr.mxu0 %v1005
    %1170 = vmatpush1.msra.mxu0 %v1004
    %1171 = vmatprep.subr.mxu0 %v1009
    %1172 = vmatpush1.msra.mxu0 %v1008
    %1173 = vmatprep.subr.mxu0 %v1013
    %1174 = vmatpush1.msra.mxu0 %v1012
    %1175 = vmatprep.subr.mxu0 %v1044
    %1176 = vmatpush1.msra.mxu0 %v1041
    %1177 = vmatprep.subr.mxu0 0.0
    %1178 = vmatpush1.msra.mxu0 0.0
    %1179 = vmatprep.subr.mxu0 0.0
    %1180 = vmatpush1.msra.mxu0 0.0
    %1181 = vmatprep.subr.mxu0 0.0
    %1182 = vmatpush1.msra.mxu0 0.0
    %1183 = vmatprep.subr.mxu0 0.0
    %1184 = vmatpush1.msra.mxu0 0.0
    %1185 = vmatprep.subr.mxu0 0.0
    %1186 = vmatpush1.msra.mxu0 0.0
    %1187 = vmatprep.subr.mxu0 0.0
    %1188 = vmatpush1.msra.mxu0 0.0
    %1189 = vmatprep.subr.mxu0 0.0
    %1190 = vmatpush1.msra.mxu0 0.0
    %1191 = vmatprep.subr.mxu0 0.0
    %1192 = vmatpush1.msra.mxu0 0.0
    %1193 = vmatprep.subr.mxu0 0.0
    %1194 = vmatpush1.msra.mxu0 0.0
    %1195 = vmatprep.subr.mxu0 0.0
    %1196 = vmatpush1.msra.mxu0 0.0
    %1197 = vmatprep.subr.mxu0 0.0
    %1198 = vmatpush1.msra.mxu0 0.0
    %1199 = vmatprep.subr.mxu0 0.0
    %1200 = vmatpush1.msra.mxu0 0.0
    %1201 = vmatprep.subr.mxu0 0.0
    %1202 = vmatpush1.msra.mxu0 0.0
    %1203 = vmatprep.subr.mxu0 0.0
    %1204 = vmatpush1.msra.mxu0 0.0
    %1205 = vmatprep.subr.mxu0 0.0
    %1206 = vmatpush1.msra.mxu0 0.0
    %1207 = vmatprep.subr.mxu0 0.0
    %1208 = vmatpush1.msra.mxu0 0.0
    %1209 = vmatprep.subr.mxu0 0.0
    %1210 = vmatpush1.msra.mxu0 0.0
    %1211 = vmatprep.subr.mxu0 0.0
    %1212 = vmatpush1.msra.mxu0 0.0
    %1213 = vmatprep.subr.mxu0 0.0
    %1214 = vmatpush1.msra.mxu0 0.0
    %1215 = vmatprep.subr.mxu0 0.0
    %1216 = vmatpush1.msra.mxu0 0.0
    %1217 = vmatprep.mubr.f32.mxu0 0.0
    %1218 = vmatmul.mubr.f32.gmra.mrb[0].mxu0 %v1022
    %v1219 = vpop.f32.mrb[0].mxu0
    %v1220 = vadd.f32 %v1119, %v1219
    %v1221 = vpop.f32.mrb[0].mxu0
    %v1222 = vadd.f32 %v1121, %v1221
    %1223 = vmatprep.mubr.f32.mxu0 0.0
    %1224 = vmatmul.mubr.f32.gmra.mrb[0].mxu0 %v1025
    %v1225 = vpop.f32.mrb[0].mxu0
    %v1226 = vadd.f32 %v1125, %v1225
    %v1227 = vpop.f32.mrb[0].mxu0
    %v1228 = vadd.f32 %v1127, %v1227
    %1229 = vmatprep.mubr.f32.mxu0 0.0
    %1230 = vmatmul.mubr.f32.gmra.mrb[0].mxu0 %v1028
    %v1231 = vpop.f32.mrb[0].mxu0
    %v1232 = vadd.f32 %v1131, %v1231
    %v1233 = vpop.f32.mrb[0].mxu0
    %v1234 = vadd.f32 %v1133, %v1233
    %1235 = vmatprep.mubr.f32.mxu0 0.0
    %1236 = vmatmul.mubr.f32.gmra.mrb[0].mxu0 %v1031
    %v1237 = vpop.f32.mrb[0].mxu0
    %v1238 = vadd.f32 %v1137, %v1237
    %v1239 = vpop.f32.mrb[0].mxu0
    %v1240 = vadd.f32 %v1139, %v1239
    %1241 = vmatprep.mubr.f32.mxu0 0.0
    %1242 = vmatmul.mubr.f32.gmra.mrb[0].mxu0 %v1034
    %v1243 = vpop.f32.mrb[0].mxu0
    %v1244 = vadd.f32 %v1143, %v1243
    %v1245 = vpop.f32.mrb[0].mxu0
    %v1246 = vadd.f32 %v1145, %v1245
    %1247 = vmatprep.mubr.f32.mxu0 0.0
    %1248 = vmatmul.mubr.f32.gmra.mrb[0].mxu0 %v1037
    %v1249 = vpop.f32.mrb[0].mxu0
    %v1250 = vadd.f32 %v1149, %v1249
    %v1251 = vpop.f32.mrb[0].mxu0
    %v1252 = vadd.f32 %v1151, %v1251
    %1253 = vdwg.mxu0
    %1254 = vmatprep.subr.mxu0 %v847
    %1255 = vmatpush1.msra.mxu0 %v846
    %1256 = vmatprep.subr.mxu0 %v851
    %1257 = vmatpush1.msra.mxu0 %v850
    %1258 = vmatprep.subr.mxu0 %v855
    %1259 = vmatpush1.msra.mxu0 %v854
    %1260 = vmatprep.subr.mxu0 %v859
    %1261 = vmatpush1.msra.mxu0 %v858
    %1262 = vmatprep.subr.mxu0 %v863
    %1263 = vmatpush1.msra.mxu0 %v862
    %1264 = vmatprep.subr.mxu0 %v867
    %1265 = vmatpush1.msra.mxu0 %v866
    %1266 = vmatprep.subr.mxu0 %v871
    %1267 = vmatpush1.msra.mxu0 %v870
    %1268 = vmatprep.subr.mxu0 %v875
    %1269 = vmatpush1.msra.mxu0 %v874
    %1270 = vmatprep.subr.mxu0 %v879
    %1271 = vmatpush1.msra.mxu0 %v878
    %1272 = vmatprep.subr.mxu0 %v883
    %1273 = vmatpush1.msra.mxu0 %v882
    %1274 = vmatprep.subr.mxu0 %v887
    %1275 = vmatpush1.msra.mxu0 %v886
    %1276 = vmatprep.subr.mxu0 %v891
    %1277 = vmatpush1.msra.mxu0 %v890
    %1278 = vmatprep.subr.mxu0 %v895
    %1279 = vmatpush1.msra.mxu0 %v894
    %1280 = vmatprep.subr.mxu0 %v899
    %1281 = vmatpush1.msra.mxu0 %v898
    %1282 = vmatprep.subr.mxu0 %v903
    %1283 = vmatpush1.msra.mxu0 %v902
    %1284 = vmatprep.subr.mxu0 %v907
    %1285 = vmatpush1.msra.mxu0 %v906
    %1286 = vmatprep.subr.mxu0 %v911
    %1287 = vmatpush1.msra.mxu0 %v910
    %1288 = vmatprep.subr.mxu0 %v915
    %1289 = vmatpush1.msra.mxu0 %v914
    %1290 = vmatprep.subr.mxu0 %v919
    %1291 = vmatpush1.msra.mxu0 %v918
    %1292 = vmatprep.subr.mxu0 %v923
    %1293 = vmatpush1.msra.mxu0 %v922
    %1294 = vmatprep.subr.mxu0 %v927
    %1295 = vmatpush1.msra.mxu0 %v926
    %1296 = vmatprep.subr.mxu0 %v931
    %1297 = vmatpush1.msra.mxu0 %v930
    %1298 = vmatprep.subr.mxu0 %v935
    %1299 = vmatpush1.msra.mxu0 %v934
    %1300 = vmatprep.subr.mxu0 %v939
    %1301 = vmatpush1.msra.mxu0 %v938
    %1302 = vmatprep.subr.mxu0 %v943
    %1303 = vmatpush1.msra.mxu0 %v942
    %1304 = vmatprep.subr.mxu0 %v947
    %1305 = vmatpush1.msra.mxu0 %v946
    %1306 = vmatprep.subr.mxu0 %v951
    %1307 = vmatpush1.msra.mxu0 %v950
    %1308 = vmatprep.subr.mxu0 %v955
    %1309 = vmatpush1.msra.mxu0 %v954
    %1310 = vmatprep.subr.mxu0 %v959
    %1311 = vmatpush1.msra.mxu0 %v958
    %1312 = vmatprep.subr.mxu0 %v963
    %1313 = vmatpush1.msra.mxu0 %v962
    %1314 = vmatprep.subr.mxu0 %v967
    %1315 = vmatpush1.msra.mxu0 %v966
    %1316 = vmatprep.subr.mxu0 %v971
    %1317 = vmatpush1.msra.mxu0 %v970
    %1318 = vmatprep.mubr.f32.mxu0 %v72
    %1319 = vmatmul.mubr.f32.gmra.mrb[0].mxu0 %v71
    %v1320 = vpop.f32.mrb[0].mxu0
    %v1321 = vadd.f32 0.0, %v1320
    %v1322 = vpop.f32.mrb[0].mxu0
    %v1323 = vadd.f32 0.0, %v1322
    %1324 = vmatprep.mubr.f32.mxu0 %v75
    %1325 = vmatmul.mubr.f32.gmra.mrb[0].mxu0 %v74
    %v1326 = vpop.f32.mrb[0].mxu0
    %v1327 = vadd.f32 0.0, %v1326
    %v1328 = vpop.f32.mrb[0].mxu0
    %v1329 = vadd.f32 0.0, %v1328
    %1330 = vmatprep.mubr.f32.mxu0 %v78
    %1331 = vmatmul.mubr.f32.gmra.mrb[0].mxu0 %v77
    %v1332 = vpop.f32.mrb[0].mxu0
    %v1333 = vadd.f32 0.0, %v1332
    %v1334 = vpop.f32.mrb[0].mxu0
    %v1335 = vadd.f32 0.0, %v1334
    %1336 = vmatprep.mubr.f32.mxu0 %v81
    %1337 = vmatmul.mubr.f32.gmra.mrb[0].mxu0 %v80
    %v1338 = vpop.f32.mrb[0].mxu0
    %v1339 = vadd.f32 0.0, %v1338
    %v1340 = vpop.f32.mrb[0].mxu0
    %v1341 = vadd.f32 0.0, %v1340
    %1342 = vmatprep.mubr.f32.mxu0 %v84
    %1343 = vmatmul.mubr.f32.gmra.mrb[0].mxu0 %v83
    %v1344 = vpop.f32.mrb[0].mxu0
    %v1345 = vadd.f32 0.0, %v1344
    %v1346 = vpop.f32.mrb[0].mxu0
    %v1347 = vadd.f32 0.0, %v1346
    %1348 = vmatprep.mubr.f32.mxu0 %v87
    %1349 = vmatmul.mubr.f32.gmra.mrb[0].mxu0 %v86
    %v1350 = vpop.f32.mrb[0].mxu0
    %v1351 = vadd.f32 0.0, %v1350
    %v1352 = vpop.f32.mrb[0].mxu0
    %v1353 = vadd.f32 0.0, %v1352
    %1354 = vdwg.mxu0
    %1355 = vmatprep.subr.mxu0 %v975
    %1356 = vmatpush1.msra.mxu0 %v974
    %1357 = vmatprep.subr.mxu0 %v979
    %1358 = vmatpush1.msra.mxu0 %v978
    %1359 = vmatprep.subr.mxu0 %v983
    %1360 = vmatpush1.msra.mxu0 %v982
    %1361 = vmatprep.subr.mxu0 %v987
    %1362 = vmatpush1.msra.mxu0 %v986
    %1363 = vmatprep.subr.mxu0 %v991
    %1364 = vmatpush1.msra.mxu0 %v990
    %1365 = vmatprep.subr.mxu0 %v995
    %1366 = vmatpush1.msra.mxu0 %v994
    %1367 = vmatprep.subr.mxu0 %v999
    %1368 = vmatpush1.msra.mxu0 %v998
    %1369 = vmatprep.subr.mxu0 %v1003
    %1370 = vmatpush1.msra.mxu0 %v1002
    %1371 = vmatprep.subr.mxu0 %v1007
    %1372 = vmatpush1.msra.mxu0 %v1006
    %1373 = vmatprep.subr.mxu0 %v1011
    %1374 = vmatpush1.msra.mxu0 %v1010
    %1375 = vmatprep.subr.mxu0 %v1015
    %1376 = vmatpush1.msra.mxu0 %v1014
    %1377 = vmatprep.subr.mxu0 %v1050
    %1378 = vmatpush1.msra.mxu0 %v1047
    %1379 = vmatprep.subr.mxu0 0.0
    %1380 = vmatpush1.msra.mxu0 0.0
    %1381 = vmatprep.subr.mxu0 0.0
    %1382 = vmatpush1.msra.mxu0 0.0
    %1383 = vmatprep.subr.mxu0 0.0
    %1384 = vmatpush1.msra.mxu0 0.0
    %1385 = vmatprep.subr.mxu0 0.0
    %1386 = vmatpush1.msra.mxu0 0.0
    %1387 = vmatprep.subr.mxu0 0.0
    %1388 = vmatpush1.msra.mxu0 0.0
    %1389 = vmatprep.subr.mxu0 0.0
    %1390 = vmatpush1.msra.mxu0 0.0
    %1391 = vmatprep.subr.mxu0 0.0
    %1392 = vmatpush1.msra.mxu0 0.0
    %1393 = vmatprep.subr.mxu0 0.0
    %1394 = vmatpush1.msra.mxu0 0.0
    %1395 = vmatprep.subr.mxu0 0.0
    %1396 = vmatpush1.msra.mxu0 0.0
    %1397 = vmatprep.subr.mxu0 0.0
    %1398 = vmatpush1.msra.mxu0 0.0
    %1399 = vmatprep.subr.mxu0 0.0
    %1400 = vmatpush1.msra.mxu0 0.0
    %1401 = vmatprep.subr.mxu0 0.0
    %1402 = vmatpush1.msra.mxu0 0.0
    %1403 = vmatprep.subr.mxu0 0.0
    %1404 = vmatpush1.msra.mxu0 0.0
    %1405 = vmatprep.subr.mxu0 0.0
    %1406 = vmatpush1.msra.mxu0 0.0
    %1407 = vmatprep.subr.mxu0 0.0
    %1408 = vmatpush1.msra.mxu0 0.0
    %1409 = vmatprep.subr.mxu0 0.0
    %1410 = vmatpush1.msra.mxu0 0.0
    %1411 = vmatprep.subr.mxu0 0.0
    %1412 = vmatpush1.msra.mxu0 0.0
    %1413 = vmatprep.subr.mxu0 0.0
    %1414 = vmatpush1.msra.mxu0 0.0
    %1415 = vmatprep.subr.mxu0 0.0
    %1416 = vmatpush1.msra.mxu0 0.0
    %1417 = vmatprep.subr.mxu0 0.0
    %1418 = vmatpush1.msra.mxu0 0.0
    %1419 = vmatprep.mubr.f32.mxu0 0.0
    %1420 = vmatmul.mubr.f32.gmra.mrb[0].mxu0 %v1022
    %v1421 = vpop.f32.mrb[0].mxu0
    %v1422 = vadd.f32 %v1321, %v1421
    %v1423 = vpop.f32.mrb[0].mxu0
    %v1424 = vadd.f32 %v1323, %v1423
    %1425 = vmatprep.mubr.f32.mxu0 0.0
    %1426 = vmatmul.mubr.f32.gmra.mrb[0].mxu0 %v1025
    %v1427 = vpop.f32.mrb[0].mxu0
    %v1428 = vadd.f32 %v1327, %v1427
    %v1429 = vpop.f32.mrb[0].mxu0
    %v1430 = vadd.f32 %v1329, %v1429
    %1431 = vmatprep.mubr.f32.mxu0 0.0
    %1432 = vmatmul.mubr.f32.gmra.mrb[0].mxu0 %v1028
    %v1433 = vpop.f32.mrb[0].mxu0
    %v1434 = vadd.f32 %v1333, %v1433
    %v1435 = vpop.f32.mrb[0].mxu0
    %v1436 = vadd.f32 %v1335, %v1435
    %1437 = vmatprep.mubr.f32.mxu0 0.0
    %1438 = vmatmul.mubr.f32.gmra.mrb[0].mxu0 %v1031
    %v1439 = vpop.f32.mrb[0].mxu0
    %v1440 = vadd.f32 %v1339, %v1439
    %v1441 = vpop.f32.mrb[0].mxu0
    %v1442 = vadd.f32 %v1341, %v1441
    %1443 = vmatprep.mubr.f32.mxu0 0.0
    %1444 = vmatmul.mubr.f32.gmra.mrb[0].mxu0 %v1034
    %v1445 = vpop.f32.mrb[0].mxu0
    %v1446 = vadd.f32 %v1345, %v1445
    %v1447 = vpop.f32.mrb[0].mxu0
    %v1448 = vadd.f32 %v1347, %v1447
    %1449 = vmatprep.mubr.f32.mxu0 0.0
    %1450 = vmatmul.mubr.f32.gmra.mrb[0].mxu0 %v1037
    %v1451 = vpop.f32.mrb[0].mxu0
    %v1452 = vadd.f32 %v1351, %v1451
    %v1453 = vpop.f32.mrb[0].mxu0
    %v1454 = vadd.f32 %v1353, %v1453
    %1455 = vdwg.mxu0
    %v1456 = vadd.f32 %v709, %v1220
    %v1457 = vadd.f32 %v711, %v1222
    %v1458 = vadd.f32 %v810, %v1422
    %v1459 = vadd.f32 %v812, %v1424
    %v1460 = vadd.f32 %v715, %v1226
    %v1461 = vadd.f32 %v717, %v1228
    %v1462 = vadd.f32 %v816, %v1428
    %v1463 = vadd.f32 %v818, %v1430
    %v1464 = vadd.f32 %v721, %v1232
    %v1465 = vadd.f32 %v723, %v1234
    %v1466 = vadd.f32 %v822, %v1434
    %v1467 = vadd.f32 %v824, %v1436
    %v1468 = vadd.f32 %v727, %v1238
    %v1469 = vadd.f32 %v729, %v1240
    %v1470 = vadd.f32 %v828, %v1440
    %v1471 = vadd.f32 %v830, %v1442
    %v1472 = vadd.f32 %v733, %v1244
    %v1473 = vadd.f32 %v735, %v1246
    %v1474 = vadd.f32 %v834, %v1446
    %v1475 = vadd.f32 %v836, %v1448
    %v1476 = vadd.f32 %v739, %v1250
    %v1477 = vadd.f32 %v741, %v1252
    %v1478 = vadd.f32 %v840, %v1452
    %v1479 = vadd.f32 %v842, %v1454
    %v1480 = vld [vmem:[%s8] sm:$0xf]
    %v1482 = vlaneseq
    %v1483 = vshrl.u32 %v1482, 7
    %v1484 = vsub.s32 0, %v1483
    %v1485 = vrot.slane %v1480, %v1484
    %v1486 = vlaneseq
    %v1487 = vshrl.u32 %v1486, 7
    %v1488 = vsub.s32 1, %v1487
    %v1489 = vrot.slane %v1480, %v1488
    %v1490 = vlaneseq
    %v1491 = vshrl.u32 %v1490, 7
    %v1492 = vsub.s32 2, %v1491
    %v1493 = vrot.slane %v1480, %v1492
    %v1494 = vlaneseq
    %v1495 = vshrl.u32 %v1494, 7
    %v1496 = vsub.s32 3, %v1495
    %v1497 = vrot.slane %v1480, %v1496
    %v1502 = vadd.f32 %v1456, %v1485
    %v1503 = vadd.f32 %v1457, %v1489
    %v1504 = vadd.f32 %v1458, %v1493
    %v1505 = vadd.f32 %v1459, %v1497
    %v1506 = vadd.f32 %v1460, %v1485
    %v1507 = vadd.f32 %v1461, %v1489
    %v1508 = vadd.f32 %v1462, %v1493
    %v1509 = vadd.f32 %v1463, %v1497
    %v1510 = vadd.f32 %v1464, %v1485
    %v1511 = vadd.f32 %v1465, %v1489
    %v1512 = vadd.f32 %v1466, %v1493
    %v1513 = vadd.f32 %v1467, %v1497
    %v1514 = vadd.f32 %v1468, %v1485
    %v1515 = vadd.f32 %v1469, %v1489
    %v1516 = vadd.f32 %v1470, %v1493
    %v1517 = vadd.f32 %v1471, %v1497
    %v1518 = vadd.f32 %v1472, %v1485
    %v1519 = vadd.f32 %v1473, %v1489
    %v1520 = vadd.f32 %v1474, %v1493
    %v1521 = vadd.f32 %v1475, %v1497
    %v1522 = vadd.f32 %v1476, %v1485
    %v1523 = vadd.f32 %v1477, %v1489
    %v1524 = vadd.f32 %v1478, %v1493
    %v1525 = vadd.f32 %v1479, %v1497
    %vm1526 = vcmp.gt.f32.partialorder %v1504, 0.0
    %vm1527 = vcmp.gt.f32.partialorder %v1505, 0.0
    %vm1528 = vcmp.gt.f32.partialorder %v1508, 0.0
    %vm1529 = vcmp.gt.f32.partialorder %v1509, 0.0
    %vm1530 = vcmp.gt.f32.partialorder %v1512, 0.0
    %vm1531 = vcmp.gt.f32.partialorder %v1513, 0.0
    %vm1532 = vcmp.gt.f32.partialorder %v1516, 0.0
    %vm1533 = vcmp.gt.f32.partialorder %v1517, 0.0
    %vm1534 = vcmp.gt.f32.partialorder %v1520, 0.0
    %vm1535 = vcmp.gt.f32.partialorder %v1521, 0.0
    %vm1536 = vcmp.gt.f32.partialorder %v1524, 0.0
    %vm1537 = vcmp.gt.f32.partialorder %v1525, 0.0
    %v1538 = vmul.f32 %v1504, 1.442695
    %v1539 = vpow.pop %v1538
    %v1540 = vmul.f32 %v1505, 1.442695
    %v1541 = vpow.pop %v1540
    %v1542 = vmul.f32 %v1508, 1.442695
    %v1543 = vpow.pop %v1542
    %v1544 = vmul.f32 %v1509, 1.442695
    %v1545 = vpow.pop %v1544
    %v1546 = vmul.f32 %v1512, 1.442695
    %v1547 = vpow.pop %v1546
    %v1548 = vmul.f32 %v1513, 1.442695
    %v1549 = vpow.pop %v1548
    %v1550 = vmul.f32 %v1516, 1.442695
    %v1551 = vpow.pop %v1550
    %v1552 = vmul.f32 %v1517, 1.442695
    %v1553 = vpow.pop %v1552
    %v1554 = vmul.f32 %v1520, 1.442695
    %v1555 = vpow.pop %v1554
    %v1556 = vmul.f32 %v1521, 1.442695
    %v1557 = vpow.pop %v1556
    %v1558 = vmul.f32 %v1524, 1.442695
    %v1559 = vpow.pop %v1558
    %v1560 = vmul.f32 %v1525, 1.442695
    %v1561 = vpow.pop %v1560
    %v1562 = vsub.f32 %v1539, 1.0
    %v1563 = vsub.f32 %v1541, 1.0
    %v1564 = vsub.f32 %v1543, 1.0
    %v1565 = vsub.f32 %v1545, 1.0
    %v1566 = vsub.f32 %v1547, 1.0
    %v1567 = vsub.f32 %v1549, 1.0
    %v1568 = vsub.f32 %v1551, 1.0
    %v1569 = vsub.f32 %v1553, 1.0
    %v1570 = vsub.f32 %v1555, 1.0
    %v1571 = vsub.f32 %v1557, 1.0
    %v1572 = vsub.f32 %v1559, 1.0
    %v1573 = vsub.f32 %v1561, 1.0
    %v1574 = vsel %vm1526, %v1504, %v1562
    %v1575 = vsel %vm1527, %v1505, %v1563
    %v1576 = vsel %vm1528, %v1508, %v1564
    %v1577 = vsel %vm1529, %v1509, %v1565
    %v1578 = vsel %vm1530, %v1512, %v1566
    %v1579 = vsel %vm1531, %v1513, %v1567
    %v1580 = vsel %vm1532, %v1516, %v1568
    %v1581 = vsel %vm1533, %v1517, %v1569
    %v1582 = vsel %vm1534, %v1520, %v1570
    %v1583 = vsel %vm1535, %v1521, %v1571
    %v1584 = vsel %vm1536, %v1524, %v1572
    %v1585 = vsel %vm1537, %v1525, %v1573
    %vm1586 = vcmask 392192
    %v1588 = vsel %vm1586, %v101, 0
    %v1591 = vsel %vm1586, %v102, 0
    %1593 = vmatprep.subr.mxu0 %v1503
    %1594 = vmatpush1.msra.mxu0 %v1502
    %1595 = vmatprep.subr.mxu0 %v1507
    %1596 = vmatpush1.msra.mxu0 %v1506
    %1597 = vmatprep.subr.mxu0 %v1511
    %1598 = vmatpush1.msra.mxu0 %v1510
    %1599 = vmatprep.subr.mxu0 %v1515
    %1600 = vmatpush1.msra.mxu0 %v1514
    %1601 = vmatprep.subr.mxu0 %v1519
    %1602 = vmatpush1.msra.mxu0 %v1518
    %1603 = vmatprep.subr.mxu0 %v1523
    %1604 = vmatpush1.msra.mxu0 %v1522
    %1605 = vmatprep.subr.mxu0 0.0
    %1606 = vmatpush1.msra.mxu0 0.0
    %1607 = vmatprep.subr.mxu0 0.0
    %1608 = vmatpush1.msra.mxu0 0.0
    %1609 = vmatprep.subr.mxu0 0.0
    %1610 = vmatpush1.msra.mxu0 0.0
    %1611 = vmatprep.subr.mxu0 0.0
    %1612 = vmatpush1.msra.mxu0 0.0
    %1613 = vmatprep.subr.mxu0 0.0
    %1614 = vmatpush1.msra.mxu0 0.0
    %1615 = vmatprep.subr.mxu0 0.0
    %1616 = vmatpush1.msra.mxu0 0.0
    %1617 = vmatprep.subr.mxu0 0.0
    %1618 = vmatpush1.msra.mxu0 0.0
    %1619 = vmatprep.subr.mxu0 0.0
    %1620 = vmatpush1.msra.mxu0 0.0
    %1621 = vmatprep.subr.mxu0 0.0
    %1622 = vmatpush1.msra.mxu0 0.0
    %1623 = vmatprep.subr.mxu0 0.0
    %1624 = vmatpush1.msra.mxu0 0.0
    %1625 = vmatprep.subr.mxu0 0.0
    %1626 = vmatpush1.msra.mxu0 0.0
    %1627 = vmatprep.subr.mxu0 0.0
    %1628 = vmatpush1.msra.mxu0 0.0
    %1629 = vmatprep.subr.mxu0 0.0
    %1630 = vmatpush1.msra.mxu0 0.0
    %1631 = vmatprep.subr.mxu0 0.0
    %1632 = vmatpush1.msra.mxu0 0.0
    %1633 = vmatprep.subr.mxu0 0.0
    %1634 = vmatpush1.msra.mxu0 0.0
    %1635 = vmatprep.subr.mxu0 0.0
    %1636 = vmatpush1.msra.mxu0 0.0
    %1637 = vmatprep.subr.mxu0 0.0
    %1638 = vmatpush1.msra.mxu0 0.0
    %1639 = vmatprep.subr.mxu0 0.0
    %1640 = vmatpush1.msra.mxu0 0.0
    %1641 = vmatprep.subr.mxu0 0.0
    %1642 = vmatpush1.msra.mxu0 0.0
    %1643 = vmatprep.subr.mxu0 0.0
    %1644 = vmatpush1.msra.mxu0 0.0
    %1645 = vmatprep.subr.mxu0 0.0
    %1646 = vmatpush1.msra.mxu0 0.0
    %1647 = vmatprep.subr.mxu0 0.0
    %1648 = vmatpush1.msra.mxu0 0.0
    %1649 = vmatprep.subr.mxu0 0.0
    %1650 = vmatpush1.msra.mxu0 0.0
    %1651 = vmatprep.subr.mxu0 0.0
    %1652 = vmatpush1.msra.mxu0 0.0
    %1653 = vmatprep.subr.mxu0 0.0
    %1654 = vmatpush1.msra.mxu0 0.0
    %1655 = vmatprep.subr.mxu0 0.0
    %1656 = vmatpush1.msra.mxu0 0.0
    %1657 = vmatprep.mubr.f32.mxu0 0.0
    %1658 = vmatmul.mubr.f32.gmra.mrb[0].mxu0 %v1588
    %v1659 = vpop.f32.mrb[0].mxu0
    %v1660 = vadd.f32 0.0, %v1659
    %v1661 = vpop.f32.mrb[0].mxu0
    %v1662 = vadd.f32 0.0, %v1661
    %1663 = vmatprep.mubr.f32.mxu0 0.0
    %1664 = vmatmul.mubr.f32.gmra.mrb[0].mxu0 %v1591
    %v1665 = vpop.f32.mrb[0].mxu0
    %v1666 = vadd.f32 0.0, %v1665
    %v1667 = vpop.f32.mrb[0].mxu0
    %v1668 = vadd.f32 0.0, %v1667
    %1669 = vdwg.mxu0
    %v1670 = vld [vmem:[%s9] sm:$0x3]
    %v1671 = vld [vmem:[%s10] sm:$0x3]
    %v1672 = vadd.f32 %v1660, %v1666
    %v1673 = vrot.slane %v1672, 4
    %v1674 = vadd.f32 %v1672, %v1673
    %v1675 = vrot.slane %v1674, 2
    %v1676 = vadd.f32 %v1674, %v1675
    %v1677 = vrot.slane %v1676, 1
    %v1678 = vadd.f32 %v1676, %v1677
    %vm1679 = vcmask 998400
    %v1680 = vsel %vm1679, %v1662, 0.0
    %v1681 = vsel %vm1679, %v1668, 0.0
    %v1682 = vadd.f32 %v1680, %v1681
    %v1683 = vrot.slane %v1682, 4
    %v1684 = vadd.f32 %v1682, %v1683
    %v1685 = vrot.slane %v1684, 2
    %v1686 = vadd.f32 %v1684, %v1685
    %v1687 = vrot.slane %v1686, 1
    %v1688 = vadd.f32 %v1686, %v1687
    %v1689 = vrcp.pop 16.0
    %v1690 = vmul.f32 %v1678, %v1689
    %v1691 = vmul.f32 %v1688, %v1689
    %v1692 = vsub.f32 %v1660, %v1690
    %v1693 = vsub.f32 %v1662, %v1691
    %v1694 = vsub.f32 %v1666, %v1690
    %v1695 = vsub.f32 %v1668, %v1691
    %v1696 = vmul.f32 %v1692, %v1692
    %v1697 = vmul.f32 %v1693, %v1693
    %v1698 = vmul.f32 %v1694, %v1694
    %v1699 = vmul.f32 %v1695, %v1695
    %v1700 = vadd.f32 %v1696, %v1698
    %v1701 = vrot.slane %v1700, 4
    %v1702 = vadd.f32 %v1700, %v1701
    %v1703 = vrot.slane %v1702, 2
    %v1704 = vadd.f32 %v1702, %v1703
    %v1705 = vrot.slane %v1704, 1
    %v1706 = vadd.f32 %v1704, %v1705
    %v1707 = vsel %vm1679, %v1697, 0.0
    %v1708 = vsel %vm1679, %v1699, 0.0
    %v1709 = vadd.f32 %v1707, %v1708
    %v1710 = vrot.slane %v1709, 4
    %v1711 = vadd.f32 %v1709, %v1710
    %v1712 = vrot.slane %v1711, 2
    %v1713 = vadd.f32 %v1711, %v1712
    %v1714 = vrot.slane %v1713, 1
    %v1715 = vadd.f32 %v1713, %v1714
    %v1716 = vmul.f32 %v1706, %v1689
    %v1717 = vmul.f32 %v1715, %v1689
    %v1718 = vadd.f32 %v1716, 1e-05
    %v1719 = vadd.f32 %v1717, 1e-05
    %v1720 = vrsqrt.pop %v1718
    %v1721 = vrsqrt.pop %v1719
    %v1722 = vmul.f32 %v1692, %v1720
    %v1723 = vmul.f32 %v1693, %v1721
    %v1724 = vmul.f32 %v1694, %v1720
    %v1725 = vmul.f32 %v1695, %v1721
    %v1727 = vlaneseq
    %v1728 = vshrl.u32 %v1727, 7
    %v1729 = vsub.s32 0, %v1728
    %v1730 = vrot.slane %v1670, %v1729
    %v1731 = vlaneseq
    %v1732 = vshrl.u32 %v1731, 7
    %v1733 = vsub.s32 1, %v1732
    %v1734 = vrot.slane %v1670, %v1733
    %v1737 = vmul.f32 %v1722, %v1730
    %v1738 = vmul.f32 %v1723, %v1734
    %v1739 = vmul.f32 %v1724, %v1730
    %v1740 = vmul.f32 %v1725, %v1734
    %v1742 = vlaneseq
    %v1743 = vshrl.u32 %v1742, 7
    %v1744 = vsub.s32 0, %v1743
    %v1745 = vrot.slane %v1671, %v1744
    %v1746 = vlaneseq
    %v1747 = vshrl.u32 %v1746, 7
    %v1748 = vsub.s32 1, %v1747
    %v1749 = vrot.slane %v1671, %v1748
    %v1752 = vadd.f32 %v1737, %v1745
    %v1753 = vadd.f32 %v1738, %v1749
    %v1754 = vadd.f32 %v1739, %v1745
    %v1755 = vadd.f32 %v1740, %v1749
    %vm1756 = vcmp.gt.f32.partialorder %v1752, 0.0
    %vm1757 = vcmp.gt.f32.partialorder %v1753, 0.0
    %vm1758 = vcmp.gt.f32.partialorder %v1754, 0.0
    %vm1759 = vcmp.gt.f32.partialorder %v1755, 0.0
    %v1760 = vmul.f32 %v1752, 1.442695
    %v1761 = vpow.pop %v1760
    %v1762 = vmul.f32 %v1753, 1.442695
    %v1763 = vpow.pop %v1762
    %v1764 = vmul.f32 %v1754, 1.442695
    %v1765 = vpow.pop %v1764
    %v1766 = vmul.f32 %v1755, 1.442695
    %v1767 = vpow.pop %v1766
    %v1768 = vsub.f32 %v1761, 1.0
    %v1769 = vsub.f32 %v1763, 1.0
    %v1770 = vsub.f32 %v1765, 1.0
    %v1771 = vsub.f32 %v1767, 1.0
    %v1772 = vsel %vm1756, %v1752, %v1768
    %v1773 = vsel %vm1757, %v1753, %v1769
    %v1774 = vsel %vm1758, %v1754, %v1770
    %v1775 = vsel %vm1759, %v1755, %v1771
    %v1776 = vld [vmem:[%s11] sm:$0xff]
    %v1777 = vld [vmem:[%s11 + $0x8] sm:$0xff]
    %v1778 = vld [vmem:[%s11 + $0x10] sm:$0xff]
    %v1779 = vld [vmem:[%s11 + $0x18] sm:$0xff]
    %v1780 = vld [vmem:[%s11 + $0x20] sm:$0xff]
    %v1781 = vld [vmem:[%s11 + $0x28] sm:$0xff]
    %v1782 = vld [vmem:[%s11 + $0x30] sm:$0x3]
    %v1783 = vld [vmem:[%s12] sm:$0xff]
    %v1784 = vld [vmem:[%s12 + $0x8] sm:$0xff]
    %v1785 = vld [vmem:[%s12 + $0x10] sm:$0xff]
    %v1786 = vld [vmem:[%s12 + $0x18] sm:$0xff]
    %v1787 = vld [vmem:[%s12 + $0x20] sm:$0xff]
    %v1788 = vld [vmem:[%s12 + $0x28] sm:$0xff]
    %v1789 = vld [vmem:[%s12 + $0x30] sm:$0x3]
    %v1790 = vld [vmem:[%s13] sm:$0xff]
    %v1791 = vld [vmem:[%s13 + $0x8] sm:$0xff]
    %v1792 = vld [vmem:[%s13 + $0x10] sm:$0xff]
    %v1793 = vld [vmem:[%s13 + $0x18] sm:$0xff]
    %v1794 = vld [vmem:[%s13 + $0x20] sm:$0xff]
    %v1795 = vld [vmem:[%s13 + $0x28] sm:$0xff]
    %v1796 = vld [vmem:[%s13 + $0x30] sm:$0x3]
    %v1797 = vld [vmem:[%s14] sm:$0x1]
    %v1798 = vld [vmem:[%s15] sm:$0x1]
    %v1799 = vld [vmem:[%s16] sm:$0x1]
    %1802 = vrot.lane.b32.xlu0 %v1772, 78
    %v1803 = vpop.permute.xlu0 %1802
    %1804 = vrot.lane.b32.xlu0 %v1774, 78
    %v1805 = vpop.permute.xlu0 %1804
    %1808 = vmatprep.subr.mxu0 0.0
    %1809 = vmatpush1.msra.mxu0 %v1803
    %1810 = vmatprep.subr.mxu0 0.0
    %1811 = vmatpush1.msra.mxu0 %v1805
    %1812 = vmatprep.subr.mxu0 0.0
    %1813 = vmatpush1.msra.mxu0 0.0
    %1814 = vmatprep.subr.mxu0 0.0
    %1815 = vmatpush1.msra.mxu0 0.0
    %1816 = vmatprep.subr.mxu0 0.0
    %1817 = vmatpush1.msra.mxu0 0.0
    %1818 = vmatprep.subr.mxu0 0.0
    %1819 = vmatpush1.msra.mxu0 0.0
    %1820 = vmatprep.subr.mxu0 0.0
    %1821 = vmatpush1.msra.mxu0 0.0
    %1822 = vmatprep.subr.mxu0 0.0
    %1823 = vmatpush1.msra.mxu0 0.0
    %1824 = vmatprep.subr.mxu0 0.0
    %1825 = vmatpush1.msra.mxu0 0.0
    %1826 = vmatprep.subr.mxu0 0.0
    %1827 = vmatpush1.msra.mxu0 0.0
    %1828 = vmatprep.subr.mxu0 0.0
    %1829 = vmatpush1.msra.mxu0 0.0
    %1830 = vmatprep.subr.mxu0 0.0
    %1831 = vmatpush1.msra.mxu0 0.0
    %1832 = vmatprep.subr.mxu0 0.0
    %1833 = vmatpush1.msra.mxu0 0.0
    %1834 = vmatprep.subr.mxu0 0.0
    %1835 = vmatpush1.msra.mxu0 0.0
    %1836 = vmatprep.subr.mxu0 0.0
    %1837 = vmatpush1.msra.mxu0 0.0
    %1838 = vmatprep.subr.mxu0 0.0
    %1839 = vmatpush1.msra.mxu0 0.0
    %1840 = vmatprep.subr.mxu0 0.0
    %1841 = vmatpush1.msra.mxu0 0.0
    %1842 = vmatprep.subr.mxu0 0.0
    %1843 = vmatpush1.msra.mxu0 0.0
    %1844 = vmatprep.subr.mxu0 0.0
    %1845 = vmatpush1.msra.mxu0 0.0
    %1846 = vmatprep.subr.mxu0 0.0
    %1847 = vmatpush1.msra.mxu0 0.0
    %1848 = vmatprep.subr.mxu0 0.0
    %1849 = vmatpush1.msra.mxu0 0.0
    %1850 = vmatprep.subr.mxu0 0.0
    %1851 = vmatpush1.msra.mxu0 0.0
    %1852 = vmatprep.subr.mxu0 0.0
    %1853 = vmatpush1.msra.mxu0 0.0
    %1854 = vmatprep.subr.mxu0 0.0
    %1855 = vmatpush1.msra.mxu0 0.0
    %1856 = vmatprep.subr.mxu0 0.0
    %1857 = vmatpush1.msra.mxu0 0.0
    %1858 = vmatprep.subr.mxu0 0.0
    %1859 = vmatpush1.msra.mxu0 0.0
    %1860 = vmatprep.subr.mxu0 0.0
    %1861 = vmatpush1.msra.mxu0 0.0
    %1862 = vmatprep.subr.mxu0 0.0
    %1863 = vmatpush1.msra.mxu0 0.0
    %1864 = vmatprep.subr.mxu0 0.0
    %1865 = vmatpush1.msra.mxu0 0.0
    %1866 = vmatprep.subr.mxu0 0.0
    %1867 = vmatpush1.msra.mxu0 0.0
    %1868 = vmatprep.subr.mxu0 0.0
    %1869 = vmatpush1.msra.mxu0 0.0
    %1870 = vmatprep.subr.mxu0 0.0
    %1871 = vmatpush1.msra.mxu0 0.0
    %1872 = vmatprep.mubr.f32.mxu0 0.0
    %1873 = vmatmul.mubr.f32.gmra.mrb[0].mxu0 %v105
    %v1874 = vpop.f32.mrb[0].mxu0
    %v1875 = vadd.f32 0.0, %v1874
    %v1876 = vpop.f32.mrb[0].mxu0
    %1877 = vmatprep.mubr.f32.mxu0 0.0
    %1878 = vmatmul.mubr.f32.gmra.mrb[0].mxu0 %v108
    %v1879 = vpop.f32.mrb[0].mxu0
    %v1880 = vadd.f32 0.0, %v1879
    %v1881 = vpop.f32.mrb[0].mxu0
    %1882 = vmatprep.mubr.f32.mxu0 0.0
    %1883 = vmatmul.mubr.f32.gmra.mrb[0].mxu0 %v111
    %v1884 = vpop.f32.mrb[0].mxu0
    %v1885 = vadd.f32 0.0, %v1884
    %v1886 = vpop.f32.mrb[0].mxu0
    %1887 = vmatprep.mubr.f32.mxu0 0.0
    %1888 = vmatmul.mubr.f32.gmra.mrb[0].mxu0 %v114
    %v1889 = vpop.f32.mrb[0].mxu0
    %v1890 = vadd.f32 0.0, %v1889
    %v1891 = vpop.f32.mrb[0].mxu0
    %1892 = vmatprep.mubr.f32.mxu0 0.0
    %1893 = vmatmul.mubr.f32.gmra.mrb[0].mxu0 %v117
    %v1894 = vpop.f32.mrb[0].mxu0
    %v1895 = vadd.f32 0.0, %v1894
    %v1896 = vpop.f32.mrb[0].mxu0
    %1897 = vmatprep.mubr.f32.mxu0 0.0
    %1898 = vmatmul.mubr.f32.gmra.mrb[0].mxu0 %v120
    %v1899 = vpop.f32.mrb[0].mxu0
    %v1900 = vadd.f32 0.0, %v1899
    %v1901 = vpop.f32.mrb[0].mxu0
    %1902 = vdwg.mxu0
    %1903 = vmatprep.subr.mxu0 0.0
    %1904 = vmatpush1.msra.mxu0 %v1803
    %1905 = vmatprep.subr.mxu0 0.0
    %1906 = vmatpush1.msra.mxu0 %v1805
    %1907 = vmatprep.subr.mxu0 0.0
    %1908 = vmatpush1.msra.mxu0 0.0
    %1909 = vmatprep.subr.mxu0 0.0
    %1910 = vmatpush1.msra.mxu0 0.0
    %1911 = vmatprep.subr.mxu0 0.0
    %1912 = vmatpush1.msra.mxu0 0.0
    %1913 = vmatprep.subr.mxu0 0.0
    %1914 = vmatpush1.msra.mxu0 0.0
    %1915 = vmatprep.subr.mxu0 0.0
    %1916 = vmatpush1.msra.mxu0 0.0
    %1917 = vmatprep.subr.mxu0 0.0
    %1918 = vmatpush1.msra.mxu0 0.0
    %1919 = vmatprep.subr.mxu0 0.0
    %1920 = vmatpush1.msra.mxu0 0.0
    %1921 = vmatprep.subr.mxu0 0.0
    %1922 = vmatpush1.msra.mxu0 0.0
    %1923 = vmatprep.subr.mxu0 0.0
    %1924 = vmatpush1.msra.mxu0 0.0
    %1925 = vmatprep.subr.mxu0 0.0
    %1926 = vmatpush1.msra.mxu0 0.0
    %1927 = vmatprep.subr.mxu0 0.0
    %1928 = vmatpush1.msra.mxu0 0.0
    %1929 = vmatprep.subr.mxu0 0.0
    %1930 = vmatpush1.msra.mxu0 0.0
    %1931 = vmatprep.subr.mxu0 0.0
    %1932 = vmatpush1.msra.mxu0 0.0
    %1933 = vmatprep.subr.mxu0 0.0
    %1934 = vmatpush1.msra.mxu0 0.0
    %1935 = vmatprep.subr.mxu0 0.0
    %1936 = vmatpush1.msra.mxu0 0.0
    %1937 = vmatprep.subr.mxu0 0.0
    %1938 = vmatpush1.msra.mxu0 0.0
    %1939 = vmatprep.subr.mxu0 0.0
    %1940 = vmatpush1.msra.mxu0 0.0
    %1941 = vmatprep.subr.mxu0 0.0
    %1942 = vmatpush1.msra.mxu0 0.0
    %1943 = vmatprep.subr.mxu0 0.0
    %1944 = vmatpush1.msra.mxu0 0.0
    %1945 = vmatprep.subr.mxu0 0.0
    %1946 = vmatpush1.msra.mxu0 0.0
    %1947 = vmatprep.subr.mxu0 0.0
    %1948 = vmatpush1.msra.mxu0 0.0
    %1949 = vmatprep.subr.mxu0 0.0
    %1950 = vmatpush1.msra.mxu0 0.0
    %1951 = vmatprep.subr.mxu0 0.0
    %1952 = vmatpush1.msra.mxu0 0.0
    %1953 = vmatprep.subr.mxu0 0.0
    %1954 = vmatpush1.msra.mxu0 0.0
    %1955 = vmatprep.subr.mxu0 0.0
    %1956 = vmatpush1.msra.mxu0 0.0
    %1957 = vmatprep.subr.mxu0 0.0
    %1958 = vmatpush1.msra.mxu0 0.0
    %1959 = vmatprep.subr.mxu0 0.0
    %1960 = vmatpush1.msra.mxu0 0.0
    %1961 = vmatprep.subr.mxu0 0.0
    %1962 = vmatpush1.msra.mxu0 0.0
    %1963 = vmatprep.subr.mxu0 0.0
    %1964 = vmatpush1.msra.mxu0 0.0
    %1965 = vmatprep.subr.mxu0 0.0
    %1966 = vmatpush1.msra.mxu0 0.0
    %1967 = vmatprep.mubr.f32.mxu0 0.0
    %1968 = vmatmul.mubr.f32.gmra.mrb[0].mxu0 %v218
    %v1969 = vpop.f32.mrb[0].mxu0
    %v1970 = vadd.f32 0.0, %v1969
    %v1971 = vpop.f32.mrb[0].mxu0
    %1972 = vmatprep.mubr.f32.mxu0 0.0
    %1973 = vmatmul.mubr.f32.gmra.mrb[0].mxu0 %v221
    %v1974 = vpop.f32.mrb[0].mxu0
    %v1975 = vadd.f32 0.0, %v1974
    %v1976 = vpop.f32.mrb[0].mxu0
    %1977 = vmatprep.mubr.f32.mxu0 0.0
    %1978 = vmatmul.mubr.f32.gmra.mrb[0].mxu0 %v224
    %v1979 = vpop.f32.mrb[0].mxu0
    %v1980 = vadd.f32 0.0, %v1979
    %v1981 = vpop.f32.mrb[0].mxu0
    %1982 = vmatprep.mubr.f32.mxu0 0.0
    %1983 = vmatmul.mubr.f32.gmra.mrb[0].mxu0 %v227
    %v1984 = vpop.f32.mrb[0].mxu0
    %v1985 = vadd.f32 0.0, %v1984
    %v1986 = vpop.f32.mrb[0].mxu0
    %1987 = vmatprep.mubr.f32.mxu0 0.0
    %1988 = vmatmul.mubr.f32.gmra.mrb[0].mxu0 %v230
    %v1989 = vpop.f32.mrb[0].mxu0
    %v1990 = vadd.f32 0.0, %v1989
    %v1991 = vpop.f32.mrb[0].mxu0
    %1992 = vmatprep.mubr.f32.mxu0 0.0
    %1993 = vmatmul.mubr.f32.gmra.mrb[0].mxu0 %v233
    %v1994 = vpop.f32.mrb[0].mxu0
    %v1995 = vadd.f32 0.0, %v1994
    %v1996 = vpop.f32.mrb[0].mxu0
    %1997 = vdwg.mxu0
    %vm1998 = vcmask 408576
    %v2000 = vsel %vm1998, %v1970, 0
    %v2003 = vsel %vm1998, %v1975, 0
    %v2006 = vsel %vm1998, %v1980, 0
    %v2009 = vsel %vm1998, %v1985, 0
    %v2012 = vsel %vm1998, %v1990, 0
    %v2015 = vsel %vm1998, %v1995, 0
    %vm2017 = vcmask 1041408
    %v2019 = vsel %vm2017, %v1789, 0
    %2021 = vmatprep.subr.mxu0 0.0
    %2022 = vmatpush1.msra.mxu0 %v1783
    %2023 = vmatprep.subr.mxu0 0.0
    %2024 = vmatpush1.msra.mxu0 %v1784
    %2025 = vmatprep.subr.mxu0 0.0
    %2026 = vmatpush1.msra.mxu0 %v1785
    %2027 = vmatprep.subr.mxu0 0.0
    %2028 = vmatpush1.msra.mxu0 %v1786
    %2029 = vmatprep.subr.mxu0 0.0
    %2030 = vmatpush1.msra.mxu0 %v1787
    %2031 = vmatprep.subr.mxu0 0.0
    %2032 = vmatpush1.msra.mxu0 %v1788
    %2033 = vmatprep.subr.mxu0 0.0
    %2034 = vmatpush1.msra.mxu0 %v2019
    %2035 = vmatprep.subr.mxu0 0.0
    %2036 = vmatpush1.msra.mxu0 0.0
    %2037 = vmatprep.subr.mxu0 0.0
    %2038 = vmatpush1.msra.mxu0 0.0
    %2039 = vmatprep.subr.mxu0 0.0
    %2040 = vmatpush1.msra.mxu0 0.0
    %2041 = vmatprep.subr.mxu0 0.0
    %2042 = vmatpush1.msra.mxu0 0.0
    %2043 = vmatprep.subr.mxu0 0.0
    %2044 = vmatpush1.msra.mxu0 0.0
    %2045 = vmatprep.subr.mxu0 0.0
    %2046 = vmatpush1.msra.mxu0 0.0
    %2047 = vmatprep.subr.mxu0 0.0
    %2048 = vmatpush1.msra.mxu0 0.0
    %2049 = vmatprep.subr.mxu0 0.0
    %2050 = vmatpush1.msra.mxu0 0.0
    %2051 = vmatprep.subr.mxu0 0.0
    %2052 = vmatpush1.msra.mxu0 0.0
    %2053 = vmatprep.subr.mxu0 0.0
    %2054 = vmatpush1.msra.mxu0 0.0
    %2055 = vmatprep.subr.mxu0 0.0
    %2056 = vmatpush1.msra.mxu0 0.0
    %2057 = vmatprep.subr.mxu0 0.0
    %2058 = vmatpush1.msra.mxu0 0.0
    %2059 = vmatprep.subr.mxu0 0.0
    %2060 = vmatpush1.msra.mxu0 0.0
    %2061 = vmatprep.subr.mxu0 0.0
    %2062 = vmatpush1.msra.mxu0 0.0
    %2063 = vmatprep.subr.mxu0 0.0
    %2064 = vmatpush1.msra.mxu0 0.0
    %2065 = vmatprep.subr.mxu0 0.0
    %2066 = vmatpush1.msra.mxu0 0.0
    %2067 = vmatprep.subr.mxu0 0.0
    %2068 = vmatpush1.msra.mxu0 0.0
    %2069 = vmatprep.subr.mxu0 0.0
    %2070 = vmatpush1.msra.mxu0 0.0
    %2071 = vmatprep.subr.mxu0 0.0
    %2072 = vmatpush1.msra.mxu0 0.0
    %2073 = vmatprep.subr.mxu0 0.0
    %2074 = vmatpush1.msra.mxu0 0.0
    %2075 = vmatprep.subr.mxu0 0.0
    %2076 = vmatpush1.msra.mxu0 0.0
    %2077 = vmatprep.subr.mxu0 0.0
    %2078 = vmatpush1.msra.mxu0 0.0
    %2079 = vmatprep.subr.mxu0 0.0
    %2080 = vmatpush1.msra.mxu0 0.0
    %2081 = vmatprep.subr.mxu0 0.0
    %2082 = vmatpush1.msra.mxu0 0.0
    %2083 = vmatprep.subr.mxu0 0.0
    %2084 = vmatpush1.msra.mxu0 0.0
    %2085 = vmatprep.mubr.f32.mxu0 0.0
    %2086 = vmatmul.mubr.f32.gmra.mrb[0].mxu0 %v2000
    %v2087 = vpop.f32.mrb[0].mxu0
    %v2088 = vadd.f32 0.0, %v2087
    %v2089 = vpop.f32.mrb[0].mxu0
    %2090 = vmatprep.mubr.f32.mxu0 0.0
    %2091 = vmatmul.mubr.f32.gmra.mrb[0].mxu0 %v2003
    %v2092 = vpop.f32.mrb[0].mxu0
    %v2093 = vadd.f32 0.0, %v2092
    %v2094 = vpop.f32.mrb[0].mxu0
    %2095 = vmatprep.mubr.f32.mxu0 0.0
    %2096 = vmatmul.mubr.f32.gmra.mrb[0].mxu0 %v2006
    %v2097 = vpop.f32.mrb[0].mxu0
    %v2098 = vadd.f32 0.0, %v2097
    %v2099 = vpop.f32.mrb[0].mxu0
    %2100 = vmatprep.mubr.f32.mxu0 0.0
    %2101 = vmatmul.mubr.f32.gmra.mrb[0].mxu0 %v2009
    %v2102 = vpop.f32.mrb[0].mxu0
    %v2103 = vadd.f32 0.0, %v2102
    %v2104 = vpop.f32.mrb[0].mxu0
    %2105 = vmatprep.mubr.f32.mxu0 0.0
    %2106 = vmatmul.mubr.f32.gmra.mrb[0].mxu0 %v2012
    %v2107 = vpop.f32.mrb[0].mxu0
    %v2108 = vadd.f32 0.0, %v2107
    %v2109 = vpop.f32.mrb[0].mxu0
    %2110 = vmatprep.mubr.f32.mxu0 0.0
    %2111 = vmatmul.mubr.f32.gmra.mrb[0].mxu0 %v2015
    %v2112 = vpop.f32.mrb[0].mxu0
    %v2113 = vadd.f32 0.0, %v2112
    %v2114 = vpop.f32.mrb[0].mxu0
    %2115 = vdwg.mxu0
    %v2117 = vsel %vm1998, %v1875, 0
    %v2120 = vsel %vm1998, %v1880, 0
    %v2123 = vsel %vm1998, %v1885, 0
    %v2126 = vsel %vm1998, %v1890, 0
    %v2129 = vsel %vm1998, %v1895, 0
    %v2132 = vsel %vm1998, %v1900, 0
    %v2135 = vsel %vm2017, %v1782, 0
    %2137 = vmatprep.subr.mxu0 0.0
    %2138 = vmatpush1.msra.mxu0 %v1776
    %2139 = vmatprep.subr.mxu0 0.0
    %2140 = vmatpush1.msra.mxu0 %v1777
    %2141 = vmatprep.subr.mxu0 0.0
    %2142 = vmatpush1.msra.mxu0 %v1778
    %2143 = vmatprep.subr.mxu0 0.0
    %2144 = vmatpush1.msra.mxu0 %v1779
    %2145 = vmatprep.subr.mxu0 0.0
    %2146 = vmatpush1.msra.mxu0 %v1780
    %2147 = vmatprep.subr.mxu0 0.0
    %2148 = vmatpush1.msra.mxu0 %v1781
    %2149 = vmatprep.subr.mxu0 0.0
    %2150 = vmatpush1.msra.mxu0 %v2135
    %2151 = vmatprep.subr.mxu0 0.0
    %2152 = vmatpush1.msra.mxu0 0.0
    %2153 = vmatprep.subr.mxu0 0.0
    %2154 = vmatpush1.msra.mxu0 0.0
    %2155 = vmatprep.subr.mxu0 0.0
    %2156 = vmatpush1.msra.mxu0 0.0
    %2157 = vmatprep.subr.mxu0 0.0
    %2158 = vmatpush1.msra.mxu0 0.0
    %2159 = vmatprep.subr.mxu0 0.0
    %2160 = vmatpush1.msra.mxu0 0.0
    %2161 = vmatprep.subr.mxu0 0.0
    %2162 = vmatpush1.msra.mxu0 0.0
    %2163 = vmatprep.subr.mxu0 0.0
    %2164 = vmatpush1.msra.mxu0 0.0
    %2165 = vmatprep.subr.mxu0 0.0
    %2166 = vmatpush1.msra.mxu0 0.0
    %2167 = vmatprep.subr.mxu0 0.0
    %2168 = vmatpush1.msra.mxu0 0.0
    %2169 = vmatprep.subr.mxu0 0.0
    %2170 = vmatpush1.msra.mxu0 0.0
    %2171 = vmatprep.subr.mxu0 0.0
    %2172 = vmatpush1.msra.mxu0 0.0
    %2173 = vmatprep.subr.mxu0 0.0
    %2174 = vmatpush1.msra.mxu0 0.0
    %2175 = vmatprep.subr.mxu0 0.0
    %2176 = vmatpush1.msra.mxu0 0.0
    %2177 = vmatprep.subr.mxu0 0.0
    %2178 = vmatpush1.msra.mxu0 0.0
    %2179 = vmatprep.subr.mxu0 0.0
    %2180 = vmatpush1.msra.mxu0 0.0
    %2181 = vmatprep.subr.mxu0 0.0
    %2182 = vmatpush1.msra.mxu0 0.0
    %2183 = vmatprep.subr.mxu0 0.0
    %2184 = vmatpush1.msra.mxu0 0.0
    %2185 = vmatprep.subr.mxu0 0.0
    %2186 = vmatpush1.msra.mxu0 0.0
    %2187 = vmatprep.subr.mxu0 0.0
    %2188 = vmatpush1.msra.mxu0 0.0
    %2189 = vmatprep.subr.mxu0 0.0
    %2190 = vmatpush1.msra.mxu0 0.0
    %2191 = vmatprep.subr.mxu0 0.0
    %2192 = vmatpush1.msra.mxu0 0.0
    %2193 = vmatprep.subr.mxu0 0.0
    %2194 = vmatpush1.msra.mxu0 0.0
    %2195 = vmatprep.subr.mxu0 0.0
    %2196 = vmatpush1.msra.mxu0 0.0
    %2197 = vmatprep.subr.mxu0 0.0
    %2198 = vmatpush1.msra.mxu0 0.0
    %2199 = vmatprep.subr.mxu0 0.0
    %2200 = vmatpush1.msra.mxu0 0.0
    %2201 = vmatprep.mubr.f32.mxu0 0.0
    %2202 = vmatmul.mubr.f32.gmra.mrb[0].mxu0 %v2117
    %v2203 = vpop.f32.mrb[0].mxu0
    %v2204 = vadd.f32 %v2088, %v2203
    %v2205 = vpop.f32.mrb[0].mxu0
    %2206 = vmatprep.mubr.f32.mxu0 0.0
    %2207 = vmatmul.mubr.f32.gmra.mrb[0].mxu0 %v2120
    %v2208 = vpop.f32.mrb[0].mxu0
    %v2209 = vadd.f32 %v2093, %v2208
    %v2210 = vpop.f32.mrb[0].mxu0
    %2211 = vmatprep.mubr.f32.mxu0 0.0
    %2212 = vmatmul.mubr.f32.gmra.mrb[0].mxu0 %v2123
    %v2213 = vpop.f32.mrb[0].mxu0
    %v2214 = vadd.f32 %v2098, %v2213
    %v2215 = vpop.f32.mrb[0].mxu0
    %2216 = vmatprep.mubr.f32.mxu0 0.0
    %2217 = vmatmul.mubr.f32.gmra.mrb[0].mxu0 %v2126
    %v2218 = vpop.f32.mrb[0].mxu0
    %v2219 = vadd.f32 %v2103, %v2218
    %v2220 = vpop.f32.mrb[0].mxu0
    %2221 = vmatprep.mubr.f32.mxu0 0.0
    %2222 = vmatmul.mubr.f32.gmra.mrb[0].mxu0 %v2129
    %v2223 = vpop.f32.mrb[0].mxu0
    %v2224 = vadd.f32 %v2108, %v2223
    %v2225 = vpop.f32.mrb[0].mxu0
    %2226 = vmatprep.mubr.f32.mxu0 0.0
    %2227 = vmatmul.mubr.f32.gmra.mrb[0].mxu0 %v2132
    %v2228 = vpop.f32.mrb[0].mxu0
    %v2229 = vadd.f32 %v2113, %v2228
    %v2230 = vpop.f32.mrb[0].mxu0
    %2231 = vdwg.mxu0
    %2238 = vrot.lane.b32.xlu0 %v1574, 84
    %v2239 = vpop.permute.xlu0 %2238
    %2240 = vrot.lane.b32.xlu0 %v1576, 84
    %v2241 = vpop.permute.xlu0 %2240
    %2242 = vrot.lane.b32.xlu0 %v1578, 84
    %v2243 = vpop.permute.xlu0 %2242
    %2244 = vrot.lane.b32.xlu0 %v1580, 84
    %v2245 = vpop.permute.xlu0 %2244
    %2246 = vrot.lane.b32.xlu0 %v1582, 84
    %v2247 = vpop.permute.xlu0 %2246
    %2248 = vrot.lane.b32.xlu0 %v1584, 84
    %v2249 = vpop.permute.xlu0 %2248
    %v2250 = vsel %vm1998, %v2239, 0
    %v2252 = vsel %vm1998, %v2241, 0
    %v2254 = vsel %vm1998, %v2243, 0
    %v2256 = vsel %vm1998, %v2245, 0
    %v2258 = vsel %vm1998, %v2247, 0
    %v2260 = vsel %vm1998, %v2249, 0
    %v2263 = vsel %vm2017, %v1796, 0
    %2265 = vmatprep.subr.mxu0 0.0
    %2266 = vmatpush1.msra.mxu0 %v1790
    %2267 = vmatprep.subr.mxu0 0.0
    %2268 = vmatpush1.msra.mxu0 %v1791
    %2269 = vmatprep.subr.mxu0 0.0
    %2270 = vmatpush1.msra.mxu0 %v1792
    %2271 = vmatprep.subr.mxu0 0.0
    %2272 = vmatpush1.msra.mxu0 %v1793
    %2273 = vmatprep.subr.mxu0 0.0
    %2274 = vmatpush1.msra.mxu0 %v1794
    %2275 = vmatprep.subr.mxu0 0.0
    %2276 = vmatpush1.msra.mxu0 %v1795
    %2277 = vmatprep.subr.mxu0 0.0
    %2278 = vmatpush1.msra.mxu0 %v2263
    %2279 = vmatprep.subr.mxu0 0.0
    %2280 = vmatpush1.msra.mxu0 0.0
    %2281 = vmatprep.subr.mxu0 0.0
    %2282 = vmatpush1.msra.mxu0 0.0
    %2283 = vmatprep.subr.mxu0 0.0
    %2284 = vmatpush1.msra.mxu0 0.0
    %2285 = vmatprep.subr.mxu0 0.0
    %2286 = vmatpush1.msra.mxu0 0.0
    %2287 = vmatprep.subr.mxu0 0.0
    %2288 = vmatpush1.msra.mxu0 0.0
    %2289 = vmatprep.subr.mxu0 0.0
    %2290 = vmatpush1.msra.mxu0 0.0
    %2291 = vmatprep.subr.mxu0 0.0
    %2292 = vmatpush1.msra.mxu0 0.0
    %2293 = vmatprep.subr.mxu0 0.0
    %2294 = vmatpush1.msra.mxu0 0.0
    %2295 = vmatprep.subr.mxu0 0.0
    %2296 = vmatpush1.msra.mxu0 0.0
    %2297 = vmatprep.subr.mxu0 0.0
    %2298 = vmatpush1.msra.mxu0 0.0
    %2299 = vmatprep.subr.mxu0 0.0
    %2300 = vmatpush1.msra.mxu0 0.0
    %2301 = vmatprep.subr.mxu0 0.0
    %2302 = vmatpush1.msra.mxu0 0.0
    %2303 = vmatprep.subr.mxu0 0.0
    %2304 = vmatpush1.msra.mxu0 0.0
    %2305 = vmatprep.subr.mxu0 0.0
    %2306 = vmatpush1.msra.mxu0 0.0
    %2307 = vmatprep.subr.mxu0 0.0
    %2308 = vmatpush1.msra.mxu0 0.0
    %2309 = vmatprep.subr.mxu0 0.0
    %2310 = vmatpush1.msra.mxu0 0.0
    %2311 = vmatprep.subr.mxu0 0.0
    %2312 = vmatpush1.msra.mxu0 0.0
    %2313 = vmatprep.subr.mxu0 0.0
    %2314 = vmatpush1.msra.mxu0 0.0
    %2315 = vmatprep.subr.mxu0 0.0
    %2316 = vmatpush1.msra.mxu0 0.0
    %2317 = vmatprep.subr.mxu0 0.0
    %2318 = vmatpush1.msra.mxu0 0.0
    %2319 = vmatprep.subr.mxu0 0.0
    %2320 = vmatpush1.msra.mxu0 0.0
    %2321 = vmatprep.subr.mxu0 0.0
    %2322 = vmatpush1.msra.mxu0 0.0
    %2323 = vmatprep.subr.mxu0 0.0
    %2324 = vmatpush1.msra.mxu0 0.0
    %2325 = vmatprep.subr.mxu0 0.0
    %2326 = vmatpush1.msra.mxu0 0.0
    %2327 = vmatprep.subr.mxu0 0.0
    %2328 = vmatpush1.msra.mxu0 0.0
    %2329 = vmatprep.mubr.f32.mxu0 0.0
    %2330 = vmatmul.mubr.f32.gmra.mrb[0].mxu0 %v2250
    %v2331 = vpop.f32.mrb[0].mxu0
    %v2332 = vadd.f32 0.0, %v2331
    %v2333 = vpop.f32.mrb[0].mxu0
    %2334 = vmatprep.mubr.f32.mxu0 0.0
    %2335 = vmatmul.mubr.f32.gmra.mrb[0].mxu0 %v2252
    %v2336 = vpop.f32.mrb[0].mxu0
    %v2337 = vadd.f32 0.0, %v2336
    %v2338 = vpop.f32.mrb[0].mxu0
    %2339 = vmatprep.mubr.f32.mxu0 0.0
    %2340 = vmatmul.mubr.f32.gmra.mrb[0].mxu0 %v2254
    %v2341 = vpop.f32.mrb[0].mxu0
    %v2342 = vadd.f32 0.0, %v2341
    %v2343 = vpop.f32.mrb[0].mxu0
    %2344 = vmatprep.mubr.f32.mxu0 0.0
    %2345 = vmatmul.mubr.f32.gmra.mrb[0].mxu0 %v2256
    %v2346 = vpop.f32.mrb[0].mxu0
    %v2347 = vadd.f32 0.0, %v2346
    %v2348 = vpop.f32.mrb[0].mxu0
    %2349 = vmatprep.mubr.f32.mxu0 0.0
    %2350 = vmatmul.mubr.f32.gmra.mrb[0].mxu0 %v2258
    %v2351 = vpop.f32.mrb[0].mxu0
    %v2352 = vadd.f32 0.0, %v2351
    %v2353 = vpop.f32.mrb[0].mxu0
    %2354 = vmatprep.mubr.f32.mxu0 0.0
    %2355 = vmatmul.mubr.f32.gmra.mrb[0].mxu0 %v2260
    %v2356 = vpop.f32.mrb[0].mxu0
    %v2357 = vadd.f32 0.0, %v2356
    %v2358 = vpop.f32.mrb[0].mxu0
    %2359 = vdwg.mxu0
    %v2360 = vadd.f32 %v2204, %v2332
    %v2361 = vadd.f32 %v2209, %v2337
    %v2362 = vadd.f32 %v2214, %v2342
    %v2363 = vadd.f32 %v2219, %v2347
    %v2364 = vadd.f32 %v2224, %v2352
    %v2365 = vadd.f32 %v2229, %v2357
    %v2366 = vlaneseq
    %v2367 = vshrl.u32 %v2366, 7
    %v2368 = vsub.s32 0, %v2367
    %v2369 = vrot.slane %v1797, %v2368
    %v2370 = vadd.f32 %v2360, %v2369
    %v2371 = vadd.f32 %v2361, %v2369
    %v2372 = vadd.f32 %v2362, %v2369
    %v2373 = vadd.f32 %v2363, %v2369
    %v2374 = vadd.f32 %v2364, %v2369
    %v2375 = vadd.f32 %v2365, %v2369
    %2376 = vmatprep.subr.mxu0 0.0
    %2377 = vmatpush1.msra.mxu0 %v2370
    %2378 = vmatprep.subr.mxu0 0.0
    %2379 = vmatpush1.msra.mxu0 %v2371
    %2380 = vmatprep.subr.mxu0 0.0
    %2381 = vmatpush1.msra.mxu0 %v2372
    %2382 = vmatprep.subr.mxu0 0.0
    %2383 = vmatpush1.msra.mxu0 %v2373
    %2384 = vmatprep.subr.mxu0 0.0
    %2385 = vmatpush1.msra.mxu0 %v2374
    %2386 = vmatprep.subr.mxu0 0.0
    %2387 = vmatpush1.msra.mxu0 %v2375
    %2388 = vmatprep.subr.mxu0 0.0
    %2389 = vmatpush1.msra.mxu0 0.0
    %2390 = vmatprep.subr.mxu0 0.0
    %2391 = vmatpush1.msra.mxu0 0.0
    %2392 = vmatprep.subr.mxu0 0.0
    %2393 = vmatpush1.msra.mxu0 0.0
    %2394 = vmatprep.subr.mxu0 0.0
    %2395 = vmatpush1.msra.mxu0 0.0
    %2396 = vmatprep.subr.mxu0 0.0
    %2397 = vmatpush1.msra.mxu0 0.0
    %2398 = vmatprep.subr.mxu0 0.0
    %2399 = vmatpush1.msra.mxu0 0.0
    %2400 = vmatprep.subr.mxu0 0.0
    %2401 = vmatpush1.msra.mxu0 0.0
    %2402 = vmatprep.subr.mxu0 0.0
    %2403 = vmatpush1.msra.mxu0 0.0
    %2404 = vmatprep.subr.mxu0 0.0
    %2405 = vmatpush1.msra.mxu0 0.0
    %2406 = vmatprep.subr.mxu0 0.0
    %2407 = vmatpush1.msra.mxu0 0.0
    %2408 = vmatprep.subr.mxu0 0.0
    %2409 = vmatpush1.msra.mxu0 0.0
    %2410 = vmatprep.subr.mxu0 0.0
    %2411 = vmatpush1.msra.mxu0 0.0
    %2412 = vmatprep.subr.mxu0 0.0
    %2413 = vmatpush1.msra.mxu0 0.0
    %2414 = vmatprep.subr.mxu0 0.0
    %2415 = vmatpush1.msra.mxu0 0.0
    %2416 = vmatprep.subr.mxu0 0.0
    %2417 = vmatpush1.msra.mxu0 0.0
    %2418 = vmatprep.subr.mxu0 0.0
    %2419 = vmatpush1.msra.mxu0 0.0
    %2420 = vmatprep.subr.mxu0 0.0
    %2421 = vmatpush1.msra.mxu0 0.0
    %2422 = vmatprep.subr.mxu0 0.0
    %2423 = vmatpush1.msra.mxu0 0.0
    %2424 = vmatprep.subr.mxu0 0.0
    %2425 = vmatpush1.msra.mxu0 0.0
    %2426 = vmatprep.subr.mxu0 0.0
    %2427 = vmatpush1.msra.mxu0 0.0
    %2428 = vmatprep.subr.mxu0 0.0
    %2429 = vmatpush1.msra.mxu0 0.0
    %2430 = vmatprep.subr.mxu0 0.0
    %2431 = vmatpush1.msra.mxu0 0.0
    %2432 = vmatprep.subr.mxu0 0.0
    %2433 = vmatpush1.msra.mxu0 0.0
    %2434 = vmatprep.subr.mxu0 0.0
    %2435 = vmatpush1.msra.mxu0 0.0
    %2436 = vmatprep.subr.mxu0 0.0
    %2437 = vmatpush1.msra.mxu0 0.0
    %2438 = vmatprep.subr.mxu0 0.0
    %2439 = vmatpush1.msra.mxu0 0.0
    %2440 = vmatprep.mubr.f32.mxu0 0.0
    %2441 = vmatmul.mubr.f32.gmra.mrb[0].mxu0 %v1588
    %v2442 = vpop.f32.mrb[0].mxu0
    %v2443 = vadd.f32 0.0, %v2442
    %v2444 = vpop.f32.mrb[0].mxu0
    %2445 = vmatprep.mubr.f32.mxu0 0.0
    %2446 = vmatmul.mubr.f32.gmra.mrb[0].mxu0 %v1591
    %v2447 = vpop.f32.mrb[0].mxu0
    %v2448 = vadd.f32 0.0, %v2447
    %v2449 = vpop.f32.mrb[0].mxu0
    %2450 = vdwg.mxu0
    %v2451 = vsel %vm1998, %v2443, 0.0
    %v2452 = vsel %vm1998, %v2448, 0.0
    %v2453 = vadd.f32 %v2451, %v2452
    %v2454 = vrot.slane %v2453, 4
    %v2455 = vadd.f32 %v2453, %v2454
    %v2456 = vrot.slane %v2455, 2
    %v2457 = vadd.f32 %v2455, %v2456
    %v2458 = vrot.slane %v2457, 1
    %v2459 = vadd.f32 %v2457, %v2458
    %v2460 = vmul.f32 %v2459, %v1689
    %v2461 = vsub.f32 %v2443, %v2460
    %v2462 = vsub.f32 %v2448, %v2460
    %v2463 = vmul.f32 %v2461, %v2461
    %v2464 = vmul.f32 %v2462, %v2462
    %v2465 = vsel %vm1998, %v2463, 0.0
    %v2466 = vsel %vm1998, %v2464, 0.0
    %v2467 = vadd.f32 %v2465, %v2466
    %v2468 = vrot.slane %v2467, 4
    %v2469 = vadd.f32 %v2467, %v2468
    %v2470 = vrot.slane %v2469, 2
    %v2471 = vadd.f32 %v2469, %v2470
    %v2472 = vrot.slane %v2471, 1
    %v2473 = vadd.f32 %v2471, %v2472
    %v2474 = vmul.f32 %v2473, %v1689
    %v2475 = vadd.f32 %v2474, 1e-05
    %v2476 = vrsqrt.pop %v2475
    %v2477 = vmul.f32 %v2461, %v2476
    %v2478 = vmul.f32 %v2462, %v2476
    %v2479 = vlaneseq
    %v2480 = vshrl.u32 %v2479, 7
    %v2481 = vsub.s32 0, %v2480
    %v2482 = vrot.slane %v1798, %v2481
    %v2483 = vmul.f32 %v2477, %v2482
    %v2484 = vmul.f32 %v2478, %v2482
    %v2485 = vlaneseq
    %v2486 = vshrl.u32 %v2485, 7
    %v2487 = vsub.s32 0, %v2486
    %v2488 = vrot.slane %v1799, %v2487
    %v2489 = vadd.f32 %v2483, %v2488
    %v2490 = vadd.f32 %v2484, %v2488
    %vm2491 = vcmp.gt.f32.partialorder %v2489, 0.0
    %vm2492 = vcmp.gt.f32.partialorder %v2490, 0.0
    %v2493 = vmul.f32 %v2489, 1.442695
    %v2494 = vpow.pop %v2493
    %v2495 = vmul.f32 %v2490, 1.442695
    %v2496 = vpow.pop %v2495
    %v2497 = vsub.f32 %v2494, 1.0
    %v2498 = vsub.f32 %v2496, 1.0
    %v2499 = vsel %vm2491, %v2489, %v2497
    %v2500 = vsel %vm2492, %v2490, %v2498
    %s2501 = scalar_lea.vmem %s11, 56
    %v2502 = vld [vmem:[%s2501] sm:$0xff]
    %v2503 = vld [vmem:[%s2501 + $0x8] sm:$0xff]
    %v2504 = vld [vmem:[%s2501 + $0x10] sm:$0xff]
    %v2505 = vld [vmem:[%s2501 + $0x18] sm:$0xff]
    %v2506 = vld [vmem:[%s2501 + $0x20] sm:$0xff]
    %v2507 = vld [vmem:[%s2501 + $0x28] sm:$0xff]
    %v2508 = vld [vmem:[%s2501 + $0x30] sm:$0x3]
    %s2509 = scalar_lea.vmem %s12, 56
    %v2510 = vld [vmem:[%s2509] sm:$0xff]
    %v2511 = vld [vmem:[%s2509 + $0x8] sm:$0xff]
    %v2512 = vld [vmem:[%s2509 + $0x10] sm:$0xff]
    %v2513 = vld [vmem:[%s2509 + $0x18] sm:$0xff]
    %v2514 = vld [vmem:[%s2509 + $0x20] sm:$0xff]
    %v2515 = vld [vmem:[%s2509 + $0x28] sm:$0xff]
    %v2516 = vld [vmem:[%s2509 + $0x30] sm:$0x3]
    %s2517 = scalar_lea.vmem %s13, 56
    %v2518 = vld [vmem:[%s2517] sm:$0xff]
    %v2519 = vld [vmem:[%s2517 + $0x8] sm:$0xff]
    %v2520 = vld [vmem:[%s2517 + $0x10] sm:$0xff]
    %v2521 = vld [vmem:[%s2517 + $0x18] sm:$0xff]
    %v2522 = vld [vmem:[%s2517 + $0x20] sm:$0xff]
    %v2523 = vld [vmem:[%s2517 + $0x28] sm:$0xff]
    %v2524 = vld [vmem:[%s2517 + $0x30] sm:$0x3]
    %v2525 = vld [vmem:[%s14 + $0x1] sm:$0x1]
    %v2526 = vld [vmem:[%s15 + $0x1] sm:$0x1]
    %v2527 = vld [vmem:[%s16 + $0x1] sm:$0x1]
    %2530 = vrot.lane.b32.xlu0 %v1772, 28
    %v2531 = vpop.permute.xlu0 %2530
    %2532 = vrot.lane.b32.xlu0 %v1773, 28
    %v2533 = vpop.permute.xlu0 %2532
    %2534 = vrot.lane.b32.xlu0 %v1774, 28
    %v2535 = vpop.permute.xlu0 %2534
    %2536 = vrot.lane.b32.xlu0 %v1775, 28
    %v2537 = vpop.permute.xlu0 %2536
    %vm2538 = vcmask 228352
    %v2539 = vsel %vm2538, %v2531, %v2533
    %v2540 = vsel %vm2538, %v2535, %v2537
    %2543 = vmatprep.subr.mxu0 0.0
    %2544 = vmatpush1.msra.mxu0 %v2539
    %2545 = vmatprep.subr.mxu0 0.0
    %2546 = vmatpush1.msra.mxu0 %v2540
    %2547 = vmatprep.subr.mxu0 0.0
    %2548 = vmatpush1.msra.mxu0 0.0
    %2549 = vmatprep.subr.mxu0 0.0
    %2550 = vmatpush1.msra.mxu0 0.0
    %2551 = vmatprep.subr.mxu0 0.0
    %2552 = vmatpush1.msra.mxu0 0.0
    %2553 = vmatprep.subr.mxu0 0.0
    %2554 = vmatpush1.msra.mxu0 0.0
    %2555 = vmatprep.subr.mxu0 0.0
    %2556 = vmatpush1.msra.mxu0 0.0
    %2557 = vmatprep.subr.mxu0 0.0
    %2558 = vmatpush1.msra.mxu0 0.0
    %2559 = vmatprep.subr.mxu0 0.0
    %2560 = vmatpush1.msra.mxu0 0.0
    %2561 = vmatprep.subr.mxu0 0.0
    %2562 = vmatpush1.msra.mxu0 0.0
    %2563 = vmatprep.subr.mxu0 0.0
    %2564 = vmatpush1.msra.mxu0 0.0
    %2565 = vmatprep.subr.mxu0 0.0
    %2566 = vmatpush1.msra.mxu0 0.0
    %2567 = vmatprep.subr.mxu0 0.0
    %2568 = vmatpush1.msra.mxu0 0.0
    %2569 = vmatprep.subr.mxu0 0.0
    %2570 = vmatpush1.msra.mxu0 0.0
    %2571 = vmatprep.subr.mxu0 0.0
    %2572 = vmatpush1.msra.mxu0 0.0
    %2573 = vmatprep.subr.mxu0 0.0
    %2574 = vmatpush1.msra.mxu0 0.0
    %2575 = vmatprep.subr.mxu0 0.0
    %2576 = vmatpush1.msra.mxu0 0.0
    %2577 = vmatprep.subr.mxu0 0.0
    %2578 = vmatpush1.msra.mxu0 0.0
    %2579 = vmatprep.subr.mxu0 0.0
    %2580 = vmatpush1.msra.mxu0 0.0
    %2581 = vmatprep.subr.mxu0 0.0
    %2582 = vmatpush1.msra.mxu0 0.0
    %2583 = vmatprep.subr.mxu0 0.0
    %2584 = vmatpush1.msra.mxu0 0.0
    %2585 = vmatprep.subr.mxu0 0.0
    %2586 = vmatpush1.msra.mxu0 0.0
    %2587 = vmatprep.subr.mxu0 0.0
    %2588 = vmatpush1.msra.mxu0 0.0
    %2589 = vmatprep.subr.mxu0 0.0
    %2590 = vmatpush1.msra.mxu0 0.0
    %2591 = vmatprep.subr.mxu0 0.0
    %2592 = vmatpush1.msra.mxu0 0.0
    %2593 = vmatprep.subr.mxu0 0.0
    %2594 = vmatpush1.msra.mxu0 0.0
    %2595 = vmatprep.subr.mxu0 0.0
    %2596 = vmatpush1.msra.mxu0 0.0
    %2597 = vmatprep.subr.mxu0 0.0
    %2598 = vmatpush1.msra.mxu0 0.0
    %2599 = vmatprep.subr.mxu0 0.0
    %2600 = vmatpush1.msra.mxu0 0.0
    %2601 = vmatprep.subr.mxu0 0.0
    %2602 = vmatpush1.msra.mxu0 0.0
    %2603 = vmatprep.subr.mxu0 0.0
    %2604 = vmatpush1.msra.mxu0 0.0
    %2605 = vmatprep.subr.mxu0 0.0
    %2606 = vmatpush1.msra.mxu0 0.0
    %2607 = vmatprep.mubr.f32.mxu0 0.0
    %2608 = vmatmul.mubr.f32.gmra.mrb[0].mxu0 %v105
    %v2609 = vpop.f32.mrb[0].mxu0
    %v2610 = vadd.f32 0.0, %v2609
    %v2611 = vpop.f32.mrb[0].mxu0
    %2612 = vmatprep.mubr.f32.mxu0 0.0
    %2613 = vmatmul.mubr.f32.gmra.mrb[0].mxu0 %v108
    %v2614 = vpop.f32.mrb[0].mxu0
    %v2615 = vadd.f32 0.0, %v2614
    %v2616 = vpop.f32.mrb[0].mxu0
    %2617 = vmatprep.mubr.f32.mxu0 0.0
    %2618 = vmatmul.mubr.f32.gmra.mrb[0].mxu0 %v111
    %v2619 = vpop.f32.mrb[0].mxu0
    %v2620 = vadd.f32 0.0, %v2619
    %v2621 = vpop.f32.mrb[0].mxu0
    %2622 = vmatprep.mubr.f32.mxu0 0.0
    %2623 = vmatmul.mubr.f32.gmra.mrb[0].mxu0 %v114
    %v2624 = vpop.f32.mrb[0].mxu0
    %v2625 = vadd.f32 0.0, %v2624
    %v2626 = vpop.f32.mrb[0].mxu0
    %2627 = vmatprep.mubr.f32.mxu0 0.0
    %2628 = vmatmul.mubr.f32.gmra.mrb[0].mxu0 %v117
    %v2629 = vpop.f32.mrb[0].mxu0
    %v2630 = vadd.f32 0.0, %v2629
    %v2631 = vpop.f32.mrb[0].mxu0
    %2632 = vmatprep.mubr.f32.mxu0 0.0
    %2633 = vmatmul.mubr.f32.gmra.mrb[0].mxu0 %v120
    %v2634 = vpop.f32.mrb[0].mxu0
    %v2635 = vadd.f32 0.0, %v2634
    %v2636 = vpop.f32.mrb[0].mxu0
    %2637 = vdwg.mxu0
    %2638 = vmatprep.subr.mxu0 0.0
    %2639 = vmatpush1.msra.mxu0 %v2539
    %2640 = vmatprep.subr.mxu0 0.0
    %2641 = vmatpush1.msra.mxu0 %v2540
    %2642 = vmatprep.subr.mxu0 0.0
    %2643 = vmatpush1.msra.mxu0 0.0
    %2644 = vmatprep.subr.mxu0 0.0
    %2645 = vmatpush1.msra.mxu0 0.0
    %2646 = vmatprep.subr.mxu0 0.0
    %2647 = vmatpush1.msra.mxu0 0.0
    %2648 = vmatprep.subr.mxu0 0.0
    %2649 = vmatpush1.msra.mxu0 0.0
    %2650 = vmatprep.subr.mxu0 0.0
    %2651 = vmatpush1.msra.mxu0 0.0
    %2652 = vmatprep.subr.mxu0 0.0
    %2653 = vmatpush1.msra.mxu0 0.0
    %2654 = vmatprep.subr.mxu0 0.0
    %2655 = vmatpush1.msra.mxu0 0.0
    %2656 = vmatprep.subr.mxu0 0.0
    %2657 = vmatpush1.msra.mxu0 0.0
    %2658 = vmatprep.subr.mxu0 0.0
    %2659 = vmatpush1.msra.mxu0 0.0
    %2660 = vmatprep.subr.mxu0 0.0
    %2661 = vmatpush1.msra.mxu0 0.0
    %2662 = vmatprep.subr.mxu0 0.0
    %2663 = vmatpush1.msra.mxu0 0.0
    %2664 = vmatprep.subr.mxu0 0.0
    %2665 = vmatpush1.msra.mxu0 0.0
    %2666 = vmatprep.subr.mxu0 0.0
    %2667 = vmatpush1.msra.mxu0 0.0
    %2668 = vmatprep.subr.mxu0 0.0
    %2669 = vmatpush1.msra.mxu0 0.0
    %2670 = vmatprep.subr.mxu0 0.0
    %2671 = vmatpush1.msra.mxu0 0.0
    %2672 = vmatprep.subr.mxu0 0.0
    %2673 = vmatpush1.msra.mxu0 0.0
    %2674 = vmatprep.subr.mxu0 0.0
    %2675 = vmatpush1.msra.mxu0 0.0
    %2676 = vmatprep.subr.mxu0 0.0
    %2677 = vmatpush1.msra.mxu0 0.0
    %2678 = vmatprep.subr.mxu0 0.0
    %2679 = vmatpush1.msra.mxu0 0.0
    %2680 = vmatprep.subr.mxu0 0.0
    %2681 = vmatpush1.msra.mxu0 0.0
    %2682 = vmatprep.subr.mxu0 0.0
    %2683 = vmatpush1.msra.mxu0 0.0
    %2684 = vmatprep.subr.mxu0 0.0
    %2685 = vmatpush1.msra.mxu0 0.0
    %2686 = vmatprep.subr.mxu0 0.0
    %2687 = vmatpush1.msra.mxu0 0.0
    %2688 = vmatprep.subr.mxu0 0.0
    %2689 = vmatpush1.msra.mxu0 0.0
    %2690 = vmatprep.subr.mxu0 0.0
    %2691 = vmatpush1.msra.mxu0 0.0
    %2692 = vmatprep.subr.mxu0 0.0
    %2693 = vmatpush1.msra.mxu0 0.0
    %2694 = vmatprep.subr.mxu0 0.0
    %2695 = vmatpush1.msra.mxu0 0.0
    %2696 = vmatprep.subr.mxu0 0.0
    %2697 = vmatpush1.msra.mxu0 0.0
    %2698 = vmatprep.subr.mxu0 0.0
    %2699 = vmatpush1.msra.mxu0 0.0
    %2700 = vmatprep.subr.mxu0 0.0
    %2701 = vmatpush1.msra.mxu0 0.0
    %2702 = vmatprep.mubr.f32.mxu0 0.0
    %2703 = vmatmul.mubr.f32.gmra.mrb[0].mxu0 %v218
    %v2704 = vpop.f32.mrb[0].mxu0
    %v2705 = vadd.f32 0.0, %v2704
    %v2706 = vpop.f32.mrb[0].mxu0
    %2707 = vmatprep.mubr.f32.mxu0 0.0
    %2708 = vmatmul.mubr.f32.gmra.mrb[0].mxu0 %v221
    %v2709 = vpop.f32.mrb[0].mxu0
    %v2710 = vadd.f32 0.0, %v2709
    %v2711 = vpop.f32.mrb[0].mxu0
    %2712 = vmatprep.mubr.f32.mxu0 0.0
    %2713 = vmatmul.mubr.f32.gmra.mrb[0].mxu0 %v224
    %v2714 = vpop.f32.mrb[0].mxu0
    %v2715 = vadd.f32 0.0, %v2714
    %v2716 = vpop.f32.mrb[0].mxu0
    %2717 = vmatprep.mubr.f32.mxu0 0.0
    %2718 = vmatmul.mubr.f32.gmra.mrb[0].mxu0 %v227
    %v2719 = vpop.f32.mrb[0].mxu0
    %v2720 = vadd.f32 0.0, %v2719
    %v2721 = vpop.f32.mrb[0].mxu0
    %2722 = vmatprep.mubr.f32.mxu0 0.0
    %2723 = vmatmul.mubr.f32.gmra.mrb[0].mxu0 %v230
    %v2724 = vpop.f32.mrb[0].mxu0
    %v2725 = vadd.f32 0.0, %v2724
    %v2726 = vpop.f32.mrb[0].mxu0
    %2727 = vmatprep.mubr.f32.mxu0 0.0
    %2728 = vmatmul.mubr.f32.gmra.mrb[0].mxu0 %v233
    %v2729 = vpop.f32.mrb[0].mxu0
    %v2730 = vadd.f32 0.0, %v2729
    %v2731 = vpop.f32.mrb[0].mxu0
    %2732 = vdwg.mxu0
    %v2734 = vsel %vm1998, %v2705, 0
    %v2737 = vsel %vm1998, %v2710, 0
    %v2740 = vsel %vm1998, %v2715, 0
    %v2743 = vsel %vm1998, %v2720, 0
    %v2746 = vsel %vm1998, %v2725, 0
    %v2749 = vsel %vm1998, %v2730, 0
    %v2752 = vsel %vm2017, %v2516, 0
    %2754 = vmatprep.subr.mxu0 0.0
    %2755 = vmatpush1.msra.mxu0 %v2510
    %2756 = vmatprep.subr.mxu0 0.0
    %2757 = vmatpush1.msra.mxu0 %v2511
    %2758 = vmatprep.subr.mxu0 0.0
    %2759 = vmatpush1.msra.mxu0 %v2512
    %2760 = vmatprep.subr.mxu0 0.0
    %2761 = vmatpush1.msra.mxu0 %v2513
    %2762 = vmatprep.subr.mxu0 0.0
    %2763 = vmatpush1.msra.mxu0 %v2514
    %2764 = vmatprep.subr.mxu0 0.0
    %2765 = vmatpush1.msra.mxu0 %v2515
    %2766 = vmatprep.subr.mxu0 0.0
    %2767 = vmatpush1.msra.mxu0 %v2752
    %2768 = vmatprep.subr.mxu0 0.0
    %2769 = vmatpush1.msra.mxu0 0.0
    %2770 = vmatprep.subr.mxu0 0.0
    %2771 = vmatpush1.msra.mxu0 0.0
    %2772 = vmatprep.subr.mxu0 0.0
    %2773 = vmatpush1.msra.mxu0 0.0
    %2774 = vmatprep.subr.mxu0 0.0
    %2775 = vmatpush1.msra.mxu0 0.0
    %2776 = vmatprep.subr.mxu0 0.0
    %2777 = vmatpush1.msra.mxu0 0.0
    %2778 = vmatprep.subr.mxu0 0.0
    %2779 = vmatpush1.msra.mxu0 0.0
    %2780 = vmatprep.subr.mxu0 0.0
    %2781 = vmatpush1.msra.mxu0 0.0
    %2782 = vmatprep.subr.mxu0 0.0
    %2783 = vmatpush1.msra.mxu0 0.0
    %2784 = vmatprep.subr.mxu0 0.0
    %2785 = vmatpush1.msra.mxu0 0.0
    %2786 = vmatprep.subr.mxu0 0.0
    %2787 = vmatpush1.msra.mxu0 0.0
    %2788 = vmatprep.subr.mxu0 0.0
    %2789 = vmatpush1.msra.mxu0 0.0
    %2790 = vmatprep.subr.mxu0 0.0
    %2791 = vmatpush1.msra.mxu0 0.0
    %2792 = vmatprep.subr.mxu0 0.0
    %2793 = vmatpush1.msra.mxu0 0.0
    %2794 = vmatprep.subr.mxu0 0.0
    %2795 = vmatpush1.msra.mxu0 0.0
    %2796 = vmatprep.subr.mxu0 0.0
    %2797 = vmatpush1.msra.mxu0 0.0
    %2798 = vmatprep.subr.mxu0 0.0
    %2799 = vmatpush1.msra.mxu0 0.0
    %2800 = vmatprep.subr.mxu0 0.0
    %2801 = vmatpush1.msra.mxu0 0.0
    %2802 = vmatprep.subr.mxu0 0.0
    %2803 = vmatpush1.msra.mxu0 0.0
    %2804 = vmatprep.subr.mxu0 0.0
    %2805 = vmatpush1.msra.mxu0 0.0
    %2806 = vmatprep.subr.mxu0 0.0
    %2807 = vmatpush1.msra.mxu0 0.0
    %2808 = vmatprep.subr.mxu0 0.0
    %2809 = vmatpush1.msra.mxu0 0.0
    %2810 = vmatprep.subr.mxu0 0.0
    %2811 = vmatpush1.msra.mxu0 0.0
    %2812 = vmatprep.subr.mxu0 0.0
    %2813 = vmatpush1.msra.mxu0 0.0
    %2814 = vmatprep.subr.mxu0 0.0
    %2815 = vmatpush1.msra.mxu0 0.0
    %2816 = vmatprep.subr.mxu0 0.0
    %2817 = vmatpush1.msra.mxu0 0.0
    %2818 = vmatprep.mubr.f32.mxu0 0.0
    %2819 = vmatmul.mubr.f32.gmra.mrb[0].mxu0 %v2734
    %v2820 = vpop.f32.mrb[0].mxu0
    %v2821 = vadd.f32 0.0, %v2820
    %v2822 = vpop.f32.mrb[0].mxu0
    %2823 = vmatprep.mubr.f32.mxu0 0.0
    %2824 = vmatmul.mubr.f32.gmra.mrb[0].mxu0 %v2737
    %v2825 = vpop.f32.mrb[0].mxu0
    %v2826 = vadd.f32 0.0, %v2825
    %v2827 = vpop.f32.mrb[0].mxu0
    %2828 = vmatprep.mubr.f32.mxu0 0.0
    %2829 = vmatmul.mubr.f32.gmra.mrb[0].mxu0 %v2740
    %v2830 = vpop.f32.mrb[0].mxu0
    %v2831 = vadd.f32 0.0, %v2830
    %v2832 = vpop.f32.mrb[0].mxu0
    %2833 = vmatprep.mubr.f32.mxu0 0.0
    %2834 = vmatmul.mubr.f32.gmra.mrb[0].mxu0 %v2743
    %v2835 = vpop.f32.mrb[0].mxu0
    %v2836 = vadd.f32 0.0, %v2835
    %v2837 = vpop.f32.mrb[0].mxu0
    %2838 = vmatprep.mubr.f32.mxu0 0.0
    %2839 = vmatmul.mubr.f32.gmra.mrb[0].mxu0 %v2746
    %v2840 = vpop.f32.mrb[0].mxu0
    %v2841 = vadd.f32 0.0, %v2840
    %v2842 = vpop.f32.mrb[0].mxu0
    %2843 = vmatprep.mubr.f32.mxu0 0.0
    %2844 = vmatmul.mubr.f32.gmra.mrb[0].mxu0 %v2749
    %v2845 = vpop.f32.mrb[0].mxu0
    %v2846 = vadd.f32 0.0, %v2845
    %v2847 = vpop.f32.mrb[0].mxu0
    %2848 = vdwg.mxu0
    %v2850 = vsel %vm1998, %v2610, 0
    %v2853 = vsel %vm1998, %v2615, 0
    %v2856 = vsel %vm1998, %v2620, 0
    %v2859 = vsel %vm1998, %v2625, 0
    %v2862 = vsel %vm1998, %v2630, 0
    %v2865 = vsel %vm1998, %v2635, 0
    %v2868 = vsel %vm2017, %v2508, 0
    %2870 = vmatprep.subr.mxu0 0.0
    %2871 = vmatpush1.msra.mxu0 %v2502
    %2872 = vmatprep.subr.mxu0 0.0
    %2873 = vmatpush1.msra.mxu0 %v2503
    %2874 = vmatprep.subr.mxu0 0.0
    %2875 = vmatpush1.msra.mxu0 %v2504
    %2876 = vmatprep.subr.mxu0 0.0
    %2877 = vmatpush1.msra.mxu0 %v2505
    %2878 = vmatprep.subr.mxu0 0.0
    %2879 = vmatpush1.msra.mxu0 %v2506
    %2880 = vmatprep.subr.mxu0 0.0
    %2881 = vmatpush1.msra.mxu0 %v2507
    %2882 = vmatprep.subr.mxu0 0.0
    %2883 = vmatpush1.msra.mxu0 %v2868
    %2884 = vmatprep.subr.mxu0 0.0
    %2885 = vmatpush1.msra.mxu0 0.0
    %2886 = vmatprep.subr.mxu0 0.0
    %2887 = vmatpush1.msra.mxu0 0.0
    %2888 = vmatprep.subr.mxu0 0.0
    %2889 = vmatpush1.msra.mxu0 0.0
    %2890 = vmatprep.subr.mxu0 0.0
    %2891 = vmatpush1.msra.mxu0 0.0
    %2892 = vmatprep.subr.mxu0 0.0
    %2893 = vmatpush1.msra.mxu0 0.0
    %2894 = vmatprep.subr.mxu0 0.0
    %2895 = vmatpush1.msra.mxu0 0.0
    %2896 = vmatprep.subr.mxu0 0.0
    %2897 = vmatpush1.msra.mxu0 0.0
    %2898 = vmatprep.subr.mxu0 0.0
    %2899 = vmatpush1.msra.mxu0 0.0
    %2900 = vmatprep.subr.mxu0 0.0
    %2901 = vmatpush1.msra.mxu0 0.0
    %2902 = vmatprep.subr.mxu0 0.0
    %2903 = vmatpush1.msra.mxu0 0.0
    %2904 = vmatprep.subr.mxu0 0.0
    %2905 = vmatpush1.msra.mxu0 0.0
    %2906 = vmatprep.subr.mxu0 0.0
    %2907 = vmatpush1.msra.mxu0 0.0
    %2908 = vmatprep.subr.mxu0 0.0
    %2909 = vmatpush1.msra.mxu0 0.0
    %2910 = vmatprep.subr.mxu0 0.0
    %2911 = vmatpush1.msra.mxu0 0.0
    %2912 = vmatprep.subr.mxu0 0.0
    %2913 = vmatpush1.msra.mxu0 0.0
    %2914 = vmatprep.subr.mxu0 0.0
    %2915 = vmatpush1.msra.mxu0 0.0
    %2916 = vmatprep.subr.mxu0 0.0
    %2917 = vmatpush1.msra.mxu0 0.0
    %2918 = vmatprep.subr.mxu0 0.0
    %2919 = vmatpush1.msra.mxu0 0.0
    %2920 = vmatprep.subr.mxu0 0.0
    %2921 = vmatpush1.msra.mxu0 0.0
    %2922 = vmatprep.subr.mxu0 0.0
    %2923 = vmatpush1.msra.mxu0 0.0
    %2924 = vmatprep.subr.mxu0 0.0
    %2925 = vmatpush1.msra.mxu0 0.0
    %2926 = vmatprep.subr.mxu0 0.0
    %2927 = vmatpush1.msra.mxu0 0.0
    %2928 = vmatprep.subr.mxu0 0.0
    %2929 = vmatpush1.msra.mxu0 0.0
    %2930 = vmatprep.subr.mxu0 0.0
    %2931 = vmatpush1.msra.mxu0 0.0
    %2932 = vmatprep.subr.mxu0 0.0
    %2933 = vmatpush1.msra.mxu0 0.0
    %2934 = vmatprep.mubr.f32.mxu0 0.0
    %2935 = vmatmul.mubr.f32.gmra.mrb[0].mxu0 %v2850
    %v2936 = vpop.f32.mrb[0].mxu0
    %v2937 = vadd.f32 %v2821, %v2936
    %v2938 = vpop.f32.mrb[0].mxu0
    %2939 = vmatprep.mubr.f32.mxu0 0.0
    %2940 = vmatmul.mubr.f32.gmra.mrb[0].mxu0 %v2853
    %v2941 = vpop.f32.mrb[0].mxu0
    %v2942 = vadd.f32 %v2826, %v2941
    %v2943 = vpop.f32.mrb[0].mxu0
    %2944 = vmatprep.mubr.f32.mxu0 0.0
    %2945 = vmatmul.mubr.f32.gmra.mrb[0].mxu0 %v2856
    %v2946 = vpop.f32.mrb[0].mxu0
    %v2947 = vadd.f32 %v2831, %v2946
    %v2948 = vpop.f32.mrb[0].mxu0
    %2949 = vmatprep.mubr.f32.mxu0 0.0
    %2950 = vmatmul.mubr.f32.gmra.mrb[0].mxu0 %v2859
    %v2951 = vpop.f32.mrb[0].mxu0
    %v2952 = vadd.f32 %v2836, %v2951
    %v2953 = vpop.f32.mrb[0].mxu0
    %2954 = vmatprep.mubr.f32.mxu0 0.0
    %2955 = vmatmul.mubr.f32.gmra.mrb[0].mxu0 %v2862
    %v2956 = vpop.f32.mrb[0].mxu0
    %v2957 = vadd.f32 %v2841, %v2956
    %v2958 = vpop.f32.mrb[0].mxu0
    %2959 = vmatprep.mubr.f32.mxu0 0.0
    %2960 = vmatmul.mubr.f32.gmra.mrb[0].mxu0 %v2865
    %v2961 = vpop.f32.mrb[0].mxu0
    %v2962 = vadd.f32 %v2846, %v2961
    %v2963 = vpop.f32.mrb[0].mxu0
    %2964 = vdwg.mxu0
    %2971 = vrot.lane.b32.xlu0 %v1574, 34
    %v2972 = vpop.permute.xlu0 %2971
    %2973 = vrot.lane.b32.xlu0 %v1575, 34
    %v2974 = vpop.permute.xlu0 %2973
    %2975 = vrot.lane.b32.xlu0 %v1576, 34
    %v2976 = vpop.permute.xlu0 %2975
    %2977 = vrot.lane.b32.xlu0 %v1577, 34
    %v2978 = vpop.permute.xlu0 %2977
    %2979 = vrot.lane.b32.xlu0 %v1578, 34
    %v2980 = vpop.permute.xlu0 %2979
    %2981 = vrot.lane.b32.xlu0 %v1579, 34
    %v2982 = vpop.permute.xlu0 %2981
    %2983 = vrot.lane.b32.xlu0 %v1580, 34
    %v2984 = vpop.permute.xlu0 %2983
    %2985 = vrot.lane.b32.xlu0 %v1581, 34
    %v2986 = vpop.permute.xlu0 %2985
    %2987 = vrot.lane.b32.xlu0 %v1582, 34
    %v2988 = vpop.permute.xlu0 %2987
    %2989 = vrot.lane.b32.xlu0 %v1583, 34
    %v2990 = vpop.permute.xlu0 %2989
    %2991 = vrot.lane.b32.xlu0 %v1584, 34
    %v2992 = vpop.permute.xlu0 %2991
    %2993 = vrot.lane.b32.xlu0 %v1585, 34
    %v2994 = vpop.permute.xlu0 %2993
    %vm2995 = vcmask 277504
    %v2996 = vsel %vm2995, %v2972, %v2974
    %v2997 = vsel %vm2995, %v2976, %v2978
    %v2998 = vsel %vm2995, %v2980, %v2982
    %v2999 = vsel %vm2995, %v2984, %v2986
    %v3000 = vsel %vm2995, %v2988, %v2990
    %v3001 = vsel %vm2995, %v2992, %v2994
    %v3002 = vsel %vm1998, %v2996, 0
    %v3004 = vsel %vm1998, %v2997, 0
    %v3006 = vsel %vm1998, %v2998, 0
    %v3008 = vsel %vm1998, %v2999, 0
    %v3010 = vsel %vm1998, %v3000, 0
    %v3012 = vsel %vm1998, %v3001, 0
    %v3015 = vsel %vm2017, %v2524, 0
    %3017 = vmatprep.subr.mxu0 0.0
    %3018 = vmatpush1.msra.mxu0 %v2518
    %3019 = vmatprep.subr.mxu0 0.0
    %3020 = vmatpush1.msra.mxu0 %v2519
    %3021 = vmatprep.subr.mxu0 0.0
    %3022 = vmatpush1.msra.mxu0 %v2520
    %3023 = vmatprep.subr.mxu0 0.0
    %3024 = vmatpush1.msra.mxu0 %v2521
    %3025 = vmatprep.subr.mxu0 0.0
    %3026 = vmatpush1.msra.mxu0 %v2522
    %3027 = vmatprep.subr.mxu0 0.0
    %3028 = vmatpush1.msra.mxu0 %v2523
    %3029 = vmatprep.subr.mxu0 0.0
    %3030 = vmatpush1.msra.mxu0 %v3015
    %3031 = vmatprep.subr.mxu0 0.0
    %3032 = vmatpush1.msra.mxu0 0.0
    %3033 = vmatprep.subr.mxu0 0.0
    %3034 = vmatpush1.msra.mxu0 0.0
    %3035 = vmatprep.subr.mxu0 0.0
    %3036 = vmatpush1.msra.mxu0 0.0
    %3037 = vmatprep.subr.mxu0 0.0
    %3038 = vmatpush1.msra.mxu0 0.0
    %3039 = vmatprep.subr.mxu0 0.0
    %3040 = vmatpush1.msra.mxu0 0.0
    %3041 = vmatprep.subr.mxu0 0.0
    %3042 = vmatpush1.msra.mxu0 0.0
    %3043 = vmatprep.subr.mxu0 0.0
    %3044 = vmatpush1.msra.mxu0 0.0
    %3045 = vmatprep.subr.mxu0 0.0
    %3046 = vmatpush1.msra.mxu0 0.0
    %3047 = vmatprep.subr.mxu0 0.0
    %3048 = vmatpush1.msra.mxu0 0.0
    %3049 = vmatprep.subr.mxu0 0.0
    %3050 = vmatpush1.msra.mxu0 0.0
    %3051 = vmatprep.subr.mxu0 0.0
    %3052 = vmatpush1.msra.mxu0 0.0
    %3053 = vmatprep.subr.mxu0 0.0
    %3054 = vmatpush1.msra.mxu0 0.0
    %3055 = vmatprep.subr.mxu0 0.0
    %3056 = vmatpush1.msra.mxu0 0.0
    %3057 = vmatprep.subr.mxu0 0.0
    %3058 = vmatpush1.msra.mxu0 0.0
    %3059 = vmatprep.subr.mxu0 0.0
    %3060 = vmatpush1.msra.mxu0 0.0
    %3061 = vmatprep.subr.mxu0 0.0
    %3062 = vmatpush1.msra.mxu0 0.0
    %3063 = vmatprep.subr.mxu0 0.0
    %3064 = vmatpush1.msra.mxu0 0.0
    %3065 = vmatprep.subr.mxu0 0.0
    %3066 = vmatpush1.msra.mxu0 0.0
    %3067 = vmatprep.subr.mxu0 0.0
    %3068 = vmatpush1.msra.mxu0 0.0
    %3069 = vmatprep.subr.mxu0 0.0
    %3070 = vmatpush1.msra.mxu0 0.0
    %3071 = vmatprep.subr.mxu0 0.0
    %3072 = vmatpush1.msra.mxu0 0.0
    %3073 = vmatprep.subr.mxu0 0.0
    %3074 = vmatpush1.msra.mxu0 0.0
    %3075 = vmatprep.subr.mxu0 0.0
    %3076 = vmatpush1.msra.mxu0 0.0
    %3077 = vmatprep.subr.mxu0 0.0
    %3078 = vmatpush1.msra.mxu0 0.0
    %3079 = vmatprep.subr.mxu0 0.0
    %3080 = vmatpush1.msra.mxu0 0.0
    %3081 = vmatprep.mubr.f32.mxu0 0.0
    %3082 = vmatmul.mubr.f32.gmra.mrb[0].mxu0 %v3002
    %v3083 = vpop.f32.mrb[0].mxu0
    %v3084 = vadd.f32 0.0, %v3083
    %v3085 = vpop.f32.mrb[0].mxu0
    %3086 = vmatprep.mubr.f32.mxu0 0.0
    %3087 = vmatmul.mubr.f32.gmra.mrb[0].mxu0 %v3004
    %v3088 = vpop.f32.mrb[0].mxu0
    %v3089 = vadd.f32 0.0, %v3088
    %v3090 = vpop.f32.mrb[0].mxu0
    %3091 = vmatprep.mubr.f32.mxu0 0.0
    %3092 = vmatmul.mubr.f32.gmra.mrb[0].mxu0 %v3006
    %v3093 = vpop.f32.mrb[0].mxu0
    %v3094 = vadd.f32 0.0, %v3093
    %v3095 = vpop.f32.mrb[0].mxu0
    %3096 = vmatprep.mubr.f32.mxu0 0.0
    %3097 = vmatmul.mubr.f32.gmra.mrb[0].mxu0 %v3008
    %v3098 = vpop.f32.mrb[0].mxu0
    %v3099 = vadd.f32 0.0, %v3098
    %v3100 = vpop.f32.mrb[0].mxu0
    %3101 = vmatprep.mubr.f32.mxu0 0.0
    %3102 = vmatmul.mubr.f32.gmra.mrb[0].mxu0 %v3010
    %v3103 = vpop.f32.mrb[0].mxu0
    %v3104 = vadd.f32 0.0, %v3103
    %v3105 = vpop.f32.mrb[0].mxu0
    %3106 = vmatprep.mubr.f32.mxu0 0.0
    %3107 = vmatmul.mubr.f32.gmra.mrb[0].mxu0 %v3012
    %v3108 = vpop.f32.mrb[0].mxu0
    %v3109 = vadd.f32 0.0, %v3108
    %v3110 = vpop.f32.mrb[0].mxu0
    %3111 = vdwg.mxu0
    %v3112 = vadd.f32 %v2937, %v3084
    %v3113 = vadd.f32 %v2942, %v3089
    %v3114 = vadd.f32 %v2947, %v3094
    %v3115 = vadd.f32 %v2952, %v3099
    %v3116 = vadd.f32 %v2957, %v3104
    %v3117 = vadd.f32 %v2962, %v3109
    %v3118 = vlaneseq
    %v3119 = vshrl.u32 %v3118, 7
    %v3120 = vsub.s32 0, %v3119
    %v3121 = vrot.slane %v2525, %v3120
    %v3122 = vadd.f32 %v3112, %v3121
    %v3123 = vadd.f32 %v3113, %v3121
    %v3124 = vadd.f32 %v3114, %v3121
    %v3125 = vadd.f32 %v3115, %v3121
    %v3126 = vadd.f32 %v3116, %v3121
    %v3127 = vadd.f32 %v3117, %v3121
    %vm3128 = vcmp.gt.f32.partialorder %v3122, 0.0
    %vm3129 = vcmp.gt.f32.partialorder %v3123, 0.0
    %vm3130 = vcmp.gt.f32.partialorder %v3124, 0.0
    %vm3131 = vcmp.gt.f32.partialorder %v3125, 0.0
    %vm3132 = vcmp.gt.f32.partialorder %v3126, 0.0
    %vm3133 = vcmp.gt.f32.partialorder %v3127, 0.0
    %v3134 = vmul.f32 %v3122, 1.442695
    %v3135 = vpow.pop %v3134
    %v3136 = vmul.f32 %v3123, 1.442695
    %v3137 = vpow.pop %v3136
    %v3138 = vmul.f32 %v3124, 1.442695
    %v3139 = vpow.pop %v3138
    %v3140 = vmul.f32 %v3125, 1.442695
    %v3141 = vpow.pop %v3140
    %v3142 = vmul.f32 %v3126, 1.442695
    %v3143 = vpow.pop %v3142
    %v3144 = vmul.f32 %v3127, 1.442695
    %v3145 = vpow.pop %v3144
    %v3146 = vsub.f32 %v3135, 1.0
    %v3147 = vsub.f32 %v3137, 1.0
    %v3148 = vsub.f32 %v3139, 1.0
    %v3149 = vsub.f32 %v3141, 1.0
    %v3150 = vsub.f32 %v3143, 1.0
    %v3151 = vsub.f32 %v3145, 1.0
    %v3152 = vsel %vm3128, %v3122, %v3146
    %v3153 = vsel %vm3129, %v3123, %v3147
    %v3154 = vsel %vm3130, %v3124, %v3148
    %v3155 = vsel %vm3131, %v3125, %v3149
    %v3156 = vsel %vm3132, %v3126, %v3150
    %v3157 = vsel %vm3133, %v3127, %v3151
    %3158 = vmatprep.subr.mxu0 0.0
    %3159 = vmatpush1.msra.mxu0 %v3122
    %3160 = vmatprep.subr.mxu0 0.0
    %3161 = vmatpush1.msra.mxu0 %v3123
    %3162 = vmatprep.subr.mxu0 0.0
    %3163 = vmatpush1.msra.mxu0 %v3124
    %3164 = vmatprep.subr.mxu0 0.0
    %3165 = vmatpush1.msra.mxu0 %v3125
    %3166 = vmatprep.subr.mxu0 0.0
    %3167 = vmatpush1.msra.mxu0 %v3126
    %3168 = vmatprep.subr.mxu0 0.0
    %3169 = vmatpush1.msra.mxu0 %v3127
    %3170 = vmatprep.subr.mxu0 0.0
    %3171 = vmatpush1.msra.mxu0 0.0
    %3172 = vmatprep.subr.mxu0 0.0
    %3173 = vmatpush1.msra.mxu0 0.0
    %3174 = vmatprep.subr.mxu0 0.0
    %3175 = vmatpush1.msra.mxu0 0.0
    %3176 = vmatprep.subr.mxu0 0.0
    %3177 = vmatpush1.msra.mxu0 0.0
    %3178 = vmatprep.subr.mxu0 0.0
    %3179 = vmatpush1.msra.mxu0 0.0
    %3180 = vmatprep.subr.mxu0 0.0
    %3181 = vmatpush1.msra.mxu0 0.0
    %3182 = vmatprep.subr.mxu0 0.0
    %3183 = vmatpush1.msra.mxu0 0.0
    %3184 = vmatprep.subr.mxu0 0.0
    %3185 = vmatpush1.msra.mxu0 0.0
    %3186 = vmatprep.subr.mxu0 0.0
    %3187 = vmatpush1.msra.mxu0 0.0
    %3188 = vmatprep.subr.mxu0 0.0
    %3189 = vmatpush1.msra.mxu0 0.0
    %3190 = vmatprep.subr.mxu0 0.0
    %3191 = vmatpush1.msra.mxu0 0.0
    %3192 = vmatprep.subr.mxu0 0.0
    %3193 = vmatpush1.msra.mxu0 0.0
    %3194 = vmatprep.subr.mxu0 0.0
    %3195 = vmatpush1.msra.mxu0 0.0
    %3196 = vmatprep.subr.mxu0 0.0
    %3197 = vmatpush1.msra.mxu0 0.0
    %3198 = vmatprep.subr.mxu0 0.0
    %3199 = vmatpush1.msra.mxu0 0.0
    %3200 = vmatprep.subr.mxu0 0.0
    %3201 = vmatpush1.msra.mxu0 0.0
    %3202 = vmatprep.subr.mxu0 0.0
    %3203 = vmatpush1.msra.mxu0 0.0
    %3204 = vmatprep.subr.mxu0 0.0
    %3205 = vmatpush1.msra.mxu0 0.0
    %3206 = vmatprep.subr.mxu0 0.0
    %3207 = vmatpush1.msra.mxu0 0.0
    %3208 = vmatprep.subr.mxu0 0.0
    %3209 = vmatpush1.msra.mxu0 0.0
    %3210 = vmatprep.subr.mxu0 0.0
    %3211 = vmatpush1.msra.mxu0 0.0
    %3212 = vmatprep.subr.mxu0 0.0
    %3213 = vmatpush1.msra.mxu0 0.0
    %3214 = vmatprep.subr.mxu0 0.0
    %3215 = vmatpush1.msra.mxu0 0.0
    %3216 = vmatprep.subr.mxu0 0.0
    %3217 = vmatpush1.msra.mxu0 0.0
    %3218 = vmatprep.subr.mxu0 0.0
    %3219 = vmatpush1.msra.mxu0 0.0
    %3220 = vmatprep.subr.mxu0 0.0
    %3221 = vmatpush1.msra.mxu0 0.0
    %3222 = vmatprep.mubr.f32.mxu0 0.0
    %3223 = vmatmul.mubr.f32.gmra.mrb[0].mxu0 %v1588
    %v3224 = vpop.f32.mrb[0].mxu0
    %v3225 = vadd.f32 0.0, %v3224
    %v3226 = vpop.f32.mrb[0].mxu0
    %3227 = vmatprep.mubr.f32.mxu0 0.0
    %3228 = vmatmul.mubr.f32.gmra.mrb[0].mxu0 %v1591
    %v3229 = vpop.f32.mrb[0].mxu0
    %v3230 = vadd.f32 0.0, %v3229
    %v3231 = vpop.f32.mrb[0].mxu0
    %3232 = vdwg.mxu0
    %v3233 = vsel %vm1998, %v3225, 0.0
    %v3234 = vsel %vm1998, %v3230, 0.0
    %v3235 = vadd.f32 %v3233, %v3234
    %v3236 = vrot.slane %v3235, 4
    %v3237 = vadd.f32 %v3235, %v3236
    %v3238 = vrot.slane %v3237, 2
    %v3239 = vadd.f32 %v3237, %v3238
    %v3240 = vrot.slane %v3239, 1
    %v3241 = vadd.f32 %v3239, %v3240
    %v3242 = vmul.f32 %v3241, %v1689
    %v3243 = vsub.f32 %v3225, %v3242
    %v3244 = vsub.f32 %v3230, %v3242
    %v3245 = vmul.f32 %v3243, %v3243
    %v3246 = vmul.f32 %v3244, %v3244
    %v3247 = vsel %vm1998, %v3245, 0.0
    %v3248 = vsel %vm1998, %v3246, 0.0
    %v3249 = vadd.f32 %v3247, %v3248
    %v3250 = vrot.slane %v3249, 4
    %v3251 = vadd.f32 %v3249, %v3250
    %v3252 = vrot.slane %v3251, 2
    %v3253 = vadd.f32 %v3251, %v3252
    %v3254 = vrot.slane %v3253, 1
    %v3255 = vadd.f32 %v3253, %v3254
    %v3256 = vmul.f32 %v3255, %v1689
    %v3257 = vadd.f32 %v3256, 1e-05
    %v3258 = vrsqrt.pop %v3257
    %v3259 = vmul.f32 %v3243, %v3258
    %v3260 = vmul.f32 %v3244, %v3258
    %v3261 = vlaneseq
    %v3262 = vshrl.u32 %v3261, 7
    %v3263 = vsub.s32 0, %v3262
    %v3264 = vrot.slane %v2526, %v3263
    %v3265 = vmul.f32 %v3259, %v3264
    %v3266 = vmul.f32 %v3260, %v3264
    %v3267 = vlaneseq
    %v3268 = vshrl.u32 %v3267, 7
    %v3269 = vsub.s32 0, %v3268
    %v3270 = vrot.slane %v2527, %v3269
    %v3271 = vadd.f32 %v3265, %v3270
    %v3272 = vadd.f32 %v3266, %v3270
    %vm3273 = vcmp.gt.f32.partialorder %v3271, 0.0
    %vm3274 = vcmp.gt.f32.partialorder %v3272, 0.0
    %v3275 = vmul.f32 %v3271, 1.442695
    %v3276 = vpow.pop %v3275
    %v3277 = vmul.f32 %v3272, 1.442695
    %v3278 = vpow.pop %v3277
    %v3279 = vsub.f32 %v3276, 1.0
    %v3280 = vsub.f32 %v3278, 1.0
    %v3281 = vsel %vm3273, %v3271, %v3279
    %v3282 = vsel %vm3274, %v3272, %v3280
    %s3283 = scalar_lea.vmem %s11, 112
    %v3284 = vld [vmem:[%s3283] sm:$0xff]
    %v3285 = vld [vmem:[%s3283 + $0x8] sm:$0xff]
    %v3286 = vld [vmem:[%s3283 + $0x10] sm:$0xff]
    %v3287 = vld [vmem:[%s3283 + $0x18] sm:$0xff]
    %v3288 = vld [vmem:[%s3283 + $0x20] sm:$0xff]
    %v3289 = vld [vmem:[%s3283 + $0x28] sm:$0xff]
    %v3290 = vld [vmem:[%s3283 + $0x30] sm:$0x3]
    %s3291 = scalar_lea.vmem %s12, 112
    %v3292 = vld [vmem:[%s3291] sm:$0xff]
    %v3293 = vld [vmem:[%s3291 + $0x8] sm:$0xff]
    %v3294 = vld [vmem:[%s3291 + $0x10] sm:$0xff]
    %v3295 = vld [vmem:[%s3291 + $0x18] sm:$0xff]
    %v3296 = vld [vmem:[%s3291 + $0x20] sm:$0xff]
    %v3297 = vld [vmem:[%s3291 + $0x28] sm:$0xff]
    %v3298 = vld [vmem:[%s3291 + $0x30] sm:$0x3]
    %s3299 = scalar_lea.vmem %s13, 112
    %v3300 = vld [vmem:[%s3299] sm:$0xff]
    %v3301 = vld [vmem:[%s3299 + $0x8] sm:$0xff]
    %v3302 = vld [vmem:[%s3299 + $0x10] sm:$0xff]
    %v3303 = vld [vmem:[%s3299 + $0x18] sm:$0xff]
    %v3304 = vld [vmem:[%s3299 + $0x20] sm:$0xff]
    %v3305 = vld [vmem:[%s3299 + $0x28] sm:$0xff]
    %v3306 = vld [vmem:[%s3299 + $0x30] sm:$0x3]
    %v3307 = vld [vmem:[%s14 + $0x2] sm:$0x1]
    %v3308 = vld [vmem:[%s15 + $0x2] sm:$0x1]
    %v3309 = vld [vmem:[%s16 + $0x2] sm:$0x1]
    %3310 = vmatprep.subr.mxu0 0.0
    %3311 = vmatpush1.msra.mxu0 %v3281
    %3312 = vmatprep.subr.mxu0 0.0
    %3313 = vmatpush1.msra.mxu0 %v3282
    %3314 = vmatprep.subr.mxu0 0.0
    %3315 = vmatpush1.msra.mxu0 0.0
    %3316 = vmatprep.subr.mxu0 0.0
    %3317 = vmatpush1.msra.mxu0 0.0
    %3318 = vmatprep.subr.mxu0 0.0
    %3319 = vmatpush1.msra.mxu0 0.0
    %3320 = vmatprep.subr.mxu0 0.0
    %3321 = vmatpush1.msra.mxu0 0.0
    %3322 = vmatprep.subr.mxu0 0.0
    %3323 = vmatpush1.msra.mxu0 0.0
    %3324 = vmatprep.subr.mxu0 0.0
    %3325 = vmatpush1.msra.mxu0 0.0
    %3326 = vmatprep.subr.mxu0 0.0
    %3327 = vmatpush1.msra.mxu0 0.0
    %3328 = vmatprep.subr.mxu0 0.0
    %3329 = vmatpush1.msra.mxu0 0.0
    %3330 = vmatprep.subr.mxu0 0.0
    %3331 = vmatpush1.msra.mxu0 0.0
    %3332 = vmatprep.subr.mxu0 0.0
    %3333 = vmatpush1.msra.mxu0 0.0
    %3334 = vmatprep.subr.mxu0 0.0
    %3335 = vmatpush1.msra.mxu0 0.0
    %3336 = vmatprep.subr.mxu0 0.0
    %3337 = vmatpush1.msra.mxu0 0.0
    %3338 = vmatprep.subr.mxu0 0.0
    %3339 = vmatpush1.msra.mxu0 0.0
    %3340 = vmatprep.subr.mxu0 0.0
    %3341 = vmatpush1.msra.mxu0 0.0
    %3342 = vmatprep.subr.mxu0 0.0
    %3343 = vmatpush1.msra.mxu0 0.0
    %3344 = vmatprep.subr.mxu0 0.0
    %3345 = vmatpush1.msra.mxu0 0.0
    %3346 = vmatprep.subr.mxu0 0.0
    %3347 = vmatpush1.msra.mxu0 0.0
    %3348 = vmatprep.subr.mxu0 0.0
    %3349 = vmatpush1.msra.mxu0 0.0
    %3350 = vmatprep.subr.mxu0 0.0
    %3351 = vmatpush1.msra.mxu0 0.0
    %3352 = vmatprep.subr.mxu0 0.0
    %3353 = vmatpush1.msra.mxu0 0.0
    %3354 = vmatprep.subr.mxu0 0.0
    %3355 = vmatpush1.msra.mxu0 0.0
    %3356 = vmatprep.subr.mxu0 0.0
    %3357 = vmatpush1.msra.mxu0 0.0
    %3358 = vmatprep.subr.mxu0 0.0
    %3359 = vmatpush1.msra.mxu0 0.0
    %3360 = vmatprep.subr.mxu0 0.0
    %3361 = vmatpush1.msra.mxu0 0.0
    %3362 = vmatprep.subr.mxu0 0.0
    %3363 = vmatpush1.msra.mxu0 0.0
    %3364 = vmatprep.subr.mxu0 0.0
    %3365 = vmatpush1.msra.mxu0 0.0
    %3366 = vmatprep.subr.mxu0 0.0
    %3367 = vmatpush1.msra.mxu0 0.0
    %3368 = vmatprep.subr.mxu0 0.0
    %3369 = vmatpush1.msra.mxu0 0.0
    %3370 = vmatprep.subr.mxu0 0.0
    %3371 = vmatpush1.msra.mxu0 0.0
    %3372 = vmatprep.subr.mxu0 0.0
    %3373 = vmatpush1.msra.mxu0 0.0
    %3374 = vmatprep.mubr.f32.mxu0 0.0
    %3375 = vmatmul.mubr.f32.gmra.mrb[0].mxu0 %v105
    %v3376 = vpop.f32.mrb[0].mxu0
    %v3377 = vadd.f32 0.0, %v3376
    %v3378 = vpop.f32.mrb[0].mxu0
    %3379 = vmatprep.mubr.f32.mxu0 0.0
    %3380 = vmatmul.mubr.f32.gmra.mrb[0].mxu0 %v108
    %v3381 = vpop.f32.mrb[0].mxu0
    %v3382 = vadd.f32 0.0, %v3381
    %v3383 = vpop.f32.mrb[0].mxu0
    %3384 = vmatprep.mubr.f32.mxu0 0.0
    %3385 = vmatmul.mubr.f32.gmra.mrb[0].mxu0 %v111
    %v3386 = vpop.f32.mrb[0].mxu0
    %v3387 = vadd.f32 0.0, %v3386
    %v3388 = vpop.f32.mrb[0].mxu0
    %3389 = vmatprep.mubr.f32.mxu0 0.0
    %3390 = vmatmul.mubr.f32.gmra.mrb[0].mxu0 %v114
    %v3391 = vpop.f32.mrb[0].mxu0
    %v3392 = vadd.f32 0.0, %v3391
    %v3393 = vpop.f32.mrb[0].mxu0
    %3394 = vmatprep.mubr.f32.mxu0 0.0
    %3395 = vmatmul.mubr.f32.gmra.mrb[0].mxu0 %v117
    %v3396 = vpop.f32.mrb[0].mxu0
    %v3397 = vadd.f32 0.0, %v3396
    %v3398 = vpop.f32.mrb[0].mxu0
    %3399 = vmatprep.mubr.f32.mxu0 0.0
    %3400 = vmatmul.mubr.f32.gmra.mrb[0].mxu0 %v120
    %v3401 = vpop.f32.mrb[0].mxu0
    %v3402 = vadd.f32 0.0, %v3401
    %v3403 = vpop.f32.mrb[0].mxu0
    %3404 = vdwg.mxu0
    %3405 = vmatprep.subr.mxu0 0.0
    %3406 = vmatpush1.msra.mxu0 %v3281
    %3407 = vmatprep.subr.mxu0 0.0
    %3408 = vmatpush1.msra.mxu0 %v3282
    %3409 = vmatprep.subr.mxu0 0.0
    %3410 = vmatpush1.msra.mxu0 0.0
    %3411 = vmatprep.subr.mxu0 0.0
    %3412 = vmatpush1.msra.mxu0 0.0
    %3413 = vmatprep.subr.mxu0 0.0
    %3414 = vmatpush1.msra.mxu0 0.0
    %3415 = vmatprep.subr.mxu0 0.0
    %3416 = vmatpush1.msra.mxu0 0.0
    %3417 = vmatprep.subr.mxu0 0.0
    %3418 = vmatpush1.msra.mxu0 0.0
    %3419 = vmatprep.subr.mxu0 0.0
    %3420 = vmatpush1.msra.mxu0 0.0
    %3421 = vmatprep.subr.mxu0 0.0
    %3422 = vmatpush1.msra.mxu0 0.0
    %3423 = vmatprep.subr.mxu0 0.0
    %3424 = vmatpush1.msra.mxu0 0.0
    %3425 = vmatprep.subr.mxu0 0.0
    %3426 = vmatpush1.msra.mxu0 0.0
    %3427 = vmatprep.subr.mxu0 0.0
    %3428 = vmatpush1.msra.mxu0 0.0
    %3429 = vmatprep.subr.mxu0 0.0
    %3430 = vmatpush1.msra.mxu0 0.0
    %3431 = vmatprep.subr.mxu0 0.0
    %3432 = vmatpush1.msra.mxu0 0.0
    %3433 = vmatprep.subr.mxu0 0.0
    %3434 = vmatpush1.msra.mxu0 0.0
    %3435 = vmatprep.subr.mxu0 0.0
    %3436 = vmatpush1.msra.mxu0 0.0
    %3437 = vmatprep.subr.mxu0 0.0
    %3438 = vmatpush1.msra.mxu0 0.0
    %3439 = vmatprep.subr.mxu0 0.0
    %3440 = vmatpush1.msra.mxu0 0.0
    %3441 = vmatprep.subr.mxu0 0.0
    %3442 = vmatpush1.msra.mxu0 0.0
    %3443 = vmatprep.subr.mxu0 0.0
    %3444 = vmatpush1.msra.mxu0 0.0
    %3445 = vmatprep.subr.mxu0 0.0
    %3446 = vmatpush1.msra.mxu0 0.0
    %3447 = vmatprep.subr.mxu0 0.0
    %3448 = vmatpush1.msra.mxu0 0.0
    %3449 = vmatprep.subr.mxu0 0.0
    %3450 = vmatpush1.msra.mxu0 0.0
    %3451 = vmatprep.subr.mxu0 0.0
    %3452 = vmatpush1.msra.mxu0 0.0
    %3453 = vmatprep.subr.mxu0 0.0
    %3454 = vmatpush1.msra.mxu0 0.0
    %3455 = vmatprep.subr.mxu0 0.0
    %3456 = vmatpush1.msra.mxu0 0.0
    %3457 = vmatprep.subr.mxu0 0.0
    %3458 = vmatpush1.msra.mxu0 0.0
    %3459 = vmatprep.subr.mxu0 0.0
    %3460 = vmatpush1.msra.mxu0 0.0
    %3461 = vmatprep.subr.mxu0 0.0
    %3462 = vmatpush1.msra.mxu0 0.0
    %3463 = vmatprep.subr.mxu0 0.0
    %3464 = vmatpush1.msra.mxu0 0.0
    %3465 = vmatprep.subr.mxu0 0.0
    %3466 = vmatpush1.msra.mxu0 0.0
    %3467 = vmatprep.subr.mxu0 0.0
    %3468 = vmatpush1.msra.mxu0 0.0
    %3469 = vmatprep.mubr.f32.mxu0 0.0
    %3470 = vmatmul.mubr.f32.gmra.mrb[0].mxu0 %v218
    %v3471 = vpop.f32.mrb[0].mxu0
    %v3472 = vadd.f32 0.0, %v3471
    %v3473 = vpop.f32.mrb[0].mxu0
    %3474 = vmatprep.mubr.f32.mxu0 0.0
    %3475 = vmatmul.mubr.f32.gmra.mrb[0].mxu0 %v221
    %v3476 = vpop.f32.mrb[0].mxu0
    %v3477 = vadd.f32 0.0, %v3476
    %v3478 = vpop.f32.mrb[0].mxu0
    %3479 = vmatprep.mubr.f32.mxu0 0.0
    %3480 = vmatmul.mubr.f32.gmra.mrb[0].mxu0 %v224
    %v3481 = vpop.f32.mrb[0].mxu0
    %v3482 = vadd.f32 0.0, %v3481
    %v3483 = vpop.f32.mrb[0].mxu0
    %3484 = vmatprep.mubr.f32.mxu0 0.0
    %3485 = vmatmul.mubr.f32.gmra.mrb[0].mxu0 %v227
    %v3486 = vpop.f32.mrb[0].mxu0
    %v3487 = vadd.f32 0.0, %v3486
    %v3488 = vpop.f32.mrb[0].mxu0
    %3489 = vmatprep.mubr.f32.mxu0 0.0
    %3490 = vmatmul.mubr.f32.gmra.mrb[0].mxu0 %v230
    %v3491 = vpop.f32.mrb[0].mxu0
    %v3492 = vadd.f32 0.0, %v3491
    %v3493 = vpop.f32.mrb[0].mxu0
    %3494 = vmatprep.mubr.f32.mxu0 0.0
    %3495 = vmatmul.mubr.f32.gmra.mrb[0].mxu0 %v233
    %v3496 = vpop.f32.mrb[0].mxu0
    %v3497 = vadd.f32 0.0, %v3496
    %v3498 = vpop.f32.mrb[0].mxu0
    %3499 = vdwg.mxu0
    %v3501 = vsel %vm1998, %v3472, 0
    %v3504 = vsel %vm1998, %v3477, 0
    %v3507 = vsel %vm1998, %v3482, 0
    %v3510 = vsel %vm1998, %v3487, 0
    %v3513 = vsel %vm1998, %v3492, 0
    %v3516 = vsel %vm1998, %v3497, 0
    %v3519 = vsel %vm2017, %v3298, 0
    %3521 = vmatprep.subr.mxu0 0.0
    %3522 = vmatpush1.msra.mxu0 %v3292
    %3523 = vmatprep.subr.mxu0 0.0
    %3524 = vmatpush1.msra.mxu0 %v3293
    %3525 = vmatprep.subr.mxu0 0.0
    %3526 = vmatpush1.msra.mxu0 %v3294
    %3527 = vmatprep.subr.mxu0 0.0
    %3528 = vmatpush1.msra.mxu0 %v3295
    %3529 = vmatprep.subr.mxu0 0.0
    %3530 = vmatpush1.msra.mxu0 %v3296
    %3531 = vmatprep.subr.mxu0 0.0
    %3532 = vmatpush1.msra.mxu0 %v3297
    %3533 = vmatprep.subr.mxu0 0.0
    %3534 = vmatpush1.msra.mxu0 %v3519
    %3535 = vmatprep.subr.mxu0 0.0
    %3536 = vmatpush1.msra.mxu0 0.0
    %3537 = vmatprep.subr.mxu0 0.0
    %3538 = vmatpush1.msra.mxu0 0.0
    %3539 = vmatprep.subr.mxu0 0.0
    %3540 = vmatpush1.msra.mxu0 0.0
    %3541 = vmatprep.subr.mxu0 0.0
    %3542 = vmatpush1.msra.mxu0 0.0
    %3543 = vmatprep.subr.mxu0 0.0
    %3544 = vmatpush1.msra.mxu0 0.0
    %3545 = vmatprep.subr.mxu0 0.0
    %3546 = vmatpush1.msra.mxu0 0.0
    %3547 = vmatprep.subr.mxu0 0.0
    %3548 = vmatpush1.msra.mxu0 0.0
    %3549 = vmatprep.subr.mxu0 0.0
    %3550 = vmatpush1.msra.mxu0 0.0
    %3551 = vmatprep.subr.mxu0 0.0
    %3552 = vmatpush1.msra.mxu0 0.0
    %3553 = vmatprep.subr.mxu0 0.0
    %3554 = vmatpush1.msra.mxu0 0.0
    %3555 = vmatprep.subr.mxu0 0.0
    %3556 = vmatpush1.msra.mxu0 0.0
    %3557 = vmatprep.subr.mxu0 0.0
    %3558 = vmatpush1.msra.mxu0 0.0
    %3559 = vmatprep.subr.mxu0 0.0
    %3560 = vmatpush1.msra.mxu0 0.0
    %3561 = vmatprep.subr.mxu0 0.0
    %3562 = vmatpush1.msra.mxu0 0.0
    %3563 = vmatprep.subr.mxu0 0.0
    %3564 = vmatpush1.msra.mxu0 0.0
    %3565 = vmatprep.subr.mxu0 0.0
    %3566 = vmatpush1.msra.mxu0 0.0
    %3567 = vmatprep.subr.mxu0 0.0
    %3568 = vmatpush1.msra.mxu0 0.0
    %3569 = vmatprep.subr.mxu0 0.0
    %3570 = vmatpush1.msra.mxu0 0.0
    %3571 = vmatprep.subr.mxu0 0.0
    %3572 = vmatpush1.msra.mxu0 0.0
    %3573 = vmatprep.subr.mxu0 0.0
    %3574 = vmatpush1.msra.mxu0 0.0
    %3575 = vmatprep.subr.mxu0 0.0
    %3576 = vmatpush1.msra.mxu0 0.0
    %3577 = vmatprep.subr.mxu0 0.0
    %3578 = vmatpush1.msra.mxu0 0.0
    %3579 = vmatprep.subr.mxu0 0.0
    %3580 = vmatpush1.msra.mxu0 0.0
    %3581 = vmatprep.subr.mxu0 0.0
    %3582 = vmatpush1.msra.mxu0 0.0
    %3583 = vmatprep.subr.mxu0 0.0
    %3584 = vmatpush1.msra.mxu0 0.0
    %3585 = vmatprep.mubr.f32.mxu0 0.0
    %3586 = vmatmul.mubr.f32.gmra.mrb[0].mxu0 %v3501
    %v3587 = vpop.f32.mrb[0].mxu0
    %v3588 = vadd.f32 0.0, %v3587
    %v3589 = vpop.f32.mrb[0].mxu0
    %3590 = vmatprep.mubr.f32.mxu0 0.0
    %3591 = vmatmul.mubr.f32.gmra.mrb[0].mxu0 %v3504
    %v3592 = vpop.f32.mrb[0].mxu0
    %v3593 = vadd.f32 0.0, %v3592
    %v3594 = vpop.f32.mrb[0].mxu0
    %3595 = vmatprep.mubr.f32.mxu0 0.0
    %3596 = vmatmul.mubr.f32.gmra.mrb[0].mxu0 %v3507
    %v3597 = vpop.f32.mrb[0].mxu0
    %v3598 = vadd.f32 0.0, %v3597
    %v3599 = vpop.f32.mrb[0].mxu0
    %3600 = vmatprep.mubr.f32.mxu0 0.0
    %3601 = vmatmul.mubr.f32.gmra.mrb[0].mxu0 %v3510
    %v3602 = vpop.f32.mrb[0].mxu0
    %v3603 = vadd.f32 0.0, %v3602
    %v3604 = vpop.f32.mrb[0].mxu0
    %3605 = vmatprep.mubr.f32.mxu0 0.0
    %3606 = vmatmul.mubr.f32.gmra.mrb[0].mxu0 %v3513
    %v3607 = vpop.f32.mrb[0].mxu0
    %v3608 = vadd.f32 0.0, %v3607
    %v3609 = vpop.f32.mrb[0].mxu0
    %3610 = vmatprep.mubr.f32.mxu0 0.0
    %3611 = vmatmul.mubr.f32.gmra.mrb[0].mxu0 %v3516
    %v3612 = vpop.f32.mrb[0].mxu0
    %v3613 = vadd.f32 0.0, %v3612
    %v3614 = vpop.f32.mrb[0].mxu0
    %3615 = vdwg.mxu0
    %v3617 = vsel %vm1998, %v3377, 0
    %v3620 = vsel %vm1998, %v3382, 0
    %v3623 = vsel %vm1998, %v3387, 0
    %v3626 = vsel %vm1998, %v3392, 0
    %v3629 = vsel %vm1998, %v3397, 0
    %v3632 = vsel %vm1998, %v3402, 0
    %v3635 = vsel %vm2017, %v3290, 0
    %3637 = vmatprep.subr.mxu0 0.0
    %3638 = vmatpush1.msra.mxu0 %v3284
    %3639 = vmatprep.subr.mxu0 0.0
    %3640 = vmatpush1.msra.mxu0 %v3285
    %3641 = vmatprep.subr.mxu0 0.0
    %3642 = vmatpush1.msra.mxu0 %v3286
    %3643 = vmatprep.subr.mxu0 0.0
    %3644 = vmatpush1.msra.mxu0 %v3287
    %3645 = vmatprep.subr.mxu0 0.0
    %3646 = vmatpush1.msra.mxu0 %v3288
    %3647 = vmatprep.subr.mxu0 0.0
    %3648 = vmatpush1.msra.mxu0 %v3289
    %3649 = vmatprep.subr.mxu0 0.0
    %3650 = vmatpush1.msra.mxu0 %v3635
    %3651 = vmatprep.subr.mxu0 0.0
    %3652 = vmatpush1.msra.mxu0 0.0
    %3653 = vmatprep.subr.mxu0 0.0
    %3654 = vmatpush1.msra.mxu0 0.0
    %3655 = vmatprep.subr.mxu0 0.0
    %3656 = vmatpush1.msra.mxu0 0.0
    %3657 = vmatprep.subr.mxu0 0.0
    %3658 = vmatpush1.msra.mxu0 0.0
    %3659 = vmatprep.subr.mxu0 0.0
    %3660 = vmatpush1.msra.mxu0 0.0
    %3661 = vmatprep.subr.mxu0 0.0
    %3662 = vmatpush1.msra.mxu0 0.0
    %3663 = vmatprep.subr.mxu0 0.0
    %3664 = vmatpush1.msra.mxu0 0.0
    %3665 = vmatprep.subr.mxu0 0.0
    %3666 = vmatpush1.msra.mxu0 0.0
    %3667 = vmatprep.subr.mxu0 0.0
    %3668 = vmatpush1.msra.mxu0 0.0
    %3669 = vmatprep.subr.mxu0 0.0
    %3670 = vmatpush1.msra.mxu0 0.0
    %3671 = vmatprep.subr.mxu0 0.0
    %3672 = vmatpush1.msra.mxu0 0.0
    %3673 = vmatprep.subr.mxu0 0.0
    %3674 = vmatpush1.msra.mxu0 0.0
    %3675 = vmatprep.subr.mxu0 0.0
    %3676 = vmatpush1.msra.mxu0 0.0
    %3677 = vmatprep.subr.mxu0 0.0
    %3678 = vmatpush1.msra.mxu0 0.0
    %3679 = vmatprep.subr.mxu0 0.0
    %3680 = vmatpush1.msra.mxu0 0.0
    %3681 = vmatprep.subr.mxu0 0.0
    %3682 = vmatpush1.msra.mxu0 0.0
    %3683 = vmatprep.subr.mxu0 0.0
    %3684 = vmatpush1.msra.mxu0 0.0
    %3685 = vmatprep.subr.mxu0 0.0
    %3686 = vmatpush1.msra.mxu0 0.0
    %3687 = vmatprep.subr.mxu0 0.0
    %3688 = vmatpush1.msra.mxu0 0.0
    %3689 = vmatprep.subr.mxu0 0.0
    %3690 = vmatpush1.msra.mxu0 0.0
    %3691 = vmatprep.subr.mxu0 0.0
    %3692 = vmatpush1.msra.mxu0 0.0
    %3693 = vmatprep.subr.mxu0 0.0
    %3694 = vmatpush1.msra.mxu0 0.0
    %3695 = vmatprep.subr.mxu0 0.0
    %3696 = vmatpush1.msra.mxu0 0.0
    %3697 = vmatprep.subr.mxu0 0.0
    %3698 = vmatpush1.msra.mxu0 0.0
    %3699 = vmatprep.subr.mxu0 0.0
    %3700 = vmatpush1.msra.mxu0 0.0
    %3701 = vmatprep.mubr.f32.mxu0 0.0
    %3702 = vmatmul.mubr.f32.gmra.mrb[0].mxu0 %v3617
    %v3703 = vpop.f32.mrb[0].mxu0
    %v3704 = vadd.f32 %v3588, %v3703
    %v3705 = vpop.f32.mrb[0].mxu0
    %3706 = vmatprep.mubr.f32.mxu0 0.0
    %3707 = vmatmul.mubr.f32.gmra.mrb[0].mxu0 %v3620
    %v3708 = vpop.f32.mrb[0].mxu0
    %v3709 = vadd.f32 %v3593, %v3708
    %v3710 = vpop.f32.mrb[0].mxu0
    %3711 = vmatprep.mubr.f32.mxu0 0.0
    %3712 = vmatmul.mubr.f32.gmra.mrb[0].mxu0 %v3623
    %v3713 = vpop.f32.mrb[0].mxu0
    %v3714 = vadd.f32 %v3598, %v3713
    %v3715 = vpop.f32.mrb[0].mxu0
    %3716 = vmatprep.mubr.f32.mxu0 0.0
    %3717 = vmatmul.mubr.f32.gmra.mrb[0].mxu0 %v3626
    %v3718 = vpop.f32.mrb[0].mxu0
    %v3719 = vadd.f32 %v3603, %v3718
    %v3720 = vpop.f32.mrb[0].mxu0
    %3721 = vmatprep.mubr.f32.mxu0 0.0
    %3722 = vmatmul.mubr.f32.gmra.mrb[0].mxu0 %v3629
    %v3723 = vpop.f32.mrb[0].mxu0
    %v3724 = vadd.f32 %v3608, %v3723
    %v3725 = vpop.f32.mrb[0].mxu0
    %3726 = vmatprep.mubr.f32.mxu0 0.0
    %3727 = vmatmul.mubr.f32.gmra.mrb[0].mxu0 %v3632
    %v3728 = vpop.f32.mrb[0].mxu0
    %v3729 = vadd.f32 %v3613, %v3728
    %v3730 = vpop.f32.mrb[0].mxu0
    %3731 = vdwg.mxu0
    %3738 = vrot.lane.b32.xlu0 %v3152, 78
    %v3739 = vpop.permute.xlu0 %3738
    %3740 = vrot.lane.b32.xlu0 %v3153, 78
    %v3741 = vpop.permute.xlu0 %3740
    %3742 = vrot.lane.b32.xlu0 %v3154, 78
    %v3743 = vpop.permute.xlu0 %3742
    %3744 = vrot.lane.b32.xlu0 %v3155, 78
    %v3745 = vpop.permute.xlu0 %3744
    %3746 = vrot.lane.b32.xlu0 %v3156, 78
    %v3747 = vpop.permute.xlu0 %3746
    %3748 = vrot.lane.b32.xlu0 %v3157, 78
    %v3749 = vpop.permute.xlu0 %3748
    %v3750 = vsel %vm1998, %v3739, 0
    %v3752 = vsel %vm1998, %v3741, 0
    %v3754 = vsel %vm1998, %v3743, 0
    %v3756 = vsel %vm1998, %v3745, 0
    %v3758 = vsel %vm1998, %v3747, 0
    %v3760 = vsel %vm1998, %v3749, 0
    %v3763 = vsel %vm2017, %v3306, 0
    %3765 = vmatprep.subr.mxu0 0.0
    %3766 = vmatpush1.msra.mxu0 %v3300
    %3767 = vmatprep.subr.mxu0 0.0
    %3768 = vmatpush1.msra.mxu0 %v3301
    %3769 = vmatprep.subr.mxu0 0.0
    %3770 = vmatpush1.msra.mxu0 %v3302
    %3771 = vmatprep.subr.mxu0 0.0
    %3772 = vmatpush1.msra.mxu0 %v3303
    %3773 = vmatprep.subr.mxu0 0.0
    %3774 = vmatpush1.msra.mxu0 %v3304
    %3775 = vmatprep.subr.mxu0 0.0
    %3776 = vmatpush1.msra.mxu0 %v3305
    %3777 = vmatprep.subr.mxu0 0.0
    %3778 = vmatpush1.msra.mxu0 %v3763
    %3779 = vmatprep.subr.mxu0 0.0
    %3780 = vmatpush1.msra.mxu0 0.0
    %3781 = vmatprep.subr.mxu0 0.0
    %3782 = vmatpush1.msra.mxu0 0.0
    %3783 = vmatprep.subr.mxu0 0.0
    %3784 = vmatpush1.msra.mxu0 0.0
    %3785 = vmatprep.subr.mxu0 0.0
    %3786 = vmatpush1.msra.mxu0 0.0
    %3787 = vmatprep.subr.mxu0 0.0
    %3788 = vmatpush1.msra.mxu0 0.0
    %3789 = vmatprep.subr.mxu0 0.0
    %3790 = vmatpush1.msra.mxu0 0.0
    %3791 = vmatprep.subr.mxu0 0.0
    %3792 = vmatpush1.msra.mxu0 0.0
    %3793 = vmatprep.subr.mxu0 0.0
    %3794 = vmatpush1.msra.mxu0 0.0
    %3795 = vmatprep.subr.mxu0 0.0
    %3796 = vmatpush1.msra.mxu0 0.0
    %3797 = vmatprep.subr.mxu0 0.0
    %3798 = vmatpush1.msra.mxu0 0.0
    %3799 = vmatprep.subr.mxu0 0.0
    %3800 = vmatpush1.msra.mxu0 0.0
    %3801 = vmatprep.subr.mxu0 0.0
    %3802 = vmatpush1.msra.mxu0 0.0
    %3803 = vmatprep.subr.mxu0 0.0
    %3804 = vmatpush1.msra.mxu0 0.0
    %3805 = vmatprep.subr.mxu0 0.0
    %3806 = vmatpush1.msra.mxu0 0.0
    %3807 = vmatprep.subr.mxu0 0.0
    %3808 = vmatpush1.msra.mxu0 0.0
    %3809 = vmatprep.subr.mxu0 0.0
    %3810 = vmatpush1.msra.mxu0 0.0
    %3811 = vmatprep.subr.mxu0 0.0
    %3812 = vmatpush1.msra.mxu0 0.0
    %3813 = vmatprep.subr.mxu0 0.0
    %3814 = vmatpush1.msra.mxu0 0.0
    %3815 = vmatprep.subr.mxu0 0.0
    %3816 = vmatpush1.msra.mxu0 0.0
    %3817 = vmatprep.subr.mxu0 0.0
    %3818 = vmatpush1.msra.mxu0 0.0
    %3819 = vmatprep.subr.mxu0 0.0
    %3820 = vmatpush1.msra.mxu0 0.0
    %3821 = vmatprep.subr.mxu0 0.0
    %3822 = vmatpush1.msra.mxu0 0.0
    %3823 = vmatprep.subr.mxu0 0.0
    %3824 = vmatpush1.msra.mxu0 0.0
    %3825 = vmatprep.subr.mxu0 0.0
    %3826 = vmatpush1.msra.mxu0 0.0
    %3827 = vmatprep.subr.mxu0 0.0
    %3828 = vmatpush1.msra.mxu0 0.0
    %3829 = vmatprep.mubr.f32.mxu0 0.0
    %3830 = vmatmul.mubr.f32.gmra.mrb[0].mxu0 %v3750
    %v3831 = vpop.f32.mrb[0].mxu0
    %v3832 = vadd.f32 0.0, %v3831
    %v3833 = vpop.f32.mrb[0].mxu0
    %3834 = vmatprep.mubr.f32.mxu0 0.0
    %3835 = vmatmul.mubr.f32.gmra.mrb[0].mxu0 %v3752
    %v3836 = vpop.f32.mrb[0].mxu0
    %v3837 = vadd.f32 0.0, %v3836
    %v3838 = vpop.f32.mrb[0].mxu0
    %3839 = vmatprep.mubr.f32.mxu0 0.0
    %3840 = vmatmul.mubr.f32.gmra.mrb[0].mxu0 %v3754
    %v3841 = vpop.f32.mrb[0].mxu0
    %v3842 = vadd.f32 0.0, %v3841
    %v3843 = vpop.f32.mrb[0].mxu0
    %3844 = vmatprep.mubr.f32.mxu0 0.0
    %3845 = vmatmul.mubr.f32.gmra.mrb[0].mxu0 %v3756
    %v3846 = vpop.f32.mrb[0].mxu0
    %v3847 = vadd.f32 0.0, %v3846
    %v3848 = vpop.f32.mrb[0].mxu0
    %3849 = vmatprep.mubr.f32.mxu0 0.0
    %3850 = vmatmul.mubr.f32.gmra.mrb[0].mxu0 %v3758
    %v3851 = vpop.f32.mrb[0].mxu0
    %v3852 = vadd.f32 0.0, %v3851
    %v3853 = vpop.f32.mrb[0].mxu0
    %3854 = vmatprep.mubr.f32.mxu0 0.0
    %3855 = vmatmul.mubr.f32.gmra.mrb[0].mxu0 %v3760
    %v3856 = vpop.f32.mrb[0].mxu0
    %v3857 = vadd.f32 0.0, %v3856
    %v3858 = vpop.f32.mrb[0].mxu0
    %3859 = vdwg.mxu0
    %v3860 = vadd.f32 %v3704, %v3832
    %v3861 = vadd.f32 %v3709, %v3837
    %v3862 = vadd.f32 %v3714, %v3842
    %v3863 = vadd.f32 %v3719, %v3847
    %v3864 = vadd.f32 %v3724, %v3852
    %v3865 = vadd.f32 %v3729, %v3857
    %v3866 = vlaneseq
    %v3867 = vshrl.u32 %v3866, 7
    %v3868 = vsub.s32 0, %v3867
    %v3869 = vrot.slane %v3307, %v3868
    %v3870 = vadd.f32 %v3860, %v3869
    %v3871 = vadd.f32 %v3861, %v3869
    %v3872 = vadd.f32 %v3862, %v3869
    %v3873 = vadd.f32 %v3863, %v3869
    %v3874 = vadd.f32 %v3864, %v3869
    %v3875 = vadd.f32 %v3865, %v3869
    %3876 = vmatprep.subr.mxu0 0.0
    %3877 = vmatpush1.msra.mxu0 %v3870
    %3878 = vmatprep.subr.mxu0 0.0
    %3879 = vmatpush1.msra.mxu0 %v3871
    %3880 = vmatprep.subr.mxu0 0.0
    %3881 = vmatpush1.msra.mxu0 %v3872
    %3882 = vmatprep.subr.mxu0 0.0
    %3883 = vmatpush1.msra.mxu0 %v3873
    %3884 = vmatprep.subr.mxu0 0.0
    %3885 = vmatpush1.msra.mxu0 %v3874
    %3886 = vmatprep.subr.mxu0 0.0
    %3887 = vmatpush1.msra.mxu0 %v3875
    %3888 = vmatprep.subr.mxu0 0.0
    %3889 = vmatpush1.msra.mxu0 0.0
    %3890 = vmatprep.subr.mxu0 0.0
    %3891 = vmatpush1.msra.mxu0 0.0
    %3892 = vmatprep.subr.mxu0 0.0
    %3893 = vmatpush1.msra.mxu0 0.0
    %3894 = vmatprep.subr.mxu0 0.0
    %3895 = vmatpush1.msra.mxu0 0.0
    %3896 = vmatprep.subr.mxu0 0.0
    %3897 = vmatpush1.msra.mxu0 0.0
    %3898 = vmatprep.subr.mxu0 0.0
    %3899 = vmatpush1.msra.mxu0 0.0
    %3900 = vmatprep.subr.mxu0 0.0
    %3901 = vmatpush1.msra.mxu0 0.0
    %3902 = vmatprep.subr.mxu0 0.0
    %3903 = vmatpush1.msra.mxu0 0.0
    %3904 = vmatprep.subr.mxu0 0.0
    %3905 = vmatpush1.msra.mxu0 0.0
    %3906 = vmatprep.subr.mxu0 0.0
    %3907 = vmatpush1.msra.mxu0 0.0
    %3908 = vmatprep.subr.mxu0 0.0
    %3909 = vmatpush1.msra.mxu0 0.0
    %3910 = vmatprep.subr.mxu0 0.0
    %3911 = vmatpush1.msra.mxu0 0.0
    %3912 = vmatprep.subr.mxu0 0.0
    %3913 = vmatpush1.msra.mxu0 0.0
    %3914 = vmatprep.subr.mxu0 0.0
    %3915 = vmatpush1.msra.mxu0 0.0
    %3916 = vmatprep.subr.mxu0 0.0
    %3917 = vmatpush1.msra.mxu0 0.0
    %3918 = vmatprep.subr.mxu0 0.0
    %3919 = vmatpush1.msra.mxu0 0.0
    %3920 = vmatprep.subr.mxu0 0.0
    %3921 = vmatpush1.msra.mxu0 0.0
    %3922 = vmatprep.subr.mxu0 0.0
    %3923 = vmatpush1.msra.mxu0 0.0
    %3924 = vmatprep.subr.mxu0 0.0
    %3925 = vmatpush1.msra.mxu0 0.0
    %3926 = vmatprep.subr.mxu0 0.0
    %3927 = vmatpush1.msra.mxu0 0.0
    %3928 = vmatprep.subr.mxu0 0.0
    %3929 = vmatpush1.msra.mxu0 0.0
    %3930 = vmatprep.subr.mxu0 0.0
    %3931 = vmatpush1.msra.mxu0 0.0
    %3932 = vmatprep.subr.mxu0 0.0
    %3933 = vmatpush1.msra.mxu0 0.0
    %3934 = vmatprep.subr.mxu0 0.0
    %3935 = vmatpush1.msra.mxu0 0.0
    %3936 = vmatprep.subr.mxu0 0.0
    %3937 = vmatpush1.msra.mxu0 0.0
    %3938 = vmatprep.subr.mxu0 0.0
    %3939 = vmatpush1.msra.mxu0 0.0
    %3940 = vmatprep.mubr.f32.mxu0 0.0
    %3941 = vmatmul.mubr.f32.gmra.mrb[0].mxu0 %v1588
    %v3942 = vpop.f32.mrb[0].mxu0
    %v3943 = vadd.f32 0.0, %v3942
    %v3944 = vpop.f32.mrb[0].mxu0
    %3945 = vmatprep.mubr.f32.mxu0 0.0
    %3946 = vmatmul.mubr.f32.gmra.mrb[0].mxu0 %v1591
    %v3947 = vpop.f32.mrb[0].mxu0
    %v3948 = vadd.f32 0.0, %v3947
    %v3949 = vpop.f32.mrb[0].mxu0
    %3950 = vdwg.mxu0
    %v3951 = vsel %vm1998, %v3943, 0.0
    %v3952 = vsel %vm1998, %v3948, 0.0
    %v3953 = vadd.f32 %v3951, %v3952
    %v3954 = vrot.slane %v3953, 4
    %v3955 = vadd.f32 %v3953, %v3954
    %v3956 = vrot.slane %v3955, 2
    %v3957 = vadd.f32 %v3955, %v3956
    %v3958 = vrot.slane %v3957, 1
    %v3959 = vadd.f32 %v3957, %v3958
    %v3960 = vmul.f32 %v3959, %v1689
    %v3961 = vsub.f32 %v3943, %v3960
    %v3962 = vsub.f32 %v3948, %v3960
    %v3963 = vmul.f32 %v3961, %v3961
    %v3964 = vmul.f32 %v3962, %v3962
    %v3965 = vsel %vm1998, %v3963, 0.0
    %v3966 = vsel %vm1998, %v3964, 0.0
    %v3967 = vadd.f32 %v3965, %v3966
    %v3968 = vrot.slane %v3967, 4
    %v3969 = vadd.f32 %v3967, %v3968
    %v3970 = vrot.slane %v3969, 2
    %v3971 = vadd.f32 %v3969, %v3970
    %v3972 = vrot.slane %v3971, 1
    %v3973 = vadd.f32 %v3971, %v3972
    %v3974 = vmul.f32 %v3973, %v1689
    %v3975 = vadd.f32 %v3974, 1e-05
    %v3976 = vrsqrt.pop %v3975
    %v3977 = vmul.f32 %v3961, %v3976
    %v3978 = vmul.f32 %v3962, %v3976
    %v3979 = vlaneseq
    %v3980 = vshrl.u32 %v3979, 7
    %v3981 = vsub.s32 0, %v3980
    %v3982 = vrot.slane %v3308, %v3981
    %v3983 = vmul.f32 %v3977, %v3982
    %v3984 = vmul.f32 %v3978, %v3982
    %v3985 = vlaneseq
    %v3986 = vshrl.u32 %v3985, 7
    %v3987 = vsub.s32 0, %v3986
    %v3988 = vrot.slane %v3309, %v3987
    %v3989 = vadd.f32 %v3983, %v3988
    %v3990 = vadd.f32 %v3984, %v3988
    %vm3991 = vcmp.gt.f32.partialorder %v3989, 0.0
    %vm3992 = vcmp.gt.f32.partialorder %v3990, 0.0
    %v3993 = vmul.f32 %v3989, 1.442695
    %v3994 = vpow.pop %v3993
    %v3995 = vmul.f32 %v3990, 1.442695
    %v3996 = vpow.pop %v3995
    %v3997 = vsub.f32 %v3994, 1.0
    %v3998 = vsub.f32 %v3996, 1.0
    %v3999 = vsel %vm3991, %v3989, %v3997
    %v4000 = vsel %vm3992, %v3990, %v3998
    %s4001 = scalar_lea.vmem %s11, 168
    %v4002 = vld [vmem:[%s4001] sm:$0xff]
    %v4003 = vld [vmem:[%s4001 + $0x8] sm:$0xff]
    %v4004 = vld [vmem:[%s4001 + $0x10] sm:$0xff]
    %v4005 = vld [vmem:[%s4001 + $0x18] sm:$0xff]
    %v4006 = vld [vmem:[%s4001 + $0x20] sm:$0xff]
    %v4007 = vld [vmem:[%s4001 + $0x28] sm:$0xff]
    %v4008 = vld [vmem:[%s4001 + $0x30] sm:$0x3]
    %s4009 = scalar_lea.vmem %s12, 168
    %v4010 = vld [vmem:[%s4009] sm:$0xff]
    %v4011 = vld [vmem:[%s4009 + $0x8] sm:$0xff]
    %v4012 = vld [vmem:[%s4009 + $0x10] sm:$0xff]
    %v4013 = vld [vmem:[%s4009 + $0x18] sm:$0xff]
    %v4014 = vld [vmem:[%s4009 + $0x20] sm:$0xff]
    %v4015 = vld [vmem:[%s4009 + $0x28] sm:$0xff]
    %v4016 = vld [vmem:[%s4009 + $0x30] sm:$0x3]
    %s4017 = scalar_lea.vmem %s13, 168
    %v4018 = vld [vmem:[%s4017] sm:$0xff]
    %v4019 = vld [vmem:[%s4017 + $0x8] sm:$0xff]
    %v4020 = vld [vmem:[%s4017 + $0x10] sm:$0xff]
    %v4021 = vld [vmem:[%s4017 + $0x18] sm:$0xff]
    %v4022 = vld [vmem:[%s4017 + $0x20] sm:$0xff]
    %v4023 = vld [vmem:[%s4017 + $0x28] sm:$0xff]
    %v4024 = vld [vmem:[%s4017 + $0x30] sm:$0x3]
    %v4025 = vld [vmem:[%s14 + $0x3] sm:$0x1]
    %v4026 = vld [vmem:[%s15 + $0x3] sm:$0x1]
    %v4027 = vld [vmem:[%s16 + $0x3] sm:$0x1]
    %4028 = vrot.lane.b32.xlu0 %v1773, 106
    %v4029 = vpop.permute.xlu0 %4028
    %4030 = vrot.lane.b32.xlu0 %v1775, 106
    %v4031 = vpop.permute.xlu0 %4030
    %4034 = vmatprep.subr.mxu0 0.0
    %4035 = vmatpush1.msra.mxu0 %v4029
    %4036 = vmatprep.subr.mxu0 0.0
    %4037 = vmatpush1.msra.mxu0 %v4031
    %4038 = vmatprep.subr.mxu0 0.0
    %4039 = vmatpush1.msra.mxu0 0.0
    %4040 = vmatprep.subr.mxu0 0.0
    %4041 = vmatpush1.msra.mxu0 0.0
    %4042 = vmatprep.subr.mxu0 0.0
    %4043 = vmatpush1.msra.mxu0 0.0
    %4044 = vmatprep.subr.mxu0 0.0
    %4045 = vmatpush1.msra.mxu0 0.0
    %4046 = vmatprep.subr.mxu0 0.0
    %4047 = vmatpush1.msra.mxu0 0.0
    %4048 = vmatprep.subr.mxu0 0.0
    %4049 = vmatpush1.msra.mxu0 0.0
    %4050 = vmatprep.subr.mxu0 0.0
    %4051 = vmatpush1.msra.mxu0 0.0
    %4052 = vmatprep.subr.mxu0 0.0
    %4053 = vmatpush1.msra.mxu0 0.0
    %4054 = vmatprep.subr.mxu0 0.0
    %4055 = vmatpush1.msra.mxu0 0.0
    %4056 = vmatprep.subr.mxu0 0.0
    %4057 = vmatpush1.msra.mxu0 0.0
    %4058 = vmatprep.subr.mxu0 0.0
    %4059 = vmatpush1.msra.mxu0 0.0
    %4060 = vmatprep.subr.mxu0 0.0
    %4061 = vmatpush1.msra.mxu0 0.0
    %4062 = vmatprep.subr.mxu0 0.0
    %4063 = vmatpush1.msra.mxu0 0.0
    %4064 = vmatprep.subr.mxu0 0.0
    %4065 = vmatpush1.msra.mxu0 0.0
    %4066 = vmatprep.subr.mxu0 0.0
    %4067 = vmatpush1.msra.mxu0 0.0
    %4068 = vmatprep.subr.mxu0 0.0
    %4069 = vmatpush1.msra.mxu0 0.0
    %4070 = vmatprep.subr.mxu0 0.0
    %4071 = vmatpush1.msra.mxu0 0.0
    %4072 = vmatprep.subr.mxu0 0.0
    %4073 = vmatpush1.msra.mxu0 0.0
    %4074 = vmatprep.subr.mxu0 0.0
    %4075 = vmatpush1.msra.mxu0 0.0
    %4076 = vmatprep.subr.mxu0 0.0
    %4077 = vmatpush1.msra.mxu0 0.0
    %4078 = vmatprep.subr.mxu0 0.0
    %4079 = vmatpush1.msra.mxu0 0.0
    %4080 = vmatprep.subr.mxu0 0.0
    %4081 = vmatpush1.msra.mxu0 0.0
    %4082 = vmatprep.subr.mxu0 0.0
    %4083 = vmatpush1.msra.mxu0 0.0
    %4084 = vmatprep.subr.mxu0 0.0
    %4085 = vmatpush1.msra.mxu0 0.0
    %4086 = vmatprep.subr.mxu0 0.0
    %4087 = vmatpush1.msra.mxu0 0.0
    %4088 = vmatprep.subr.mxu0 0.0
    %4089 = vmatpush1.msra.mxu0 0.0
    %4090 = vmatprep.subr.mxu0 0.0
    %4091 = vmatpush1.msra.mxu0 0.0
    %4092 = vmatprep.subr.mxu0 0.0
    %4093 = vmatpush1.msra.mxu0 0.0
    %4094 = vmatprep.subr.mxu0 0.0
    %4095 = vmatpush1.msra.mxu0 0.0
    %4096 = vmatprep.subr.mxu0 0.0
    %4097 = vmatpush1.msra.mxu0 0.0
    %4098 = vmatprep.mubr.f32.mxu0 0.0
    %4099 = vmatmul.mubr.f32.gmra.mrb[0].mxu0 %v105
    %v4100 = vpop.f32.mrb[0].mxu0
    %v4101 = vadd.f32 0.0, %v4100
    %v4102 = vpop.f32.mrb[0].mxu0
    %4103 = vmatprep.mubr.f32.mxu0 0.0
    %4104 = vmatmul.mubr.f32.gmra.mrb[0].mxu0 %v108
    %v4105 = vpop.f32.mrb[0].mxu0
    %v4106 = vadd.f32 0.0, %v4105
    %v4107 = vpop.f32.mrb[0].mxu0
    %4108 = vmatprep.mubr.f32.mxu0 0.0
    %4109 = vmatmul.mubr.f32.gmra.mrb[0].mxu0 %v111
    %v4110 = vpop.f32.mrb[0].mxu0
    %v4111 = vadd.f32 0.0, %v4110
    %v4112 = vpop.f32.mrb[0].mxu0
    %4113 = vmatprep.mubr.f32.mxu0 0.0
    %4114 = vmatmul.mubr.f32.gmra.mrb[0].mxu0 %v114
    %v4115 = vpop.f32.mrb[0].mxu0
    %v4116 = vadd.f32 0.0, %v4115
    %v4117 = vpop.f32.mrb[0].mxu0
    %4118 = vmatprep.mubr.f32.mxu0 0.0
    %4119 = vmatmul.mubr.f32.gmra.mrb[0].mxu0 %v117
    %v4120 = vpop.f32.mrb[0].mxu0
    %v4121 = vadd.f32 0.0, %v4120
    %v4122 = vpop.f32.mrb[0].mxu0
    %4123 = vmatprep.mubr.f32.mxu0 0.0
    %4124 = vmatmul.mubr.f32.gmra.mrb[0].mxu0 %v120
    %v4125 = vpop.f32.mrb[0].mxu0
    %v4126 = vadd.f32 0.0, %v4125
    %v4127 = vpop.f32.mrb[0].mxu0
    %4128 = vdwg.mxu0
    %4129 = vmatprep.subr.mxu0 0.0
    %4130 = vmatpush1.msra.mxu0 %v4029
    %4131 = vmatprep.subr.mxu0 0.0
    %4132 = vmatpush1.msra.mxu0 %v4031
    %4133 = vmatprep.subr.mxu0 0.0
    %4134 = vmatpush1.msra.mxu0 0.0
    %4135 = vmatprep.subr.mxu0 0.0
    %4136 = vmatpush1.msra.mxu0 0.0
    %4137 = vmatprep.subr.mxu0 0.0
    %4138 = vmatpush1.msra.mxu0 0.0
    %4139 = vmatprep.subr.mxu0 0.0
    %4140 = vmatpush1.msra.mxu0 0.0
    %4141 = vmatprep.subr.mxu0 0.0
    %4142 = vmatpush1.msra.mxu0 0.0
    %4143 = vmatprep.subr.mxu0 0.0
    %4144 = vmatpush1.msra.mxu0 0.0
    %4145 = vmatprep.subr.mxu0 0.0
    %4146 = vmatpush1.msra.mxu0 0.0
    %4147 = vmatprep.subr.mxu0 0.0
    %4148 = vmatpush1.msra.mxu0 0.0
    %4149 = vmatprep.subr.mxu0 0.0
    %4150 = vmatpush1.msra.mxu0 0.0
    %4151 = vmatprep.subr.mxu0 0.0
    %4152 = vmatpush1.msra.mxu0 0.0
    %4153 = vmatprep.subr.mxu0 0.0
    %4154 = vmatpush1.msra.mxu0 0.0
    %4155 = vmatprep.subr.mxu0 0.0
    %4156 = vmatpush1.msra.mxu0 0.0
    %4157 = vmatprep.subr.mxu0 0.0
    %4158 = vmatpush1.msra.mxu0 0.0
    %4159 = vmatprep.subr.mxu0 0.0
    %4160 = vmatpush1.msra.mxu0 0.0
    %4161 = vmatprep.subr.mxu0 0.0
    %4162 = vmatpush1.msra.mxu0 0.0
    %4163 = vmatprep.subr.mxu0 0.0
    %4164 = vmatpush1.msra.mxu0 0.0
    %4165 = vmatprep.subr.mxu0 0.0
    %4166 = vmatpush1.msra.mxu0 0.0
    %4167 = vmatprep.subr.mxu0 0.0
    %4168 = vmatpush1.msra.mxu0 0.0
    %4169 = vmatprep.subr.mxu0 0.0
    %4170 = vmatpush1.msra.mxu0 0.0
    %4171 = vmatprep.subr.mxu0 0.0
    %4172 = vmatpush1.msra.mxu0 0.0
    %4173 = vmatprep.subr.mxu0 0.0
    %4174 = vmatpush1.msra.mxu0 0.0
    %4175 = vmatprep.subr.mxu0 0.0
    %4176 = vmatpush1.msra.mxu0 0.0
    %4177 = vmatprep.subr.mxu0 0.0
    %4178 = vmatpush1.msra.mxu0 0.0
    %4179 = vmatprep.subr.mxu0 0.0
    %4180 = vmatpush1.msra.mxu0 0.0
    %4181 = vmatprep.subr.mxu0 0.0
    %4182 = vmatpush1.msra.mxu0 0.0
    %4183 = vmatprep.subr.mxu0 0.0
    %4184 = vmatpush1.msra.mxu0 0.0
    %4185 = vmatprep.subr.mxu0 0.0
    %4186 = vmatpush1.msra.mxu0 0.0
    %4187 = vmatprep.subr.mxu0 0.0
    %4188 = vmatpush1.msra.mxu0 0.0
    %4189 = vmatprep.subr.mxu0 0.0
    %4190 = vmatpush1.msra.mxu0 0.0
    %4191 = vmatprep.subr.mxu0 0.0
    %4192 = vmatpush1.msra.mxu0 0.0
    %4193 = vmatprep.mubr.f32.mxu0 0.0
    %4194 = vmatmul.mubr.f32.gmra.mrb[0].mxu0 %v218
    %v4195 = vpop.f32.mrb[0].mxu0
    %v4196 = vadd.f32 0.0, %v4195
    %v4197 = vpop.f32.mrb[0].mxu0
    %4198 = vmatprep.mubr.f32.mxu0 0.0
    %4199 = vmatmul.mubr.f32.gmra.mrb[0].mxu0 %v221
    %v4200 = vpop.f32.mrb[0].mxu0
    %v4201 = vadd.f32 0.0, %v4200
    %v4202 = vpop.f32.mrb[0].mxu0
    %4203 = vmatprep.mubr.f32.mxu0 0.0
    %4204 = vmatmul.mubr.f32.gmra.mrb[0].mxu0 %v224
    %v4205 = vpop.f32.mrb[0].mxu0
    %v4206 = vadd.f32 0.0, %v4205
    %v4207 = vpop.f32.mrb[0].mxu0
    %4208 = vmatprep.mubr.f32.mxu0 0.0
    %4209 = vmatmul.mubr.f32.gmra.mrb[0].mxu0 %v227
    %v4210 = vpop.f32.mrb[0].mxu0
    %v4211 = vadd.f32 0.0, %v4210
    %v4212 = vpop.f32.mrb[0].mxu0
    %4213 = vmatprep.mubr.f32.mxu0 0.0
    %4214 = vmatmul.mubr.f32.gmra.mrb[0].mxu0 %v230
    %v4215 = vpop.f32.mrb[0].mxu0
    %v4216 = vadd.f32 0.0, %v4215
    %v4217 = vpop.f32.mrb[0].mxu0
    %4218 = vmatprep.mubr.f32.mxu0 0.0
    %4219 = vmatmul.mubr.f32.gmra.mrb[0].mxu0 %v233
    %v4220 = vpop.f32.mrb[0].mxu0
    %v4221 = vadd.f32 0.0, %v4220
    %v4222 = vpop.f32.mrb[0].mxu0
    %4223 = vdwg.mxu0
    %v4225 = vsel %vm1998, %v4196, 0
    %v4228 = vsel %vm1998, %v4201, 0
    %v4231 = vsel %vm1998, %v4206, 0
    %v4234 = vsel %vm1998, %v4211, 0
    %v4237 = vsel %vm1998, %v4216, 0
    %v4240 = vsel %vm1998, %v4221, 0
    %v4243 = vsel %vm2017, %v4016, 0
    %4245 = vmatprep.subr.mxu0 0.0
    %4246 = vmatpush1.msra.mxu0 %v4010
    %4247 = vmatprep.subr.mxu0 0.0
    %4248 = vmatpush1.msra.mxu0 %v4011
    %4249 = vmatprep.subr.mxu0 0.0
    %4250 = vmatpush1.msra.mxu0 %v4012
    %4251 = vmatprep.subr.mxu0 0.0
    %4252 = vmatpush1.msra.mxu0 %v4013
    %4253 = vmatprep.subr.mxu0 0.0
    %4254 = vmatpush1.msra.mxu0 %v4014
    %4255 = vmatprep.subr.mxu0 0.0
    %4256 = vmatpush1.msra.mxu0 %v4015
    %4257 = vmatprep.subr.mxu0 0.0
    %4258 = vmatpush1.msra.mxu0 %v4243
    %4259 = vmatprep.subr.mxu0 0.0
    %4260 = vmatpush1.msra.mxu0 0.0
    %4261 = vmatprep.subr.mxu0 0.0
    %4262 = vmatpush1.msra.mxu0 0.0
    %4263 = vmatprep.subr.mxu0 0.0
    %4264 = vmatpush1.msra.mxu0 0.0
    %4265 = vmatprep.subr.mxu0 0.0
    %4266 = vmatpush1.msra.mxu0 0.0
    %4267 = vmatprep.subr.mxu0 0.0
    %4268 = vmatpush1.msra.mxu0 0.0
    %4269 = vmatprep.subr.mxu0 0.0
    %4270 = vmatpush1.msra.mxu0 0.0
    %4271 = vmatprep.subr.mxu0 0.0
    %4272 = vmatpush1.msra.mxu0 0.0
    %4273 = vmatprep.subr.mxu0 0.0
    %4274 = vmatpush1.msra.mxu0 0.0
    %4275 = vmatprep.subr.mxu0 0.0
    %4276 = vmatpush1.msra.mxu0 0.0
    %4277 = vmatprep.subr.mxu0 0.0
    %4278 = vmatpush1.msra.mxu0 0.0
    %4279 = vmatprep.subr.mxu0 0.0
    %4280 = vmatpush1.msra.mxu0 0.0
    %4281 = vmatprep.subr.mxu0 0.0
    %4282 = vmatpush1.msra.mxu0 0.0
    %4283 = vmatprep.subr.mxu0 0.0
    %4284 = vmatpush1.msra.mxu0 0.0
    %4285 = vmatprep.subr.mxu0 0.0
    %4286 = vmatpush1.msra.mxu0 0.0
    %4287 = vmatprep.subr.mxu0 0.0
    %4288 = vmatpush1.msra.mxu0 0.0
    %4289 = vmatprep.subr.mxu0 0.0
    %4290 = vmatpush1.msra.mxu0 0.0
    %4291 = vmatprep.subr.mxu0 0.0
    %4292 = vmatpush1.msra.mxu0 0.0
    %4293 = vmatprep.subr.mxu0 0.0
    %4294 = vmatpush1.msra.mxu0 0.0
    %4295 = vmatprep.subr.mxu0 0.0
    %4296 = vmatpush1.msra.mxu0 0.0
    %4297 = vmatprep.subr.mxu0 0.0
    %4298 = vmatpush1.msra.mxu0 0.0
    %4299 = vmatprep.subr.mxu0 0.0
    %4300 = vmatpush1.msra.mxu0 0.0
    %4301 = vmatprep.subr.mxu0 0.0
    %4302 = vmatpush1.msra.mxu0 0.0
    %4303 = vmatprep.subr.mxu0 0.0
    %4304 = vmatpush1.msra.mxu0 0.0
    %4305 = vmatprep.subr.mxu0 0.0
    %4306 = vmatpush1.msra.mxu0 0.0
    %4307 = vmatprep.subr.mxu0 0.0
    %4308 = vmatpush1.msra.mxu0 0.0
    %4309 = vmatprep.mubr.f32.mxu0 0.0
    %4310 = vmatmul.mubr.f32.gmra.mrb[0].mxu0 %v4225
    %v4311 = vpop.f32.mrb[0].mxu0
    %v4312 = vadd.f32 0.0, %v4311
    %v4313 = vpop.f32.mrb[0].mxu0
    %4314 = vmatprep.mubr.f32.mxu0 0.0
    %4315 = vmatmul.mubr.f32.gmra.mrb[0].mxu0 %v4228
    %v4316 = vpop.f32.mrb[0].mxu0
    %v4317 = vadd.f32 0.0, %v4316
    %v4318 = vpop.f32.mrb[0].mxu0
    %4319 = vmatprep.mubr.f32.mxu0 0.0
    %4320 = vmatmul.mubr.f32.gmra.mrb[0].mxu0 %v4231
    %v4321 = vpop.f32.mrb[0].mxu0
    %v4322 = vadd.f32 0.0, %v4321
    %v4323 = vpop.f32.mrb[0].mxu0
    %4324 = vmatprep.mubr.f32.mxu0 0.0
    %4325 = vmatmul.mubr.f32.gmra.mrb[0].mxu0 %v4234
    %v4326 = vpop.f32.mrb[0].mxu0
    %v4327 = vadd.f32 0.0, %v4326
    %v4328 = vpop.f32.mrb[0].mxu0
    %4329 = vmatprep.mubr.f32.mxu0 0.0
    %4330 = vmatmul.mubr.f32.gmra.mrb[0].mxu0 %v4237
    %v4331 = vpop.f32.mrb[0].mxu0
    %v4332 = vadd.f32 0.0, %v4331
    %v4333 = vpop.f32.mrb[0].mxu0
    %4334 = vmatprep.mubr.f32.mxu0 0.0
    %4335 = vmatmul.mubr.f32.gmra.mrb[0].mxu0 %v4240
    %v4336 = vpop.f32.mrb[0].mxu0
    %v4337 = vadd.f32 0.0, %v4336
    %v4338 = vpop.f32.mrb[0].mxu0
    %4339 = vdwg.mxu0
    %v4341 = vsel %vm1998, %v4101, 0
    %v4344 = vsel %vm1998, %v4106, 0
    %v4347 = vsel %vm1998, %v4111, 0
    %v4350 = vsel %vm1998, %v4116, 0
    %v4353 = vsel %vm1998, %v4121, 0
    %v4356 = vsel %vm1998, %v4126, 0
    %v4359 = vsel %vm2017, %v4008, 0
    %4361 = vmatprep.subr.mxu0 0.0
    %4362 = vmatpush1.msra.mxu0 %v4002
    %4363 = vmatprep.subr.mxu0 0.0
    %4364 = vmatpush1.msra.mxu0 %v4003
    %4365 = vmatprep.subr.mxu0 0.0
    %4366 = vmatpush1.msra.mxu0 %v4004
    %4367 = vmatprep.subr.mxu0 0.0
    %4368 = vmatpush1.msra.mxu0 %v4005
    %4369 = vmatprep.subr.mxu0 0.0
    %4370 = vmatpush1.msra.mxu0 %v4006
    %4371 = vmatprep.subr.mxu0 0.0
    %4372 = vmatpush1.msra.mxu0 %v4007
    %4373 = vmatprep.subr.mxu0 0.0
    %4374 = vmatpush1.msra.mxu0 %v4359
    %4375 = vmatprep.subr.mxu0 0.0
    %4376 = vmatpush1.msra.mxu0 0.0
    %4377 = vmatprep.subr.mxu0 0.0
    %4378 = vmatpush1.msra.mxu0 0.0
    %4379 = vmatprep.subr.mxu0 0.0
    %4380 = vmatpush1.msra.mxu0 0.0
    %4381 = vmatprep.subr.mxu0 0.0
    %4382 = vmatpush1.msra.mxu0 0.0
    %4383 = vmatprep.subr.mxu0 0.0
    %4384 = vmatpush1.msra.mxu0 0.0
    %4385 = vmatprep.subr.mxu0 0.0
    %4386 = vmatpush1.msra.mxu0 0.0
    %4387 = vmatprep.subr.mxu0 0.0
    %4388 = vmatpush1.msra.mxu0 0.0
    %4389 = vmatprep.subr.mxu0 0.0
    %4390 = vmatpush1.msra.mxu0 0.0
    %4391 = vmatprep.subr.mxu0 0.0
    %4392 = vmatpush1.msra.mxu0 0.0
    %4393 = vmatprep.subr.mxu0 0.0
    %4394 = vmatpush1.msra.mxu0 0.0
    %4395 = vmatprep.subr.mxu0 0.0
    %4396 = vmatpush1.msra.mxu0 0.0
    %4397 = vmatprep.subr.mxu0 0.0
    %4398 = vmatpush1.msra.mxu0 0.0
    %4399 = vmatprep.subr.mxu0 0.0
    %4400 = vmatpush1.msra.mxu0 0.0
    %4401 = vmatprep.subr.mxu0 0.0
    %4402 = vmatpush1.msra.mxu0 0.0
    %4403 = vmatprep.subr.mxu0 0.0
    %4404 = vmatpush1.msra.mxu0 0.0
    %4405 = vmatprep.subr.mxu0 0.0
    %4406 = vmatpush1.msra.mxu0 0.0
    %4407 = vmatprep.subr.mxu0 0.0
    %4408 = vmatpush1.msra.mxu0 0.0
    %4409 = vmatprep.subr.mxu0 0.0
    %4410 = vmatpush1.msra.mxu0 0.0
    %4411 = vmatprep.subr.mxu0 0.0
    %4412 = vmatpush1.msra.mxu0 0.0
    %4413 = vmatprep.subr.mxu0 0.0
    %4414 = vmatpush1.msra.mxu0 0.0
    %4415 = vmatprep.subr.mxu0 0.0
    %4416 = vmatpush1.msra.mxu0 0.0
    %4417 = vmatprep.subr.mxu0 0.0
    %4418 = vmatpush1.msra.mxu0 0.0
    %4419 = vmatprep.subr.mxu0 0.0
    %4420 = vmatpush1.msra.mxu0 0.0
    %4421 = vmatprep.subr.mxu0 0.0
    %4422 = vmatpush1.msra.mxu0 0.0
    %4423 = vmatprep.subr.mxu0 0.0
    %4424 = vmatpush1.msra.mxu0 0.0
    %4425 = vmatprep.mubr.f32.mxu0 0.0
    %4426 = vmatmul.mubr.f32.gmra.mrb[0].mxu0 %v4341
    %v4427 = vpop.f32.mrb[0].mxu0
    %v4428 = vadd.f32 %v4312, %v4427
    %v4429 = vpop.f32.mrb[0].mxu0
    %4430 = vmatprep.mubr.f32.mxu0 0.0
    %4431 = vmatmul.mubr.f32.gmra.mrb[0].mxu0 %v4344
    %v4432 = vpop.f32.mrb[0].mxu0
    %v4433 = vadd.f32 %v4317, %v4432
    %v4434 = vpop.f32.mrb[0].mxu0
    %4435 = vmatprep.mubr.f32.mxu0 0.0
    %4436 = vmatmul.mubr.f32.gmra.mrb[0].mxu0 %v4347
    %v4437 = vpop.f32.mrb[0].mxu0
    %v4438 = vadd.f32 %v4322, %v4437
    %v4439 = vpop.f32.mrb[0].mxu0
    %4440 = vmatprep.mubr.f32.mxu0 0.0
    %4441 = vmatmul.mubr.f32.gmra.mrb[0].mxu0 %v4350
    %v4442 = vpop.f32.mrb[0].mxu0
    %v4443 = vadd.f32 %v4327, %v4442
    %v4444 = vpop.f32.mrb[0].mxu0
    %4445 = vmatprep.mubr.f32.mxu0 0.0
    %4446 = vmatmul.mubr.f32.gmra.mrb[0].mxu0 %v4353
    %v4447 = vpop.f32.mrb[0].mxu0
    %v4448 = vadd.f32 %v4332, %v4447
    %v4449 = vpop.f32.mrb[0].mxu0
    %4450 = vmatprep.mubr.f32.mxu0 0.0
    %4451 = vmatmul.mubr.f32.gmra.mrb[0].mxu0 %v4356
    %v4452 = vpop.f32.mrb[0].mxu0
    %v4453 = vadd.f32 %v4337, %v4452
    %v4454 = vpop.f32.mrb[0].mxu0
    %4455 = vdwg.mxu0
    %4456 = vrot.lane.b32.xlu0 %v1575, 112
    %v4457 = vpop.permute.xlu0 %4456
    %4458 = vrot.lane.b32.xlu0 %v1577, 112
    %v4459 = vpop.permute.xlu0 %4458
    %4460 = vrot.lane.b32.xlu0 %v1579, 112
    %v4461 = vpop.permute.xlu0 %4460
    %4462 = vrot.lane.b32.xlu0 %v1581, 112
    %v4463 = vpop.permute.xlu0 %4462
    %4464 = vrot.lane.b32.xlu0 %v1583, 112
    %v4465 = vpop.permute.xlu0 %4464
    %4466 = vrot.lane.b32.xlu0 %v1585, 112
    %v4467 = vpop.permute.xlu0 %4466
    %v4468 = vsel %vm1998, %v4457, 0
    %v4470 = vsel %vm1998, %v4459, 0
    %v4472 = vsel %vm1998, %v4461, 0
    %v4474 = vsel %vm1998, %v4463, 0
    %v4476 = vsel %vm1998, %v4465, 0
    %v4478 = vsel %vm1998, %v4467, 0
    %v4481 = vsel %vm2017, %v4024, 0
    %4483 = vmatprep.subr.mxu0 0.0
    %4484 = vmatpush1.msra.mxu0 %v4018
    %4485 = vmatprep.subr.mxu0 0.0
    %4486 = vmatpush1.msra.mxu0 %v4019
    %4487 = vmatprep.subr.mxu0 0.0
    %4488 = vmatpush1.msra.mxu0 %v4020
    %4489 = vmatprep.subr.mxu0 0.0
    %4490 = vmatpush1.msra.mxu0 %v4021
    %4491 = vmatprep.subr.mxu0 0.0
    %4492 = vmatpush1.msra.mxu0 %v4022
    %4493 = vmatprep.subr.mxu0 0.0
    %4494 = vmatpush1.msra.mxu0 %v4023
    %4495 = vmatprep.subr.mxu0 0.0
    %4496 = vmatpush1.msra.mxu0 %v4481
    %4497 = vmatprep.subr.mxu0 0.0
    %4498 = vmatpush1.msra.mxu0 0.0
    %4499 = vmatprep.subr.mxu0 0.0
    %4500 = vmatpush1.msra.mxu0 0.0
    %4501 = vmatprep.subr.mxu0 0.0
    %4502 = vmatpush1.msra.mxu0 0.0
    %4503 = vmatprep.subr.mxu0 0.0
    %4504 = vmatpush1.msra.mxu0 0.0
    %4505 = vmatprep.subr.mxu0 0.0
    %4506 = vmatpush1.msra.mxu0 0.0
    %4507 = vmatprep.subr.mxu0 0.0
    %4508 = vmatpush1.msra.mxu0 0.0
    %4509 = vmatprep.subr.mxu0 0.0
    %4510 = vmatpush1.msra.mxu0 0.0
    %4511 = vmatprep.subr.mxu0 0.0
    %4512 = vmatpush1.msra.mxu0 0.0
    %4513 = vmatprep.subr.mxu0 0.0
    %4514 = vmatpush1.msra.mxu0 0.0
    %4515 = vmatprep.subr.mxu0 0.0
    %4516 = vmatpush1.msra.mxu0 0.0
    %4517 = vmatprep.subr.mxu0 0.0
    %4518 = vmatpush1.msra.mxu0 0.0
    %4519 = vmatprep.subr.mxu0 0.0
    %4520 = vmatpush1.msra.mxu0 0.0
    %4521 = vmatprep.subr.mxu0 0.0
    %4522 = vmatpush1.msra.mxu0 0.0
    %4523 = vmatprep.subr.mxu0 0.0
    %4524 = vmatpush1.msra.mxu0 0.0
    %4525 = vmatprep.subr.mxu0 0.0
    %4526 = vmatpush1.msra.mxu0 0.0
    %4527 = vmatprep.subr.mxu0 0.0
    %4528 = vmatpush1.msra.mxu0 0.0
    %4529 = vmatprep.subr.mxu0 0.0
    %4530 = vmatpush1.msra.mxu0 0.0
    %4531 = vmatprep.subr.mxu0 0.0
    %4532 = vmatpush1.msra.mxu0 0.0
    %4533 = vmatprep.subr.mxu0 0.0
    %4534 = vmatpush1.msra.mxu0 0.0
    %4535 = vmatprep.subr.mxu0 0.0
    %4536 = vmatpush1.msra.mxu0 0.0
    %4537 = vmatprep.subr.mxu0 0.0
    %4538 = vmatpush1.msra.mxu0 0.0
    %4539 = vmatprep.subr.mxu0 0.0
    %4540 = vmatpush1.msra.mxu0 0.0
    %4541 = vmatprep.subr.mxu0 0.0
    %4542 = vmatpush1.msra.mxu0 0.0
    %4543 = vmatprep.subr.mxu0 0.0
    %4544 = vmatpush1.msra.mxu0 0.0
    %4545 = vmatprep.subr.mxu0 0.0
    %4546 = vmatpush1.msra.mxu0 0.0
    %4547 = vmatprep.mubr.f32.mxu0 0.0
    %4548 = vmatmul.mubr.f32.gmra.mrb[0].mxu0 %v4468
    %v4549 = vpop.f32.mrb[0].mxu0
    %v4550 = vadd.f32 0.0, %v4549
    %v4551 = vpop.f32.mrb[0].mxu0
    %4552 = vmatprep.mubr.f32.mxu0 0.0
    %4553 = vmatmul.mubr.f32.gmra.mrb[0].mxu0 %v4470
    %v4554 = vpop.f32.mrb[0].mxu0
    %v4555 = vadd.f32 0.0, %v4554
    %v4556 = vpop.f32.mrb[0].mxu0
    %4557 = vmatprep.mubr.f32.mxu0 0.0
    %4558 = vmatmul.mubr.f32.gmra.mrb[0].mxu0 %v4472
    %v4559 = vpop.f32.mrb[0].mxu0
    %v4560 = vadd.f32 0.0, %v4559
    %v4561 = vpop.f32.mrb[0].mxu0
    %4562 = vmatprep.mubr.f32.mxu0 0.0
    %4563 = vmatmul.mubr.f32.gmra.mrb[0].mxu0 %v4474
    %v4564 = vpop.f32.mrb[0].mxu0
    %v4565 = vadd.f32 0.0, %v4564
    %v4566 = vpop.f32.mrb[0].mxu0
    %4567 = vmatprep.mubr.f32.mxu0 0.0
    %4568 = vmatmul.mubr.f32.gmra.mrb[0].mxu0 %v4476
    %v4569 = vpop.f32.mrb[0].mxu0
    %v4570 = vadd.f32 0.0, %v4569
    %v4571 = vpop.f32.mrb[0].mxu0
    %4572 = vmatprep.mubr.f32.mxu0 0.0
    %4573 = vmatmul.mubr.f32.gmra.mrb[0].mxu0 %v4478
    %v4574 = vpop.f32.mrb[0].mxu0
    %v4575 = vadd.f32 0.0, %v4574
    %v4576 = vpop.f32.mrb[0].mxu0
    %4577 = vdwg.mxu0
    %v4578 = vadd.f32 %v4428, %v4550
    %v4579 = vadd.f32 %v4433, %v4555
    %v4580 = vadd.f32 %v4438, %v4560
    %v4581 = vadd.f32 %v4443, %v4565
    %v4582 = vadd.f32 %v4448, %v4570
    %v4583 = vadd.f32 %v4453, %v4575
    %v4584 = vlaneseq
    %v4585 = vshrl.u32 %v4584, 7
    %v4586 = vsub.s32 0, %v4585
    %v4587 = vrot.slane %v4025, %v4586
    %v4588 = vadd.f32 %v4578, %v4587
    %v4589 = vadd.f32 %v4579, %v4587
    %v4590 = vadd.f32 %v4580, %v4587
    %v4591 = vadd.f32 %v4581, %v4587
    %v4592 = vadd.f32 %v4582, %v4587
    %v4593 = vadd.f32 %v4583, %v4587
    %vm4594 = vcmp.gt.f32.partialorder %v4588, 0.0
    %vm4595 = vcmp.gt.f32.partialorder %v4589, 0.0
    %vm4596 = vcmp.gt.f32.partialorder %v4590, 0.0
    %vm4597 = vcmp.gt.f32.partialorder %v4591, 0.0
    %vm4598 = vcmp.gt.f32.partialorder %v4592, 0.0
    %vm4599 = vcmp.gt.f32.partialorder %v4593, 0.0
    %v4600 = vmul.f32 %v4588, 1.442695
    %v4601 = vpow.pop %v4600
    %v4602 = vmul.f32 %v4589, 1.442695
    %v4603 = vpow.pop %v4602
    %v4604 = vmul.f32 %v4590, 1.442695
    %v4605 = vpow.pop %v4604
    %v4606 = vmul.f32 %v4591, 1.442695
    %v4607 = vpow.pop %v4606
    %v4608 = vmul.f32 %v4592, 1.442695
    %v4609 = vpow.pop %v4608
    %v4610 = vmul.f32 %v4593, 1.442695
    %v4611 = vpow.pop %v4610
    %v4612 = vsub.f32 %v4601, 1.0
    %v4613 = vsub.f32 %v4603, 1.0
    %v4614 = vsub.f32 %v4605, 1.0
    %v4615 = vsub.f32 %v4607, 1.0
    %v4616 = vsub.f32 %v4609, 1.0
    %v4617 = vsub.f32 %v4611, 1.0
    %v4618 = vsel %vm4594, %v4588, %v4612
    %v4619 = vsel %vm4595, %v4589, %v4613
    %v4620 = vsel %vm4596, %v4590, %v4614
    %v4621 = vsel %vm4597, %v4591, %v4615
    %v4622 = vsel %vm4598, %v4592, %v4616
    %v4623 = vsel %vm4599, %v4593, %v4617
    %4624 = vmatprep.subr.mxu0 0.0
    %4625 = vmatpush1.msra.mxu0 %v4588
    %4626 = vmatprep.subr.mxu0 0.0
    %4627 = vmatpush1.msra.mxu0 %v4589
    %4628 = vmatprep.subr.mxu0 0.0
    %4629 = vmatpush1.msra.mxu0 %v4590
    %4630 = vmatprep.subr.mxu0 0.0
    %4631 = vmatpush1.msra.mxu0 %v4591
    %4632 = vmatprep.subr.mxu0 0.0
    %4633 = vmatpush1.msra.mxu0 %v4592
    %4634 = vmatprep.subr.mxu0 0.0
    %4635 = vmatpush1.msra.mxu0 %v4593
    %4636 = vmatprep.subr.mxu0 0.0
    %4637 = vmatpush1.msra.mxu0 0.0
    %4638 = vmatprep.subr.mxu0 0.0
    %4639 = vmatpush1.msra.mxu0 0.0
    %4640 = vmatprep.subr.mxu0 0.0
    %4641 = vmatpush1.msra.mxu0 0.0
    %4642 = vmatprep.subr.mxu0 0.0
    %4643 = vmatpush1.msra.mxu0 0.0
    %4644 = vmatprep.subr.mxu0 0.0
    %4645 = vmatpush1.msra.mxu0 0.0
    %4646 = vmatprep.subr.mxu0 0.0
    %4647 = vmatpush1.msra.mxu0 0.0
    %4648 = vmatprep.subr.mxu0 0.0
    %4649 = vmatpush1.msra.mxu0 0.0
    %4650 = vmatprep.subr.mxu0 0.0
    %4651 = vmatpush1.msra.mxu0 0.0
    %4652 = vmatprep.subr.mxu0 0.0
    %4653 = vmatpush1.msra.mxu0 0.0
    %4654 = vmatprep.subr.mxu0 0.0
    %4655 = vmatpush1.msra.mxu0 0.0
    %4656 = vmatprep.subr.mxu0 0.0
    %4657 = vmatpush1.msra.mxu0 0.0
    %4658 = vmatprep.subr.mxu0 0.0
    %4659 = vmatpush1.msra.mxu0 0.0
    %4660 = vmatprep.subr.mxu0 0.0
    %4661 = vmatpush1.msra.mxu0 0.0
    %4662 = vmatprep.subr.mxu0 0.0
    %4663 = vmatpush1.msra.mxu0 0.0
    %4664 = vmatprep.subr.mxu0 0.0
    %4665 = vmatpush1.msra.mxu0 0.0
    %4666 = vmatprep.subr.mxu0 0.0
    %4667 = vmatpush1.msra.mxu0 0.0
    %4668 = vmatprep.subr.mxu0 0.0
    %4669 = vmatpush1.msra.mxu0 0.0
    %4670 = vmatprep.subr.mxu0 0.0
    %4671 = vmatpush1.msra.mxu0 0.0
    %4672 = vmatprep.subr.mxu0 0.0
    %4673 = vmatpush1.msra.mxu0 0.0
    %4674 = vmatprep.subr.mxu0 0.0
    %4675 = vmatpush1.msra.mxu0 0.0
    %4676 = vmatprep.subr.mxu0 0.0
    %4677 = vmatpush1.msra.mxu0 0.0
    %4678 = vmatprep.subr.mxu0 0.0
    %4679 = vmatpush1.msra.mxu0 0.0
    %4680 = vmatprep.subr.mxu0 0.0
    %4681 = vmatpush1.msra.mxu0 0.0
    %4682 = vmatprep.subr.mxu0 0.0
    %4683 = vmatpush1.msra.mxu0 0.0
    %4684 = vmatprep.subr.mxu0 0.0
    %4685 = vmatpush1.msra.mxu0 0.0
    %4686 = vmatprep.subr.mxu0 0.0
    %4687 = vmatpush1.msra.mxu0 0.0
    %4688 = vmatprep.mubr.f32.mxu0 0.0
    %4689 = vmatmul.mubr.f32.gmra.mrb[0].mxu0 %v1588
    %v4690 = vpop.f32.mrb[0].mxu0
    %v4691 = vadd.f32 0.0, %v4690
    %v4692 = vpop.f32.mrb[0].mxu0
    %4693 = vmatprep.mubr.f32.mxu0 0.0
    %4694 = vmatmul.mubr.f32.gmra.mrb[0].mxu0 %v1591
    %v4695 = vpop.f32.mrb[0].mxu0
    %v4696 = vadd.f32 0.0, %v4695
    %v4697 = vpop.f32.mrb[0].mxu0
    %4698 = vdwg.mxu0
    %v4699 = vsel %vm1998, %v4691, 0.0
    %v4700 = vsel %vm1998, %v4696, 0.0
    %v4701 = vadd.f32 %v4699, %v4700
    %v4702 = vrot.slane %v4701, 4
    %v4703 = vadd.f32 %v4701, %v4702
    %v4704 = vrot.slane %v4703, 2
    %v4705 = vadd.f32 %v4703, %v4704
    %v4706 = vrot.slane %v4705, 1
    %v4707 = vadd.f32 %v4705, %v4706
    %v4708 = vmul.f32 %v4707, %v1689
    %v4709 = vsub.f32 %v4691, %v4708
    %v4710 = vsub.f32 %v4696, %v4708
    %v4711 = vmul.f32 %v4709, %v4709
    %v4712 = vmul.f32 %v4710, %v4710
    %v4713 = vsel %vm1998, %v4711, 0.0
    %v4714 = vsel %vm1998, %v4712, 0.0
    %v4715 = vadd.f32 %v4713, %v4714
    %v4716 = vrot.slane %v4715, 4
    %v4717 = vadd.f32 %v4715, %v4716
    %v4718 = vrot.slane %v4717, 2
    %v4719 = vadd.f32 %v4717, %v4718
    %v4720 = vrot.slane %v4719, 1
    %v4721 = vadd.f32 %v4719, %v4720
    %v4722 = vmul.f32 %v4721, %v1689
    %v4723 = vadd.f32 %v4722, 1e-05
    %v4724 = vrsqrt.pop %v4723
    %v4725 = vmul.f32 %v4709, %v4724
    %v4726 = vmul.f32 %v4710, %v4724
    %v4727 = vlaneseq
    %v4728 = vshrl.u32 %v4727, 7
    %v4729 = vsub.s32 0, %v4728
    %v4730 = vrot.slane %v4026, %v4729
    %v4731 = vmul.f32 %v4725, %v4730
    %v4732 = vmul.f32 %v4726, %v4730
    %v4733 = vlaneseq
    %v4734 = vshrl.u32 %v4733, 7
    %v4735 = vsub.s32 0, %v4734
    %v4736 = vrot.slane %v4027, %v4735
    %v4737 = vadd.f32 %v4731, %v4736
    %v4738 = vadd.f32 %v4732, %v4736
    %vm4739 = vcmp.gt.f32.partialorder %v4737, 0.0
    %vm4740 = vcmp.gt.f32.partialorder %v4738, 0.0
    %v4741 = vmul.f32 %v4737, 1.442695
    %v4742 = vpow.pop %v4741
    %v4743 = vmul.f32 %v4738, 1.442695
    %v4744 = vpow.pop %v4743
    %v4745 = vsub.f32 %v4742, 1.0
    %v4746 = vsub.f32 %v4744, 1.0
    %v4747 = vsel %vm4739, %v4737, %v4745
    %v4748 = vsel %vm4740, %v4738, %v4746
    %s4749 = scalar_lea.vmem %s11, 224
    %v4750 = vld [vmem:[%s4749] sm:$0xff]
    %v4751 = vld [vmem:[%s4749 + $0x8] sm:$0xff]
    %v4752 = vld [vmem:[%s4749 + $0x10] sm:$0xff]
    %v4753 = vld [vmem:[%s4749 + $0x18] sm:$0xff]
    %v4754 = vld [vmem:[%s4749 + $0x20] sm:$0xff]
    %v4755 = vld [vmem:[%s4749 + $0x28] sm:$0xff]
    %v4756 = vld [vmem:[%s4749 + $0x30] sm:$0x3]
    %s4757 = scalar_lea.vmem %s12, 224
    %v4758 = vld [vmem:[%s4757] sm:$0xff]
    %v4759 = vld [vmem:[%s4757 + $0x8] sm:$0xff]
    %v4760 = vld [vmem:[%s4757 + $0x10] sm:$0xff]
    %v4761 = vld [vmem:[%s4757 + $0x18] sm:$0xff]
    %v4762 = vld [vmem:[%s4757 + $0x20] sm:$0xff]
    %v4763 = vld [vmem:[%s4757 + $0x28] sm:$0xff]
    %v4764 = vld [vmem:[%s4757 + $0x30] sm:$0x3]
    %s4765 = scalar_lea.vmem %s13, 224
    %v4766 = vld [vmem:[%s4765] sm:$0xff]
    %v4767 = vld [vmem:[%s4765 + $0x8] sm:$0xff]
    %v4768 = vld [vmem:[%s4765 + $0x10] sm:$0xff]
    %v4769 = vld [vmem:[%s4765 + $0x18] sm:$0xff]
    %v4770 = vld [vmem:[%s4765 + $0x20] sm:$0xff]
    %v4771 = vld [vmem:[%s4765 + $0x28] sm:$0xff]
    %v4772 = vld [vmem:[%s4765 + $0x30] sm:$0x3]
    %v4773 = vld [vmem:[%s14 + $0x4] sm:$0x1]
    %v4774 = vld [vmem:[%s15 + $0x4] sm:$0x1]
    %v4775 = vld [vmem:[%s16 + $0x4] sm:$0x1]
    %4776 = vmatprep.subr.mxu0 0.0
    %4777 = vmatpush1.msra.mxu0 %v4747
    %4778 = vmatprep.subr.mxu0 0.0
    %4779 = vmatpush1.msra.mxu0 %v4748
    %4780 = vmatprep.subr.mxu0 0.0
    %4781 = vmatpush1.msra.mxu0 0.0
    %4782 = vmatprep.subr.mxu0 0.0
    %4783 = vmatpush1.msra.mxu0 0.0
    %4784 = vmatprep.subr.mxu0 0.0
    %4785 = vmatpush1.msra.mxu0 0.0
    %4786 = vmatprep.subr.mxu0 0.0
    %4787 = vmatpush1.msra.mxu0 0.0
    %4788 = vmatprep.subr.mxu0 0.0
    %4789 = vmatpush1.msra.mxu0 0.0
    %4790 = vmatprep.subr.mxu0 0.0
    %4791 = vmatpush1.msra.mxu0 0.0
    %4792 = vmatprep.subr.mxu0 0.0
    %4793 = vmatpush1.msra.mxu0 0.0
    %4794 = vmatprep.subr.mxu0 0.0
    %4795 = vmatpush1.msra.mxu0 0.0
    %4796 = vmatprep.subr.mxu0 0.0
    %4797 = vmatpush1.msra.mxu0 0.0
    %4798 = vmatprep.subr.mxu0 0.0
    %4799 = vmatpush1.msra.mxu0 0.0
    %4800 = vmatprep.subr.mxu0 0.0
    %4801 = vmatpush1.msra.mxu0 0.0
    %4802 = vmatprep.subr.mxu0 0.0
    %4803 = vmatpush1.msra.mxu0 0.0
    %4804 = vmatprep.subr.mxu0 0.0
    %4805 = vmatpush1.msra.mxu0 0.0
    %4806 = vmatprep.subr.mxu0 0.0
    %4807 = vmatpush1.msra.mxu0 0.0
    %4808 = vmatprep.subr.mxu0 0.0
    %4809 = vmatpush1.msra.mxu0 0.0
    %4810 = vmatprep.subr.mxu0 0.0
    %4811 = vmatpush1.msra.mxu0 0.0
    %4812 = vmatprep.subr.mxu0 0.0
    %4813 = vmatpush1.msra.mxu0 0.0
    %4814 = vmatprep.subr.mxu0 0.0
    %4815 = vmatpush1.msra.mxu0 0.0
    %4816 = vmatprep.subr.mxu0 0.0
    %4817 = vmatpush1.msra.mxu0 0.0
    %4818 = vmatprep.subr.mxu0 0.0
    %4819 = vmatpush1.msra.mxu0 0.0
    %4820 = vmatprep.subr.mxu0 0.0
    %4821 = vmatpush1.msra.mxu0 0.0
    %4822 = vmatprep.subr.mxu0 0.0
    %4823 = vmatpush1.msra.mxu0 0.0
    %4824 = vmatprep.subr.mxu0 0.0
    %4825 = vmatpush1.msra.mxu0 0.0
    %4826 = vmatprep.subr.mxu0 0.0
    %4827 = vmatpush1.msra.mxu0 0.0
    %4828 = vmatprep.subr.mxu0 0.0
    %4829 = vmatpush1.msra.mxu0 0.0
    %4830 = vmatprep.subr.mxu0 0.0
    %4831 = vmatpush1.msra.mxu0 0.0
    %4832 = vmatprep.subr.mxu0 0.0
    %4833 = vmatpush1.msra.mxu0 0.0
    %4834 = vmatprep.subr.mxu0 0.0
    %4835 = vmatpush1.msra.mxu0 0.0
    %4836 = vmatprep.subr.mxu0 0.0
    %4837 = vmatpush1.msra.mxu0 0.0
    %4838 = vmatprep.subr.mxu0 0.0
    %4839 = vmatpush1.msra.mxu0 0.0
    %4840 = vmatprep.mubr.f32.mxu0 0.0
    %4841 = vmatmul.mubr.f32.gmra.mrb[0].mxu0 %v105
    %v4842 = vpop.f32.mrb[0].mxu0
    %v4843 = vadd.f32 0.0, %v4842
    %v4844 = vpop.f32.mrb[0].mxu0
    %4845 = vmatprep.mubr.f32.mxu0 0.0
    %4846 = vmatmul.mubr.f32.gmra.mrb[0].mxu0 %v108
    %v4847 = vpop.f32.mrb[0].mxu0
    %v4848 = vadd.f32 0.0, %v4847
    %v4849 = vpop.f32.mrb[0].mxu0
    %4850 = vmatprep.mubr.f32.mxu0 0.0
    %4851 = vmatmul.mubr.f32.gmra.mrb[0].mxu0 %v111
    %v4852 = vpop.f32.mrb[0].mxu0
    %v4853 = vadd.f32 0.0, %v4852
    %v4854 = vpop.f32.mrb[0].mxu0
    %4855 = vmatprep.mubr.f32.mxu0 0.0
    %4856 = vmatmul.mubr.f32.gmra.mrb[0].mxu0 %v114
    %v4857 = vpop.f32.mrb[0].mxu0
    %v4858 = vadd.f32 0.0, %v4857
    %v4859 = vpop.f32.mrb[0].mxu0
    %4860 = vmatprep.mubr.f32.mxu0 0.0
    %4861 = vmatmul.mubr.f32.gmra.mrb[0].mxu0 %v117
    %v4862 = vpop.f32.mrb[0].mxu0
    %v4863 = vadd.f32 0.0, %v4862
    %v4864 = vpop.f32.mrb[0].mxu0
    %4865 = vmatprep.mubr.f32.mxu0 0.0
    %4866 = vmatmul.mubr.f32.gmra.mrb[0].mxu0 %v120
    %v4867 = vpop.f32.mrb[0].mxu0
    %v4868 = vadd.f32 0.0, %v4867
    %v4869 = vpop.f32.mrb[0].mxu0
    %4870 = vdwg.mxu0
    %4871 = vmatprep.subr.mxu0 0.0
    %4872 = vmatpush1.msra.mxu0 %v4747
    %4873 = vmatprep.subr.mxu0 0.0
    %4874 = vmatpush1.msra.mxu0 %v4748
    %4875 = vmatprep.subr.mxu0 0.0
    %4876 = vmatpush1.msra.mxu0 0.0
    %4877 = vmatprep.subr.mxu0 0.0
    %4878 = vmatpush1.msra.mxu0 0.0
    %4879 = vmatprep.subr.mxu0 0.0
    %4880 = vmatpush1.msra.mxu0 0.0
    %4881 = vmatprep.subr.mxu0 0.0
    %4882 = vmatpush1.msra.mxu0 0.0
    %4883 = vmatprep.subr.mxu0 0.0
    %4884 = vmatpush1.msra.mxu0 0.0
    %4885 = vmatprep.subr.mxu0 0.0
    %4886 = vmatpush1.msra.mxu0 0.0
    %4887 = vmatprep.subr.mxu0 0.0
    %4888 = vmatpush1.msra.mxu0 0.0
    %4889 = vmatprep.subr.mxu0 0.0
    %4890 = vmatpush1.msra.mxu0 0.0
    %4891 = vmatprep.subr.mxu0 0.0
    %4892 = vmatpush1.msra.mxu0 0.0
    %4893 = vmatprep.subr.mxu0 0.0
    %4894 = vmatpush1.msra.mxu0 0.0
    %4895 = vmatprep.subr.mxu0 0.0
    %4896 = vmatpush1.msra.mxu0 0.0
    %4897 = vmatprep.subr.mxu0 0.0
    %4898 = vmatpush1.msra.mxu0 0.0
    %4899 = vmatprep.subr.mxu0 0.0
    %4900 = vmatpush1.msra.mxu0 0.0
    %4901 = vmatprep.subr.mxu0 0.0
    %4902 = vmatpush1.msra.mxu0 0.0
    %4903 = vmatprep.subr.mxu0 0.0
    %4904 = vmatpush1.msra.mxu0 0.0
    %4905 = vmatprep.subr.mxu0 0.0
    %4906 = vmatpush1.msra.mxu0 0.0
    %4907 = vmatprep.subr.mxu0 0.0
    %4908 = vmatpush1.msra.mxu0 0.0
    %4909 = vmatprep.subr.mxu0 0.0
    %4910 = vmatpush1.msra.mxu0 0.0
    %4911 = vmatprep.subr.mxu0 0.0
    %4912 = vmatpush1.msra.mxu0 0.0
    %4913 = vmatprep.subr.mxu0 0.0
    %4914 = vmatpush1.msra.mxu0 0.0
    %4915 = vmatprep.subr.mxu0 0.0
    %4916 = vmatpush1.msra.mxu0 0.0
    %4917 = vmatprep.subr.mxu0 0.0
    %4918 = vmatpush1.msra.mxu0 0.0
    %4919 = vmatprep.subr.mxu0 0.0
    %4920 = vmatpush1.msra.mxu0 0.0
    %4921 = vmatprep.subr.mxu0 0.0
    %4922 = vmatpush1.msra.mxu0 0.0
    %4923 = vmatprep.subr.mxu0 0.0
    %4924 = vmatpush1.msra.mxu0 0.0
    %4925 = vmatprep.subr.mxu0 0.0
    %4926 = vmatpush1.msra.mxu0 0.0
    %4927 = vmatprep.subr.mxu0 0.0
    %4928 = vmatpush1.msra.mxu0 0.0
    %4929 = vmatprep.subr.mxu0 0.0
    %4930 = vmatpush1.msra.mxu0 0.0
    %4931 = vmatprep.subr.mxu0 0.0
    %4932 = vmatpush1.msra.mxu0 0.0
    %4933 = vmatprep.subr.mxu0 0.0
    %4934 = vmatpush1.msra.mxu0 0.0
    %4935 = vmatprep.mubr.f32.mxu0 0.0
    %4936 = vmatmul.mubr.f32.gmra.mrb[0].mxu0 %v218
    %v4937 = vpop.f32.mrb[0].mxu0
    %v4938 = vadd.f32 0.0, %v4937
    %v4939 = vpop.f32.mrb[0].mxu0
    %4940 = vmatprep.mubr.f32.mxu0 0.0
    %4941 = vmatmul.mubr.f32.gmra.mrb[0].mxu0 %v221
    %v4942 = vpop.f32.mrb[0].mxu0
    %v4943 = vadd.f32 0.0, %v4942
    %v4944 = vpop.f32.mrb[0].mxu0
    %4945 = vmatprep.mubr.f32.mxu0 0.0
    %4946 = vmatmul.mubr.f32.gmra.mrb[0].mxu0 %v224
    %v4947 = vpop.f32.mrb[0].mxu0
    %v4948 = vadd.f32 0.0, %v4947
    %v4949 = vpop.f32.mrb[0].mxu0
    %4950 = vmatprep.mubr.f32.mxu0 0.0
    %4951 = vmatmul.mubr.f32.gmra.mrb[0].mxu0 %v227
    %v4952 = vpop.f32.mrb[0].mxu0
    %v4953 = vadd.f32 0.0, %v4952
    %v4954 = vpop.f32.mrb[0].mxu0
    %4955 = vmatprep.mubr.f32.mxu0 0.0
    %4956 = vmatmul.mubr.f32.gmra.mrb[0].mxu0 %v230
    %v4957 = vpop.f32.mrb[0].mxu0
    %v4958 = vadd.f32 0.0, %v4957
    %v4959 = vpop.f32.mrb[0].mxu0
    %4960 = vmatprep.mubr.f32.mxu0 0.0
    %4961 = vmatmul.mubr.f32.gmra.mrb[0].mxu0 %v233
    %v4962 = vpop.f32.mrb[0].mxu0
    %v4963 = vadd.f32 0.0, %v4962
    %v4964 = vpop.f32.mrb[0].mxu0
    %4965 = vdwg.mxu0
    %v4967 = vsel %vm1998, %v4938, 0
    %v4970 = vsel %vm1998, %v4943, 0
    %v4973 = vsel %vm1998, %v4948, 0
    %v4976 = vsel %vm1998, %v4953, 0
    %v4979 = vsel %vm1998, %v4958, 0
    %v4982 = vsel %vm1998, %v4963, 0
    %v4985 = vsel %vm2017, %v4764, 0
    %4987 = vmatprep.subr.mxu0 0.0
    %4988 = vmatpush1.msra.mxu0 %v4758
    %4989 = vmatprep.subr.mxu0 0.0
    %4990 = vmatpush1.msra.mxu0 %v4759
    %4991 = vmatprep.subr.mxu0 0.0
    %4992 = vmatpush1.msra.mxu0 %v4760
    %4993 = vmatprep.subr.mxu0 0.0
    %4994 = vmatpush1.msra.mxu0 %v4761
    %4995 = vmatprep.subr.mxu0 0.0
    %4996 = vmatpush1.msra.mxu0 %v4762
    %4997 = vmatprep.subr.mxu0 0.0
    %4998 = vmatpush1.msra.mxu0 %v4763
    %4999 = vmatprep.subr.mxu0 0.0
    %5000 = vmatpush1.msra.mxu0 %v4985
    %5001 = vmatprep.subr.mxu0 0.0
    %5002 = vmatpush1.msra.mxu0 0.0
    %5003 = vmatprep.subr.mxu0 0.0
    %5004 = vmatpush1.msra.mxu0 0.0
    %5005 = vmatprep.subr.mxu0 0.0
    %5006 = vmatpush1.msra.mxu0 0.0
    %5007 = vmatprep.subr.mxu0 0.0
    %5008 = vmatpush1.msra.mxu0 0.0
    %5009 = vmatprep.subr.mxu0 0.0
    %5010 = vmatpush1.msra.mxu0 0.0
    %5011 = vmatprep.subr.mxu0 0.0
    %5012 = vmatpush1.msra.mxu0 0.0
    %5013 = vmatprep.subr.mxu0 0.0
    %5014 = vmatpush1.msra.mxu0 0.0
    %5015 = vmatprep.subr.mxu0 0.0
    %5016 = vmatpush1.msra.mxu0 0.0
    %5017 = vmatprep.subr.mxu0 0.0
    %5018 = vmatpush1.msra.mxu0 0.0
    %5019 = vmatprep.subr.mxu0 0.0
    %5020 = vmatpush1.msra.mxu0 0.0
    %5021 = vmatprep.subr.mxu0 0.0
    %5022 = vmatpush1.msra.mxu0 0.0
    %5023 = vmatprep.subr.mxu0 0.0
    %5024 = vmatpush1.msra.mxu0 0.0
    %5025 = vmatprep.subr.mxu0 0.0
    %5026 = vmatpush1.msra.mxu0 0.0
    %5027 = vmatprep.subr.mxu0 0.0
    %5028 = vmatpush1.msra.mxu0 0.0
    %5029 = vmatprep.subr.mxu0 0.0
    %5030 = vmatpush1.msra.mxu0 0.0
    %5031 = vmatprep.subr.mxu0 0.0
    %5032 = vmatpush1.msra.mxu0 0.0
    %5033 = vmatprep.subr.mxu0 0.0
    %5034 = vmatpush1.msra.mxu0 0.0
    %5035 = vmatprep.subr.mxu0 0.0
    %5036 = vmatpush1.msra.mxu0 0.0
    %5037 = vmatprep.subr.mxu0 0.0
    %5038 = vmatpush1.msra.mxu0 0.0
    %5039 = vmatprep.subr.mxu0 0.0
    %5040 = vmatpush1.msra.mxu0 0.0
    %5041 = vmatprep.subr.mxu0 0.0
    %5042 = vmatpush1.msra.mxu0 0.0
    %5043 = vmatprep.subr.mxu0 0.0
    %5044 = vmatpush1.msra.mxu0 0.0
    %5045 = vmatprep.subr.mxu0 0.0
    %5046 = vmatpush1.msra.mxu0 0.0
    %5047 = vmatprep.subr.mxu0 0.0
    %5048 = vmatpush1.msra.mxu0 0.0
    %5049 = vmatprep.subr.mxu0 0.0
    %5050 = vmatpush1.msra.mxu0 0.0
    %5051 = vmatprep.mubr.f32.mxu0 0.0
    %5052 = vmatmul.mubr.f32.gmra.mrb[0].mxu0 %v4967
    %v5053 = vpop.f32.mrb[0].mxu0
    %v5054 = vadd.f32 0.0, %v5053
    %v5055 = vpop.f32.mrb[0].mxu0
    %5056 = vmatprep.mubr.f32.mxu0 0.0
    %5057 = vmatmul.mubr.f32.gmra.mrb[0].mxu0 %v4970
    %v5058 = vpop.f32.mrb[0].mxu0
    %v5059 = vadd.f32 0.0, %v5058
    %v5060 = vpop.f32.mrb[0].mxu0
    %5061 = vmatprep.mubr.f32.mxu0 0.0
    %5062 = vmatmul.mubr.f32.gmra.mrb[0].mxu0 %v4973
    %v5063 = vpop.f32.mrb[0].mxu0
    %v5064 = vadd.f32 0.0, %v5063
    %v5065 = vpop.f32.mrb[0].mxu0
    %5066 = vmatprep.mubr.f32.mxu0 0.0
    %5067 = vmatmul.mubr.f32.gmra.mrb[0].mxu0 %v4976
    %v5068 = vpop.f32.mrb[0].mxu0
    %v5069 = vadd.f32 0.0, %v5068
    %v5070 = vpop.f32.mrb[0].mxu0
    %5071 = vmatprep.mubr.f32.mxu0 0.0
    %5072 = vmatmul.mubr.f32.gmra.mrb[0].mxu0 %v4979
    %v5073 = vpop.f32.mrb[0].mxu0
    %v5074 = vadd.f32 0.0, %v5073
    %v5075 = vpop.f32.mrb[0].mxu0
    %5076 = vmatprep.mubr.f32.mxu0 0.0
    %5077 = vmatmul.mubr.f32.gmra.mrb[0].mxu0 %v4982
    %v5078 = vpop.f32.mrb[0].mxu0
    %v5079 = vadd.f32 0.0, %v5078
    %v5080 = vpop.f32.mrb[0].mxu0
    %5081 = vdwg.mxu0
    %v5083 = vsel %vm1998, %v4843, 0
    %v5086 = vsel %vm1998, %v4848, 0
    %v5089 = vsel %vm1998, %v4853, 0
    %v5092 = vsel %vm1998, %v4858, 0
    %v5095 = vsel %vm1998, %v4863, 0
    %v5098 = vsel %vm1998, %v4868, 0
    %v5101 = vsel %vm2017, %v4756, 0
    %5103 = vmatprep.subr.mxu0 0.0
    %5104 = vmatpush1.msra.mxu0 %v4750
    %5105 = vmatprep.subr.mxu0 0.0
    %5106 = vmatpush1.msra.mxu0 %v4751
    %5107 = vmatprep.subr.mxu0 0.0
    %5108 = vmatpush1.msra.mxu0 %v4752
    %5109 = vmatprep.subr.mxu0 0.0
    %5110 = vmatpush1.msra.mxu0 %v4753
    %5111 = vmatprep.subr.mxu0 0.0
    %5112 = vmatpush1.msra.mxu0 %v4754
    %5113 = vmatprep.subr.mxu0 0.0
    %5114 = vmatpush1.msra.mxu0 %v4755
    %5115 = vmatprep.subr.mxu0 0.0
    %5116 = vmatpush1.msra.mxu0 %v5101
    %5117 = vmatprep.subr.mxu0 0.0
    %5118 = vmatpush1.msra.mxu0 0.0
    %5119 = vmatprep.subr.mxu0 0.0
    %5120 = vmatpush1.msra.mxu0 0.0
    %5121 = vmatprep.subr.mxu0 0.0
    %5122 = vmatpush1.msra.mxu0 0.0
    %5123 = vmatprep.subr.mxu0 0.0
    %5124 = vmatpush1.msra.mxu0 0.0
    %5125 = vmatprep.subr.mxu0 0.0
    %5126 = vmatpush1.msra.mxu0 0.0
    %5127 = vmatprep.subr.mxu0 0.0
    %5128 = vmatpush1.msra.mxu0 0.0
    %5129 = vmatprep.subr.mxu0 0.0
    %5130 = vmatpush1.msra.mxu0 0.0
    %5131 = vmatprep.subr.mxu0 0.0
    %5132 = vmatpush1.msra.mxu0 0.0
    %5133 = vmatprep.subr.mxu0 0.0
    %5134 = vmatpush1.msra.mxu0 0.0
    %5135 = vmatprep.subr.mxu0 0.0
    %5136 = vmatpush1.msra.mxu0 0.0
    %5137 = vmatprep.subr.mxu0 0.0
    %5138 = vmatpush1.msra.mxu0 0.0
    %5139 = vmatprep.subr.mxu0 0.0
    %5140 = vmatpush1.msra.mxu0 0.0
    %5141 = vmatprep.subr.mxu0 0.0
    %5142 = vmatpush1.msra.mxu0 0.0
    %5143 = vmatprep.subr.mxu0 0.0
    %5144 = vmatpush1.msra.mxu0 0.0
    %5145 = vmatprep.subr.mxu0 0.0
    %5146 = vmatpush1.msra.mxu0 0.0
    %5147 = vmatprep.subr.mxu0 0.0
    %5148 = vmatpush1.msra.mxu0 0.0
    %5149 = vmatprep.subr.mxu0 0.0
    %5150 = vmatpush1.msra.mxu0 0.0
    %5151 = vmatprep.subr.mxu0 0.0
    %5152 = vmatpush1.msra.mxu0 0.0
    %5153 = vmatprep.subr.mxu0 0.0
    %5154 = vmatpush1.msra.mxu0 0.0
    %5155 = vmatprep.subr.mxu0 0.0
    %5156 = vmatpush1.msra.mxu0 0.0
    %5157 = vmatprep.subr.mxu0 0.0
    %5158 = vmatpush1.msra.mxu0 0.0
    %5159 = vmatprep.subr.mxu0 0.0
    %5160 = vmatpush1.msra.mxu0 0.0
    %5161 = vmatprep.subr.mxu0 0.0
    %5162 = vmatpush1.msra.mxu0 0.0
    %5163 = vmatprep.subr.mxu0 0.0
    %5164 = vmatpush1.msra.mxu0 0.0
    %5165 = vmatprep.subr.mxu0 0.0
    %5166 = vmatpush1.msra.mxu0 0.0
    %5167 = vmatprep.mubr.f32.mxu0 0.0
    %5168 = vmatmul.mubr.f32.gmra.mrb[0].mxu0 %v5083
    %v5169 = vpop.f32.mrb[0].mxu0
    %v5170 = vadd.f32 %v5054, %v5169
    %v5171 = vpop.f32.mrb[0].mxu0
    %5172 = vmatprep.mubr.f32.mxu0 0.0
    %5173 = vmatmul.mubr.f32.gmra.mrb[0].mxu0 %v5086
    %v5174 = vpop.f32.mrb[0].mxu0
    %v5175 = vadd.f32 %v5059, %v5174
    %v5176 = vpop.f32.mrb[0].mxu0
    %5177 = vmatprep.mubr.f32.mxu0 0.0
    %5178 = vmatmul.mubr.f32.gmra.mrb[0].mxu0 %v5089
    %v5179 = vpop.f32.mrb[0].mxu0
    %v5180 = vadd.f32 %v5064, %v5179
    %v5181 = vpop.f32.mrb[0].mxu0
    %5182 = vmatprep.mubr.f32.mxu0 0.0
    %5183 = vmatmul.mubr.f32.gmra.mrb[0].mxu0 %v5092
    %v5184 = vpop.f32.mrb[0].mxu0
    %v5185 = vadd.f32 %v5069, %v5184
    %v5186 = vpop.f32.mrb[0].mxu0
    %5187 = vmatprep.mubr.f32.mxu0 0.0
    %5188 = vmatmul.mubr.f32.gmra.mrb[0].mxu0 %v5095
    %v5189 = vpop.f32.mrb[0].mxu0
    %v5190 = vadd.f32 %v5074, %v5189
    %v5191 = vpop.f32.mrb[0].mxu0
    %5192 = vmatprep.mubr.f32.mxu0 0.0
    %5193 = vmatmul.mubr.f32.gmra.mrb[0].mxu0 %v5098
    %v5194 = vpop.f32.mrb[0].mxu0
    %v5195 = vadd.f32 %v5079, %v5194
    %v5196 = vpop.f32.mrb[0].mxu0
    %5197 = vdwg.mxu0
    %5204 = vrot.lane.b32.xlu0 %v4618, 78
    %v5205 = vpop.permute.xlu0 %5204
    %5206 = vrot.lane.b32.xlu0 %v4619, 78
    %v5207 = vpop.permute.xlu0 %5206
    %5208 = vrot.lane.b32.xlu0 %v4620, 78
    %v5209 = vpop.permute.xlu0 %5208
    %5210 = vrot.lane.b32.xlu0 %v4621, 78
    %v5211 = vpop.permute.xlu0 %5210
    %5212 = vrot.lane.b32.xlu0 %v4622, 78
    %v5213 = vpop.permute.xlu0 %5212
    %5214 = vrot.lane.b32.xlu0 %v4623, 78
    %v5215 = vpop.permute.xlu0 %5214
    %v5216 = vsel %vm1998, %v5205, 0
    %v5218 = vsel %vm1998, %v5207, 0
    %v5220 = vsel %vm1998, %v5209, 0
    %v5222 = vsel %vm1998, %v5211, 0
    %v5224 = vsel %vm1998, %v5213, 0
    %v5226 = vsel %vm1998, %v5215, 0
    %v5229 = vsel %vm2017, %v4772, 0
    %5231 = vmatprep.subr.mxu0 0.0
    %5232 = vmatpush1.msra.mxu0 %v4766
    %5233 = vmatprep.subr.mxu0 0.0
    %5234 = vmatpush1.msra.mxu0 %v4767
    %5235 = vmatprep.subr.mxu0 0.0
    %5236 = vmatpush1.msra.mxu0 %v4768
    %5237 = vmatprep.subr.mxu0 0.0
    %5238 = vmatpush1.msra.mxu0 %v4769
    %5239 = vmatprep.subr.mxu0 0.0
    %5240 = vmatpush1.msra.mxu0 %v4770
    %5241 = vmatprep.subr.mxu0 0.0
    %5242 = vmatpush1.msra.mxu0 %v4771
    %5243 = vmatprep.subr.mxu0 0.0
    %5244 = vmatpush1.msra.mxu0 %v5229
    %5245 = vmatprep.subr.mxu0 0.0
    %5246 = vmatpush1.msra.mxu0 0.0
    %5247 = vmatprep.subr.mxu0 0.0
    %5248 = vmatpush1.msra.mxu0 0.0
    %5249 = vmatprep.subr.mxu0 0.0
    %5250 = vmatpush1.msra.mxu0 0.0
    %5251 = vmatprep.subr.mxu0 0.0
    %5252 = vmatpush1.msra.mxu0 0.0
    %5253 = vmatprep.subr.mxu0 0.0
    %5254 = vmatpush1.msra.mxu0 0.0
    %5255 = vmatprep.subr.mxu0 0.0
    %5256 = vmatpush1.msra.mxu0 0.0
    %5257 = vmatprep.subr.mxu0 0.0
    %5258 = vmatpush1.msra.mxu0 0.0
    %5259 = vmatprep.subr.mxu0 0.0
    %5260 = vmatpush1.msra.mxu0 0.0
    %5261 = vmatprep.subr.mxu0 0.0
    %5262 = vmatpush1.msra.mxu0 0.0
    %5263 = vmatprep.subr.mxu0 0.0
    %5264 = vmatpush1.msra.mxu0 0.0
    %5265 = vmatprep.subr.mxu0 0.0
    %5266 = vmatpush1.msra.mxu0 0.0
    %5267 = vmatprep.subr.mxu0 0.0
    %5268 = vmatpush1.msra.mxu0 0.0
    %5269 = vmatprep.subr.mxu0 0.0
    %5270 = vmatpush1.msra.mxu0 0.0
    %5271 = vmatprep.subr.mxu0 0.0
    %5272 = vmatpush1.msra.mxu0 0.0
    %5273 = vmatprep.subr.mxu0 0.0
    %5274 = vmatpush1.msra.mxu0 0.0
    %5275 = vmatprep.subr.mxu0 0.0
    %5276 = vmatpush1.msra.mxu0 0.0
    %5277 = vmatprep.subr.mxu0 0.0
    %5278 = vmatpush1.msra.mxu0 0.0
    %5279 = vmatprep.subr.mxu0 0.0
    %5280 = vmatpush1.msra.mxu0 0.0
    %5281 = vmatprep.subr.mxu0 0.0
    %5282 = vmatpush1.msra.mxu0 0.0
    %5283 = vmatprep.subr.mxu0 0.0
    %5284 = vmatpush1.msra.mxu0 0.0
    %5285 = vmatprep.subr.mxu0 0.0
    %5286 = vmatpush1.msra.mxu0 0.0
    %5287 = vmatprep.subr.mxu0 0.0
    %5288 = vmatpush1.msra.mxu0 0.0
    %5289 = vmatprep.subr.mxu0 0.0
    %5290 = vmatpush1.msra.mxu0 0.0
    %5291 = vmatprep.subr.mxu0 0.0
    %5292 = vmatpush1.msra.mxu0 0.0
    %5293 = vmatprep.subr.mxu0 0.0
    %5294 = vmatpush1.msra.mxu0 0.0
    %5295 = vmatprep.mubr.f32.mxu0 0.0
    %5296 = vmatmul.mubr.f32.gmra.mrb[0].mxu0 %v5216
    %v5297 = vpop.f32.mrb[0].mxu0
    %v5298 = vadd.f32 0.0, %v5297
    %v5299 = vpop.f32.mrb[0].mxu0
    %5300 = vmatprep.mubr.f32.mxu0 0.0
    %5301 = vmatmul.mubr.f32.gmra.mrb[0].mxu0 %v5218
    %v5302 = vpop.f32.mrb[0].mxu0
    %v5303 = vadd.f32 0.0, %v5302
    %v5304 = vpop.f32.mrb[0].mxu0
    %5305 = vmatprep.mubr.f32.mxu0 0.0
    %5306 = vmatmul.mubr.f32.gmra.mrb[0].mxu0 %v5220
    %v5307 = vpop.f32.mrb[0].mxu0
    %v5308 = vadd.f32 0.0, %v5307
    %v5309 = vpop.f32.mrb[0].mxu0
    %5310 = vmatprep.mubr.f32.mxu0 0.0
    %5311 = vmatmul.mubr.f32.gmra.mrb[0].mxu0 %v5222
    %v5312 = vpop.f32.mrb[0].mxu0
    %v5313 = vadd.f32 0.0, %v5312
    %v5314 = vpop.f32.mrb[0].mxu0
    %5315 = vmatprep.mubr.f32.mxu0 0.0
    %5316 = vmatmul.mubr.f32.gmra.mrb[0].mxu0 %v5224
    %v5317 = vpop.f32.mrb[0].mxu0
    %v5318 = vadd.f32 0.0, %v5317
    %v5319 = vpop.f32.mrb[0].mxu0
    %5320 = vmatprep.mubr.f32.mxu0 0.0
    %5321 = vmatmul.mubr.f32.gmra.mrb[0].mxu0 %v5226
    %v5322 = vpop.f32.mrb[0].mxu0
    %v5323 = vadd.f32 0.0, %v5322
    %v5324 = vpop.f32.mrb[0].mxu0
    %5325 = vdwg.mxu0
    %v5326 = vadd.f32 %v5170, %v5298
    %v5327 = vadd.f32 %v5175, %v5303
    %v5328 = vadd.f32 %v5180, %v5308
    %v5329 = vadd.f32 %v5185, %v5313
    %v5330 = vadd.f32 %v5190, %v5318
    %v5331 = vadd.f32 %v5195, %v5323
    %v5332 = vlaneseq
    %v5333 = vshrl.u32 %v5332, 7
    %v5334 = vsub.s32 0, %v5333
    %v5335 = vrot.slane %v4773, %v5334
    %v5336 = vadd.f32 %v5326, %v5335
    %v5337 = vadd.f32 %v5327, %v5335
    %v5338 = vadd.f32 %v5328, %v5335
    %v5339 = vadd.f32 %v5329, %v5335
    %v5340 = vadd.f32 %v5330, %v5335
    %v5341 = vadd.f32 %v5331, %v5335
    %vm5342 = vcmp.gt.f32.partialorder %v5336, 0.0
    %vm5343 = vcmp.gt.f32.partialorder %v5337, 0.0
    %vm5344 = vcmp.gt.f32.partialorder %v5338, 0.0
    %vm5345 = vcmp.gt.f32.partialorder %v5339, 0.0
    %vm5346 = vcmp.gt.f32.partialorder %v5340, 0.0
    %vm5347 = vcmp.gt.f32.partialorder %v5341, 0.0
    %v5348 = vmul.f32 %v5336, 1.442695
    %v5349 = vpow.pop %v5348
    %v5350 = vmul.f32 %v5337, 1.442695
    %v5351 = vpow.pop %v5350
    %v5352 = vmul.f32 %v5338, 1.442695
    %v5353 = vpow.pop %v5352
    %v5354 = vmul.f32 %v5339, 1.442695
    %v5355 = vpow.pop %v5354
    %v5356 = vmul.f32 %v5340, 1.442695
    %v5357 = vpow.pop %v5356
    %v5358 = vmul.f32 %v5341, 1.442695
    %v5359 = vpow.pop %v5358
    %v5360 = vsub.f32 %v5349, 1.0
    %v5361 = vsub.f32 %v5351, 1.0
    %v5362 = vsub.f32 %v5353, 1.0
    %v5363 = vsub.f32 %v5355, 1.0
    %v5364 = vsub.f32 %v5357, 1.0
    %v5365 = vsub.f32 %v5359, 1.0
    %v5366 = vsel %vm5342, %v5336, %v5360
    %v5367 = vsel %vm5343, %v5337, %v5361
    %v5368 = vsel %vm5344, %v5338, %v5362
    %v5369 = vsel %vm5345, %v5339, %v5363
    %v5370 = vsel %vm5346, %v5340, %v5364
    %v5371 = vsel %vm5347, %v5341, %v5365
    %5372 = vmatprep.subr.mxu0 0.0
    %5373 = vmatpush1.msra.mxu0 %v5336
    %5374 = vmatprep.subr.mxu0 0.0
    %5375 = vmatpush1.msra.mxu0 %v5337
    %5376 = vmatprep.subr.mxu0 0.0
    %5377 = vmatpush1.msra.mxu0 %v5338
    %5378 = vmatprep.subr.mxu0 0.0
    %5379 = vmatpush1.msra.mxu0 %v5339
    %5380 = vmatprep.subr.mxu0 0.0
    %5381 = vmatpush1.msra.mxu0 %v5340
    %5382 = vmatprep.subr.mxu0 0.0
    %5383 = vmatpush1.msra.mxu0 %v5341
    %5384 = vmatprep.subr.mxu0 0.0
    %5385 = vmatpush1.msra.mxu0 0.0
    %5386 = vmatprep.subr.mxu0 0.0
    %5387 = vmatpush1.msra.mxu0 0.0
    %5388 = vmatprep.subr.mxu0 0.0
    %5389 = vmatpush1.msra.mxu0 0.0
    %5390 = vmatprep.subr.mxu0 0.0
    %5391 = vmatpush1.msra.mxu0 0.0
    %5392 = vmatprep.subr.mxu0 0.0
    %5393 = vmatpush1.msra.mxu0 0.0
    %5394 = vmatprep.subr.mxu0 0.0
    %5395 = vmatpush1.msra.mxu0 0.0
    %5396 = vmatprep.subr.mxu0 0.0
    %5397 = vmatpush1.msra.mxu0 0.0
    %5398 = vmatprep.subr.mxu0 0.0
    %5399 = vmatpush1.msra.mxu0 0.0
    %5400 = vmatprep.subr.mxu0 0.0
    %5401 = vmatpush1.msra.mxu0 0.0
    %5402 = vmatprep.subr.mxu0 0.0
    %5403 = vmatpush1.msra.mxu0 0.0
    %5404 = vmatprep.subr.mxu0 0.0
    %5405 = vmatpush1.msra.mxu0 0.0
    %5406 = vmatprep.subr.mxu0 0.0
    %5407 = vmatpush1.msra.mxu0 0.0
    %5408 = vmatprep.subr.mxu0 0.0
    %5409 = vmatpush1.msra.mxu0 0.0
    %5410 = vmatprep.subr.mxu0 0.0
    %5411 = vmatpush1.msra.mxu0 0.0
    %5412 = vmatprep.subr.mxu0 0.0
    %5413 = vmatpush1.msra.mxu0 0.0
    %5414 = vmatprep.subr.mxu0 0.0
    %5415 = vmatpush1.msra.mxu0 0.0
    %5416 = vmatprep.subr.mxu0 0.0
    %5417 = vmatpush1.msra.mxu0 0.0
    %5418 = vmatprep.subr.mxu0 0.0
    %5419 = vmatpush1.msra.mxu0 0.0
    %5420 = vmatprep.subr.mxu0 0.0
    %5421 = vmatpush1.msra.mxu0 0.0
    %5422 = vmatprep.subr.mxu0 0.0
    %5423 = vmatpush1.msra.mxu0 0.0
    %5424 = vmatprep.subr.mxu0 0.0
    %5425 = vmatpush1.msra.mxu0 0.0
    %5426 = vmatprep.subr.mxu0 0.0
    %5427 = vmatpush1.msra.mxu0 0.0
    %5428 = vmatprep.subr.mxu0 0.0
    %5429 = vmatpush1.msra.mxu0 0.0
    %5430 = vmatprep.subr.mxu0 0.0
    %5431 = vmatpush1.msra.mxu0 0.0
    %5432 = vmatprep.subr.mxu0 0.0
    %5433 = vmatpush1.msra.mxu0 0.0
    %5434 = vmatprep.subr.mxu0 0.0
    %5435 = vmatpush1.msra.mxu0 0.0
    %5436 = vmatprep.mubr.f32.mxu0 0.0
    %5437 = vmatmul.mubr.f32.gmra.mrb[0].mxu0 %v1588
    %v5438 = vpop.f32.mrb[0].mxu0
    %v5439 = vadd.f32 0.0, %v5438
    %v5440 = vpop.f32.mrb[0].mxu0
    %5441 = vmatprep.mubr.f32.mxu0 0.0
    %5442 = vmatmul.mubr.f32.gmra.mrb[0].mxu0 %v1591
    %v5443 = vpop.f32.mrb[0].mxu0
    %v5444 = vadd.f32 0.0, %v5443
    %v5445 = vpop.f32.mrb[0].mxu0
    %5446 = vdwg.mxu0
    %v5447 = vsel %vm1998, %v5439, 0.0
    %v5448 = vsel %vm1998, %v5444, 0.0
    %v5449 = vadd.f32 %v5447, %v5448
    %v5450 = vrot.slane %v5449, 4
    %v5451 = vadd.f32 %v5449, %v5450
    %v5452 = vrot.slane %v5451, 2
    %v5453 = vadd.f32 %v5451, %v5452
    %v5454 = vrot.slane %v5453, 1
    %v5455 = vadd.f32 %v5453, %v5454
    %v5456 = vmul.f32 %v5455, %v1689
    %v5457 = vsub.f32 %v5439, %v5456
    %v5458 = vsub.f32 %v5444, %v5456
    %v5459 = vmul.f32 %v5457, %v5457
    %v5460 = vmul.f32 %v5458, %v5458
    %v5461 = vsel %vm1998, %v5459, 0.0
    %v5462 = vsel %vm1998, %v5460, 0.0
    %v5463 = vadd.f32 %v5461, %v5462
    %v5464 = vrot.slane %v5463, 4
    %v5465 = vadd.f32 %v5463, %v5464
    %v5466 = vrot.slane %v5465, 2
    %v5467 = vadd.f32 %v5465, %v5466
    %v5468 = vrot.slane %v5467, 1
    %v5469 = vadd.f32 %v5467, %v5468
    %v5470 = vmul.f32 %v5469, %v1689
    %v5471 = vadd.f32 %v5470, 1e-05
    %v5472 = vrsqrt.pop %v5471
    %v5473 = vmul.f32 %v5457, %v5472
    %v5474 = vmul.f32 %v5458, %v5472
    %v5475 = vlaneseq
    %v5476 = vshrl.u32 %v5475, 7
    %v5477 = vsub.s32 0, %v5476
    %v5478 = vrot.slane %v4774, %v5477
    %v5479 = vmul.f32 %v5473, %v5478
    %v5480 = vmul.f32 %v5474, %v5478
    %v5481 = vlaneseq
    %v5482 = vshrl.u32 %v5481, 7
    %v5483 = vsub.s32 0, %v5482
    %v5484 = vrot.slane %v4775, %v5483
    %v5485 = vadd.f32 %v5479, %v5484
    %v5486 = vadd.f32 %v5480, %v5484
    %vm5487 = vcmp.gt.f32.partialorder %v5485, 0.0
    %vm5488 = vcmp.gt.f32.partialorder %v5486, 0.0
    %v5489 = vmul.f32 %v5485, 1.442695
    %v5490 = vpow.pop %v5489
    %v5491 = vmul.f32 %v5486, 1.442695
    %v5492 = vpow.pop %v5491
    %v5493 = vsub.f32 %v5490, 1.0
    %v5494 = vsub.f32 %v5492, 1.0
    %v5495 = vsel %vm5487, %v5485, %v5493
    %v5496 = vsel %vm5488, %v5486, %v5494
    %s5497 = scalar_lea.vmem %s11, 280
    %v5498 = vld [vmem:[%s5497] sm:$0xff]
    %v5499 = vld [vmem:[%s5497 + $0x8] sm:$0xff]
    %v5500 = vld [vmem:[%s5497 + $0x10] sm:$0xff]
    %v5501 = vld [vmem:[%s5497 + $0x18] sm:$0xff]
    %v5502 = vld [vmem:[%s5497 + $0x20] sm:$0xff]
    %v5503 = vld [vmem:[%s5497 + $0x28] sm:$0xff]
    %v5504 = vld [vmem:[%s5497 + $0x30] sm:$0x3]
    %s5505 = scalar_lea.vmem %s12, 280
    %v5506 = vld [vmem:[%s5505] sm:$0xff]
    %v5507 = vld [vmem:[%s5505 + $0x8] sm:$0xff]
    %v5508 = vld [vmem:[%s5505 + $0x10] sm:$0xff]
    %v5509 = vld [vmem:[%s5505 + $0x18] sm:$0xff]
    %v5510 = vld [vmem:[%s5505 + $0x20] sm:$0xff]
    %v5511 = vld [vmem:[%s5505 + $0x28] sm:$0xff]
    %v5512 = vld [vmem:[%s5505 + $0x30] sm:$0x3]
    %s5513 = scalar_lea.vmem %s13, 280
    %v5514 = vld [vmem:[%s5513] sm:$0xff]
    %v5515 = vld [vmem:[%s5513 + $0x8] sm:$0xff]
    %v5516 = vld [vmem:[%s5513 + $0x10] sm:$0xff]
    %v5517 = vld [vmem:[%s5513 + $0x18] sm:$0xff]
    %v5518 = vld [vmem:[%s5513 + $0x20] sm:$0xff]
    %v5519 = vld [vmem:[%s5513 + $0x28] sm:$0xff]
    %v5520 = vld [vmem:[%s5513 + $0x30] sm:$0x3]
    %v5521 = vld [vmem:[%s14 + $0x5] sm:$0x1]
    %v5522 = vld [vmem:[%s15 + $0x5] sm:$0x1]
    %v5523 = vld [vmem:[%s16 + $0x5] sm:$0x1]
    %5524 = vmatprep.subr.mxu0 0.0
    %5525 = vmatpush1.msra.mxu0 %v5495
    %5526 = vmatprep.subr.mxu0 0.0
    %5527 = vmatpush1.msra.mxu0 %v5496
    %5528 = vmatprep.subr.mxu0 0.0
    %5529 = vmatpush1.msra.mxu0 0.0
    %5530 = vmatprep.subr.mxu0 0.0
    %5531 = vmatpush1.msra.mxu0 0.0
    %5532 = vmatprep.subr.mxu0 0.0
    %5533 = vmatpush1.msra.mxu0 0.0
    %5534 = vmatprep.subr.mxu0 0.0
    %5535 = vmatpush1.msra.mxu0 0.0
    %5536 = vmatprep.subr.mxu0 0.0
    %5537 = vmatpush1.msra.mxu0 0.0
    %5538 = vmatprep.subr.mxu0 0.0
    %5539 = vmatpush1.msra.mxu0 0.0
    %5540 = vmatprep.subr.mxu0 0.0
    %5541 = vmatpush1.msra.mxu0 0.0
    %5542 = vmatprep.subr.mxu0 0.0
    %5543 = vmatpush1.msra.mxu0 0.0
    %5544 = vmatprep.subr.mxu0 0.0
    %5545 = vmatpush1.msra.mxu0 0.0
    %5546 = vmatprep.subr.mxu0 0.0
    %5547 = vmatpush1.msra.mxu0 0.0
    %5548 = vmatprep.subr.mxu0 0.0
    %5549 = vmatpush1.msra.mxu0 0.0
    %5550 = vmatprep.subr.mxu0 0.0
    %5551 = vmatpush1.msra.mxu0 0.0
    %5552 = vmatprep.subr.mxu0 0.0
    %5553 = vmatpush1.msra.mxu0 0.0
    %5554 = vmatprep.subr.mxu0 0.0
    %5555 = vmatpush1.msra.mxu0 0.0
    %5556 = vmatprep.subr.mxu0 0.0
    %5557 = vmatpush1.msra.mxu0 0.0
    %5558 = vmatprep.subr.mxu0 0.0
    %5559 = vmatpush1.msra.mxu0 0.0
    %5560 = vmatprep.subr.mxu0 0.0
    %5561 = vmatpush1.msra.mxu0 0.0
    %5562 = vmatprep.subr.mxu0 0.0
    %5563 = vmatpush1.msra.mxu0 0.0
    %5564 = vmatprep.subr.mxu0 0.0
    %5565 = vmatpush1.msra.mxu0 0.0
    %5566 = vmatprep.subr.mxu0 0.0
    %5567 = vmatpush1.msra.mxu0 0.0
    %5568 = vmatprep.subr.mxu0 0.0
    %5569 = vmatpush1.msra.mxu0 0.0
    %5570 = vmatprep.subr.mxu0 0.0
    %5571 = vmatpush1.msra.mxu0 0.0
    %5572 = vmatprep.subr.mxu0 0.0
    %5573 = vmatpush1.msra.mxu0 0.0
    %5574 = vmatprep.subr.mxu0 0.0
    %5575 = vmatpush1.msra.mxu0 0.0
    %5576 = vmatprep.subr.mxu0 0.0
    %5577 = vmatpush1.msra.mxu0 0.0
    %5578 = vmatprep.subr.mxu0 0.0
    %5579 = vmatpush1.msra.mxu0 0.0
    %5580 = vmatprep.subr.mxu0 0.0
    %5581 = vmatpush1.msra.mxu0 0.0
    %5582 = vmatprep.subr.mxu0 0.0
    %5583 = vmatpush1.msra.mxu0 0.0
    %5584 = vmatprep.subr.mxu0 0.0
    %5585 = vmatpush1.msra.mxu0 0.0
    %5586 = vmatprep.subr.mxu0 0.0
    %5587 = vmatpush1.msra.mxu0 0.0
    %5588 = vmatprep.mubr.f32.mxu0 0.0
    %5589 = vmatmul.mubr.f32.gmra.mrb[0].mxu0 %v105
    %v5590 = vpop.f32.mrb[0].mxu0
    %v5591 = vadd.f32 0.0, %v5590
    %v5592 = vpop.f32.mrb[0].mxu0
    %5593 = vmatprep.mubr.f32.mxu0 0.0
    %5594 = vmatmul.mubr.f32.gmra.mrb[0].mxu0 %v108
    %v5595 = vpop.f32.mrb[0].mxu0
    %v5596 = vadd.f32 0.0, %v5595
    %v5597 = vpop.f32.mrb[0].mxu0
    %5598 = vmatprep.mubr.f32.mxu0 0.0
    %5599 = vmatmul.mubr.f32.gmra.mrb[0].mxu0 %v111
    %v5600 = vpop.f32.mrb[0].mxu0
    %v5601 = vadd.f32 0.0, %v5600
    %v5602 = vpop.f32.mrb[0].mxu0
    %5603 = vmatprep.mubr.f32.mxu0 0.0
    %5604 = vmatmul.mubr.f32.gmra.mrb[0].mxu0 %v114
    %v5605 = vpop.f32.mrb[0].mxu0
    %v5606 = vadd.f32 0.0, %v5605
    %v5607 = vpop.f32.mrb[0].mxu0
    %5608 = vmatprep.mubr.f32.mxu0 0.0
    %5609 = vmatmul.mubr.f32.gmra.mrb[0].mxu0 %v117
    %v5610 = vpop.f32.mrb[0].mxu0
    %v5611 = vadd.f32 0.0, %v5610
    %v5612 = vpop.f32.mrb[0].mxu0
    %5613 = vmatprep.mubr.f32.mxu0 0.0
    %5614 = vmatmul.mubr.f32.gmra.mrb[0].mxu0 %v120
    %v5615 = vpop.f32.mrb[0].mxu0
    %v5616 = vadd.f32 0.0, %v5615
    %v5617 = vpop.f32.mrb[0].mxu0
    %5618 = vdwg.mxu0
    %5619 = vmatprep.subr.mxu0 0.0
    %5620 = vmatpush1.msra.mxu0 %v5495
    %5621 = vmatprep.subr.mxu0 0.0
    %5622 = vmatpush1.msra.mxu0 %v5496
    %5623 = vmatprep.subr.mxu0 0.0
    %5624 = vmatpush1.msra.mxu0 0.0
    %5625 = vmatprep.subr.mxu0 0.0
    %5626 = vmatpush1.msra.mxu0 0.0
    %5627 = vmatprep.subr.mxu0 0.0
    %5628 = vmatpush1.msra.mxu0 0.0
    %5629 = vmatprep.subr.mxu0 0.0
    %5630 = vmatpush1.msra.mxu0 0.0
    %5631 = vmatprep.subr.mxu0 0.0
    %5632 = vmatpush1.msra.mxu0 0.0
    %5633 = vmatprep.subr.mxu0 0.0
    %5634 = vmatpush1.msra.mxu0 0.0
    %5635 = vmatprep.subr.mxu0 0.0
    %5636 = vmatpush1.msra.mxu0 0.0
    %5637 = vmatprep.subr.mxu0 0.0
    %5638 = vmatpush1.msra.mxu0 0.0
    %5639 = vmatprep.subr.mxu0 0.0
    %5640 = vmatpush1.msra.mxu0 0.0
    %5641 = vmatprep.subr.mxu0 0.0
    %5642 = vmatpush1.msra.mxu0 0.0
    %5643 = vmatprep.subr.mxu0 0.0
    %5644 = vmatpush1.msra.mxu0 0.0
    %5645 = vmatprep.subr.mxu0 0.0
    %5646 = vmatpush1.msra.mxu0 0.0
    %5647 = vmatprep.subr.mxu0 0.0
    %5648 = vmatpush1.msra.mxu0 0.0
    %5649 = vmatprep.subr.mxu0 0.0
    %5650 = vmatpush1.msra.mxu0 0.0
    %5651 = vmatprep.subr.mxu0 0.0
    %5652 = vmatpush1.msra.mxu0 0.0
    %5653 = vmatprep.subr.mxu0 0.0
    %5654 = vmatpush1.msra.mxu0 0.0
    %5655 = vmatprep.subr.mxu0 0.0
    %5656 = vmatpush1.msra.mxu0 0.0
    %5657 = vmatprep.subr.mxu0 0.0
    %5658 = vmatpush1.msra.mxu0 0.0
    %5659 = vmatprep.subr.mxu0 0.0
    %5660 = vmatpush1.msra.mxu0 0.0
    %5661 = vmatprep.subr.mxu0 0.0
    %5662 = vmatpush1.msra.mxu0 0.0
    %5663 = vmatprep.subr.mxu0 0.0
    %5664 = vmatpush1.msra.mxu0 0.0
    %5665 = vmatprep.subr.mxu0 0.0
    %5666 = vmatpush1.msra.mxu0 0.0
    %5667 = vmatprep.subr.mxu0 0.0
    %5668 = vmatpush1.msra.mxu0 0.0
    %5669 = vmatprep.subr.mxu0 0.0
    %5670 = vmatpush1.msra.mxu0 0.0
    %5671 = vmatprep.subr.mxu0 0.0
    %5672 = vmatpush1.msra.mxu0 0.0
    %5673 = vmatprep.subr.mxu0 0.0
    %5674 = vmatpush1.msra.mxu0 0.0
    %5675 = vmatprep.subr.mxu0 0.0
    %5676 = vmatpush1.msra.mxu0 0.0
    %5677 = vmatprep.subr.mxu0 0.0
    %5678 = vmatpush1.msra.mxu0 0.0
    %5679 = vmatprep.subr.mxu0 0.0
    %5680 = vmatpush1.msra.mxu0 0.0
    %5681 = vmatprep.subr.mxu0 0.0
    %5682 = vmatpush1.msra.mxu0 0.0
    %5683 = vmatprep.mubr.f32.mxu0 0.0
    %5684 = vmatmul.mubr.f32.gmra.mrb[0].mxu0 %v218
    %v5685 = vpop.f32.mrb[0].mxu0
    %v5686 = vadd.f32 0.0, %v5685
    %v5687 = vpop.f32.mrb[0].mxu0
    %5688 = vmatprep.mubr.f32.mxu0 0.0
    %5689 = vmatmul.mubr.f32.gmra.mrb[0].mxu0 %v221
    %v5690 = vpop.f32.mrb[0].mxu0
    %v5691 = vadd.f32 0.0, %v5690
    %v5692 = vpop.f32.mrb[0].mxu0
    %5693 = vmatprep.mubr.f32.mxu0 0.0
    %5694 = vmatmul.mubr.f32.gmra.mrb[0].mxu0 %v224
    %v5695 = vpop.f32.mrb[0].mxu0
    %v5696 = vadd.f32 0.0, %v5695
    %v5697 = vpop.f32.mrb[0].mxu0
    %5698 = vmatprep.mubr.f32.mxu0 0.0
    %5699 = vmatmul.mubr.f32.gmra.mrb[0].mxu0 %v227
    %v5700 = vpop.f32.mrb[0].mxu0
    %v5701 = vadd.f32 0.0, %v5700
    %v5702 = vpop.f32.mrb[0].mxu0
    %5703 = vmatprep.mubr.f32.mxu0 0.0
    %5704 = vmatmul.mubr.f32.gmra.mrb[0].mxu0 %v230
    %v5705 = vpop.f32.mrb[0].mxu0
    %v5706 = vadd.f32 0.0, %v5705
    %v5707 = vpop.f32.mrb[0].mxu0
    %5708 = vmatprep.mubr.f32.mxu0 0.0
    %5709 = vmatmul.mubr.f32.gmra.mrb[0].mxu0 %v233
    %v5710 = vpop.f32.mrb[0].mxu0
    %v5711 = vadd.f32 0.0, %v5710
    %v5712 = vpop.f32.mrb[0].mxu0
    %5713 = vdwg.mxu0
    %v5715 = vsel %vm1998, %v5686, 0
    %v5718 = vsel %vm1998, %v5691, 0
    %v5721 = vsel %vm1998, %v5696, 0
    %v5724 = vsel %vm1998, %v5701, 0
    %v5727 = vsel %vm1998, %v5706, 0
    %v5730 = vsel %vm1998, %v5711, 0
    %v5733 = vsel %vm2017, %v5512, 0
    %5735 = vmatprep.subr.mxu0 0.0
    %5736 = vmatpush1.msra.mxu0 %v5506
    %5737 = vmatprep.subr.mxu0 0.0
    %5738 = vmatpush1.msra.mxu0 %v5507
    %5739 = vmatprep.subr.mxu0 0.0
    %5740 = vmatpush1.msra.mxu0 %v5508
    %5741 = vmatprep.subr.mxu0 0.0
    %5742 = vmatpush1.msra.mxu0 %v5509
    %5743 = vmatprep.subr.mxu0 0.0
    %5744 = vmatpush1.msra.mxu0 %v5510
    %5745 = vmatprep.subr.mxu0 0.0
    %5746 = vmatpush1.msra.mxu0 %v5511
    %5747 = vmatprep.subr.mxu0 0.0
    %5748 = vmatpush1.msra.mxu0 %v5733
    %5749 = vmatprep.subr.mxu0 0.0
    %5750 = vmatpush1.msra.mxu0 0.0
    %5751 = vmatprep.subr.mxu0 0.0
    %5752 = vmatpush1.msra.mxu0 0.0
    %5753 = vmatprep.subr.mxu0 0.0
    %5754 = vmatpush1.msra.mxu0 0.0
    %5755 = vmatprep.subr.mxu0 0.0
    %5756 = vmatpush1.msra.mxu0 0.0
    %5757 = vmatprep.subr.mxu0 0.0
    %5758 = vmatpush1.msra.mxu0 0.0
    %5759 = vmatprep.subr.mxu0 0.0
    %5760 = vmatpush1.msra.mxu0 0.0
    %5761 = vmatprep.subr.mxu0 0.0
    %5762 = vmatpush1.msra.mxu0 0.0
    %5763 = vmatprep.subr.mxu0 0.0
    %5764 = vmatpush1.msra.mxu0 0.0
    %5765 = vmatprep.subr.mxu0 0.0
    %5766 = vmatpush1.msra.mxu0 0.0
    %5767 = vmatprep.subr.mxu0 0.0
    %5768 = vmatpush1.msra.mxu0 0.0
    %5769 = vmatprep.subr.mxu0 0.0
    %5770 = vmatpush1.msra.mxu0 0.0
    %5771 = vmatprep.subr.mxu0 0.0
    %5772 = vmatpush1.msra.mxu0 0.0
    %5773 = vmatprep.subr.mxu0 0.0
    %5774 = vmatpush1.msra.mxu0 0.0
    %5775 = vmatprep.subr.mxu0 0.0
    %5776 = vmatpush1.msra.mxu0 0.0
    %5777 = vmatprep.subr.mxu0 0.0
    %5778 = vmatpush1.msra.mxu0 0.0
    %5779 = vmatprep.subr.mxu0 0.0
    %5780 = vmatpush1.msra.mxu0 0.0
    %5781 = vmatprep.subr.mxu0 0.0
    %5782 = vmatpush1.msra.mxu0 0.0
    %5783 = vmatprep.subr.mxu0 0.0
    %5784 = vmatpush1.msra.mxu0 0.0
    %5785 = vmatprep.subr.mxu0 0.0
    %5786 = vmatpush1.msra.mxu0 0.0
    %5787 = vmatprep.subr.mxu0 0.0
    %5788 = vmatpush1.msra.mxu0 0.0
    %5789 = vmatprep.subr.mxu0 0.0
    %5790 = vmatpush1.msra.mxu0 0.0
    %5791 = vmatprep.subr.mxu0 0.0
    %5792 = vmatpush1.msra.mxu0 0.0
    %5793 = vmatprep.subr.mxu0 0.0
    %5794 = vmatpush1.msra.mxu0 0.0
    %5795 = vmatprep.subr.mxu0 0.0
    %5796 = vmatpush1.msra.mxu0 0.0
    %5797 = vmatprep.subr.mxu0 0.0
    %5798 = vmatpush1.msra.mxu0 0.0
    %5799 = vmatprep.mubr.f32.mxu0 0.0
    %5800 = vmatmul.mubr.f32.gmra.mrb[0].mxu0 %v5715
    %v5801 = vpop.f32.mrb[0].mxu0
    %v5802 = vadd.f32 0.0, %v5801
    %v5803 = vpop.f32.mrb[0].mxu0
    %5804 = vmatprep.mubr.f32.mxu0 0.0
    %5805 = vmatmul.mubr.f32.gmra.mrb[0].mxu0 %v5718
    %v5806 = vpop.f32.mrb[0].mxu0
    %v5807 = vadd.f32 0.0, %v5806
    %v5808 = vpop.f32.mrb[0].mxu0
    %5809 = vmatprep.mubr.f32.mxu0 0.0
    %5810 = vmatmul.mubr.f32.gmra.mrb[0].mxu0 %v5721
    %v5811 = vpop.f32.mrb[0].mxu0
    %v5812 = vadd.f32 0.0, %v5811
    %v5813 = vpop.f32.mrb[0].mxu0
    %5814 = vmatprep.mubr.f32.mxu0 0.0
    %5815 = vmatmul.mubr.f32.gmra.mrb[0].mxu0 %v5724
    %v5816 = vpop.f32.mrb[0].mxu0
    %v5817 = vadd.f32 0.0, %v5816
    %v5818 = vpop.f32.mrb[0].mxu0
    %5819 = vmatprep.mubr.f32.mxu0 0.0
    %5820 = vmatmul.mubr.f32.gmra.mrb[0].mxu0 %v5727
    %v5821 = vpop.f32.mrb[0].mxu0
    %v5822 = vadd.f32 0.0, %v5821
    %v5823 = vpop.f32.mrb[0].mxu0
    %5824 = vmatprep.mubr.f32.mxu0 0.0
    %5825 = vmatmul.mubr.f32.gmra.mrb[0].mxu0 %v5730
    %v5826 = vpop.f32.mrb[0].mxu0
    %v5827 = vadd.f32 0.0, %v5826
    %v5828 = vpop.f32.mrb[0].mxu0
    %5829 = vdwg.mxu0
    %v5831 = vsel %vm1998, %v5591, 0
    %v5834 = vsel %vm1998, %v5596, 0
    %v5837 = vsel %vm1998, %v5601, 0
    %v5840 = vsel %vm1998, %v5606, 0
    %v5843 = vsel %vm1998, %v5611, 0
    %v5846 = vsel %vm1998, %v5616, 0
    %v5849 = vsel %vm2017, %v5504, 0
    %5851 = vmatprep.subr.mxu0 0.0
    %5852 = vmatpush1.msra.mxu0 %v5498
    %5853 = vmatprep.subr.mxu0 0.0
    %5854 = vmatpush1.msra.mxu0 %v5499
    %5855 = vmatprep.subr.mxu0 0.0
    %5856 = vmatpush1.msra.mxu0 %v5500
    %5857 = vmatprep.subr.mxu0 0.0
    %5858 = vmatpush1.msra.mxu0 %v5501
    %5859 = vmatprep.subr.mxu0 0.0
    %5860 = vmatpush1.msra.mxu0 %v5502
    %5861 = vmatprep.subr.mxu0 0.0
    %5862 = vmatpush1.msra.mxu0 %v5503
    %5863 = vmatprep.subr.mxu0 0.0
    %5864 = vmatpush1.msra.mxu0 %v5849
    %5865 = vmatprep.subr.mxu0 0.0
    %5866 = vmatpush1.msra.mxu0 0.0
    %5867 = vmatprep.subr.mxu0 0.0
    %5868 = vmatpush1.msra.mxu0 0.0
    %5869 = vmatprep.subr.mxu0 0.0
    %5870 = vmatpush1.msra.mxu0 0.0
    %5871 = vmatprep.subr.mxu0 0.0
    %5872 = vmatpush1.msra.mxu0 0.0
    %5873 = vmatprep.subr.mxu0 0.0
    %5874 = vmatpush1.msra.mxu0 0.0
    %5875 = vmatprep.subr.mxu0 0.0
    %5876 = vmatpush1.msra.mxu0 0.0
    %5877 = vmatprep.subr.mxu0 0.0
    %5878 = vmatpush1.msra.mxu0 0.0
    %5879 = vmatprep.subr.mxu0 0.0
    %5880 = vmatpush1.msra.mxu0 0.0
    %5881 = vmatprep.subr.mxu0 0.0
    %5882 = vmatpush1.msra.mxu0 0.0
    %5883 = vmatprep.subr.mxu0 0.0
    %5884 = vmatpush1.msra.mxu0 0.0
    %5885 = vmatprep.subr.mxu0 0.0
    %5886 = vmatpush1.msra.mxu0 0.0
    %5887 = vmatprep.subr.mxu0 0.0
    %5888 = vmatpush1.msra.mxu0 0.0
    %5889 = vmatprep.subr.mxu0 0.0
    %5890 = vmatpush1.msra.mxu0 0.0
    %5891 = vmatprep.subr.mxu0 0.0
    %5892 = vmatpush1.msra.mxu0 0.0
    %5893 = vmatprep.subr.mxu0 0.0
    %5894 = vmatpush1.msra.mxu0 0.0
    %5895 = vmatprep.subr.mxu0 0.0
    %5896 = vmatpush1.msra.mxu0 0.0
    %5897 = vmatprep.subr.mxu0 0.0
    %5898 = vmatpush1.msra.mxu0 0.0
    %5899 = vmatprep.subr.mxu0 0.0
    %5900 = vmatpush1.msra.mxu0 0.0
    %5901 = vmatprep.subr.mxu0 0.0
    %5902 = vmatpush1.msra.mxu0 0.0
    %5903 = vmatprep.subr.mxu0 0.0
    %5904 = vmatpush1.msra.mxu0 0.0
    %5905 = vmatprep.subr.mxu0 0.0
    %5906 = vmatpush1.msra.mxu0 0.0
    %5907 = vmatprep.subr.mxu0 0.0
    %5908 = vmatpush1.msra.mxu0 0.0
    %5909 = vmatprep.subr.mxu0 0.0
    %5910 = vmatpush1.msra.mxu0 0.0
    %5911 = vmatprep.subr.mxu0 0.0
    %5912 = vmatpush1.msra.mxu0 0.0
    %5913 = vmatprep.subr.mxu0 0.0
    %5914 = vmatpush1.msra.mxu0 0.0
    %5915 = vmatprep.mubr.f32.mxu0 0.0
    %5916 = vmatmul.mubr.f32.gmra.mrb[0].mxu0 %v5831
    %v5917 = vpop.f32.mrb[0].mxu0
    %v5918 = vadd.f32 %v5802, %v5917
    %v5919 = vpop.f32.mrb[0].mxu0
    %5920 = vmatprep.mubr.f32.mxu0 0.0
    %5921 = vmatmul.mubr.f32.gmra.mrb[0].mxu0 %v5834
    %v5922 = vpop.f32.mrb[0].mxu0
    %v5923 = vadd.f32 %v5807, %v5922
    %v5924 = vpop.f32.mrb[0].mxu0
    %5925 = vmatprep.mubr.f32.mxu0 0.0
    %5926 = vmatmul.mubr.f32.gmra.mrb[0].mxu0 %v5837
    %v5927 = vpop.f32.mrb[0].mxu0
    %v5928 = vadd.f32 %v5812, %v5927
    %v5929 = vpop.f32.mrb[0].mxu0
    %5930 = vmatprep.mubr.f32.mxu0 0.0
    %5931 = vmatmul.mubr.f32.gmra.mrb[0].mxu0 %v5840
    %v5932 = vpop.f32.mrb[0].mxu0
    %v5933 = vadd.f32 %v5817, %v5932
    %v5934 = vpop.f32.mrb[0].mxu0
    %5935 = vmatprep.mubr.f32.mxu0 0.0
    %5936 = vmatmul.mubr.f32.gmra.mrb[0].mxu0 %v5843
    %v5937 = vpop.f32.mrb[0].mxu0
    %v5938 = vadd.f32 %v5822, %v5937
    %v5939 = vpop.f32.mrb[0].mxu0
    %5940 = vmatprep.mubr.f32.mxu0 0.0
    %5941 = vmatmul.mubr.f32.gmra.mrb[0].mxu0 %v5846
    %v5942 = vpop.f32.mrb[0].mxu0
    %v5943 = vadd.f32 %v5827, %v5942
    %v5944 = vpop.f32.mrb[0].mxu0
    %5945 = vdwg.mxu0
    %5952 = vrot.lane.b32.xlu0 %v5366, 78
    %v5953 = vpop.permute.xlu0 %5952
    %5954 = vrot.lane.b32.xlu0 %v5367, 78
    %v5955 = vpop.permute.xlu0 %5954
    %5956 = vrot.lane.b32.xlu0 %v5368, 78
    %v5957 = vpop.permute.xlu0 %5956
    %5958 = vrot.lane.b32.xlu0 %v5369, 78
    %v5959 = vpop.permute.xlu0 %5958
    %5960 = vrot.lane.b32.xlu0 %v5370, 78
    %v5961 = vpop.permute.xlu0 %5960
    %5962 = vrot.lane.b32.xlu0 %v5371, 78
    %v5963 = vpop.permute.xlu0 %5962
    %v5964 = vsel %vm1998, %v5953, 0
    %v5966 = vsel %vm1998, %v5955, 0
    %v5968 = vsel %vm1998, %v5957, 0
    %v5970 = vsel %vm1998, %v5959, 0
    %v5972 = vsel %vm1998, %v5961, 0
    %v5974 = vsel %vm1998, %v5963, 0
    %v5977 = vsel %vm2017, %v5520, 0
    %5979 = vmatprep.subr.mxu0 0.0
    %5980 = vmatpush1.msra.mxu0 %v5514
    %5981 = vmatprep.subr.mxu0 0.0
    %5982 = vmatpush1.msra.mxu0 %v5515
    %5983 = vmatprep.subr.mxu0 0.0
    %5984 = vmatpush1.msra.mxu0 %v5516
    %5985 = vmatprep.subr.mxu0 0.0
    %5986 = vmatpush1.msra.mxu0 %v5517
    %5987 = vmatprep.subr.mxu0 0.0
    %5988 = vmatpush1.msra.mxu0 %v5518
    %5989 = vmatprep.subr.mxu0 0.0
    %5990 = vmatpush1.msra.mxu0 %v5519
    %5991 = vmatprep.subr.mxu0 0.0
    %5992 = vmatpush1.msra.mxu0 %v5977
    %5993 = vmatprep.subr.mxu0 0.0
    %5994 = vmatpush1.msra.mxu0 0.0
    %5995 = vmatprep.subr.mxu0 0.0
    %5996 = vmatpush1.msra.mxu0 0.0
    %5997 = vmatprep.subr.mxu0 0.0
    %5998 = vmatpush1.msra.mxu0 0.0
    %5999 = vmatprep.subr.mxu0 0.0
    %6000 = vmatpush1.msra.mxu0 0.0
    %6001 = vmatprep.subr.mxu0 0.0
    %6002 = vmatpush1.msra.mxu0 0.0
    %6003 = vmatprep.subr.mxu0 0.0
    %6004 = vmatpush1.msra.mxu0 0.0
    %6005 = vmatprep.subr.mxu0 0.0
    %6006 = vmatpush1.msra.mxu0 0.0
    %6007 = vmatprep.subr.mxu0 0.0
    %6008 = vmatpush1.msra.mxu0 0.0
    %6009 = vmatprep.subr.mxu0 0.0
    %6010 = vmatpush1.msra.mxu0 0.0
    %6011 = vmatprep.subr.mxu0 0.0
    %6012 = vmatpush1.msra.mxu0 0.0
    %6013 = vmatprep.subr.mxu0 0.0
    %6014 = vmatpush1.msra.mxu0 0.0
    %6015 = vmatprep.subr.mxu0 0.0
    %6016 = vmatpush1.msra.mxu0 0.0
    %6017 = vmatprep.subr.mxu0 0.0
    %6018 = vmatpush1.msra.mxu0 0.0
    %6019 = vmatprep.subr.mxu0 0.0
    %6020 = vmatpush1.msra.mxu0 0.0
    %6021 = vmatprep.subr.mxu0 0.0
    %6022 = vmatpush1.msra.mxu0 0.0
    %6023 = vmatprep.subr.mxu0 0.0
    %6024 = vmatpush1.msra.mxu0 0.0
    %6025 = vmatprep.subr.mxu0 0.0
    %6026 = vmatpush1.msra.mxu0 0.0
    %6027 = vmatprep.subr.mxu0 0.0
    %6028 = vmatpush1.msra.mxu0 0.0
    %6029 = vmatprep.subr.mxu0 0.0
    %6030 = vmatpush1.msra.mxu0 0.0
    %6031 = vmatprep.subr.mxu0 0.0
    %6032 = vmatpush1.msra.mxu0 0.0
    %6033 = vmatprep.subr.mxu0 0.0
    %6034 = vmatpush1.msra.mxu0 0.0
    %6035 = vmatprep.subr.mxu0 0.0
    %6036 = vmatpush1.msra.mxu0 0.0
    %6037 = vmatprep.subr.mxu0 0.0
    %6038 = vmatpush1.msra.mxu0 0.0
    %6039 = vmatprep.subr.mxu0 0.0
    %6040 = vmatpush1.msra.mxu0 0.0
    %6041 = vmatprep.subr.mxu0 0.0
    %6042 = vmatpush1.msra.mxu0 0.0
    %6043 = vmatprep.mubr.f32.mxu0 0.0
    %6044 = vmatmul.mubr.f32.gmra.mrb[0].mxu0 %v5964
    %v6045 = vpop.f32.mrb[0].mxu0
    %v6046 = vadd.f32 0.0, %v6045
    %v6047 = vpop.f32.mrb[0].mxu0
    %6048 = vmatprep.mubr.f32.mxu0 0.0
    %6049 = vmatmul.mubr.f32.gmra.mrb[0].mxu0 %v5966
    %v6050 = vpop.f32.mrb[0].mxu0
    %v6051 = vadd.f32 0.0, %v6050
    %v6052 = vpop.f32.mrb[0].mxu0
    %6053 = vmatprep.mubr.f32.mxu0 0.0
    %6054 = vmatmul.mubr.f32.gmra.mrb[0].mxu0 %v5968
    %v6055 = vpop.f32.mrb[0].mxu0
    %v6056 = vadd.f32 0.0, %v6055
    %v6057 = vpop.f32.mrb[0].mxu0
    %6058 = vmatprep.mubr.f32.mxu0 0.0
    %6059 = vmatmul.mubr.f32.gmra.mrb[0].mxu0 %v5970
    %v6060 = vpop.f32.mrb[0].mxu0
    %v6061 = vadd.f32 0.0, %v6060
    %v6062 = vpop.f32.mrb[0].mxu0
    %6063 = vmatprep.mubr.f32.mxu0 0.0
    %6064 = vmatmul.mubr.f32.gmra.mrb[0].mxu0 %v5972
    %v6065 = vpop.f32.mrb[0].mxu0
    %v6066 = vadd.f32 0.0, %v6065
    %v6067 = vpop.f32.mrb[0].mxu0
    %6068 = vmatprep.mubr.f32.mxu0 0.0
    %6069 = vmatmul.mubr.f32.gmra.mrb[0].mxu0 %v5974
    %v6070 = vpop.f32.mrb[0].mxu0
    %v6071 = vadd.f32 0.0, %v6070
    %v6072 = vpop.f32.mrb[0].mxu0
    %6073 = vdwg.mxu0
    %v6074 = vadd.f32 %v5918, %v6046
    %v6075 = vadd.f32 %v5923, %v6051
    %v6076 = vadd.f32 %v5928, %v6056
    %v6077 = vadd.f32 %v5933, %v6061
    %v6078 = vadd.f32 %v5938, %v6066
    %v6079 = vadd.f32 %v5943, %v6071
    %v6080 = vlaneseq
    %v6081 = vshrl.u32 %v6080, 7
    %v6082 = vsub.s32 0, %v6081
    %v6083 = vrot.slane %v5521, %v6082
    %v6084 = vadd.f32 %v6074, %v6083
    %v6085 = vadd.f32 %v6075, %v6083
    %v6086 = vadd.f32 %v6076, %v6083
    %v6087 = vadd.f32 %v6077, %v6083
    %v6088 = vadd.f32 %v6078, %v6083
    %v6089 = vadd.f32 %v6079, %v6083
    %6090 = vmatprep.subr.mxu0 0.0
    %6091 = vmatpush1.msra.mxu0 %v6084
    %6092 = vmatprep.subr.mxu0 0.0
    %6093 = vmatpush1.msra.mxu0 %v6085
    %6094 = vmatprep.subr.mxu0 0.0
    %6095 = vmatpush1.msra.mxu0 %v6086
    %6096 = vmatprep.subr.mxu0 0.0
    %6097 = vmatpush1.msra.mxu0 %v6087
    %6098 = vmatprep.subr.mxu0 0.0
    %6099 = vmatpush1.msra.mxu0 %v6088
    %6100 = vmatprep.subr.mxu0 0.0
    %6101 = vmatpush1.msra.mxu0 %v6089
    %6102 = vmatprep.subr.mxu0 0.0
    %6103 = vmatpush1.msra.mxu0 0.0
    %6104 = vmatprep.subr.mxu0 0.0
    %6105 = vmatpush1.msra.mxu0 0.0
    %6106 = vmatprep.subr.mxu0 0.0
    %6107 = vmatpush1.msra.mxu0 0.0
    %6108 = vmatprep.subr.mxu0 0.0
    %6109 = vmatpush1.msra.mxu0 0.0
    %6110 = vmatprep.subr.mxu0 0.0
    %6111 = vmatpush1.msra.mxu0 0.0
    %6112 = vmatprep.subr.mxu0 0.0
    %6113 = vmatpush1.msra.mxu0 0.0
    %6114 = vmatprep.subr.mxu0 0.0
    %6115 = vmatpush1.msra.mxu0 0.0
    %6116 = vmatprep.subr.mxu0 0.0
    %6117 = vmatpush1.msra.mxu0 0.0
    %6118 = vmatprep.subr.mxu0 0.0
    %6119 = vmatpush1.msra.mxu0 0.0
    %6120 = vmatprep.subr.mxu0 0.0
    %6121 = vmatpush1.msra.mxu0 0.0
    %6122 = vmatprep.subr.mxu0 0.0
    %6123 = vmatpush1.msra.mxu0 0.0
    %6124 = vmatprep.subr.mxu0 0.0
    %6125 = vmatpush1.msra.mxu0 0.0
    %6126 = vmatprep.subr.mxu0 0.0
    %6127 = vmatpush1.msra.mxu0 0.0
    %6128 = vmatprep.subr.mxu0 0.0
    %6129 = vmatpush1.msra.mxu0 0.0
    %6130 = vmatprep.subr.mxu0 0.0
    %6131 = vmatpush1.msra.mxu0 0.0
    %6132 = vmatprep.subr.mxu0 0.0
    %6133 = vmatpush1.msra.mxu0 0.0
    %6134 = vmatprep.subr.mxu0 0.0
    %6135 = vmatpush1.msra.mxu0 0.0
    %6136 = vmatprep.subr.mxu0 0.0
    %6137 = vmatpush1.msra.mxu0 0.0
    %6138 = vmatprep.subr.mxu0 0.0
    %6139 = vmatpush1.msra.mxu0 0.0
    %6140 = vmatprep.subr.mxu0 0.0
    %6141 = vmatpush1.msra.mxu0 0.0
    %6142 = vmatprep.subr.mxu0 0.0
    %6143 = vmatpush1.msra.mxu0 0.0
    %6144 = vmatprep.subr.mxu0 0.0
    %6145 = vmatpush1.msra.mxu0 0.0
    %6146 = vmatprep.subr.mxu0 0.0
    %6147 = vmatpush1.msra.mxu0 0.0
    %6148 = vmatprep.subr.mxu0 0.0
    %6149 = vmatpush1.msra.mxu0 0.0
    %6150 = vmatprep.subr.mxu0 0.0
    %6151 = vmatpush1.msra.mxu0 0.0
    %6152 = vmatprep.subr.mxu0 0.0
    %6153 = vmatpush1.msra.mxu0 0.0
    %6154 = vmatprep.mubr.f32.mxu0 0.0
    %6155 = vmatmul.mubr.f32.gmra.mrb[0].mxu0 %v1588
    %v6156 = vpop.f32.mrb[0].mxu0
    %v6157 = vadd.f32 0.0, %v6156
    %v6158 = vpop.f32.mrb[0].mxu0
    %6159 = vmatprep.mubr.f32.mxu0 0.0
    %6160 = vmatmul.mubr.f32.gmra.mrb[0].mxu0 %v1591
    %v6161 = vpop.f32.mrb[0].mxu0
    %v6162 = vadd.f32 0.0, %v6161
    %v6163 = vpop.f32.mrb[0].mxu0
    %6164 = vdwg.mxu0
    %v6165 = vsel %vm1998, %v6157, 0.0
    %v6166 = vsel %vm1998, %v6162, 0.0
    %v6167 = vadd.f32 %v6165, %v6166
    %v6168 = vrot.slane %v6167, 4
    %v6169 = vadd.f32 %v6167, %v6168
    %v6170 = vrot.slane %v6169, 2
    %v6171 = vadd.f32 %v6169, %v6170
    %v6172 = vrot.slane %v6171, 1
    %v6173 = vadd.f32 %v6171, %v6172
    %v6174 = vmul.f32 %v6173, %v1689
    %v6175 = vsub.f32 %v6157, %v6174
    %v6176 = vsub.f32 %v6162, %v6174
    %v6177 = vmul.f32 %v6175, %v6175
    %v6178 = vmul.f32 %v6176, %v6176
    %v6179 = vsel %vm1998, %v6177, 0.0
    %v6180 = vsel %vm1998, %v6178, 0.0
    %v6181 = vadd.f32 %v6179, %v6180
    %v6182 = vrot.slane %v6181, 4
    %v6183 = vadd.f32 %v6181, %v6182
    %v6184 = vrot.slane %v6183, 2
    %v6185 = vadd.f32 %v6183, %v6184
    %v6186 = vrot.slane %v6185, 1
    %v6187 = vadd.f32 %v6185, %v6186
    %v6188 = vmul.f32 %v6187, %v1689
    %v6189 = vadd.f32 %v6188, 1e-05
    %v6190 = vrsqrt.pop %v6189
    %v6191 = vmul.f32 %v6175, %v6190
    %v6192 = vmul.f32 %v6176, %v6190
    %v6193 = vlaneseq
    %v6194 = vshrl.u32 %v6193, 7
    %v6195 = vsub.s32 0, %v6194
    %v6196 = vrot.slane %v5522, %v6195
    %v6197 = vmul.f32 %v6191, %v6196
    %v6198 = vmul.f32 %v6192, %v6196
    %v6199 = vlaneseq
    %v6200 = vshrl.u32 %v6199, 7
    %v6201 = vsub.s32 0, %v6200
    %v6202 = vrot.slane %v5523, %v6201
    %v6203 = vadd.f32 %v6197, %v6202
    %v6204 = vadd.f32 %v6198, %v6202
    %vm6205 = vcmp.gt.f32.partialorder %v6203, 0.0
    %vm6206 = vcmp.gt.f32.partialorder %v6204, 0.0
    %v6207 = vmul.f32 %v6203, 1.442695
    %v6208 = vpow.pop %v6207
    %v6209 = vmul.f32 %v6204, 1.442695
    %v6210 = vpow.pop %v6209
    %v6211 = vsub.f32 %v6208, 1.0
    %v6212 = vsub.f32 %v6210, 1.0
    %v6213 = vsel %vm6205, %v6203, %v6211
    %v6214 = vsel %vm6206, %v6204, %v6212
    %s6215 = scalar_lea.vmem %s11, 336
    %v6216 = vld [vmem:[%s6215] sm:$0xff]
    %v6217 = vld [vmem:[%s6215 + $0x8] sm:$0xff]
    %v6218 = vld [vmem:[%s6215 + $0x10] sm:$0xff]
    %v6219 = vld [vmem:[%s6215 + $0x18] sm:$0xff]
    %v6220 = vld [vmem:[%s6215 + $0x20] sm:$0xff]
    %v6221 = vld [vmem:[%s6215 + $0x28] sm:$0xff]
    %v6222 = vld [vmem:[%s6215 + $0x30] sm:$0x3]
    %s6223 = scalar_lea.vmem %s12, 336
    %v6224 = vld [vmem:[%s6223] sm:$0xff]
    %v6225 = vld [vmem:[%s6223 + $0x8] sm:$0xff]
    %v6226 = vld [vmem:[%s6223 + $0x10] sm:$0xff]
    %v6227 = vld [vmem:[%s6223 + $0x18] sm:$0xff]
    %v6228 = vld [vmem:[%s6223 + $0x20] sm:$0xff]
    %v6229 = vld [vmem:[%s6223 + $0x28] sm:$0xff]
    %v6230 = vld [vmem:[%s6223 + $0x30] sm:$0x3]
    %s6231 = scalar_lea.vmem %s13, 336
    %v6232 = vld [vmem:[%s6231] sm:$0xff]
    %v6233 = vld [vmem:[%s6231 + $0x8] sm:$0xff]
    %v6234 = vld [vmem:[%s6231 + $0x10] sm:$0xff]
    %v6235 = vld [vmem:[%s6231 + $0x18] sm:$0xff]
    %v6236 = vld [vmem:[%s6231 + $0x20] sm:$0xff]
    %v6237 = vld [vmem:[%s6231 + $0x28] sm:$0xff]
    %v6238 = vld [vmem:[%s6231 + $0x30] sm:$0x3]
    %v6239 = vld [vmem:[%s14 + $0x6] sm:$0x1]
    %v6240 = vld [vmem:[%s15 + $0x6] sm:$0x1]
    %v6241 = vld [vmem:[%s16 + $0x6] sm:$0x1]
    %6242 = vrot.lane.b32.xlu0 %v1773, 56
    %v6243 = vpop.permute.xlu0 %6242
    %6244 = vrot.lane.b32.xlu0 %v1775, 56
    %v6245 = vpop.permute.xlu0 %6244
    %6248 = vmatprep.subr.mxu0 0.0
    %6249 = vmatpush1.msra.mxu0 %v6243
    %6250 = vmatprep.subr.mxu0 0.0
    %6251 = vmatpush1.msra.mxu0 %v6245
    %6252 = vmatprep.subr.mxu0 0.0
    %6253 = vmatpush1.msra.mxu0 0.0
    %6254 = vmatprep.subr.mxu0 0.0
    %6255 = vmatpush1.msra.mxu0 0.0
    %6256 = vmatprep.subr.mxu0 0.0
    %6257 = vmatpush1.msra.mxu0 0.0
    %6258 = vmatprep.subr.mxu0 0.0
    %6259 = vmatpush1.msra.mxu0 0.0
    %6260 = vmatprep.subr.mxu0 0.0
    %6261 = vmatpush1.msra.mxu0 0.0
    %6262 = vmatprep.subr.mxu0 0.0
    %6263 = vmatpush1.msra.mxu0 0.0
    %6264 = vmatprep.subr.mxu0 0.0
    %6265 = vmatpush1.msra.mxu0 0.0
    %6266 = vmatprep.subr.mxu0 0.0
    %6267 = vmatpush1.msra.mxu0 0.0
    %6268 = vmatprep.subr.mxu0 0.0
    %6269 = vmatpush1.msra.mxu0 0.0
    %6270 = vmatprep.subr.mxu0 0.0
    %6271 = vmatpush1.msra.mxu0 0.0
    %6272 = vmatprep.subr.mxu0 0.0
    %6273 = vmatpush1.msra.mxu0 0.0
    %6274 = vmatprep.subr.mxu0 0.0
    %6275 = vmatpush1.msra.mxu0 0.0
    %6276 = vmatprep.subr.mxu0 0.0
    %6277 = vmatpush1.msra.mxu0 0.0
    %6278 = vmatprep.subr.mxu0 0.0
    %6279 = vmatpush1.msra.mxu0 0.0
    %6280 = vmatprep.subr.mxu0 0.0
    %6281 = vmatpush1.msra.mxu0 0.0
    %6282 = vmatprep.subr.mxu0 0.0
    %6283 = vmatpush1.msra.mxu0 0.0
    %6284 = vmatprep.subr.mxu0 0.0
    %6285 = vmatpush1.msra.mxu0 0.0
    %6286 = vmatprep.subr.mxu0 0.0
    %6287 = vmatpush1.msra.mxu0 0.0
    %6288 = vmatprep.subr.mxu0 0.0
    %6289 = vmatpush1.msra.mxu0 0.0
    %6290 = vmatprep.subr.mxu0 0.0
    %6291 = vmatpush1.msra.mxu0 0.0
    %6292 = vmatprep.subr.mxu0 0.0
    %6293 = vmatpush1.msra.mxu0 0.0
    %6294 = vmatprep.subr.mxu0 0.0
    %6295 = vmatpush1.msra.mxu0 0.0
    %6296 = vmatprep.subr.mxu0 0.0
    %6297 = vmatpush1.msra.mxu0 0.0
    %6298 = vmatprep.subr.mxu0 0.0
    %6299 = vmatpush1.msra.mxu0 0.0
    %6300 = vmatprep.subr.mxu0 0.0
    %6301 = vmatpush1.msra.mxu0 0.0
    %6302 = vmatprep.subr.mxu0 0.0
    %6303 = vmatpush1.msra.mxu0 0.0
    %6304 = vmatprep.subr.mxu0 0.0
    %6305 = vmatpush1.msra.mxu0 0.0
    %6306 = vmatprep.subr.mxu0 0.0
    %6307 = vmatpush1.msra.mxu0 0.0
    %6308 = vmatprep.subr.mxu0 0.0
    %6309 = vmatpush1.msra.mxu0 0.0
    %6310 = vmatprep.subr.mxu0 0.0
    %6311 = vmatpush1.msra.mxu0 0.0
    %6312 = vmatprep.mubr.f32.mxu0 0.0
    %6313 = vmatmul.mubr.f32.gmra.mrb[0].mxu0 %v105
    %v6314 = vpop.f32.mrb[0].mxu0
    %v6315 = vadd.f32 0.0, %v6314
    %v6316 = vpop.f32.mrb[0].mxu0
    %6317 = vmatprep.mubr.f32.mxu0 0.0
    %6318 = vmatmul.mubr.f32.gmra.mrb[0].mxu0 %v108
    %v6319 = vpop.f32.mrb[0].mxu0
    %v6320 = vadd.f32 0.0, %v6319
    %v6321 = vpop.f32.mrb[0].mxu0
    %6322 = vmatprep.mubr.f32.mxu0 0.0
    %6323 = vmatmul.mubr.f32.gmra.mrb[0].mxu0 %v111
    %v6324 = vpop.f32.mrb[0].mxu0
    %v6325 = vadd.f32 0.0, %v6324
    %v6326 = vpop.f32.mrb[0].mxu0
    %6327 = vmatprep.mubr.f32.mxu0 0.0
    %6328 = vmatmul.mubr.f32.gmra.mrb[0].mxu0 %v114
    %v6329 = vpop.f32.mrb[0].mxu0
    %v6330 = vadd.f32 0.0, %v6329
    %v6331 = vpop.f32.mrb[0].mxu0
    %6332 = vmatprep.mubr.f32.mxu0 0.0
    %6333 = vmatmul.mubr.f32.gmra.mrb[0].mxu0 %v117
    %v6334 = vpop.f32.mrb[0].mxu0
    %v6335 = vadd.f32 0.0, %v6334
    %v6336 = vpop.f32.mrb[0].mxu0
    %6337 = vmatprep.mubr.f32.mxu0 0.0
    %6338 = vmatmul.mubr.f32.gmra.mrb[0].mxu0 %v120
    %v6339 = vpop.f32.mrb[0].mxu0
    %v6340 = vadd.f32 0.0, %v6339
    %v6341 = vpop.f32.mrb[0].mxu0
    %6342 = vdwg.mxu0
    %6343 = vmatprep.subr.mxu0 0.0
    %6344 = vmatpush1.msra.mxu0 %v6243
    %6345 = vmatprep.subr.mxu0 0.0
    %6346 = vmatpush1.msra.mxu0 %v6245
    %6347 = vmatprep.subr.mxu0 0.0
    %6348 = vmatpush1.msra.mxu0 0.0
    %6349 = vmatprep.subr.mxu0 0.0
    %6350 = vmatpush1.msra.mxu0 0.0
    %6351 = vmatprep.subr.mxu0 0.0
    %6352 = vmatpush1.msra.mxu0 0.0
    %6353 = vmatprep.subr.mxu0 0.0
    %6354 = vmatpush1.msra.mxu0 0.0
    %6355 = vmatprep.subr.mxu0 0.0
    %6356 = vmatpush1.msra.mxu0 0.0
    %6357 = vmatprep.subr.mxu0 0.0
    %6358 = vmatpush1.msra.mxu0 0.0
    %6359 = vmatprep.subr.mxu0 0.0
    %6360 = vmatpush1.msra.mxu0 0.0
    %6361 = vmatprep.subr.mxu0 0.0
    %6362 = vmatpush1.msra.mxu0 0.0
    %6363 = vmatprep.subr.mxu0 0.0
    %6364 = vmatpush1.msra.mxu0 0.0
    %6365 = vmatprep.subr.mxu0 0.0
    %6366 = vmatpush1.msra.mxu0 0.0
    %6367 = vmatprep.subr.mxu0 0.0
    %6368 = vmatpush1.msra.mxu0 0.0
    %6369 = vmatprep.subr.mxu0 0.0
    %6370 = vmatpush1.msra.mxu0 0.0
    %6371 = vmatprep.subr.mxu0 0.0
    %6372 = vmatpush1.msra.mxu0 0.0
    %6373 = vmatprep.subr.mxu0 0.0
    %6374 = vmatpush1.msra.mxu0 0.0
    %6375 = vmatprep.subr.mxu0 0.0
    %6376 = vmatpush1.msra.mxu0 0.0
    %6377 = vmatprep.subr.mxu0 0.0
    %6378 = vmatpush1.msra.mxu0 0.0
    %6379 = vmatprep.subr.mxu0 0.0
    %6380 = vmatpush1.msra.mxu0 0.0
    %6381 = vmatprep.subr.mxu0 0.0
    %6382 = vmatpush1.msra.mxu0 0.0
    %6383 = vmatprep.subr.mxu0 0.0
    %6384 = vmatpush1.msra.mxu0 0.0
    %6385 = vmatprep.subr.mxu0 0.0
    %6386 = vmatpush1.msra.mxu0 0.0
    %6387 = vmatprep.subr.mxu0 0.0
    %6388 = vmatpush1.msra.mxu0 0.0
    %6389 = vmatprep.subr.mxu0 0.0
    %6390 = vmatpush1.msra.mxu0 0.0
    %6391 = vmatprep.subr.mxu0 0.0
    %6392 = vmatpush1.msra.mxu0 0.0
    %6393 = vmatprep.subr.mxu0 0.0
    %6394 = vmatpush1.msra.mxu0 0.0
    %6395 = vmatprep.subr.mxu0 0.0
    %6396 = vmatpush1.msra.mxu0 0.0
    %6397 = vmatprep.subr.mxu0 0.0
    %6398 = vmatpush1.msra.mxu0 0.0
    %6399 = vmatprep.subr.mxu0 0.0
    %6400 = vmatpush1.msra.mxu0 0.0
    %6401 = vmatprep.subr.mxu0 0.0
    %6402 = vmatpush1.msra.mxu0 0.0
    %6403 = vmatprep.subr.mxu0 0.0
    %6404 = vmatpush1.msra.mxu0 0.0
    %6405 = vmatprep.subr.mxu0 0.0
    %6406 = vmatpush1.msra.mxu0 0.0
    %6407 = vmatprep.mubr.f32.mxu0 0.0
    %6408 = vmatmul.mubr.f32.gmra.mrb[0].mxu0 %v218
    %v6409 = vpop.f32.mrb[0].mxu0
    %v6410 = vadd.f32 0.0, %v6409
    %v6411 = vpop.f32.mrb[0].mxu0
    %6412 = vmatprep.mubr.f32.mxu0 0.0
    %6413 = vmatmul.mubr.f32.gmra.mrb[0].mxu0 %v221
    %v6414 = vpop.f32.mrb[0].mxu0
    %v6415 = vadd.f32 0.0, %v6414
    %v6416 = vpop.f32.mrb[0].mxu0
    %6417 = vmatprep.mubr.f32.mxu0 0.0
    %6418 = vmatmul.mubr.f32.gmra.mrb[0].mxu0 %v224
    %v6419 = vpop.f32.mrb[0].mxu0
    %v6420 = vadd.f32 0.0, %v6419
    %v6421 = vpop.f32.mrb[0].mxu0
    %6422 = vmatprep.mubr.f32.mxu0 0.0
    %6423 = vmatmul.mubr.f32.gmra.mrb[0].mxu0 %v227
    %v6424 = vpop.f32.mrb[0].mxu0
    %v6425 = vadd.f32 0.0, %v6424
    %v6426 = vpop.f32.mrb[0].mxu0
    %6427 = vmatprep.mubr.f32.mxu0 0.0
    %6428 = vmatmul.mubr.f32.gmra.mrb[0].mxu0 %v230
    %v6429 = vpop.f32.mrb[0].mxu0
    %v6430 = vadd.f32 0.0, %v6429
    %v6431 = vpop.f32.mrb[0].mxu0
    %6432 = vmatprep.mubr.f32.mxu0 0.0
    %6433 = vmatmul.mubr.f32.gmra.mrb[0].mxu0 %v233
    %v6434 = vpop.f32.mrb[0].mxu0
    %v6435 = vadd.f32 0.0, %v6434
    %v6436 = vpop.f32.mrb[0].mxu0
    %6437 = vdwg.mxu0
    %v6439 = vsel %vm1998, %v6410, 0
    %v6442 = vsel %vm1998, %v6415, 0
    %v6445 = vsel %vm1998, %v6420, 0
    %v6448 = vsel %vm1998, %v6425, 0
    %v6451 = vsel %vm1998, %v6430, 0
    %v6454 = vsel %vm1998, %v6435, 0
    %v6457 = vsel %vm2017, %v6230, 0
    %6459 = vmatprep.subr.mxu0 0.0
    %6460 = vmatpush1.msra.mxu0 %v6224
    %6461 = vmatprep.subr.mxu0 0.0
    %6462 = vmatpush1.msra.mxu0 %v6225
    %6463 = vmatprep.subr.mxu0 0.0
    %6464 = vmatpush1.msra.mxu0 %v6226
    %6465 = vmatprep.subr.mxu0 0.0
    %6466 = vmatpush1.msra.mxu0 %v6227
    %6467 = vmatprep.subr.mxu0 0.0
    %6468 = vmatpush1.msra.mxu0 %v6228
    %6469 = vmatprep.subr.mxu0 0.0
    %6470 = vmatpush1.msra.mxu0 %v6229
    %6471 = vmatprep.subr.mxu0 0.0
    %6472 = vmatpush1.msra.mxu0 %v6457
    %6473 = vmatprep.subr.mxu0 0.0
    %6474 = vmatpush1.msra.mxu0 0.0
    %6475 = vmatprep.subr.mxu0 0.0
    %6476 = vmatpush1.msra.mxu0 0.0
    %6477 = vmatprep.subr.mxu0 0.0
    %6478 = vmatpush1.msra.mxu0 0.0
    %6479 = vmatprep.subr.mxu0 0.0
    %6480 = vmatpush1.msra.mxu0 0.0
    %6481 = vmatprep.subr.mxu0 0.0
    %6482 = vmatpush1.msra.mxu0 0.0
    %6483 = vmatprep.subr.mxu0 0.0
    %6484 = vmatpush1.msra.mxu0 0.0
    %6485 = vmatprep.subr.mxu0 0.0
    %6486 = vmatpush1.msra.mxu0 0.0
    %6487 = vmatprep.subr.mxu0 0.0
    %6488 = vmatpush1.msra.mxu0 0.0
    %6489 = vmatprep.subr.mxu0 0.0
    %6490 = vmatpush1.msra.mxu0 0.0
    %6491 = vmatprep.subr.mxu0 0.0
    %6492 = vmatpush1.msra.mxu0 0.0
    %6493 = vmatprep.subr.mxu0 0.0
    %6494 = vmatpush1.msra.mxu0 0.0
    %6495 = vmatprep.subr.mxu0 0.0
    %6496 = vmatpush1.msra.mxu0 0.0
    %6497 = vmatprep.subr.mxu0 0.0
    %6498 = vmatpush1.msra.mxu0 0.0
    %6499 = vmatprep.subr.mxu0 0.0
    %6500 = vmatpush1.msra.mxu0 0.0
    %6501 = vmatprep.subr.mxu0 0.0
    %6502 = vmatpush1.msra.mxu0 0.0
    %6503 = vmatprep.subr.mxu0 0.0
    %6504 = vmatpush1.msra.mxu0 0.0
    %6505 = vmatprep.subr.mxu0 0.0
    %6506 = vmatpush1.msra.mxu0 0.0
    %6507 = vmatprep.subr.mxu0 0.0
    %6508 = vmatpush1.msra.mxu0 0.0
    %6509 = vmatprep.subr.mxu0 0.0
    %6510 = vmatpush1.msra.mxu0 0.0
    %6511 = vmatprep.subr.mxu0 0.0
    %6512 = vmatpush1.msra.mxu0 0.0
    %6513 = vmatprep.subr.mxu0 0.0
    %6514 = vmatpush1.msra.mxu0 0.0
    %6515 = vmatprep.subr.mxu0 0.0
    %6516 = vmatpush1.msra.mxu0 0.0
    %6517 = vmatprep.subr.mxu0 0.0
    %6518 = vmatpush1.msra.mxu0 0.0
    %6519 = vmatprep.subr.mxu0 0.0
    %6520 = vmatpush1.msra.mxu0 0.0
    %6521 = vmatprep.subr.mxu0 0.0
    %6522 = vmatpush1.msra.mxu0 0.0
    %6523 = vmatprep.mubr.f32.mxu0 0.0
    %6524 = vmatmul.mubr.f32.gmra.mrb[0].mxu0 %v6439
    %v6525 = vpop.f32.mrb[0].mxu0
    %v6526 = vadd.f32 0.0, %v6525
    %v6527 = vpop.f32.mrb[0].mxu0
    %6528 = vmatprep.mubr.f32.mxu0 0.0
    %6529 = vmatmul.mubr.f32.gmra.mrb[0].mxu0 %v6442
    %v6530 = vpop.f32.mrb[0].mxu0
    %v6531 = vadd.f32 0.0, %v6530
    %v6532 = vpop.f32.mrb[0].mxu0
    %6533 = vmatprep.mubr.f32.mxu0 0.0
    %6534 = vmatmul.mubr.f32.gmra.mrb[0].mxu0 %v6445
    %v6535 = vpop.f32.mrb[0].mxu0
    %v6536 = vadd.f32 0.0, %v6535
    %v6537 = vpop.f32.mrb[0].mxu0
    %6538 = vmatprep.mubr.f32.mxu0 0.0
    %6539 = vmatmul.mubr.f32.gmra.mrb[0].mxu0 %v6448
    %v6540 = vpop.f32.mrb[0].mxu0
    %v6541 = vadd.f32 0.0, %v6540
    %v6542 = vpop.f32.mrb[0].mxu0
    %6543 = vmatprep.mubr.f32.mxu0 0.0
    %6544 = vmatmul.mubr.f32.gmra.mrb[0].mxu0 %v6451
    %v6545 = vpop.f32.mrb[0].mxu0
    %v6546 = vadd.f32 0.0, %v6545
    %v6547 = vpop.f32.mrb[0].mxu0
    %6548 = vmatprep.mubr.f32.mxu0 0.0
    %6549 = vmatmul.mubr.f32.gmra.mrb[0].mxu0 %v6454
    %v6550 = vpop.f32.mrb[0].mxu0
    %v6551 = vadd.f32 0.0, %v6550
    %v6552 = vpop.f32.mrb[0].mxu0
    %6553 = vdwg.mxu0
    %v6555 = vsel %vm1998, %v6315, 0
    %v6558 = vsel %vm1998, %v6320, 0
    %v6561 = vsel %vm1998, %v6325, 0
    %v6564 = vsel %vm1998, %v6330, 0
    %v6567 = vsel %vm1998, %v6335, 0
    %v6570 = vsel %vm1998, %v6340, 0
    %v6573 = vsel %vm2017, %v6222, 0
    %6575 = vmatprep.subr.mxu0 0.0
    %6576 = vmatpush1.msra.mxu0 %v6216
    %6577 = vmatprep.subr.mxu0 0.0
    %6578 = vmatpush1.msra.mxu0 %v6217
    %6579 = vmatprep.subr.mxu0 0.0
    %6580 = vmatpush1.msra.mxu0 %v6218
    %6581 = vmatprep.subr.mxu0 0.0
    %6582 = vmatpush1.msra.mxu0 %v6219
    %6583 = vmatprep.subr.mxu0 0.0
    %6584 = vmatpush1.msra.mxu0 %v6220
    %6585 = vmatprep.subr.mxu0 0.0
    %6586 = vmatpush1.msra.mxu0 %v6221
    %6587 = vmatprep.subr.mxu0 0.0
    %6588 = vmatpush1.msra.mxu0 %v6573
    %6589 = vmatprep.subr.mxu0 0.0
    %6590 = vmatpush1.msra.mxu0 0.0
    %6591 = vmatprep.subr.mxu0 0.0
    %6592 = vmatpush1.msra.mxu0 0.0
    %6593 = vmatprep.subr.mxu0 0.0
    %6594 = vmatpush1.msra.mxu0 0.0
    %6595 = vmatprep.subr.mxu0 0.0
    %6596 = vmatpush1.msra.mxu0 0.0
    %6597 = vmatprep.subr.mxu0 0.0
    %6598 = vmatpush1.msra.mxu0 0.0
    %6599 = vmatprep.subr.mxu0 0.0
    %6600 = vmatpush1.msra.mxu0 0.0
    %6601 = vmatprep.subr.mxu0 0.0
    %6602 = vmatpush1.msra.mxu0 0.0
    %6603 = vmatprep.subr.mxu0 0.0
    %6604 = vmatpush1.msra.mxu0 0.0
    %6605 = vmatprep.subr.mxu0 0.0
    %6606 = vmatpush1.msra.mxu0 0.0
    %6607 = vmatprep.subr.mxu0 0.0
    %6608 = vmatpush1.msra.mxu0 0.0
    %6609 = vmatprep.subr.mxu0 0.0
    %6610 = vmatpush1.msra.mxu0 0.0
    %6611 = vmatprep.subr.mxu0 0.0
    %6612 = vmatpush1.msra.mxu0 0.0
    %6613 = vmatprep.subr.mxu0 0.0
    %6614 = vmatpush1.msra.mxu0 0.0
    %6615 = vmatprep.subr.mxu0 0.0
    %6616 = vmatpush1.msra.mxu0 0.0
    %6617 = vmatprep.subr.mxu0 0.0
    %6618 = vmatpush1.msra.mxu0 0.0
    %6619 = vmatprep.subr.mxu0 0.0
    %6620 = vmatpush1.msra.mxu0 0.0
    %6621 = vmatprep.subr.mxu0 0.0
    %6622 = vmatpush1.msra.mxu0 0.0
    %6623 = vmatprep.subr.mxu0 0.0
    %6624 = vmatpush1.msra.mxu0 0.0
    %6625 = vmatprep.subr.mxu0 0.0
    %6626 = vmatpush1.msra.mxu0 0.0
    %6627 = vmatprep.subr.mxu0 0.0
    %6628 = vmatpush1.msra.mxu0 0.0
    %6629 = vmatprep.subr.mxu0 0.0
    %6630 = vmatpush1.msra.mxu0 0.0
    %6631 = vmatprep.subr.mxu0 0.0
    %6632 = vmatpush1.msra.mxu0 0.0
    %6633 = vmatprep.subr.mxu0 0.0
    %6634 = vmatpush1.msra.mxu0 0.0
    %6635 = vmatprep.subr.mxu0 0.0
    %6636 = vmatpush1.msra.mxu0 0.0
    %6637 = vmatprep.subr.mxu0 0.0
    %6638 = vmatpush1.msra.mxu0 0.0
    %6639 = vmatprep.mubr.f32.mxu0 0.0
    %6640 = vmatmul.mubr.f32.gmra.mrb[0].mxu0 %v6555
    %v6641 = vpop.f32.mrb[0].mxu0
    %v6642 = vadd.f32 %v6526, %v6641
    %v6643 = vpop.f32.mrb[0].mxu0
    %6644 = vmatprep.mubr.f32.mxu0 0.0
    %6645 = vmatmul.mubr.f32.gmra.mrb[0].mxu0 %v6558
    %v6646 = vpop.f32.mrb[0].mxu0
    %v6647 = vadd.f32 %v6531, %v6646
    %v6648 = vpop.f32.mrb[0].mxu0
    %6649 = vmatprep.mubr.f32.mxu0 0.0
    %6650 = vmatmul.mubr.f32.gmra.mrb[0].mxu0 %v6561
    %v6651 = vpop.f32.mrb[0].mxu0
    %v6652 = vadd.f32 %v6536, %v6651
    %v6653 = vpop.f32.mrb[0].mxu0
    %6654 = vmatprep.mubr.f32.mxu0 0.0
    %6655 = vmatmul.mubr.f32.gmra.mrb[0].mxu0 %v6564
    %v6656 = vpop.f32.mrb[0].mxu0
    %v6657 = vadd.f32 %v6541, %v6656
    %v6658 = vpop.f32.mrb[0].mxu0
    %6659 = vmatprep.mubr.f32.mxu0 0.0
    %6660 = vmatmul.mubr.f32.gmra.mrb[0].mxu0 %v6567
    %v6661 = vpop.f32.mrb[0].mxu0
    %v6662 = vadd.f32 %v6546, %v6661
    %v6663 = vpop.f32.mrb[0].mxu0
    %6664 = vmatprep.mubr.f32.mxu0 0.0
    %6665 = vmatmul.mubr.f32.gmra.mrb[0].mxu0 %v6570
    %v6666 = vpop.f32.mrb[0].mxu0
    %v6667 = vadd.f32 %v6551, %v6666
    %v6668 = vpop.f32.mrb[0].mxu0
    %6669 = vdwg.mxu0
    %6670 = vrot.lane.b32.xlu0 %v1575, 62
    %v6671 = vpop.permute.xlu0 %6670
    %6672 = vrot.lane.b32.xlu0 %v1577, 62
    %v6673 = vpop.permute.xlu0 %6672
    %6674 = vrot.lane.b32.xlu0 %v1579, 62
    %v6675 = vpop.permute.xlu0 %6674
    %6676 = vrot.lane.b32.xlu0 %v1581, 62
    %v6677 = vpop.permute.xlu0 %6676
    %6678 = vrot.lane.b32.xlu0 %v1583, 62
    %v6679 = vpop.permute.xlu0 %6678
    %6680 = vrot.lane.b32.xlu0 %v1585, 62
    %v6681 = vpop.permute.xlu0 %6680
    %v6682 = vsel %vm1998, %v6671, 0
    %v6684 = vsel %vm1998, %v6673, 0
    %v6686 = vsel %vm1998, %v6675, 0
    %v6688 = vsel %vm1998, %v6677, 0
    %v6690 = vsel %vm1998, %v6679, 0
    %v6692 = vsel %vm1998, %v6681, 0
    %v6695 = vsel %vm2017, %v6238, 0
    %6697 = vmatprep.subr.mxu0 0.0
    %6698 = vmatpush1.msra.mxu0 %v6232
    %6699 = vmatprep.subr.mxu0 0.0
    %6700 = vmatpush1.msra.mxu0 %v6233
    %6701 = vmatprep.subr.mxu0 0.0
    %6702 = vmatpush1.msra.mxu0 %v6234
    %6703 = vmatprep.subr.mxu0 0.0
    %6704 = vmatpush1.msra.mxu0 %v6235
    %6705 = vmatprep.subr.mxu0 0.0
    %6706 = vmatpush1.msra.mxu0 %v6236
    %6707 = vmatprep.subr.mxu0 0.0
    %6708 = vmatpush1.msra.mxu0 %v6237
    %6709 = vmatprep.subr.mxu0 0.0
    %6710 = vmatpush1.msra.mxu0 %v6695
    %6711 = vmatprep.subr.mxu0 0.0
    %6712 = vmatpush1.msra.mxu0 0.0
    %6713 = vmatprep.subr.mxu0 0.0
    %6714 = vmatpush1.msra.mxu0 0.0
    %6715 = vmatprep.subr.mxu0 0.0
    %6716 = vmatpush1.msra.mxu0 0.0
    %6717 = vmatprep.subr.mxu0 0.0
    %6718 = vmatpush1.msra.mxu0 0.0
    %6719 = vmatprep.subr.mxu0 0.0
    %6720 = vmatpush1.msra.mxu0 0.0
    %6721 = vmatprep.subr.mxu0 0.0
    %6722 = vmatpush1.msra.mxu0 0.0
    %6723 = vmatprep.subr.mxu0 0.0
    %6724 = vmatpush1.msra.mxu0 0.0
    %6725 = vmatprep.subr.mxu0 0.0
    %6726 = vmatpush1.msra.mxu0 0.0
    %6727 = vmatprep.subr.mxu0 0.0
    %6728 = vmatpush1.msra.mxu0 0.0
    %6729 = vmatprep.subr.mxu0 0.0
    %6730 = vmatpush1.msra.mxu0 0.0
    %6731 = vmatprep.subr.mxu0 0.0
    %6732 = vmatpush1.msra.mxu0 0.0
    %6733 = vmatprep.subr.mxu0 0.0
    %6734 = vmatpush1.msra.mxu0 0.0
    %6735 = vmatprep.subr.mxu0 0.0
    %6736 = vmatpush1.msra.mxu0 0.0
    %6737 = vmatprep.subr.mxu0 0.0
    %6738 = vmatpush1.msra.mxu0 0.0
    %6739 = vmatprep.subr.mxu0 0.0
    %6740 = vmatpush1.msra.mxu0 0.0
    %6741 = vmatprep.subr.mxu0 0.0
    %6742 = vmatpush1.msra.mxu0 0.0
    %6743 = vmatprep.subr.mxu0 0.0
    %6744 = vmatpush1.msra.mxu0 0.0
    %6745 = vmatprep.subr.mxu0 0.0
    %6746 = vmatpush1.msra.mxu0 0.0
    %6747 = vmatprep.subr.mxu0 0.0
    %6748 = vmatpush1.msra.mxu0 0.0
    %6749 = vmatprep.subr.mxu0 0.0
    %6750 = vmatpush1.msra.mxu0 0.0
    %6751 = vmatprep.subr.mxu0 0.0
    %6752 = vmatpush1.msra.mxu0 0.0
    %6753 = vmatprep.subr.mxu0 0.0
    %6754 = vmatpush1.msra.mxu0 0.0
    %6755 = vmatprep.subr.mxu0 0.0
    %6756 = vmatpush1.msra.mxu0 0.0
    %6757 = vmatprep.subr.mxu0 0.0
    %6758 = vmatpush1.msra.mxu0 0.0
    %6759 = vmatprep.subr.mxu0 0.0
    %6760 = vmatpush1.msra.mxu0 0.0
    %6761 = vmatprep.mubr.f32.mxu0 0.0
    %6762 = vmatmul.mubr.f32.gmra.mrb[0].mxu0 %v6682
    %v6763 = vpop.f32.mrb[0].mxu0
    %v6764 = vadd.f32 0.0, %v6763
    %v6765 = vpop.f32.mrb[0].mxu0
    %6766 = vmatprep.mubr.f32.mxu0 0.0
    %6767 = vmatmul.mubr.f32.gmra.mrb[0].mxu0 %v6684
    %v6768 = vpop.f32.mrb[0].mxu0
    %v6769 = vadd.f32 0.0, %v6768
    %v6770 = vpop.f32.mrb[0].mxu0
    %6771 = vmatprep.mubr.f32.mxu0 0.0
    %6772 = vmatmul.mubr.f32.gmra.mrb[0].mxu0 %v6686
    %v6773 = vpop.f32.mrb[0].mxu0
    %v6774 = vadd.f32 0.0, %v6773
    %v6775 = vpop.f32.mrb[0].mxu0
    %6776 = vmatprep.mubr.f32.mxu0 0.0
    %6777 = vmatmul.mubr.f32.gmra.mrb[0].mxu0 %v6688
    %v6778 = vpop.f32.mrb[0].mxu0
    %v6779 = vadd.f32 0.0, %v6778
    %v6780 = vpop.f32.mrb[0].mxu0
    %6781 = vmatprep.mubr.f32.mxu0 0.0
    %6782 = vmatmul.mubr.f32.gmra.mrb[0].mxu0 %v6690
    %v6783 = vpop.f32.mrb[0].mxu0
    %v6784 = vadd.f32 0.0, %v6783
    %v6785 = vpop.f32.mrb[0].mxu0
    %6786 = vmatprep.mubr.f32.mxu0 0.0
    %6787 = vmatmul.mubr.f32.gmra.mrb[0].mxu0 %v6692
    %v6788 = vpop.f32.mrb[0].mxu0
    %v6789 = vadd.f32 0.0, %v6788
    %v6790 = vpop.f32.mrb[0].mxu0
    %6791 = vdwg.mxu0
    %v6792 = vadd.f32 %v6642, %v6764
    %v6793 = vadd.f32 %v6647, %v6769
    %v6794 = vadd.f32 %v6652, %v6774
    %v6795 = vadd.f32 %v6657, %v6779
    %v6796 = vadd.f32 %v6662, %v6784
    %v6797 = vadd.f32 %v6667, %v6789
    %v6798 = vlaneseq
    %v6799 = vshrl.u32 %v6798, 7
    %v6800 = vsub.s32 0, %v6799
    %v6801 = vrot.slane %v6239, %v6800
    %v6802 = vadd.f32 %v6792, %v6801
    %v6803 = vadd.f32 %v6793, %v6801
    %v6804 = vadd.f32 %v6794, %v6801
    %v6805 = vadd.f32 %v6795, %v6801
    %v6806 = vadd.f32 %v6796, %v6801
    %v6807 = vadd.f32 %v6797, %v6801
    %vm6808 = vcmp.gt.f32.partialorder %v6802, 0.0
    %vm6809 = vcmp.gt.f32.partialorder %v6803, 0.0
    %vm6810 = vcmp.gt.f32.partialorder %v6804, 0.0
    %vm6811 = vcmp.gt.f32.partialorder %v6805, 0.0
    %vm6812 = vcmp.gt.f32.partialorder %v6806, 0.0
    %vm6813 = vcmp.gt.f32.partialorder %v6807, 0.0
    %v6814 = vmul.f32 %v6802, 1.442695
    %v6815 = vpow.pop %v6814
    %v6816 = vmul.f32 %v6803, 1.442695
    %v6817 = vpow.pop %v6816
    %v6818 = vmul.f32 %v6804, 1.442695
    %v6819 = vpow.pop %v6818
    %v6820 = vmul.f32 %v6805, 1.442695
    %v6821 = vpow.pop %v6820
    %v6822 = vmul.f32 %v6806, 1.442695
    %v6823 = vpow.pop %v6822
    %v6824 = vmul.f32 %v6807, 1.442695
    %v6825 = vpow.pop %v6824
    %v6826 = vsub.f32 %v6815, 1.0
    %v6827 = vsub.f32 %v6817, 1.0
    %v6828 = vsub.f32 %v6819, 1.0
    %v6829 = vsub.f32 %v6821, 1.0
    %v6830 = vsub.f32 %v6823, 1.0
    %v6831 = vsub.f32 %v6825, 1.0
    %v6832 = vsel %vm6808, %v6802, %v6826
    %v6833 = vsel %vm6809, %v6803, %v6827
    %v6834 = vsel %vm6810, %v6804, %v6828
    %v6835 = vsel %vm6811, %v6805, %v6829
    %v6836 = vsel %vm6812, %v6806, %v6830
    %v6837 = vsel %vm6813, %v6807, %v6831
    %6838 = vmatprep.subr.mxu0 0.0
    %6839 = vmatpush1.msra.mxu0 %v6802
    %6840 = vmatprep.subr.mxu0 0.0
    %6841 = vmatpush1.msra.mxu0 %v6803
    %6842 = vmatprep.subr.mxu0 0.0
    %6843 = vmatpush1.msra.mxu0 %v6804
    %6844 = vmatprep.subr.mxu0 0.0
    %6845 = vmatpush1.msra.mxu0 %v6805
    %6846 = vmatprep.subr.mxu0 0.0
    %6847 = vmatpush1.msra.mxu0 %v6806
    %6848 = vmatprep.subr.mxu0 0.0
    %6849 = vmatpush1.msra.mxu0 %v6807
    %6850 = vmatprep.subr.mxu0 0.0
    %6851 = vmatpush1.msra.mxu0 0.0
    %6852 = vmatprep.subr.mxu0 0.0
    %6853 = vmatpush1.msra.mxu0 0.0
    %6854 = vmatprep.subr.mxu0 0.0
    %6855 = vmatpush1.msra.mxu0 0.0
    %6856 = vmatprep.subr.mxu0 0.0
    %6857 = vmatpush1.msra.mxu0 0.0
    %6858 = vmatprep.subr.mxu0 0.0
    %6859 = vmatpush1.msra.mxu0 0.0
    %6860 = vmatprep.subr.mxu0 0.0
    %6861 = vmatpush1.msra.mxu0 0.0
    %6862 = vmatprep.subr.mxu0 0.0
    %6863 = vmatpush1.msra.mxu0 0.0
    %6864 = vmatprep.subr.mxu0 0.0
    %6865 = vmatpush1.msra.mxu0 0.0
    %6866 = vmatprep.subr.mxu0 0.0
    %6867 = vmatpush1.msra.mxu0 0.0
    %6868 = vmatprep.subr.mxu0 0.0
    %6869 = vmatpush1.msra.mxu0 0.0
    %6870 = vmatprep.subr.mxu0 0.0
    %6871 = vmatpush1.msra.mxu0 0.0
    %6872 = vmatprep.subr.mxu0 0.0
    %6873 = vmatpush1.msra.mxu0 0.0
    %6874 = vmatprep.subr.mxu0 0.0
    %6875 = vmatpush1.msra.mxu0 0.0
    %6876 = vmatprep.subr.mxu0 0.0
    %6877 = vmatpush1.msra.mxu0 0.0
    %6878 = vmatprep.subr.mxu0 0.0
    %6879 = vmatpush1.msra.mxu0 0.0
    %6880 = vmatprep.subr.mxu0 0.0
    %6881 = vmatpush1.msra.mxu0 0.0
    %6882 = vmatprep.subr.mxu0 0.0
    %6883 = vmatpush1.msra.mxu0 0.0
    %6884 = vmatprep.subr.mxu0 0.0
    %6885 = vmatpush1.msra.mxu0 0.0
    %6886 = vmatprep.subr.mxu0 0.0
    %6887 = vmatpush1.msra.mxu0 0.0
    %6888 = vmatprep.subr.mxu0 0.0
    %6889 = vmatpush1.msra.mxu0 0.0
    %6890 = vmatprep.subr.mxu0 0.0
    %6891 = vmatpush1.msra.mxu0 0.0
    %6892 = vmatprep.subr.mxu0 0.0
    %6893 = vmatpush1.msra.mxu0 0.0
    %6894 = vmatprep.subr.mxu0 0.0
    %6895 = vmatpush1.msra.mxu0 0.0
    %6896 = vmatprep.subr.mxu0 0.0
    %6897 = vmatpush1.msra.mxu0 0.0
    %6898 = vmatprep.subr.mxu0 0.0
    %6899 = vmatpush1.msra.mxu0 0.0
    %6900 = vmatprep.subr.mxu0 0.0
    %6901 = vmatpush1.msra.mxu0 0.0
    %6902 = vmatprep.mubr.f32.mxu0 0.0
    %6903 = vmatmul.mubr.f32.gmra.mrb[0].mxu0 %v1588
    %v6904 = vpop.f32.mrb[0].mxu0
    %v6905 = vadd.f32 0.0, %v6904
    %v6906 = vpop.f32.mrb[0].mxu0
    %6907 = vmatprep.mubr.f32.mxu0 0.0
    %6908 = vmatmul.mubr.f32.gmra.mrb[0].mxu0 %v1591
    %v6909 = vpop.f32.mrb[0].mxu0
    %v6910 = vadd.f32 0.0, %v6909
    %v6911 = vpop.f32.mrb[0].mxu0
    %6912 = vdwg.mxu0
    %v6913 = vsel %vm1998, %v6905, 0.0
    %v6914 = vsel %vm1998, %v6910, 0.0
    %v6915 = vadd.f32 %v6913, %v6914
    %v6916 = vrot.slane %v6915, 4
    %v6917 = vadd.f32 %v6915, %v6916
    %v6918 = vrot.slane %v6917, 2
    %v6919 = vadd.f32 %v6917, %v6918
    %v6920 = vrot.slane %v6919, 1
    %v6921 = vadd.f32 %v6919, %v6920
    %v6922 = vmul.f32 %v6921, %v1689
    %v6923 = vsub.f32 %v6905, %v6922
    %v6924 = vsub.f32 %v6910, %v6922
    %v6925 = vmul.f32 %v6923, %v6923
    %v6926 = vmul.f32 %v6924, %v6924
    %v6927 = vsel %vm1998, %v6925, 0.0
    %v6928 = vsel %vm1998, %v6926, 0.0
    %v6929 = vadd.f32 %v6927, %v6928
    %v6930 = vrot.slane %v6929, 4
    %v6931 = vadd.f32 %v6929, %v6930
    %v6932 = vrot.slane %v6931, 2
    %v6933 = vadd.f32 %v6931, %v6932
    %v6934 = vrot.slane %v6933, 1
    %v6935 = vadd.f32 %v6933, %v6934
    %v6936 = vmul.f32 %v6935, %v1689
    %v6937 = vadd.f32 %v6936, 1e-05
    %v6938 = vrsqrt.pop %v6937
    %v6939 = vmul.f32 %v6923, %v6938
    %v6940 = vmul.f32 %v6924, %v6938
    %v6941 = vlaneseq
    %v6942 = vshrl.u32 %v6941, 7
    %v6943 = vsub.s32 0, %v6942
    %v6944 = vrot.slane %v6240, %v6943
    %v6945 = vmul.f32 %v6939, %v6944
    %v6946 = vmul.f32 %v6940, %v6944
    %v6947 = vlaneseq
    %v6948 = vshrl.u32 %v6947, 7
    %v6949 = vsub.s32 0, %v6948
    %v6950 = vrot.slane %v6241, %v6949
    %v6951 = vadd.f32 %v6945, %v6950
    %v6952 = vadd.f32 %v6946, %v6950
    %vm6953 = vcmp.gt.f32.partialorder %v6951, 0.0
    %vm6954 = vcmp.gt.f32.partialorder %v6952, 0.0
    %v6955 = vmul.f32 %v6951, 1.442695
    %v6956 = vpow.pop %v6955
    %v6957 = vmul.f32 %v6952, 1.442695
    %v6958 = vpow.pop %v6957
    %v6959 = vsub.f32 %v6956, 1.0
    %v6960 = vsub.f32 %v6958, 1.0
    %v6961 = vsel %vm6953, %v6951, %v6959
    %v6962 = vsel %vm6954, %v6952, %v6960
    %s6963 = scalar_lea.vmem %s11, 392
    %v6964 = vld [vmem:[%s6963] sm:$0xff]
    %v6965 = vld [vmem:[%s6963 + $0x8] sm:$0xff]
    %v6966 = vld [vmem:[%s6963 + $0x10] sm:$0xff]
    %v6967 = vld [vmem:[%s6963 + $0x18] sm:$0xff]
    %v6968 = vld [vmem:[%s6963 + $0x20] sm:$0xff]
    %v6969 = vld [vmem:[%s6963 + $0x28] sm:$0xff]
    %v6970 = vld [vmem:[%s6963 + $0x30] sm:$0x3]
    %s6971 = scalar_lea.vmem %s12, 392
    %v6972 = vld [vmem:[%s6971] sm:$0xff]
    %v6973 = vld [vmem:[%s6971 + $0x8] sm:$0xff]
    %v6974 = vld [vmem:[%s6971 + $0x10] sm:$0xff]
    %v6975 = vld [vmem:[%s6971 + $0x18] sm:$0xff]
    %v6976 = vld [vmem:[%s6971 + $0x20] sm:$0xff]
    %v6977 = vld [vmem:[%s6971 + $0x28] sm:$0xff]
    %v6978 = vld [vmem:[%s6971 + $0x30] sm:$0x3]
    %s6979 = scalar_lea.vmem %s13, 392
    %v6980 = vld [vmem:[%s6979] sm:$0xff]
    %v6981 = vld [vmem:[%s6979 + $0x8] sm:$0xff]
    %v6982 = vld [vmem:[%s6979 + $0x10] sm:$0xff]
    %v6983 = vld [vmem:[%s6979 + $0x18] sm:$0xff]
    %v6984 = vld [vmem:[%s6979 + $0x20] sm:$0xff]
    %v6985 = vld [vmem:[%s6979 + $0x28] sm:$0xff]
    %v6986 = vld [vmem:[%s6979 + $0x30] sm:$0x3]
    %v6987 = vld [vmem:[%s14 + $0x7] sm:$0x1]
    %v6988 = vld [vmem:[%s15 + $0x7] sm:$0x1]
    %v6989 = vld [vmem:[%s16 + $0x7] sm:$0x1]
    %6990 = vmatprep.subr.mxu0 0.0
    %6991 = vmatpush1.msra.mxu0 %v6961
    %6992 = vmatprep.subr.mxu0 0.0
    %6993 = vmatpush1.msra.mxu0 %v6962
    %6994 = vmatprep.subr.mxu0 0.0
    %6995 = vmatpush1.msra.mxu0 0.0
    %6996 = vmatprep.subr.mxu0 0.0
    %6997 = vmatpush1.msra.mxu0 0.0
    %6998 = vmatprep.subr.mxu0 0.0
    %6999 = vmatpush1.msra.mxu0 0.0
    %7000 = vmatprep.subr.mxu0 0.0
    %7001 = vmatpush1.msra.mxu0 0.0
    %7002 = vmatprep.subr.mxu0 0.0
    %7003 = vmatpush1.msra.mxu0 0.0
    %7004 = vmatprep.subr.mxu0 0.0
    %7005 = vmatpush1.msra.mxu0 0.0
    %7006 = vmatprep.subr.mxu0 0.0
    %7007 = vmatpush1.msra.mxu0 0.0
    %7008 = vmatprep.subr.mxu0 0.0
    %7009 = vmatpush1.msra.mxu0 0.0
    %7010 = vmatprep.subr.mxu0 0.0
    %7011 = vmatpush1.msra.mxu0 0.0
    %7012 = vmatprep.subr.mxu0 0.0
    %7013 = vmatpush1.msra.mxu0 0.0
    %7014 = vmatprep.subr.mxu0 0.0
    %7015 = vmatpush1.msra.mxu0 0.0
    %7016 = vmatprep.subr.mxu0 0.0
    %7017 = vmatpush1.msra.mxu0 0.0
    %7018 = vmatprep.subr.mxu0 0.0
    %7019 = vmatpush1.msra.mxu0 0.0
    %7020 = vmatprep.subr.mxu0 0.0
    %7021 = vmatpush1.msra.mxu0 0.0
    %7022 = vmatprep.subr.mxu0 0.0
    %7023 = vmatpush1.msra.mxu0 0.0
    %7024 = vmatprep.subr.mxu0 0.0
    %7025 = vmatpush1.msra.mxu0 0.0
    %7026 = vmatprep.subr.mxu0 0.0
    %7027 = vmatpush1.msra.mxu0 0.0
    %7028 = vmatprep.subr.mxu0 0.0
    %7029 = vmatpush1.msra.mxu0 0.0
    %7030 = vmatprep.subr.mxu0 0.0
    %7031 = vmatpush1.msra.mxu0 0.0
    %7032 = vmatprep.subr.mxu0 0.0
    %7033 = vmatpush1.msra.mxu0 0.0
    %7034 = vmatprep.subr.mxu0 0.0
    %7035 = vmatpush1.msra.mxu0 0.0
    %7036 = vmatprep.subr.mxu0 0.0
    %7037 = vmatpush1.msra.mxu0 0.0
    %7038 = vmatprep.subr.mxu0 0.0
    %7039 = vmatpush1.msra.mxu0 0.0
    %7040 = vmatprep.subr.mxu0 0.0
    %7041 = vmatpush1.msra.mxu0 0.0
    %7042 = vmatprep.subr.mxu0 0.0
    %7043 = vmatpush1.msra.mxu0 0.0
    %7044 = vmatprep.subr.mxu0 0.0
    %7045 = vmatpush1.msra.mxu0 0.0
    %7046 = vmatprep.subr.mxu0 0.0
    %7047 = vmatpush1.msra.mxu0 0.0
    %7048 = vmatprep.subr.mxu0 0.0
    %7049 = vmatpush1.msra.mxu0 0.0
    %7050 = vmatprep.subr.mxu0 0.0
    %7051 = vmatpush1.msra.mxu0 0.0
    %7052 = vmatprep.subr.mxu0 0.0
    %7053 = vmatpush1.msra.mxu0 0.0
    %7054 = vmatprep.mubr.f32.mxu0 0.0
    %7055 = vmatmul.mubr.f32.gmra.mrb[0].mxu0 %v105
    %v7056 = vpop.f32.mrb[0].mxu0
    %v7057 = vadd.f32 0.0, %v7056
    %v7058 = vpop.f32.mrb[0].mxu0
    %7059 = vmatprep.mubr.f32.mxu0 0.0
    %7060 = vmatmul.mubr.f32.gmra.mrb[0].mxu0 %v108
    %v7061 = vpop.f32.mrb[0].mxu0
    %v7062 = vadd.f32 0.0, %v7061
    %v7063 = vpop.f32.mrb[0].mxu0
    %7064 = vmatprep.mubr.f32.mxu0 0.0
    %7065 = vmatmul.mubr.f32.gmra.mrb[0].mxu0 %v111
    %v7066 = vpop.f32.mrb[0].mxu0
    %v7067 = vadd.f32 0.0, %v7066
    %v7068 = vpop.f32.mrb[0].mxu0
    %7069 = vmatprep.mubr.f32.mxu0 0.0
    %7070 = vmatmul.mubr.f32.gmra.mrb[0].mxu0 %v114
    %v7071 = vpop.f32.mrb[0].mxu0
    %v7072 = vadd.f32 0.0, %v7071
    %v7073 = vpop.f32.mrb[0].mxu0
    %7074 = vmatprep.mubr.f32.mxu0 0.0
    %7075 = vmatmul.mubr.f32.gmra.mrb[0].mxu0 %v117
    %v7076 = vpop.f32.mrb[0].mxu0
    %v7077 = vadd.f32 0.0, %v7076
    %v7078 = vpop.f32.mrb[0].mxu0
    %7079 = vmatprep.mubr.f32.mxu0 0.0
    %7080 = vmatmul.mubr.f32.gmra.mrb[0].mxu0 %v120
    %v7081 = vpop.f32.mrb[0].mxu0
    %v7082 = vadd.f32 0.0, %v7081
    %v7083 = vpop.f32.mrb[0].mxu0
    %7084 = vdwg.mxu0
    %7085 = vmatprep.subr.mxu0 0.0
    %7086 = vmatpush1.msra.mxu0 %v6961
    %7087 = vmatprep.subr.mxu0 0.0
    %7088 = vmatpush1.msra.mxu0 %v6962
    %7089 = vmatprep.subr.mxu0 0.0
    %7090 = vmatpush1.msra.mxu0 0.0
    %7091 = vmatprep.subr.mxu0 0.0
    %7092 = vmatpush1.msra.mxu0 0.0
    %7093 = vmatprep.subr.mxu0 0.0
    %7094 = vmatpush1.msra.mxu0 0.0
    %7095 = vmatprep.subr.mxu0 0.0
    %7096 = vmatpush1.msra.mxu0 0.0
    %7097 = vmatprep.subr.mxu0 0.0
    %7098 = vmatpush1.msra.mxu0 0.0
    %7099 = vmatprep.subr.mxu0 0.0
    %7100 = vmatpush1.msra.mxu0 0.0
    %7101 = vmatprep.subr.mxu0 0.0
    %7102 = vmatpush1.msra.mxu0 0.0
    %7103 = vmatprep.subr.mxu0 0.0
    %7104 = vmatpush1.msra.mxu0 0.0
    %7105 = vmatprep.subr.mxu0 0.0
    %7106 = vmatpush1.msra.mxu0 0.0
    %7107 = vmatprep.subr.mxu0 0.0
    %7108 = vmatpush1.msra.mxu0 0.0
    %7109 = vmatprep.subr.mxu0 0.0
    %7110 = vmatpush1.msra.mxu0 0.0
    %7111 = vmatprep.subr.mxu0 0.0
    %7112 = vmatpush1.msra.mxu0 0.0
    %7113 = vmatprep.subr.mxu0 0.0
    %7114 = vmatpush1.msra.mxu0 0.0
    %7115 = vmatprep.subr.mxu0 0.0
    %7116 = vmatpush1.msra.mxu0 0.0
    %7117 = vmatprep.subr.mxu0 0.0
    %7118 = vmatpush1.msra.mxu0 0.0
    %7119 = vmatprep.subr.mxu0 0.0
    %7120 = vmatpush1.msra.mxu0 0.0
    %7121 = vmatprep.subr.mxu0 0.0
    %7122 = vmatpush1.msra.mxu0 0.0
    %7123 = vmatprep.subr.mxu0 0.0
    %7124 = vmatpush1.msra.mxu0 0.0
    %7125 = vmatprep.subr.mxu0 0.0
    %7126 = vmatpush1.msra.mxu0 0.0
    %7127 = vmatprep.subr.mxu0 0.0
    %7128 = vmatpush1.msra.mxu0 0.0
    %7129 = vmatprep.subr.mxu0 0.0
    %7130 = vmatpush1.msra.mxu0 0.0
    %7131 = vmatprep.subr.mxu0 0.0
    %7132 = vmatpush1.msra.mxu0 0.0
    %7133 = vmatprep.subr.mxu0 0.0
    %7134 = vmatpush1.msra.mxu0 0.0
    %7135 = vmatprep.subr.mxu0 0.0
    %7136 = vmatpush1.msra.mxu0 0.0
    %7137 = vmatprep.subr.mxu0 0.0
    %7138 = vmatpush1.msra.mxu0 0.0
    %7139 = vmatprep.subr.mxu0 0.0
    %7140 = vmatpush1.msra.mxu0 0.0
    %7141 = vmatprep.subr.mxu0 0.0
    %7142 = vmatpush1.msra.mxu0 0.0
    %7143 = vmatprep.subr.mxu0 0.0
    %7144 = vmatpush1.msra.mxu0 0.0
    %7145 = vmatprep.subr.mxu0 0.0
    %7146 = vmatpush1.msra.mxu0 0.0
    %7147 = vmatprep.subr.mxu0 0.0
    %7148 = vmatpush1.msra.mxu0 0.0
    %7149 = vmatprep.mubr.f32.mxu0 0.0
    %7150 = vmatmul.mubr.f32.gmra.mrb[0].mxu0 %v218
    %v7151 = vpop.f32.mrb[0].mxu0
    %v7152 = vadd.f32 0.0, %v7151
    %v7153 = vpop.f32.mrb[0].mxu0
    %7154 = vmatprep.mubr.f32.mxu0 0.0
    %7155 = vmatmul.mubr.f32.gmra.mrb[0].mxu0 %v221
    %v7156 = vpop.f32.mrb[0].mxu0
    %v7157 = vadd.f32 0.0, %v7156
    %v7158 = vpop.f32.mrb[0].mxu0
    %7159 = vmatprep.mubr.f32.mxu0 0.0
    %7160 = vmatmul.mubr.f32.gmra.mrb[0].mxu0 %v224
    %v7161 = vpop.f32.mrb[0].mxu0
    %v7162 = vadd.f32 0.0, %v7161
    %v7163 = vpop.f32.mrb[0].mxu0
    %7164 = vmatprep.mubr.f32.mxu0 0.0
    %7165 = vmatmul.mubr.f32.gmra.mrb[0].mxu0 %v227
    %v7166 = vpop.f32.mrb[0].mxu0
    %v7167 = vadd.f32 0.0, %v7166
    %v7168 = vpop.f32.mrb[0].mxu0
    %7169 = vmatprep.mubr.f32.mxu0 0.0
    %7170 = vmatmul.mubr.f32.gmra.mrb[0].mxu0 %v230
    %v7171 = vpop.f32.mrb[0].mxu0
    %v7172 = vadd.f32 0.0, %v7171
    %v7173 = vpop.f32.mrb[0].mxu0
    %7174 = vmatprep.mubr.f32.mxu0 0.0
    %7175 = vmatmul.mubr.f32.gmra.mrb[0].mxu0 %v233
    %v7176 = vpop.f32.mrb[0].mxu0
    %v7177 = vadd.f32 0.0, %v7176
    %v7178 = vpop.f32.mrb[0].mxu0
    %7179 = vdwg.mxu0
    %v7181 = vsel %vm1998, %v7152, 0
    %v7184 = vsel %vm1998, %v7157, 0
    %v7187 = vsel %vm1998, %v7162, 0
    %v7190 = vsel %vm1998, %v7167, 0
    %v7193 = vsel %vm1998, %v7172, 0
    %v7196 = vsel %vm1998, %v7177, 0
    %v7199 = vsel %vm2017, %v6978, 0
    %7201 = vmatprep.subr.mxu0 0.0
    %7202 = vmatpush1.msra.mxu0 %v6972
    %7203 = vmatprep.subr.mxu0 0.0
    %7204 = vmatpush1.msra.mxu0 %v6973
    %7205 = vmatprep.subr.mxu0 0.0
    %7206 = vmatpush1.msra.mxu0 %v6974
    %7207 = vmatprep.subr.mxu0 0.0
    %7208 = vmatpush1.msra.mxu0 %v6975
    %7209 = vmatprep.subr.mxu0 0.0
    %7210 = vmatpush1.msra.mxu0 %v6976
    %7211 = vmatprep.subr.mxu0 0.0
    %7212 = vmatpush1.msra.mxu0 %v6977
    %7213 = vmatprep.subr.mxu0 0.0
    %7214 = vmatpush1.msra.mxu0 %v7199
    %7215 = vmatprep.subr.mxu0 0.0
    %7216 = vmatpush1.msra.mxu0 0.0
    %7217 = vmatprep.subr.mxu0 0.0
    %7218 = vmatpush1.msra.mxu0 0.0
    %7219 = vmatprep.subr.mxu0 0.0
    %7220 = vmatpush1.msra.mxu0 0.0
    %7221 = vmatprep.subr.mxu0 0.0
    %7222 = vmatpush1.msra.mxu0 0.0
    %7223 = vmatprep.subr.mxu0 0.0
    %7224 = vmatpush1.msra.mxu0 0.0
    %7225 = vmatprep.subr.mxu0 0.0
    %7226 = vmatpush1.msra.mxu0 0.0
    %7227 = vmatprep.subr.mxu0 0.0
    %7228 = vmatpush1.msra.mxu0 0.0
    %7229 = vmatprep.subr.mxu0 0.0
    %7230 = vmatpush1.msra.mxu0 0.0
    %7231 = vmatprep.subr.mxu0 0.0
    %7232 = vmatpush1.msra.mxu0 0.0
    %7233 = vmatprep.subr.mxu0 0.0
    %7234 = vmatpush1.msra.mxu0 0.0
    %7235 = vmatprep.subr.mxu0 0.0
    %7236 = vmatpush1.msra.mxu0 0.0
    %7237 = vmatprep.subr.mxu0 0.0
    %7238 = vmatpush1.msra.mxu0 0.0
    %7239 = vmatprep.subr.mxu0 0.0
    %7240 = vmatpush1.msra.mxu0 0.0
    %7241 = vmatprep.subr.mxu0 0.0
    %7242 = vmatpush1.msra.mxu0 0.0
    %7243 = vmatprep.subr.mxu0 0.0
    %7244 = vmatpush1.msra.mxu0 0.0
    %7245 = vmatprep.subr.mxu0 0.0
    %7246 = vmatpush1.msra.mxu0 0.0
    %7247 = vmatprep.subr.mxu0 0.0
    %7248 = vmatpush1.msra.mxu0 0.0
    %7249 = vmatprep.subr.mxu0 0.0
    %7250 = vmatpush1.msra.mxu0 0.0
    %7251 = vmatprep.subr.mxu0 0.0
    %7252 = vmatpush1.msra.mxu0 0.0
    %7253 = vmatprep.subr.mxu0 0.0
    %7254 = vmatpush1.msra.mxu0 0.0
    %7255 = vmatprep.subr.mxu0 0.0
    %7256 = vmatpush1.msra.mxu0 0.0
    %7257 = vmatprep.subr.mxu0 0.0
    %7258 = vmatpush1.msra.mxu0 0.0
    %7259 = vmatprep.subr.mxu0 0.0
    %7260 = vmatpush1.msra.mxu0 0.0
    %7261 = vmatprep.subr.mxu0 0.0
    %7262 = vmatpush1.msra.mxu0 0.0
    %7263 = vmatprep.subr.mxu0 0.0
    %7264 = vmatpush1.msra.mxu0 0.0
    %7265 = vmatprep.mubr.f32.mxu0 0.0
    %7266 = vmatmul.mubr.f32.gmra.mrb[0].mxu0 %v7181
    %v7267 = vpop.f32.mrb[0].mxu0
    %v7268 = vadd.f32 0.0, %v7267
    %v7269 = vpop.f32.mrb[0].mxu0
    %7270 = vmatprep.mubr.f32.mxu0 0.0
    %7271 = vmatmul.mubr.f32.gmra.mrb[0].mxu0 %v7184
    %v7272 = vpop.f32.mrb[0].mxu0
    %v7273 = vadd.f32 0.0, %v7272
    %v7274 = vpop.f32.mrb[0].mxu0
    %7275 = vmatprep.mubr.f32.mxu0 0.0
    %7276 = vmatmul.mubr.f32.gmra.mrb[0].mxu0 %v7187
    %v7277 = vpop.f32.mrb[0].mxu0
    %v7278 = vadd.f32 0.0, %v7277
    %v7279 = vpop.f32.mrb[0].mxu0
    %7280 = vmatprep.mubr.f32.mxu0 0.0
    %7281 = vmatmul.mubr.f32.gmra.mrb[0].mxu0 %v7190
    %v7282 = vpop.f32.mrb[0].mxu0
    %v7283 = vadd.f32 0.0, %v7282
    %v7284 = vpop.f32.mrb[0].mxu0
    %7285 = vmatprep.mubr.f32.mxu0 0.0
    %7286 = vmatmul.mubr.f32.gmra.mrb[0].mxu0 %v7193
    %v7287 = vpop.f32.mrb[0].mxu0
    %v7288 = vadd.f32 0.0, %v7287
    %v7289 = vpop.f32.mrb[0].mxu0
    %7290 = vmatprep.mubr.f32.mxu0 0.0
    %7291 = vmatmul.mubr.f32.gmra.mrb[0].mxu0 %v7196
    %v7292 = vpop.f32.mrb[0].mxu0
    %v7293 = vadd.f32 0.0, %v7292
    %v7294 = vpop.f32.mrb[0].mxu0
    %7295 = vdwg.mxu0
    %v7297 = vsel %vm1998, %v7057, 0
    %v7300 = vsel %vm1998, %v7062, 0
    %v7303 = vsel %vm1998, %v7067, 0
    %v7306 = vsel %vm1998, %v7072, 0
    %v7309 = vsel %vm1998, %v7077, 0
    %v7312 = vsel %vm1998, %v7082, 0
    %v7315 = vsel %vm2017, %v6970, 0
    %7317 = vmatprep.subr.mxu0 0.0
    %7318 = vmatpush1.msra.mxu0 %v6964
    %7319 = vmatprep.subr.mxu0 0.0
    %7320 = vmatpush1.msra.mxu0 %v6965
    %7321 = vmatprep.subr.mxu0 0.0
    %7322 = vmatpush1.msra.mxu0 %v6966
    %7323 = vmatprep.subr.mxu0 0.0
    %7324 = vmatpush1.msra.mxu0 %v6967
    %7325 = vmatprep.subr.mxu0 0.0
    %7326 = vmatpush1.msra.mxu0 %v6968
    %7327 = vmatprep.subr.mxu0 0.0
    %7328 = vmatpush1.msra.mxu0 %v6969
    %7329 = vmatprep.subr.mxu0 0.0
    %7330 = vmatpush1.msra.mxu0 %v7315
    %7331 = vmatprep.subr.mxu0 0.0
    %7332 = vmatpush1.msra.mxu0 0.0
    %7333 = vmatprep.subr.mxu0 0.0
    %7334 = vmatpush1.msra.mxu0 0.0
    %7335 = vmatprep.subr.mxu0 0.0
    %7336 = vmatpush1.msra.mxu0 0.0
    %7337 = vmatprep.subr.mxu0 0.0
    %7338 = vmatpush1.msra.mxu0 0.0
    %7339 = vmatprep.subr.mxu0 0.0
    %7340 = vmatpush1.msra.mxu0 0.0
    %7341 = vmatprep.subr.mxu0 0.0
    %7342 = vmatpush1.msra.mxu0 0.0
    %7343 = vmatprep.subr.mxu0 0.0
    %7344 = vmatpush1.msra.mxu0 0.0
    %7345 = vmatprep.subr.mxu0 0.0
    %7346 = vmatpush1.msra.mxu0 0.0
    %7347 = vmatprep.subr.mxu0 0.0
    %7348 = vmatpush1.msra.mxu0 0.0
    %7349 = vmatprep.subr.mxu0 0.0
    %7350 = vmatpush1.msra.mxu0 0.0
    %7351 = vmatprep.subr.mxu0 0.0
    %7352 = vmatpush1.msra.mxu0 0.0
    %7353 = vmatprep.subr.mxu0 0.0
    %7354 = vmatpush1.msra.mxu0 0.0
    %7355 = vmatprep.subr.mxu0 0.0
    %7356 = vmatpush1.msra.mxu0 0.0
    %7357 = vmatprep.subr.mxu0 0.0
    %7358 = vmatpush1.msra.mxu0 0.0
    %7359 = vmatprep.subr.mxu0 0.0
    %7360 = vmatpush1.msra.mxu0 0.0
    %7361 = vmatprep.subr.mxu0 0.0
    %7362 = vmatpush1.msra.mxu0 0.0
    %7363 = vmatprep.subr.mxu0 0.0
    %7364 = vmatpush1.msra.mxu0 0.0
    %7365 = vmatprep.subr.mxu0 0.0
    %7366 = vmatpush1.msra.mxu0 0.0
    %7367 = vmatprep.subr.mxu0 0.0
    %7368 = vmatpush1.msra.mxu0 0.0
    %7369 = vmatprep.subr.mxu0 0.0
    %7370 = vmatpush1.msra.mxu0 0.0
    %7371 = vmatprep.subr.mxu0 0.0
    %7372 = vmatpush1.msra.mxu0 0.0
    %7373 = vmatprep.subr.mxu0 0.0
    %7374 = vmatpush1.msra.mxu0 0.0
    %7375 = vmatprep.subr.mxu0 0.0
    %7376 = vmatpush1.msra.mxu0 0.0
    %7377 = vmatprep.subr.mxu0 0.0
    %7378 = vmatpush1.msra.mxu0 0.0
    %7379 = vmatprep.subr.mxu0 0.0
    %7380 = vmatpush1.msra.mxu0 0.0
    %7381 = vmatprep.mubr.f32.mxu0 0.0
    %7382 = vmatmul.mubr.f32.gmra.mrb[0].mxu0 %v7297
    %v7383 = vpop.f32.mrb[0].mxu0
    %v7384 = vadd.f32 %v7268, %v7383
    %v7385 = vpop.f32.mrb[0].mxu0
    %7386 = vmatprep.mubr.f32.mxu0 0.0
    %7387 = vmatmul.mubr.f32.gmra.mrb[0].mxu0 %v7300
    %v7388 = vpop.f32.mrb[0].mxu0
    %v7389 = vadd.f32 %v7273, %v7388
    %v7390 = vpop.f32.mrb[0].mxu0
    %7391 = vmatprep.mubr.f32.mxu0 0.0
    %7392 = vmatmul.mubr.f32.gmra.mrb[0].mxu0 %v7303
    %v7393 = vpop.f32.mrb[0].mxu0
    %v7394 = vadd.f32 %v7278, %v7393
    %v7395 = vpop.f32.mrb[0].mxu0
    %7396 = vmatprep.mubr.f32.mxu0 0.0
    %7397 = vmatmul.mubr.f32.gmra.mrb[0].mxu0 %v7306
    %v7398 = vpop.f32.mrb[0].mxu0
    %v7399 = vadd.f32 %v7283, %v7398
    %v7400 = vpop.f32.mrb[0].mxu0
    %7401 = vmatprep.mubr.f32.mxu0 0.0
    %7402 = vmatmul.mubr.f32.gmra.mrb[0].mxu0 %v7309
    %v7403 = vpop.f32.mrb[0].mxu0
    %v7404 = vadd.f32 %v7288, %v7403
    %v7405 = vpop.f32.mrb[0].mxu0
    %7406 = vmatprep.mubr.f32.mxu0 0.0
    %7407 = vmatmul.mubr.f32.gmra.mrb[0].mxu0 %v7312
    %v7408 = vpop.f32.mrb[0].mxu0
    %v7409 = vadd.f32 %v7293, %v7408
    %v7410 = vpop.f32.mrb[0].mxu0
    %7411 = vdwg.mxu0
    %7418 = vrot.lane.b32.xlu0 %v6832, 78
    %v7419 = vpop.permute.xlu0 %7418
    %7420 = vrot.lane.b32.xlu0 %v6833, 78
    %v7421 = vpop.permute.xlu0 %7420
    %7422 = vrot.lane.b32.xlu0 %v6834, 78
    %v7423 = vpop.permute.xlu0 %7422
    %7424 = vrot.lane.b32.xlu0 %v6835, 78
    %v7425 = vpop.permute.xlu0 %7424
    %7426 = vrot.lane.b32.xlu0 %v6836, 78
    %v7427 = vpop.permute.xlu0 %7426
    %7428 = vrot.lane.b32.xlu0 %v6837, 78
    %v7429 = vpop.permute.xlu0 %7428
    %v7430 = vsel %vm1998, %v7419, 0
    %v7432 = vsel %vm1998, %v7421, 0
    %v7434 = vsel %vm1998, %v7423, 0
    %v7436 = vsel %vm1998, %v7425, 0
    %v7438 = vsel %vm1998, %v7427, 0
    %v7440 = vsel %vm1998, %v7429, 0
    %v7443 = vsel %vm2017, %v6986, 0
    %7445 = vmatprep.subr.mxu0 0.0
    %7446 = vmatpush1.msra.mxu0 %v6980
    %7447 = vmatprep.subr.mxu0 0.0
    %7448 = vmatpush1.msra.mxu0 %v6981
    %7449 = vmatprep.subr.mxu0 0.0
    %7450 = vmatpush1.msra.mxu0 %v6982
    %7451 = vmatprep.subr.mxu0 0.0
    %7452 = vmatpush1.msra.mxu0 %v6983
    %7453 = vmatprep.subr.mxu0 0.0
    %7454 = vmatpush1.msra.mxu0 %v6984
    %7455 = vmatprep.subr.mxu0 0.0
    %7456 = vmatpush1.msra.mxu0 %v6985
    %7457 = vmatprep.subr.mxu0 0.0
    %7458 = vmatpush1.msra.mxu0 %v7443
    %7459 = vmatprep.subr.mxu0 0.0
    %7460 = vmatpush1.msra.mxu0 0.0
    %7461 = vmatprep.subr.mxu0 0.0
    %7462 = vmatpush1.msra.mxu0 0.0
    %7463 = vmatprep.subr.mxu0 0.0
    %7464 = vmatpush1.msra.mxu0 0.0
    %7465 = vmatprep.subr.mxu0 0.0
    %7466 = vmatpush1.msra.mxu0 0.0
    %7467 = vmatprep.subr.mxu0 0.0
    %7468 = vmatpush1.msra.mxu0 0.0
    %7469 = vmatprep.subr.mxu0 0.0
    %7470 = vmatpush1.msra.mxu0 0.0
    %7471 = vmatprep.subr.mxu0 0.0
    %7472 = vmatpush1.msra.mxu0 0.0
    %7473 = vmatprep.subr.mxu0 0.0
    %7474 = vmatpush1.msra.mxu0 0.0
    %7475 = vmatprep.subr.mxu0 0.0
    %7476 = vmatpush1.msra.mxu0 0.0
    %7477 = vmatprep.subr.mxu0 0.0
    %7478 = vmatpush1.msra.mxu0 0.0
    %7479 = vmatprep.subr.mxu0 0.0
    %7480 = vmatpush1.msra.mxu0 0.0
    %7481 = vmatprep.subr.mxu0 0.0
    %7482 = vmatpush1.msra.mxu0 0.0
    %7483 = vmatprep.subr.mxu0 0.0
    %7484 = vmatpush1.msra.mxu0 0.0
    %7485 = vmatprep.subr.mxu0 0.0
    %7486 = vmatpush1.msra.mxu0 0.0
    %7487 = vmatprep.subr.mxu0 0.0
    %7488 = vmatpush1.msra.mxu0 0.0
    %7489 = vmatprep.subr.mxu0 0.0
    %7490 = vmatpush1.msra.mxu0 0.0
    %7491 = vmatprep.subr.mxu0 0.0
    %7492 = vmatpush1.msra.mxu0 0.0
    %7493 = vmatprep.subr.mxu0 0.0
    %7494 = vmatpush1.msra.mxu0 0.0
    %7495 = vmatprep.subr.mxu0 0.0
    %7496 = vmatpush1.msra.mxu0 0.0
    %7497 = vmatprep.subr.mxu0 0.0
    %7498 = vmatpush1.msra.mxu0 0.0
    %7499 = vmatprep.subr.mxu0 0.0
    %7500 = vmatpush1.msra.mxu0 0.0
    %7501 = vmatprep.subr.mxu0 0.0
    %7502 = vmatpush1.msra.mxu0 0.0
    %7503 = vmatprep.subr.mxu0 0.0
    %7504 = vmatpush1.msra.mxu0 0.0
    %7505 = vmatprep.subr.mxu0 0.0
    %7506 = vmatpush1.msra.mxu0 0.0
    %7507 = vmatprep.subr.mxu0 0.0
    %7508 = vmatpush1.msra.mxu0 0.0
    %7509 = vmatprep.mubr.f32.mxu0 0.0
    %7510 = vmatmul.mubr.f32.gmra.mrb[0].mxu0 %v7430
    %v7511 = vpop.f32.mrb[0].mxu0
    %v7512 = vadd.f32 0.0, %v7511
    %v7513 = vpop.f32.mrb[0].mxu0
    %7514 = vmatprep.mubr.f32.mxu0 0.0
    %7515 = vmatmul.mubr.f32.gmra.mrb[0].mxu0 %v7432
    %v7516 = vpop.f32.mrb[0].mxu0
    %v7517 = vadd.f32 0.0, %v7516
    %v7518 = vpop.f32.mrb[0].mxu0
    %7519 = vmatprep.mubr.f32.mxu0 0.0
    %7520 = vmatmul.mubr.f32.gmra.mrb[0].mxu0 %v7434
    %v7521 = vpop.f32.mrb[0].mxu0
    %v7522 = vadd.f32 0.0, %v7521
    %v7523 = vpop.f32.mrb[0].mxu0
    %7524 = vmatprep.mubr.f32.mxu0 0.0
    %7525 = vmatmul.mubr.f32.gmra.mrb[0].mxu0 %v7436
    %v7526 = vpop.f32.mrb[0].mxu0
    %v7527 = vadd.f32 0.0, %v7526
    %v7528 = vpop.f32.mrb[0].mxu0
    %7529 = vmatprep.mubr.f32.mxu0 0.0
    %7530 = vmatmul.mubr.f32.gmra.mrb[0].mxu0 %v7438
    %v7531 = vpop.f32.mrb[0].mxu0
    %v7532 = vadd.f32 0.0, %v7531
    %v7533 = vpop.f32.mrb[0].mxu0
    %7534 = vmatprep.mubr.f32.mxu0 0.0
    %7535 = vmatmul.mubr.f32.gmra.mrb[0].mxu0 %v7440
    %v7536 = vpop.f32.mrb[0].mxu0
    %v7537 = vadd.f32 0.0, %v7536
    %v7538 = vpop.f32.mrb[0].mxu0
    %7539 = vdwg.mxu0
    %v7540 = vadd.f32 %v7384, %v7512
    %v7541 = vadd.f32 %v7389, %v7517
    %v7542 = vadd.f32 %v7394, %v7522
    %v7543 = vadd.f32 %v7399, %v7527
    %v7544 = vadd.f32 %v7404, %v7532
    %v7545 = vadd.f32 %v7409, %v7537
    %v7546 = vlaneseq
    %v7547 = vshrl.u32 %v7546, 7
    %v7548 = vsub.s32 0, %v7547
    %v7549 = vrot.slane %v6987, %v7548
    %v7550 = vadd.f32 %v7540, %v7549
    %v7551 = vadd.f32 %v7541, %v7549
    %v7552 = vadd.f32 %v7542, %v7549
    %v7553 = vadd.f32 %v7543, %v7549
    %v7554 = vadd.f32 %v7544, %v7549
    %v7555 = vadd.f32 %v7545, %v7549
    %vm7556 = vcmp.gt.f32.partialorder %v7550, 0.0
    %vm7557 = vcmp.gt.f32.partialorder %v7551, 0.0
    %vm7558 = vcmp.gt.f32.partialorder %v7552, 0.0
    %vm7559 = vcmp.gt.f32.partialorder %v7553, 0.0
    %vm7560 = vcmp.gt.f32.partialorder %v7554, 0.0
    %vm7561 = vcmp.gt.f32.partialorder %v7555, 0.0
    %v7562 = vmul.f32 %v7550, 1.442695
    %v7563 = vpow.pop %v7562
    %v7564 = vmul.f32 %v7551, 1.442695
    %v7565 = vpow.pop %v7564
    %v7566 = vmul.f32 %v7552, 1.442695
    %v7567 = vpow.pop %v7566
    %v7568 = vmul.f32 %v7553, 1.442695
    %v7569 = vpow.pop %v7568
    %v7570 = vmul.f32 %v7554, 1.442695
    %v7571 = vpow.pop %v7570
    %v7572 = vmul.f32 %v7555, 1.442695
    %v7573 = vpow.pop %v7572
    %v7574 = vsub.f32 %v7563, 1.0
    %v7575 = vsub.f32 %v7565, 1.0
    %v7576 = vsub.f32 %v7567, 1.0
    %v7577 = vsub.f32 %v7569, 1.0
    %v7578 = vsub.f32 %v7571, 1.0
    %v7579 = vsub.f32 %v7573, 1.0
    %v7580 = vsel %vm7556, %v7550, %v7574
    %v7581 = vsel %vm7557, %v7551, %v7575
    %v7582 = vsel %vm7558, %v7552, %v7576
    %v7583 = vsel %vm7559, %v7553, %v7577
    %v7584 = vsel %vm7560, %v7554, %v7578
    %v7585 = vsel %vm7561, %v7555, %v7579
    %7586 = vmatprep.subr.mxu0 0.0
    %7587 = vmatpush1.msra.mxu0 %v7550
    %7588 = vmatprep.subr.mxu0 0.0
    %7589 = vmatpush1.msra.mxu0 %v7551
    %7590 = vmatprep.subr.mxu0 0.0
    %7591 = vmatpush1.msra.mxu0 %v7552
    %7592 = vmatprep.subr.mxu0 0.0
    %7593 = vmatpush1.msra.mxu0 %v7553
    %7594 = vmatprep.subr.mxu0 0.0
    %7595 = vmatpush1.msra.mxu0 %v7554
    %7596 = vmatprep.subr.mxu0 0.0
    %7597 = vmatpush1.msra.mxu0 %v7555
    %7598 = vmatprep.subr.mxu0 0.0
    %7599 = vmatpush1.msra.mxu0 0.0
    %7600 = vmatprep.subr.mxu0 0.0
    %7601 = vmatpush1.msra.mxu0 0.0
    %7602 = vmatprep.subr.mxu0 0.0
    %7603 = vmatpush1.msra.mxu0 0.0
    %7604 = vmatprep.subr.mxu0 0.0
    %7605 = vmatpush1.msra.mxu0 0.0
    %7606 = vmatprep.subr.mxu0 0.0
    %7607 = vmatpush1.msra.mxu0 0.0
    %7608 = vmatprep.subr.mxu0 0.0
    %7609 = vmatpush1.msra.mxu0 0.0
    %7610 = vmatprep.subr.mxu0 0.0
    %7611 = vmatpush1.msra.mxu0 0.0
    %7612 = vmatprep.subr.mxu0 0.0
    %7613 = vmatpush1.msra.mxu0 0.0
    %7614 = vmatprep.subr.mxu0 0.0
    %7615 = vmatpush1.msra.mxu0 0.0
    %7616 = vmatprep.subr.mxu0 0.0
    %7617 = vmatpush1.msra.mxu0 0.0
    %7618 = vmatprep.subr.mxu0 0.0
    %7619 = vmatpush1.msra.mxu0 0.0
    %7620 = vmatprep.subr.mxu0 0.0
    %7621 = vmatpush1.msra.mxu0 0.0
    %7622 = vmatprep.subr.mxu0 0.0
    %7623 = vmatpush1.msra.mxu0 0.0
    %7624 = vmatprep.subr.mxu0 0.0
    %7625 = vmatpush1.msra.mxu0 0.0
    %7626 = vmatprep.subr.mxu0 0.0
    %7627 = vmatpush1.msra.mxu0 0.0
    %7628 = vmatprep.subr.mxu0 0.0
    %7629 = vmatpush1.msra.mxu0 0.0
    %7630 = vmatprep.subr.mxu0 0.0
    %7631 = vmatpush1.msra.mxu0 0.0
    %7632 = vmatprep.subr.mxu0 0.0
    %7633 = vmatpush1.msra.mxu0 0.0
    %7634 = vmatprep.subr.mxu0 0.0
    %7635 = vmatpush1.msra.mxu0 0.0
    %7636 = vmatprep.subr.mxu0 0.0
    %7637 = vmatpush1.msra.mxu0 0.0
    %7638 = vmatprep.subr.mxu0 0.0
    %7639 = vmatpush1.msra.mxu0 0.0
    %7640 = vmatprep.subr.mxu0 0.0
    %7641 = vmatpush1.msra.mxu0 0.0
    %7642 = vmatprep.subr.mxu0 0.0
    %7643 = vmatpush1.msra.mxu0 0.0
    %7644 = vmatprep.subr.mxu0 0.0
    %7645 = vmatpush1.msra.mxu0 0.0
    %7646 = vmatprep.subr.mxu0 0.0
    %7647 = vmatpush1.msra.mxu0 0.0
    %7648 = vmatprep.subr.mxu0 0.0
    %7649 = vmatpush1.msra.mxu0 0.0
    %7650 = vmatprep.mubr.f32.mxu0 0.0
    %7651 = vmatmul.mubr.f32.gmra.mrb[0].mxu0 %v1588
    %v7652 = vpop.f32.mrb[0].mxu0
    %v7653 = vadd.f32 0.0, %v7652
    %v7654 = vpop.f32.mrb[0].mxu0
    %7655 = vmatprep.mubr.f32.mxu0 0.0
    %7656 = vmatmul.mubr.f32.gmra.mrb[0].mxu0 %v1591
    %v7657 = vpop.f32.mrb[0].mxu0
    %v7658 = vadd.f32 0.0, %v7657
    %v7659 = vpop.f32.mrb[0].mxu0
    %7660 = vdwg.mxu0
    %v7661 = vsel %vm1998, %v7653, 0.0
    %v7662 = vsel %vm1998, %v7658, 0.0
    %v7663 = vadd.f32 %v7661, %v7662
    %v7664 = vrot.slane %v7663, 4
    %v7665 = vadd.f32 %v7663, %v7664
    %v7666 = vrot.slane %v7665, 2
    %v7667 = vadd.f32 %v7665, %v7666
    %v7668 = vrot.slane %v7667, 1
    %v7669 = vadd.f32 %v7667, %v7668
    %v7670 = vmul.f32 %v7669, %v1689
    %v7671 = vsub.f32 %v7653, %v7670
    %v7672 = vsub.f32 %v7658, %v7670
    %v7673 = vmul.f32 %v7671, %v7671
    %v7674 = vmul.f32 %v7672, %v7672
    %v7675 = vsel %vm1998, %v7673, 0.0
    %v7676 = vsel %vm1998, %v7674, 0.0
    %v7677 = vadd.f32 %v7675, %v7676
    %v7678 = vrot.slane %v7677, 4
    %v7679 = vadd.f32 %v7677, %v7678
    %v7680 = vrot.slane %v7679, 2
    %v7681 = vadd.f32 %v7679, %v7680
    %v7682 = vrot.slane %v7681, 1
    %v7683 = vadd.f32 %v7681, %v7682
    %v7684 = vmul.f32 %v7683, %v1689
    %v7685 = vadd.f32 %v7684, 1e-05
    %v7686 = vrsqrt.pop %v7685
    %v7687 = vmul.f32 %v7671, %v7686
    %v7688 = vmul.f32 %v7672, %v7686
    %v7689 = vlaneseq
    %v7690 = vshrl.u32 %v7689, 7
    %v7691 = vsub.s32 0, %v7690
    %v7692 = vrot.slane %v6988, %v7691
    %v7693 = vmul.f32 %v7687, %v7692
    %v7694 = vmul.f32 %v7688, %v7692
    %v7695 = vlaneseq
    %v7696 = vshrl.u32 %v7695, 7
    %v7697 = vsub.s32 0, %v7696
    %v7698 = vrot.slane %v6989, %v7697
    %v7699 = vadd.f32 %v7693, %v7698
    %v7700 = vadd.f32 %v7694, %v7698
    %vm7701 = vcmp.gt.f32.partialorder %v7699, 0.0
    %vm7702 = vcmp.gt.f32.partialorder %v7700, 0.0
    %v7703 = vmul.f32 %v7699, 1.442695
    %v7704 = vpow.pop %v7703
    %v7705 = vmul.f32 %v7700, 1.442695
    %v7706 = vpow.pop %v7705
    %v7707 = vsub.f32 %v7704, 1.0
    %v7708 = vsub.f32 %v7706, 1.0
    %v7709 = vsel %vm7701, %v7699, %v7707
    %v7710 = vsel %vm7702, %v7700, %v7708
    %s7711 = scalar_lea.vmem %s11, 448
    %v7712 = vld [vmem:[%s7711] sm:$0xff]
    %v7713 = vld [vmem:[%s7711 + $0x8] sm:$0xff]
    %v7714 = vld [vmem:[%s7711 + $0x10] sm:$0xff]
    %v7715 = vld [vmem:[%s7711 + $0x18] sm:$0xff]
    %v7716 = vld [vmem:[%s7711 + $0x20] sm:$0xff]
    %v7717 = vld [vmem:[%s7711 + $0x28] sm:$0xff]
    %v7718 = vld [vmem:[%s7711 + $0x30] sm:$0x3]
    %s7719 = scalar_lea.vmem %s12, 448
    %v7720 = vld [vmem:[%s7719] sm:$0xff]
    %v7721 = vld [vmem:[%s7719 + $0x8] sm:$0xff]
    %v7722 = vld [vmem:[%s7719 + $0x10] sm:$0xff]
    %v7723 = vld [vmem:[%s7719 + $0x18] sm:$0xff]
    %v7724 = vld [vmem:[%s7719 + $0x20] sm:$0xff]
    %v7725 = vld [vmem:[%s7719 + $0x28] sm:$0xff]
    %v7726 = vld [vmem:[%s7719 + $0x30] sm:$0x3]
    %s7727 = scalar_lea.vmem %s13, 448
    %v7728 = vld [vmem:[%s7727] sm:$0xff]
    %v7729 = vld [vmem:[%s7727 + $0x8] sm:$0xff]
    %v7730 = vld [vmem:[%s7727 + $0x10] sm:$0xff]
    %v7731 = vld [vmem:[%s7727 + $0x18] sm:$0xff]
    %v7732 = vld [vmem:[%s7727 + $0x20] sm:$0xff]
    %v7733 = vld [vmem:[%s7727 + $0x28] sm:$0xff]
    %v7734 = vld [vmem:[%s7727 + $0x30] sm:$0x3]
    %v7735 = vld [vmem:[%s14 + $0x8] sm:$0x1]
    %v7736 = vld [vmem:[%s15 + $0x8] sm:$0x1]
    %v7737 = vld [vmem:[%s16 + $0x8] sm:$0x1]
    %7738 = vmatprep.subr.mxu0 0.0
    %7739 = vmatpush1.msra.mxu0 %v7709
    %7740 = vmatprep.subr.mxu0 0.0
    %7741 = vmatpush1.msra.mxu0 %v7710
    %7742 = vmatprep.subr.mxu0 0.0
    %7743 = vmatpush1.msra.mxu0 0.0
    %7744 = vmatprep.subr.mxu0 0.0
    %7745 = vmatpush1.msra.mxu0 0.0
    %7746 = vmatprep.subr.mxu0 0.0
    %7747 = vmatpush1.msra.mxu0 0.0
    %7748 = vmatprep.subr.mxu0 0.0
    %7749 = vmatpush1.msra.mxu0 0.0
    %7750 = vmatprep.subr.mxu0 0.0
    %7751 = vmatpush1.msra.mxu0 0.0
    %7752 = vmatprep.subr.mxu0 0.0
    %7753 = vmatpush1.msra.mxu0 0.0
    %7754 = vmatprep.subr.mxu0 0.0
    %7755 = vmatpush1.msra.mxu0 0.0
    %7756 = vmatprep.subr.mxu0 0.0
    %7757 = vmatpush1.msra.mxu0 0.0
    %7758 = vmatprep.subr.mxu0 0.0
    %7759 = vmatpush1.msra.mxu0 0.0
    %7760 = vmatprep.subr.mxu0 0.0
    %7761 = vmatpush1.msra.mxu0 0.0
    %7762 = vmatprep.subr.mxu0 0.0
    %7763 = vmatpush1.msra.mxu0 0.0
    %7764 = vmatprep.subr.mxu0 0.0
    %7765 = vmatpush1.msra.mxu0 0.0
    %7766 = vmatprep.subr.mxu0 0.0
    %7767 = vmatpush1.msra.mxu0 0.0
    %7768 = vmatprep.subr.mxu0 0.0
    %7769 = vmatpush1.msra.mxu0 0.0
    %7770 = vmatprep.subr.mxu0 0.0
    %7771 = vmatpush1.msra.mxu0 0.0
    %7772 = vmatprep.subr.mxu0 0.0
    %7773 = vmatpush1.msra.mxu0 0.0
    %7774 = vmatprep.subr.mxu0 0.0
    %7775 = vmatpush1.msra.mxu0 0.0
    %7776 = vmatprep.subr.mxu0 0.0
    %7777 = vmatpush1.msra.mxu0 0.0
    %7778 = vmatprep.subr.mxu0 0.0
    %7779 = vmatpush1.msra.mxu0 0.0
    %7780 = vmatprep.subr.mxu0 0.0
    %7781 = vmatpush1.msra.mxu0 0.0
    %7782 = vmatprep.subr.mxu0 0.0
    %7783 = vmatpush1.msra.mxu0 0.0
    %7784 = vmatprep.subr.mxu0 0.0
    %7785 = vmatpush1.msra.mxu0 0.0
    %7786 = vmatprep.subr.mxu0 0.0
    %7787 = vmatpush1.msra.mxu0 0.0
    %7788 = vmatprep.subr.mxu0 0.0
    %7789 = vmatpush1.msra.mxu0 0.0
    %7790 = vmatprep.subr.mxu0 0.0
    %7791 = vmatpush1.msra.mxu0 0.0
    %7792 = vmatprep.subr.mxu0 0.0
    %7793 = vmatpush1.msra.mxu0 0.0
    %7794 = vmatprep.subr.mxu0 0.0
    %7795 = vmatpush1.msra.mxu0 0.0
    %7796 = vmatprep.subr.mxu0 0.0
    %7797 = vmatpush1.msra.mxu0 0.0
    %7798 = vmatprep.subr.mxu0 0.0
    %7799 = vmatpush1.msra.mxu0 0.0
    %7800 = vmatprep.subr.mxu0 0.0
    %7801 = vmatpush1.msra.mxu0 0.0
    %7802 = vmatprep.mubr.f32.mxu0 0.0
    %7803 = vmatmul.mubr.f32.gmra.mrb[0].mxu0 %v105
    %v7804 = vpop.f32.mrb[0].mxu0
    %v7805 = vadd.f32 0.0, %v7804
    %v7806 = vpop.f32.mrb[0].mxu0
    %7807 = vmatprep.mubr.f32.mxu0 0.0
    %7808 = vmatmul.mubr.f32.gmra.mrb[0].mxu0 %v108
    %v7809 = vpop.f32.mrb[0].mxu0
    %v7810 = vadd.f32 0.0, %v7809
    %v7811 = vpop.f32.mrb[0].mxu0
    %7812 = vmatprep.mubr.f32.mxu0 0.0
    %7813 = vmatmul.mubr.f32.gmra.mrb[0].mxu0 %v111
    %v7814 = vpop.f32.mrb[0].mxu0
    %v7815 = vadd.f32 0.0, %v7814
    %v7816 = vpop.f32.mrb[0].mxu0
    %7817 = vmatprep.mubr.f32.mxu0 0.0
    %7818 = vmatmul.mubr.f32.gmra.mrb[0].mxu0 %v114
    %v7819 = vpop.f32.mrb[0].mxu0
    %v7820 = vadd.f32 0.0, %v7819
    %v7821 = vpop.f32.mrb[0].mxu0
    %7822 = vmatprep.mubr.f32.mxu0 0.0
    %7823 = vmatmul.mubr.f32.gmra.mrb[0].mxu0 %v117
    %v7824 = vpop.f32.mrb[0].mxu0
    %v7825 = vadd.f32 0.0, %v7824
    %v7826 = vpop.f32.mrb[0].mxu0
    %7827 = vmatprep.mubr.f32.mxu0 0.0
    %7828 = vmatmul.mubr.f32.gmra.mrb[0].mxu0 %v120
    %v7829 = vpop.f32.mrb[0].mxu0
    %v7830 = vadd.f32 0.0, %v7829
    %v7831 = vpop.f32.mrb[0].mxu0
    %7832 = vdwg.mxu0
    %7833 = vmatprep.subr.mxu0 0.0
    %7834 = vmatpush1.msra.mxu0 %v7709
    %7835 = vmatprep.subr.mxu0 0.0
    %7836 = vmatpush1.msra.mxu0 %v7710
    %7837 = vmatprep.subr.mxu0 0.0
    %7838 = vmatpush1.msra.mxu0 0.0
    %7839 = vmatprep.subr.mxu0 0.0
    %7840 = vmatpush1.msra.mxu0 0.0
    %7841 = vmatprep.subr.mxu0 0.0
    %7842 = vmatpush1.msra.mxu0 0.0
    %7843 = vmatprep.subr.mxu0 0.0
    %7844 = vmatpush1.msra.mxu0 0.0
    %7845 = vmatprep.subr.mxu0 0.0
    %7846 = vmatpush1.msra.mxu0 0.0
    %7847 = vmatprep.subr.mxu0 0.0
    %7848 = vmatpush1.msra.mxu0 0.0
    %7849 = vmatprep.subr.mxu0 0.0
    %7850 = vmatpush1.msra.mxu0 0.0
    %7851 = vmatprep.subr.mxu0 0.0
    %7852 = vmatpush1.msra.mxu0 0.0
    %7853 = vmatprep.subr.mxu0 0.0
    %7854 = vmatpush1.msra.mxu0 0.0
    %7855 = vmatprep.subr.mxu0 0.0
    %7856 = vmatpush1.msra.mxu0 0.0
    %7857 = vmatprep.subr.mxu0 0.0
    %7858 = vmatpush1.msra.mxu0 0.0
    %7859 = vmatprep.subr.mxu0 0.0
    %7860 = vmatpush1.msra.mxu0 0.0
    %7861 = vmatprep.subr.mxu0 0.0
    %7862 = vmatpush1.msra.mxu0 0.0
    %7863 = vmatprep.subr.mxu0 0.0
    %7864 = vmatpush1.msra.mxu0 0.0
    %7865 = vmatprep.subr.mxu0 0.0
    %7866 = vmatpush1.msra.mxu0 0.0
    %7867 = vmatprep.subr.mxu0 0.0
    %7868 = vmatpush1.msra.mxu0 0.0
    %7869 = vmatprep.subr.mxu0 0.0
    %7870 = vmatpush1.msra.mxu0 0.0
    %7871 = vmatprep.subr.mxu0 0.0
    %7872 = vmatpush1.msra.mxu0 0.0
    %7873 = vmatprep.subr.mxu0 0.0
    %7874 = vmatpush1.msra.mxu0 0.0
    %7875 = vmatprep.subr.mxu0 0.0
    %7876 = vmatpush1.msra.mxu0 0.0
    %7877 = vmatprep.subr.mxu0 0.0
    %7878 = vmatpush1.msra.mxu0 0.0
    %7879 = vmatprep.subr.mxu0 0.0
    %7880 = vmatpush1.msra.mxu0 0.0
    %7881 = vmatprep.subr.mxu0 0.0
    %7882 = vmatpush1.msra.mxu0 0.0
    %7883 = vmatprep.subr.mxu0 0.0
    %7884 = vmatpush1.msra.mxu0 0.0
    %7885 = vmatprep.subr.mxu0 0.0
    %7886 = vmatpush1.msra.mxu0 0.0
    %7887 = vmatprep.subr.mxu0 0.0
    %7888 = vmatpush1.msra.mxu0 0.0
    %7889 = vmatprep.subr.mxu0 0.0
    %7890 = vmatpush1.msra.mxu0 0.0
    %7891 = vmatprep.subr.mxu0 0.0
    %7892 = vmatpush1.msra.mxu0 0.0
    %7893 = vmatprep.subr.mxu0 0.0
    %7894 = vmatpush1.msra.mxu0 0.0
    %7895 = vmatprep.subr.mxu0 0.0
    %7896 = vmatpush1.msra.mxu0 0.0
    %7897 = vmatprep.mubr.f32.mxu0 0.0
    %7898 = vmatmul.mubr.f32.gmra.mrb[0].mxu0 %v218
    %v7899 = vpop.f32.mrb[0].mxu0
    %v7900 = vadd.f32 0.0, %v7899
    %v7901 = vpop.f32.mrb[0].mxu0
    %7902 = vmatprep.mubr.f32.mxu0 0.0
    %7903 = vmatmul.mubr.f32.gmra.mrb[0].mxu0 %v221
    %v7904 = vpop.f32.mrb[0].mxu0
    %v7905 = vadd.f32 0.0, %v7904
    %v7906 = vpop.f32.mrb[0].mxu0
    %7907 = vmatprep.mubr.f32.mxu0 0.0
    %7908 = vmatmul.mubr.f32.gmra.mrb[0].mxu0 %v224
    %v7909 = vpop.f32.mrb[0].mxu0
    %v7910 = vadd.f32 0.0, %v7909
    %v7911 = vpop.f32.mrb[0].mxu0
    %7912 = vmatprep.mubr.f32.mxu0 0.0
    %7913 = vmatmul.mubr.f32.gmra.mrb[0].mxu0 %v227
    %v7914 = vpop.f32.mrb[0].mxu0
    %v7915 = vadd.f32 0.0, %v7914
    %v7916 = vpop.f32.mrb[0].mxu0
    %7917 = vmatprep.mubr.f32.mxu0 0.0
    %7918 = vmatmul.mubr.f32.gmra.mrb[0].mxu0 %v230
    %v7919 = vpop.f32.mrb[0].mxu0
    %v7920 = vadd.f32 0.0, %v7919
    %v7921 = vpop.f32.mrb[0].mxu0
    %7922 = vmatprep.mubr.f32.mxu0 0.0
    %7923 = vmatmul.mubr.f32.gmra.mrb[0].mxu0 %v233
    %v7924 = vpop.f32.mrb[0].mxu0
    %v7925 = vadd.f32 0.0, %v7924
    %v7926 = vpop.f32.mrb[0].mxu0
    %7927 = vdwg.mxu0
    %v7929 = vsel %vm1998, %v7900, 0
    %v7932 = vsel %vm1998, %v7905, 0
    %v7935 = vsel %vm1998, %v7910, 0
    %v7938 = vsel %vm1998, %v7915, 0
    %v7941 = vsel %vm1998, %v7920, 0
    %v7944 = vsel %vm1998, %v7925, 0
    %v7947 = vsel %vm2017, %v7726, 0
    %7949 = vmatprep.subr.mxu0 0.0
    %7950 = vmatpush1.msra.mxu0 %v7720
    %7951 = vmatprep.subr.mxu0 0.0
    %7952 = vmatpush1.msra.mxu0 %v7721
    %7953 = vmatprep.subr.mxu0 0.0
    %7954 = vmatpush1.msra.mxu0 %v7722
    %7955 = vmatprep.subr.mxu0 0.0
    %7956 = vmatpush1.msra.mxu0 %v7723
    %7957 = vmatprep.subr.mxu0 0.0
    %7958 = vmatpush1.msra.mxu0 %v7724
    %7959 = vmatprep.subr.mxu0 0.0
    %7960 = vmatpush1.msra.mxu0 %v7725
    %7961 = vmatprep.subr.mxu0 0.0
    %7962 = vmatpush1.msra.mxu0 %v7947
    %7963 = vmatprep.subr.mxu0 0.0
    %7964 = vmatpush1.msra.mxu0 0.0
    %7965 = vmatprep.subr.mxu0 0.0
    %7966 = vmatpush1.msra.mxu0 0.0
    %7967 = vmatprep.subr.mxu0 0.0
    %7968 = vmatpush1.msra.mxu0 0.0
    %7969 = vmatprep.subr.mxu0 0.0
    %7970 = vmatpush1.msra.mxu0 0.0
    %7971 = vmatprep.subr.mxu0 0.0
    %7972 = vmatpush1.msra.mxu0 0.0
    %7973 = vmatprep.subr.mxu0 0.0
    %7974 = vmatpush1.msra.mxu0 0.0
    %7975 = vmatprep.subr.mxu0 0.0
    %7976 = vmatpush1.msra.mxu0 0.0
    %7977 = vmatprep.subr.mxu0 0.0
    %7978 = vmatpush1.msra.mxu0 0.0
    %7979 = vmatprep.subr.mxu0 0.0
    %7980 = vmatpush1.msra.mxu0 0.0
    %7981 = vmatprep.subr.mxu0 0.0
    %7982 = vmatpush1.msra.mxu0 0.0
    %7983 = vmatprep.subr.mxu0 0.0
    %7984 = vmatpush1.msra.mxu0 0.0
    %7985 = vmatprep.subr.mxu0 0.0
    %7986 = vmatpush1.msra.mxu0 0.0
    %7987 = vmatprep.subr.mxu0 0.0
    %7988 = vmatpush1.msra.mxu0 0.0
    %7989 = vmatprep.subr.mxu0 0.0
    %7990 = vmatpush1.msra.mxu0 0.0
    %7991 = vmatprep.subr.mxu0 0.0
    %7992 = vmatpush1.msra.mxu0 0.0
    %7993 = vmatprep.subr.mxu0 0.0
    %7994 = vmatpush1.msra.mxu0 0.0
    %7995 = vmatprep.subr.mxu0 0.0
    %7996 = vmatpush1.msra.mxu0 0.0
    %7997 = vmatprep.subr.mxu0 0.0
    %7998 = vmatpush1.msra.mxu0 0.0
    %7999 = vmatprep.subr.mxu0 0.0
    %8000 = vmatpush1.msra.mxu0 0.0
    %8001 = vmatprep.subr.mxu0 0.0
    %8002 = vmatpush1.msra.mxu0 0.0
    %8003 = vmatprep.subr.mxu0 0.0
    %8004 = vmatpush1.msra.mxu0 0.0
    %8005 = vmatprep.subr.mxu0 0.0
    %8006 = vmatpush1.msra.mxu0 0.0
    %8007 = vmatprep.subr.mxu0 0.0
    %8008 = vmatpush1.msra.mxu0 0.0
    %8009 = vmatprep.subr.mxu0 0.0
    %8010 = vmatpush1.msra.mxu0 0.0
    %8011 = vmatprep.subr.mxu0 0.0
    %8012 = vmatpush1.msra.mxu0 0.0
    %8013 = vmatprep.mubr.f32.mxu0 0.0
    %8014 = vmatmul.mubr.f32.gmra.mrb[0].mxu0 %v7929
    %v8015 = vpop.f32.mrb[0].mxu0
    %v8016 = vadd.f32 0.0, %v8015
    %v8017 = vpop.f32.mrb[0].mxu0
    %8018 = vmatprep.mubr.f32.mxu0 0.0
    %8019 = vmatmul.mubr.f32.gmra.mrb[0].mxu0 %v7932
    %v8020 = vpop.f32.mrb[0].mxu0
    %v8021 = vadd.f32 0.0, %v8020
    %v8022 = vpop.f32.mrb[0].mxu0
    %8023 = vmatprep.mubr.f32.mxu0 0.0
    %8024 = vmatmul.mubr.f32.gmra.mrb[0].mxu0 %v7935
    %v8025 = vpop.f32.mrb[0].mxu0
    %v8026 = vadd.f32 0.0, %v8025
    %v8027 = vpop.f32.mrb[0].mxu0
    %8028 = vmatprep.mubr.f32.mxu0 0.0
    %8029 = vmatmul.mubr.f32.gmra.mrb[0].mxu0 %v7938
    %v8030 = vpop.f32.mrb[0].mxu0
    %v8031 = vadd.f32 0.0, %v8030
    %v8032 = vpop.f32.mrb[0].mxu0
    %8033 = vmatprep.mubr.f32.mxu0 0.0
    %8034 = vmatmul.mubr.f32.gmra.mrb[0].mxu0 %v7941
    %v8035 = vpop.f32.mrb[0].mxu0
    %v8036 = vadd.f32 0.0, %v8035
    %v8037 = vpop.f32.mrb[0].mxu0
    %8038 = vmatprep.mubr.f32.mxu0 0.0
    %8039 = vmatmul.mubr.f32.gmra.mrb[0].mxu0 %v7944
    %v8040 = vpop.f32.mrb[0].mxu0
    %v8041 = vadd.f32 0.0, %v8040
    %v8042 = vpop.f32.mrb[0].mxu0
    %8043 = vdwg.mxu0
    %v8045 = vsel %vm1998, %v7805, 0
    %v8048 = vsel %vm1998, %v7810, 0
    %v8051 = vsel %vm1998, %v7815, 0
    %v8054 = vsel %vm1998, %v7820, 0
    %v8057 = vsel %vm1998, %v7825, 0
    %v8060 = vsel %vm1998, %v7830, 0
    %v8063 = vsel %vm2017, %v7718, 0
    %8065 = vmatprep.subr.mxu0 0.0
    %8066 = vmatpush1.msra.mxu0 %v7712
    %8067 = vmatprep.subr.mxu0 0.0
    %8068 = vmatpush1.msra.mxu0 %v7713
    %8069 = vmatprep.subr.mxu0 0.0
    %8070 = vmatpush1.msra.mxu0 %v7714
    %8071 = vmatprep.subr.mxu0 0.0
    %8072 = vmatpush1.msra.mxu0 %v7715
    %8073 = vmatprep.subr.mxu0 0.0
    %8074 = vmatpush1.msra.mxu0 %v7716
    %8075 = vmatprep.subr.mxu0 0.0
    %8076 = vmatpush1.msra.mxu0 %v7717
    %8077 = vmatprep.subr.mxu0 0.0
    %8078 = vmatpush1.msra.mxu0 %v8063
    %8079 = vmatprep.subr.mxu0 0.0
    %8080 = vmatpush1.msra.mxu0 0.0
    %8081 = vmatprep.subr.mxu0 0.0
    %8082 = vmatpush1.msra.mxu0 0.0
    %8083 = vmatprep.subr.mxu0 0.0
    %8084 = vmatpush1.msra.mxu0 0.0
    %8085 = vmatprep.subr.mxu0 0.0
    %8086 = vmatpush1.msra.mxu0 0.0
    %8087 = vmatprep.subr.mxu0 0.0
    %8088 = vmatpush1.msra.mxu0 0.0
    %8089 = vmatprep.subr.mxu0 0.0
    %8090 = vmatpush1.msra.mxu0 0.0
    %8091 = vmatprep.subr.mxu0 0.0
    %8092 = vmatpush1.msra.mxu0 0.0
    %8093 = vmatprep.subr.mxu0 0.0
    %8094 = vmatpush1.msra.mxu0 0.0
    %8095 = vmatprep.subr.mxu0 0.0
    %8096 = vmatpush1.msra.mxu0 0.0
    %8097 = vmatprep.subr.mxu0 0.0
    %8098 = vmatpush1.msra.mxu0 0.0
    %8099 = vmatprep.subr.mxu0 0.0
    %8100 = vmatpush1.msra.mxu0 0.0
    %8101 = vmatprep.subr.mxu0 0.0
    %8102 = vmatpush1.msra.mxu0 0.0
    %8103 = vmatprep.subr.mxu0 0.0
    %8104 = vmatpush1.msra.mxu0 0.0
    %8105 = vmatprep.subr.mxu0 0.0
    %8106 = vmatpush1.msra.mxu0 0.0
    %8107 = vmatprep.subr.mxu0 0.0
    %8108 = vmatpush1.msra.mxu0 0.0
    %8109 = vmatprep.subr.mxu0 0.0
    %8110 = vmatpush1.msra.mxu0 0.0
    %8111 = vmatprep.subr.mxu0 0.0
    %8112 = vmatpush1.msra.mxu0 0.0
    %8113 = vmatprep.subr.mxu0 0.0
    %8114 = vmatpush1.msra.mxu0 0.0
    %8115 = vmatprep.subr.mxu0 0.0
    %8116 = vmatpush1.msra.mxu0 0.0
    %8117 = vmatprep.subr.mxu0 0.0
    %8118 = vmatpush1.msra.mxu0 0.0
    %8119 = vmatprep.subr.mxu0 0.0
    %8120 = vmatpush1.msra.mxu0 0.0
    %8121 = vmatprep.subr.mxu0 0.0
    %8122 = vmatpush1.msra.mxu0 0.0
    %8123 = vmatprep.subr.mxu0 0.0
    %8124 = vmatpush1.msra.mxu0 0.0
    %8125 = vmatprep.subr.mxu0 0.0
    %8126 = vmatpush1.msra.mxu0 0.0
    %8127 = vmatprep.subr.mxu0 0.0
    %8128 = vmatpush1.msra.mxu0 0.0
    %8129 = vmatprep.mubr.f32.mxu0 0.0
    %8130 = vmatmul.mubr.f32.gmra.mrb[0].mxu0 %v8045
    %v8131 = vpop.f32.mrb[0].mxu0
    %v8132 = vadd.f32 %v8016, %v8131
    %v8133 = vpop.f32.mrb[0].mxu0
    %8134 = vmatprep.mubr.f32.mxu0 0.0
    %8135 = vmatmul.mubr.f32.gmra.mrb[0].mxu0 %v8048
    %v8136 = vpop.f32.mrb[0].mxu0
    %v8137 = vadd.f32 %v8021, %v8136
    %v8138 = vpop.f32.mrb[0].mxu0
    %8139 = vmatprep.mubr.f32.mxu0 0.0
    %8140 = vmatmul.mubr.f32.gmra.mrb[0].mxu0 %v8051
    %v8141 = vpop.f32.mrb[0].mxu0
    %v8142 = vadd.f32 %v8026, %v8141
    %v8143 = vpop.f32.mrb[0].mxu0
    %8144 = vmatprep.mubr.f32.mxu0 0.0
    %8145 = vmatmul.mubr.f32.gmra.mrb[0].mxu0 %v8054
    %v8146 = vpop.f32.mrb[0].mxu0
    %v8147 = vadd.f32 %v8031, %v8146
    %v8148 = vpop.f32.mrb[0].mxu0
    %8149 = vmatprep.mubr.f32.mxu0 0.0
    %8150 = vmatmul.mubr.f32.gmra.mrb[0].mxu0 %v8057
    %v8151 = vpop.f32.mrb[0].mxu0
    %v8152 = vadd.f32 %v8036, %v8151
    %v8153 = vpop.f32.mrb[0].mxu0
    %8154 = vmatprep.mubr.f32.mxu0 0.0
    %8155 = vmatmul.mubr.f32.gmra.mrb[0].mxu0 %v8060
    %v8156 = vpop.f32.mrb[0].mxu0
    %v8157 = vadd.f32 %v8041, %v8156
    %v8158 = vpop.f32.mrb[0].mxu0
    %8159 = vdwg.mxu0
    %8166 = vrot.lane.b32.xlu0 %v7580, 78
    %v8167 = vpop.permute.xlu0 %8166
    %8168 = vrot.lane.b32.xlu0 %v7581, 78
    %v8169 = vpop.permute.xlu0 %8168
    %8170 = vrot.lane.b32.xlu0 %v7582, 78
    %v8171 = vpop.permute.xlu0 %8170
    %8172 = vrot.lane.b32.xlu0 %v7583, 78
    %v8173 = vpop.permute.xlu0 %8172
    %8174 = vrot.lane.b32.xlu0 %v7584, 78
    %v8175 = vpop.permute.xlu0 %8174
    %8176 = vrot.lane.b32.xlu0 %v7585, 78
    %v8177 = vpop.permute.xlu0 %8176
    %v8178 = vsel %vm1998, %v8167, 0
    %v8180 = vsel %vm1998, %v8169, 0
    %v8182 = vsel %vm1998, %v8171, 0
    %v8184 = vsel %vm1998, %v8173, 0
    %v8186 = vsel %vm1998, %v8175, 0
    %v8188 = vsel %vm1998, %v8177, 0
    %v8191 = vsel %vm2017, %v7734, 0
    %8193 = vmatprep.subr.mxu0 0.0
    %8194 = vmatpush1.msra.mxu0 %v7728
    %8195 = vmatprep.subr.mxu0 0.0
    %8196 = vmatpush1.msra.mxu0 %v7729
    %8197 = vmatprep.subr.mxu0 0.0
    %8198 = vmatpush1.msra.mxu0 %v7730
    %8199 = vmatprep.subr.mxu0 0.0
    %8200 = vmatpush1.msra.mxu0 %v7731
    %8201 = vmatprep.subr.mxu0 0.0
    %8202 = vmatpush1.msra.mxu0 %v7732
    %8203 = vmatprep.subr.mxu0 0.0
    %8204 = vmatpush1.msra.mxu0 %v7733
    %8205 = vmatprep.subr.mxu0 0.0
    %8206 = vmatpush1.msra.mxu0 %v8191
    %8207 = vmatprep.subr.mxu0 0.0
    %8208 = vmatpush1.msra.mxu0 0.0
    %8209 = vmatprep.subr.mxu0 0.0
    %8210 = vmatpush1.msra.mxu0 0.0
    %8211 = vmatprep.subr.mxu0 0.0
    %8212 = vmatpush1.msra.mxu0 0.0
    %8213 = vmatprep.subr.mxu0 0.0
    %8214 = vmatpush1.msra.mxu0 0.0
    %8215 = vmatprep.subr.mxu0 0.0
    %8216 = vmatpush1.msra.mxu0 0.0
    %8217 = vmatprep.subr.mxu0 0.0
    %8218 = vmatpush1.msra.mxu0 0.0
    %8219 = vmatprep.subr.mxu0 0.0
    %8220 = vmatpush1.msra.mxu0 0.0
    %8221 = vmatprep.subr.mxu0 0.0
    %8222 = vmatpush1.msra.mxu0 0.0
    %8223 = vmatprep.subr.mxu0 0.0
    %8224 = vmatpush1.msra.mxu0 0.0
    %8225 = vmatprep.subr.mxu0 0.0
    %8226 = vmatpush1.msra.mxu0 0.0
    %8227 = vmatprep.subr.mxu0 0.0
    %8228 = vmatpush1.msra.mxu0 0.0
    %8229 = vmatprep.subr.mxu0 0.0
    %8230 = vmatpush1.msra.mxu0 0.0
    %8231 = vmatprep.subr.mxu0 0.0
    %8232 = vmatpush1.msra.mxu0 0.0
    %8233 = vmatprep.subr.mxu0 0.0
    %8234 = vmatpush1.msra.mxu0 0.0
    %8235 = vmatprep.subr.mxu0 0.0
    %8236 = vmatpush1.msra.mxu0 0.0
    %8237 = vmatprep.subr.mxu0 0.0
    %8238 = vmatpush1.msra.mxu0 0.0
    %8239 = vmatprep.subr.mxu0 0.0
    %8240 = vmatpush1.msra.mxu0 0.0
    %8241 = vmatprep.subr.mxu0 0.0
    %8242 = vmatpush1.msra.mxu0 0.0
    %8243 = vmatprep.subr.mxu0 0.0
    %8244 = vmatpush1.msra.mxu0 0.0
    %8245 = vmatprep.subr.mxu0 0.0
    %8246 = vmatpush1.msra.mxu0 0.0
    %8247 = vmatprep.subr.mxu0 0.0
    %8248 = vmatpush1.msra.mxu0 0.0
    %8249 = vmatprep.subr.mxu0 0.0
    %8250 = vmatpush1.msra.mxu0 0.0
    %8251 = vmatprep.subr.mxu0 0.0
    %8252 = vmatpush1.msra.mxu0 0.0
    %8253 = vmatprep.subr.mxu0 0.0
    %8254 = vmatpush1.msra.mxu0 0.0
    %8255 = vmatprep.subr.mxu0 0.0
    %8256 = vmatpush1.msra.mxu0 0.0
    %8257 = vmatprep.mubr.f32.mxu0 0.0
    %8258 = vmatmul.mubr.f32.gmra.mrb[0].mxu0 %v8178
    %v8259 = vpop.f32.mrb[0].mxu0
    %v8260 = vadd.f32 0.0, %v8259
    %v8261 = vpop.f32.mrb[0].mxu0
    %8262 = vmatprep.mubr.f32.mxu0 0.0
    %8263 = vmatmul.mubr.f32.gmra.mrb[0].mxu0 %v8180
    %v8264 = vpop.f32.mrb[0].mxu0
    %v8265 = vadd.f32 0.0, %v8264
    %v8266 = vpop.f32.mrb[0].mxu0
    %8267 = vmatprep.mubr.f32.mxu0 0.0
    %8268 = vmatmul.mubr.f32.gmra.mrb[0].mxu0 %v8182
    %v8269 = vpop.f32.mrb[0].mxu0
    %v8270 = vadd.f32 0.0, %v8269
    %v8271 = vpop.f32.mrb[0].mxu0
    %8272 = vmatprep.mubr.f32.mxu0 0.0
    %8273 = vmatmul.mubr.f32.gmra.mrb[0].mxu0 %v8184
    %v8274 = vpop.f32.mrb[0].mxu0
    %v8275 = vadd.f32 0.0, %v8274
    %v8276 = vpop.f32.mrb[0].mxu0
    %8277 = vmatprep.mubr.f32.mxu0 0.0
    %8278 = vmatmul.mubr.f32.gmra.mrb[0].mxu0 %v8186
    %v8279 = vpop.f32.mrb[0].mxu0
    %v8280 = vadd.f32 0.0, %v8279
    %v8281 = vpop.f32.mrb[0].mxu0
    %8282 = vmatprep.mubr.f32.mxu0 0.0
    %8283 = vmatmul.mubr.f32.gmra.mrb[0].mxu0 %v8188
    %v8284 = vpop.f32.mrb[0].mxu0
    %v8285 = vadd.f32 0.0, %v8284
    %v8286 = vpop.f32.mrb[0].mxu0
    %8287 = vdwg.mxu0
    %v8288 = vadd.f32 %v8132, %v8260
    %v8289 = vadd.f32 %v8137, %v8265
    %v8290 = vadd.f32 %v8142, %v8270
    %v8291 = vadd.f32 %v8147, %v8275
    %v8292 = vadd.f32 %v8152, %v8280
    %v8293 = vadd.f32 %v8157, %v8285
    %v8294 = vlaneseq
    %v8295 = vshrl.u32 %v8294, 7
    %v8296 = vsub.s32 0, %v8295
    %v8297 = vrot.slane %v7735, %v8296
    %v8298 = vadd.f32 %v8288, %v8297
    %v8299 = vadd.f32 %v8289, %v8297
    %v8300 = vadd.f32 %v8290, %v8297
    %v8301 = vadd.f32 %v8291, %v8297
    %v8302 = vadd.f32 %v8292, %v8297
    %v8303 = vadd.f32 %v8293, %v8297
    %vm8304 = vcmp.gt.f32.partialorder %v8298, 0.0
    %vm8305 = vcmp.gt.f32.partialorder %v8299, 0.0
    %vm8306 = vcmp.gt.f32.partialorder %v8300, 0.0
    %vm8307 = vcmp.gt.f32.partialorder %v8301, 0.0
    %vm8308 = vcmp.gt.f32.partialorder %v8302, 0.0
    %vm8309 = vcmp.gt.f32.partialorder %v8303, 0.0
    %v8310 = vmul.f32 %v8298, 1.442695
    %v8311 = vpow.pop %v8310
    %v8312 = vmul.f32 %v8299, 1.442695
    %v8313 = vpow.pop %v8312
    %v8314 = vmul.f32 %v8300, 1.442695
    %v8315 = vpow.pop %v8314
    %v8316 = vmul.f32 %v8301, 1.442695
    %v8317 = vpow.pop %v8316
    %v8318 = vmul.f32 %v8302, 1.442695
    %v8319 = vpow.pop %v8318
    %v8320 = vmul.f32 %v8303, 1.442695
    %v8321 = vpow.pop %v8320
    %v8322 = vsub.f32 %v8311, 1.0
    %v8323 = vsub.f32 %v8313, 1.0
    %v8324 = vsub.f32 %v8315, 1.0
    %v8325 = vsub.f32 %v8317, 1.0
    %v8326 = vsub.f32 %v8319, 1.0
    %v8327 = vsub.f32 %v8321, 1.0
    %v8328 = vsel %vm8304, %v8298, %v8322
    %v8329 = vsel %vm8305, %v8299, %v8323
    %v8330 = vsel %vm8306, %v8300, %v8324
    %v8331 = vsel %vm8307, %v8301, %v8325
    %v8332 = vsel %vm8308, %v8302, %v8326
    %v8333 = vsel %vm8309, %v8303, %v8327
    %8334 = vmatprep.subr.mxu0 0.0
    %8335 = vmatpush1.msra.mxu0 %v8298
    %8336 = vmatprep.subr.mxu0 0.0
    %8337 = vmatpush1.msra.mxu0 %v8299
    %8338 = vmatprep.subr.mxu0 0.0
    %8339 = vmatpush1.msra.mxu0 %v8300
    %8340 = vmatprep.subr.mxu0 0.0
    %8341 = vmatpush1.msra.mxu0 %v8301
    %8342 = vmatprep.subr.mxu0 0.0
    %8343 = vmatpush1.msra.mxu0 %v8302
    %8344 = vmatprep.subr.mxu0 0.0
    %8345 = vmatpush1.msra.mxu0 %v8303
    %8346 = vmatprep.subr.mxu0 0.0
    %8347 = vmatpush1.msra.mxu0 0.0
    %8348 = vmatprep.subr.mxu0 0.0
    %8349 = vmatpush1.msra.mxu0 0.0
    %8350 = vmatprep.subr.mxu0 0.0
    %8351 = vmatpush1.msra.mxu0 0.0
    %8352 = vmatprep.subr.mxu0 0.0
    %8353 = vmatpush1.msra.mxu0 0.0
    %8354 = vmatprep.subr.mxu0 0.0
    %8355 = vmatpush1.msra.mxu0 0.0
    %8356 = vmatprep.subr.mxu0 0.0
    %8357 = vmatpush1.msra.mxu0 0.0
    %8358 = vmatprep.subr.mxu0 0.0
    %8359 = vmatpush1.msra.mxu0 0.0
    %8360 = vmatprep.subr.mxu0 0.0
    %8361 = vmatpush1.msra.mxu0 0.0
    %8362 = vmatprep.subr.mxu0 0.0
    %8363 = vmatpush1.msra.mxu0 0.0
    %8364 = vmatprep.subr.mxu0 0.0
    %8365 = vmatpush1.msra.mxu0 0.0
    %8366 = vmatprep.subr.mxu0 0.0
    %8367 = vmatpush1.msra.mxu0 0.0
    %8368 = vmatprep.subr.mxu0 0.0
    %8369 = vmatpush1.msra.mxu0 0.0
    %8370 = vmatprep.subr.mxu0 0.0
    %8371 = vmatpush1.msra.mxu0 0.0
    %8372 = vmatprep.subr.mxu0 0.0
    %8373 = vmatpush1.msra.mxu0 0.0
    %8374 = vmatprep.subr.mxu0 0.0
    %8375 = vmatpush1.msra.mxu0 0.0
    %8376 = vmatprep.subr.mxu0 0.0
    %8377 = vmatpush1.msra.mxu0 0.0
    %8378 = vmatprep.subr.mxu0 0.0
    %8379 = vmatpush1.msra.mxu0 0.0
    %8380 = vmatprep.subr.mxu0 0.0
    %8381 = vmatpush1.msra.mxu0 0.0
    %8382 = vmatprep.subr.mxu0 0.0
    %8383 = vmatpush1.msra.mxu0 0.0
    %8384 = vmatprep.subr.mxu0 0.0
    %8385 = vmatpush1.msra.mxu0 0.0
    %8386 = vmatprep.subr.mxu0 0.0
    %8387 = vmatpush1.msra.mxu0 0.0
    %8388 = vmatprep.subr.mxu0 0.0
    %8389 = vmatpush1.msra.mxu0 0.0
    %8390 = vmatprep.subr.mxu0 0.0
    %8391 = vmatpush1.msra.mxu0 0.0
    %8392 = vmatprep.subr.mxu0 0.0
    %8393 = vmatpush1.msra.mxu0 0.0
    %8394 = vmatprep.subr.mxu0 0.0
    %8395 = vmatpush1.msra.mxu0 0.0
    %8396 = vmatprep.subr.mxu0 0.0
    %8397 = vmatpush1.msra.mxu0 0.0
    %8398 = vmatprep.mubr.f32.mxu0 0.0
    %8399 = vmatmul.mubr.f32.gmra.mrb[0].mxu0 %v1588
    %v8400 = vpop.f32.mrb[0].mxu0
    %v8401 = vadd.f32 0.0, %v8400
    %v8402 = vpop.f32.mrb[0].mxu0
    %8403 = vmatprep.mubr.f32.mxu0 0.0
    %8404 = vmatmul.mubr.f32.gmra.mrb[0].mxu0 %v1591
    %v8405 = vpop.f32.mrb[0].mxu0
    %v8406 = vadd.f32 0.0, %v8405
    %v8407 = vpop.f32.mrb[0].mxu0
    %8408 = vdwg.mxu0
    %v8409 = vsel %vm1998, %v8401, 0.0
    %v8410 = vsel %vm1998, %v8406, 0.0
    %v8411 = vadd.f32 %v8409, %v8410
    %v8412 = vrot.slane %v8411, 4
    %v8413 = vadd.f32 %v8411, %v8412
    %v8414 = vrot.slane %v8413, 2
    %v8415 = vadd.f32 %v8413, %v8414
    %v8416 = vrot.slane %v8415, 1
    %v8417 = vadd.f32 %v8415, %v8416
    %v8418 = vmul.f32 %v8417, %v1689
    %v8419 = vsub.f32 %v8401, %v8418
    %v8420 = vsub.f32 %v8406, %v8418
    %v8421 = vmul.f32 %v8419, %v8419
    %v8422 = vmul.f32 %v8420, %v8420
    %v8423 = vsel %vm1998, %v8421, 0.0
    %v8424 = vsel %vm1998, %v8422, 0.0
    %v8425 = vadd.f32 %v8423, %v8424
    %v8426 = vrot.slane %v8425, 4
    %v8427 = vadd.f32 %v8425, %v8426
    %v8428 = vrot.slane %v8427, 2
    %v8429 = vadd.f32 %v8427, %v8428
    %v8430 = vrot.slane %v8429, 1
    %v8431 = vadd.f32 %v8429, %v8430
    %v8432 = vmul.f32 %v8431, %v1689
    %v8433 = vadd.f32 %v8432, 1e-05
    %v8434 = vrsqrt.pop %v8433
    %v8435 = vmul.f32 %v8419, %v8434
    %v8436 = vmul.f32 %v8420, %v8434
    %v8437 = vlaneseq
    %v8438 = vshrl.u32 %v8437, 7
    %v8439 = vsub.s32 0, %v8438
    %v8440 = vrot.slane %v7736, %v8439
    %v8441 = vmul.f32 %v8435, %v8440
    %v8442 = vmul.f32 %v8436, %v8440
    %v8443 = vlaneseq
    %v8444 = vshrl.u32 %v8443, 7
    %v8445 = vsub.s32 0, %v8444
    %v8446 = vrot.slane %v7737, %v8445
    %v8447 = vadd.f32 %v8441, %v8446
    %v8448 = vadd.f32 %v8442, %v8446
    %vm8449 = vcmp.gt.f32.partialorder %v8447, 0.0
    %vm8450 = vcmp.gt.f32.partialorder %v8448, 0.0
    %v8451 = vmul.f32 %v8447, 1.442695
    %v8452 = vpow.pop %v8451
    %v8453 = vmul.f32 %v8448, 1.442695
    %v8454 = vpow.pop %v8453
    %v8455 = vsub.f32 %v8452, 1.0
    %v8456 = vsub.f32 %v8454, 1.0
    %v8457 = vsel %vm8449, %v8447, %v8455
    %v8458 = vsel %vm8450, %v8448, %v8456
    %s8459 = scalar_lea.vmem %s11, 504
    %v8460 = vld [vmem:[%s8459] sm:$0xff]
    %v8461 = vld [vmem:[%s8459 + $0x8] sm:$0xff]
    %v8462 = vld [vmem:[%s8459 + $0x10] sm:$0xff]
    %v8463 = vld [vmem:[%s8459 + $0x18] sm:$0xff]
    %v8464 = vld [vmem:[%s8459 + $0x20] sm:$0xff]
    %v8465 = vld [vmem:[%s8459 + $0x28] sm:$0xff]
    %v8466 = vld [vmem:[%s8459 + $0x30] sm:$0x3]
    %s8467 = scalar_lea.vmem %s12, 504
    %v8468 = vld [vmem:[%s8467] sm:$0xff]
    %v8469 = vld [vmem:[%s8467 + $0x8] sm:$0xff]
    %v8470 = vld [vmem:[%s8467 + $0x10] sm:$0xff]
    %v8471 = vld [vmem:[%s8467 + $0x18] sm:$0xff]
    %v8472 = vld [vmem:[%s8467 + $0x20] sm:$0xff]
    %v8473 = vld [vmem:[%s8467 + $0x28] sm:$0xff]
    %v8474 = vld [vmem:[%s8467 + $0x30] sm:$0x3]
    %s8475 = scalar_lea.vmem %s13, 504
    %v8476 = vld [vmem:[%s8475] sm:$0xff]
    %v8477 = vld [vmem:[%s8475 + $0x8] sm:$0xff]
    %v8478 = vld [vmem:[%s8475 + $0x10] sm:$0xff]
    %v8479 = vld [vmem:[%s8475 + $0x18] sm:$0xff]
    %v8480 = vld [vmem:[%s8475 + $0x20] sm:$0xff]
    %v8481 = vld [vmem:[%s8475 + $0x28] sm:$0xff]
    %v8482 = vld [vmem:[%s8475 + $0x30] sm:$0x3]
    %v8483 = vld [vmem:[%s14 + $0x9] sm:$0x1]
    %v8484 = vld [vmem:[%s15 + $0x9] sm:$0x1]
    %v8485 = vld [vmem:[%s16 + $0x9] sm:$0x1]
    %8486 = vmatprep.subr.mxu0 0.0
    %8487 = vmatpush1.msra.mxu0 %v8457
    %8488 = vmatprep.subr.mxu0 0.0
    %8489 = vmatpush1.msra.mxu0 %v8458
    %8490 = vmatprep.subr.mxu0 0.0
    %8491 = vmatpush1.msra.mxu0 0.0
    %8492 = vmatprep.subr.mxu0 0.0
    %8493 = vmatpush1.msra.mxu0 0.0
    %8494 = vmatprep.subr.mxu0 0.0
    %8495 = vmatpush1.msra.mxu0 0.0
    %8496 = vmatprep.subr.mxu0 0.0
    %8497 = vmatpush1.msra.mxu0 0.0
    %8498 = vmatprep.subr.mxu0 0.0
    %8499 = vmatpush1.msra.mxu0 0.0
    %8500 = vmatprep.subr.mxu0 0.0
    %8501 = vmatpush1.msra.mxu0 0.0
    %8502 = vmatprep.subr.mxu0 0.0
    %8503 = vmatpush1.msra.mxu0 0.0
    %8504 = vmatprep.subr.mxu0 0.0
    %8505 = vmatpush1.msra.mxu0 0.0
    %8506 = vmatprep.subr.mxu0 0.0
    %8507 = vmatpush1.msra.mxu0 0.0
    %8508 = vmatprep.subr.mxu0 0.0
    %8509 = vmatpush1.msra.mxu0 0.0
    %8510 = vmatprep.subr.mxu0 0.0
    %8511 = vmatpush1.msra.mxu0 0.0
    %8512 = vmatprep.subr.mxu0 0.0
    %8513 = vmatpush1.msra.mxu0 0.0
    %8514 = vmatprep.subr.mxu0 0.0
    %8515 = vmatpush1.msra.mxu0 0.0
    %8516 = vmatprep.subr.mxu0 0.0
    %8517 = vmatpush1.msra.mxu0 0.0
    %8518 = vmatprep.subr.mxu0 0.0
    %8519 = vmatpush1.msra.mxu0 0.0
    %8520 = vmatprep.subr.mxu0 0.0
    %8521 = vmatpush1.msra.mxu0 0.0
    %8522 = vmatprep.subr.mxu0 0.0
    %8523 = vmatpush1.msra.mxu0 0.0
    %8524 = vmatprep.subr.mxu0 0.0
    %8525 = vmatpush1.msra.mxu0 0.0
    %8526 = vmatprep.subr.mxu0 0.0
    %8527 = vmatpush1.msra.mxu0 0.0
    %8528 = vmatprep.subr.mxu0 0.0
    %8529 = vmatpush1.msra.mxu0 0.0
    %8530 = vmatprep.subr.mxu0 0.0
    %8531 = vmatpush1.msra.mxu0 0.0
    %8532 = vmatprep.subr.mxu0 0.0
    %8533 = vmatpush1.msra.mxu0 0.0
    %8534 = vmatprep.subr.mxu0 0.0
    %8535 = vmatpush1.msra.mxu0 0.0
    %8536 = vmatprep.subr.mxu0 0.0
    %8537 = vmatpush1.msra.mxu0 0.0
    %8538 = vmatprep.subr.mxu0 0.0
    %8539 = vmatpush1.msra.mxu0 0.0
    %8540 = vmatprep.subr.mxu0 0.0
    %8541 = vmatpush1.msra.mxu0 0.0
    %8542 = vmatprep.subr.mxu0 0.0
    %8543 = vmatpush1.msra.mxu0 0.0
    %8544 = vmatprep.subr.mxu0 0.0
    %8545 = vmatpush1.msra.mxu0 0.0
    %8546 = vmatprep.subr.mxu0 0.0
    %8547 = vmatpush1.msra.mxu0 0.0
    %8548 = vmatprep.subr.mxu0 0.0
    %8549 = vmatpush1.msra.mxu0 0.0
    %8550 = vmatprep.mubr.f32.mxu0 0.0
    %8551 = vmatmul.mubr.f32.gmra.mrb[0].mxu0 %v105
    %v8552 = vpop.f32.mrb[0].mxu0
    %v8553 = vadd.f32 0.0, %v8552
    %v8554 = vpop.f32.mrb[0].mxu0
    %8555 = vmatprep.mubr.f32.mxu0 0.0
    %8556 = vmatmul.mubr.f32.gmra.mrb[0].mxu0 %v108
    %v8557 = vpop.f32.mrb[0].mxu0
    %v8558 = vadd.f32 0.0, %v8557
    %v8559 = vpop.f32.mrb[0].mxu0
    %8560 = vmatprep.mubr.f32.mxu0 0.0
    %8561 = vmatmul.mubr.f32.gmra.mrb[0].mxu0 %v111
    %v8562 = vpop.f32.mrb[0].mxu0
    %v8563 = vadd.f32 0.0, %v8562
    %v8564 = vpop.f32.mrb[0].mxu0
    %8565 = vmatprep.mubr.f32.mxu0 0.0
    %8566 = vmatmul.mubr.f32.gmra.mrb[0].mxu0 %v114
    %v8567 = vpop.f32.mrb[0].mxu0
    %v8568 = vadd.f32 0.0, %v8567
    %v8569 = vpop.f32.mrb[0].mxu0
    %8570 = vmatprep.mubr.f32.mxu0 0.0
    %8571 = vmatmul.mubr.f32.gmra.mrb[0].mxu0 %v117
    %v8572 = vpop.f32.mrb[0].mxu0
    %v8573 = vadd.f32 0.0, %v8572
    %v8574 = vpop.f32.mrb[0].mxu0
    %8575 = vmatprep.mubr.f32.mxu0 0.0
    %8576 = vmatmul.mubr.f32.gmra.mrb[0].mxu0 %v120
    %v8577 = vpop.f32.mrb[0].mxu0
    %v8578 = vadd.f32 0.0, %v8577
    %v8579 = vpop.f32.mrb[0].mxu0
    %8580 = vdwg.mxu0
    %8581 = vmatprep.subr.mxu0 0.0
    %8582 = vmatpush1.msra.mxu0 %v8457
    %8583 = vmatprep.subr.mxu0 0.0
    %8584 = vmatpush1.msra.mxu0 %v8458
    %8585 = vmatprep.subr.mxu0 0.0
    %8586 = vmatpush1.msra.mxu0 0.0
    %8587 = vmatprep.subr.mxu0 0.0
    %8588 = vmatpush1.msra.mxu0 0.0
    %8589 = vmatprep.subr.mxu0 0.0
    %8590 = vmatpush1.msra.mxu0 0.0
    %8591 = vmatprep.subr.mxu0 0.0
    %8592 = vmatpush1.msra.mxu0 0.0
    %8593 = vmatprep.subr.mxu0 0.0
    %8594 = vmatpush1.msra.mxu0 0.0
    %8595 = vmatprep.subr.mxu0 0.0
    %8596 = vmatpush1.msra.mxu0 0.0
    %8597 = vmatprep.subr.mxu0 0.0
    %8598 = vmatpush1.msra.mxu0 0.0
    %8599 = vmatprep.subr.mxu0 0.0
    %8600 = vmatpush1.msra.mxu0 0.0
    %8601 = vmatprep.subr.mxu0 0.0
    %8602 = vmatpush1.msra.mxu0 0.0
    %8603 = vmatprep.subr.mxu0 0.0
    %8604 = vmatpush1.msra.mxu0 0.0
    %8605 = vmatprep.subr.mxu0 0.0
    %8606 = vmatpush1.msra.mxu0 0.0
    %8607 = vmatprep.subr.mxu0 0.0
    %8608 = vmatpush1.msra.mxu0 0.0
    %8609 = vmatprep.subr.mxu0 0.0
    %8610 = vmatpush1.msra.mxu0 0.0
    %8611 = vmatprep.subr.mxu0 0.0
    %8612 = vmatpush1.msra.mxu0 0.0
    %8613 = vmatprep.subr.mxu0 0.0
    %8614 = vmatpush1.msra.mxu0 0.0
    %8615 = vmatprep.subr.mxu0 0.0
    %8616 = vmatpush1.msra.mxu0 0.0
    %8617 = vmatprep.subr.mxu0 0.0
    %8618 = vmatpush1.msra.mxu0 0.0
    %8619 = vmatprep.subr.mxu0 0.0
    %8620 = vmatpush1.msra.mxu0 0.0
    %8621 = vmatprep.subr.mxu0 0.0
    %8622 = vmatpush1.msra.mxu0 0.0
    %8623 = vmatprep.subr.mxu0 0.0
    %8624 = vmatpush1.msra.mxu0 0.0
    %8625 = vmatprep.subr.mxu0 0.0
    %8626 = vmatpush1.msra.mxu0 0.0
    %8627 = vmatprep.subr.mxu0 0.0
    %8628 = vmatpush1.msra.mxu0 0.0
    %8629 = vmatprep.subr.mxu0 0.0
    %8630 = vmatpush1.msra.mxu0 0.0
    %8631 = vmatprep.subr.mxu0 0.0
    %8632 = vmatpush1.msra.mxu0 0.0
    %8633 = vmatprep.subr.mxu0 0.0
    %8634 = vmatpush1.msra.mxu0 0.0
    %8635 = vmatprep.subr.mxu0 0.0
    %8636 = vmatpush1.msra.mxu0 0.0
    %8637 = vmatprep.subr.mxu0 0.0
    %8638 = vmatpush1.msra.mxu0 0.0
    %8639 = vmatprep.subr.mxu0 0.0
    %8640 = vmatpush1.msra.mxu0 0.0
    %8641 = vmatprep.subr.mxu0 0.0
    %8642 = vmatpush1.msra.mxu0 0.0
    %8643 = vmatprep.subr.mxu0 0.0
    %8644 = vmatpush1.msra.mxu0 0.0
    %8645 = vmatprep.mubr.f32.mxu0 0.0
    %8646 = vmatmul.mubr.f32.gmra.mrb[0].mxu0 %v218
    %v8647 = vpop.f32.mrb[0].mxu0
    %v8648 = vadd.f32 0.0, %v8647
    %v8649 = vpop.f32.mrb[0].mxu0
    %8650 = vmatprep.mubr.f32.mxu0 0.0
    %8651 = vmatmul.mubr.f32.gmra.mrb[0].mxu0 %v221
    %v8652 = vpop.f32.mrb[0].mxu0
    %v8653 = vadd.f32 0.0, %v8652
    %v8654 = vpop.f32.mrb[0].mxu0
    %8655 = vmatprep.mubr.f32.mxu0 0.0
    %8656 = vmatmul.mubr.f32.gmra.mrb[0].mxu0 %v224
    %v8657 = vpop.f32.mrb[0].mxu0
    %v8658 = vadd.f32 0.0, %v8657
    %v8659 = vpop.f32.mrb[0].mxu0
    %8660 = vmatprep.mubr.f32.mxu0 0.0
    %8661 = vmatmul.mubr.f32.gmra.mrb[0].mxu0 %v227
    %v8662 = vpop.f32.mrb[0].mxu0
    %v8663 = vadd.f32 0.0, %v8662
    %v8664 = vpop.f32.mrb[0].mxu0
    %8665 = vmatprep.mubr.f32.mxu0 0.0
    %8666 = vmatmul.mubr.f32.gmra.mrb[0].mxu0 %v230
    %v8667 = vpop.f32.mrb[0].mxu0
    %v8668 = vadd.f32 0.0, %v8667
    %v8669 = vpop.f32.mrb[0].mxu0
    %8670 = vmatprep.mubr.f32.mxu0 0.0
    %8671 = vmatmul.mubr.f32.gmra.mrb[0].mxu0 %v233
    %v8672 = vpop.f32.mrb[0].mxu0
    %v8673 = vadd.f32 0.0, %v8672
    %v8674 = vpop.f32.mrb[0].mxu0
    %8675 = vdwg.mxu0
    %v8677 = vsel %vm1998, %v8648, 0
    %v8680 = vsel %vm1998, %v8653, 0
    %v8683 = vsel %vm1998, %v8658, 0
    %v8686 = vsel %vm1998, %v8663, 0
    %v8689 = vsel %vm1998, %v8668, 0
    %v8692 = vsel %vm1998, %v8673, 0
    %v8695 = vsel %vm2017, %v8474, 0
    %8697 = vmatprep.subr.mxu0 0.0
    %8698 = vmatpush1.msra.mxu0 %v8468
    %8699 = vmatprep.subr.mxu0 0.0
    %8700 = vmatpush1.msra.mxu0 %v8469
    %8701 = vmatprep.subr.mxu0 0.0
    %8702 = vmatpush1.msra.mxu0 %v8470
    %8703 = vmatprep.subr.mxu0 0.0
    %8704 = vmatpush1.msra.mxu0 %v8471
    %8705 = vmatprep.subr.mxu0 0.0
    %8706 = vmatpush1.msra.mxu0 %v8472
    %8707 = vmatprep.subr.mxu0 0.0
    %8708 = vmatpush1.msra.mxu0 %v8473
    %8709 = vmatprep.subr.mxu0 0.0
    %8710 = vmatpush1.msra.mxu0 %v8695
    %8711 = vmatprep.subr.mxu0 0.0
    %8712 = vmatpush1.msra.mxu0 0.0
    %8713 = vmatprep.subr.mxu0 0.0
    %8714 = vmatpush1.msra.mxu0 0.0
    %8715 = vmatprep.subr.mxu0 0.0
    %8716 = vmatpush1.msra.mxu0 0.0
    %8717 = vmatprep.subr.mxu0 0.0
    %8718 = vmatpush1.msra.mxu0 0.0
    %8719 = vmatprep.subr.mxu0 0.0
    %8720 = vmatpush1.msra.mxu0 0.0
    %8721 = vmatprep.subr.mxu0 0.0
    %8722 = vmatpush1.msra.mxu0 0.0
    %8723 = vmatprep.subr.mxu0 0.0
    %8724 = vmatpush1.msra.mxu0 0.0
    %8725 = vmatprep.subr.mxu0 0.0
    %8726 = vmatpush1.msra.mxu0 0.0
    %8727 = vmatprep.subr.mxu0 0.0
    %8728 = vmatpush1.msra.mxu0 0.0
    %8729 = vmatprep.subr.mxu0 0.0
    %8730 = vmatpush1.msra.mxu0 0.0
    %8731 = vmatprep.subr.mxu0 0.0
    %8732 = vmatpush1.msra.mxu0 0.0
    %8733 = vmatprep.subr.mxu0 0.0
    %8734 = vmatpush1.msra.mxu0 0.0
    %8735 = vmatprep.subr.mxu0 0.0
    %8736 = vmatpush1.msra.mxu0 0.0
    %8737 = vmatprep.subr.mxu0 0.0
    %8738 = vmatpush1.msra.mxu0 0.0
    %8739 = vmatprep.subr.mxu0 0.0
    %8740 = vmatpush1.msra.mxu0 0.0
    %8741 = vmatprep.subr.mxu0 0.0
    %8742 = vmatpush1.msra.mxu0 0.0
    %8743 = vmatprep.subr.mxu0 0.0
    %8744 = vmatpush1.msra.mxu0 0.0
    %8745 = vmatprep.subr.mxu0 0.0
    %8746 = vmatpush1.msra.mxu0 0.0
    %8747 = vmatprep.subr.mxu0 0.0
    %8748 = vmatpush1.msra.mxu0 0.0
    %8749 = vmatprep.subr.mxu0 0.0
    %8750 = vmatpush1.msra.mxu0 0.0
    %8751 = vmatprep.subr.mxu0 0.0
    %8752 = vmatpush1.msra.mxu0 0.0
    %8753 = vmatprep.subr.mxu0 0.0
    %8754 = vmatpush1.msra.mxu0 0.0
    %8755 = vmatprep.subr.mxu0 0.0
    %8756 = vmatpush1.msra.mxu0 0.0
    %8757 = vmatprep.subr.mxu0 0.0
    %8758 = vmatpush1.msra.mxu0 0.0
    %8759 = vmatprep.subr.mxu0 0.0
    %8760 = vmatpush1.msra.mxu0 0.0
    %8761 = vmatprep.mubr.f32.mxu0 0.0
    %8762 = vmatmul.mubr.f32.gmra.mrb[0].mxu0 %v8677
    %v8763 = vpop.f32.mrb[0].mxu0
    %v8764 = vadd.f32 0.0, %v8763
    %v8765 = vpop.f32.mrb[0].mxu0
    %8766 = vmatprep.mubr.f32.mxu0 0.0
    %8767 = vmatmul.mubr.f32.gmra.mrb[0].mxu0 %v8680
    %v8768 = vpop.f32.mrb[0].mxu0
    %v8769 = vadd.f32 0.0, %v8768
    %v8770 = vpop.f32.mrb[0].mxu0
    %8771 = vmatprep.mubr.f32.mxu0 0.0
    %8772 = vmatmul.mubr.f32.gmra.mrb[0].mxu0 %v8683
    %v8773 = vpop.f32.mrb[0].mxu0
    %v8774 = vadd.f32 0.0, %v8773
    %v8775 = vpop.f32.mrb[0].mxu0
    %8776 = vmatprep.mubr.f32.mxu0 0.0
    %8777 = vmatmul.mubr.f32.gmra.mrb[0].mxu0 %v8686
    %v8778 = vpop.f32.mrb[0].mxu0
    %v8779 = vadd.f32 0.0, %v8778
    %v8780 = vpop.f32.mrb[0].mxu0
    %8781 = vmatprep.mubr.f32.mxu0 0.0
    %8782 = vmatmul.mubr.f32.gmra.mrb[0].mxu0 %v8689
    %v8783 = vpop.f32.mrb[0].mxu0
    %v8784 = vadd.f32 0.0, %v8783
    %v8785 = vpop.f32.mrb[0].mxu0
    %8786 = vmatprep.mubr.f32.mxu0 0.0
    %8787 = vmatmul.mubr.f32.gmra.mrb[0].mxu0 %v8692
    %v8788 = vpop.f32.mrb[0].mxu0
    %v8789 = vadd.f32 0.0, %v8788
    %v8790 = vpop.f32.mrb[0].mxu0
    %8791 = vdwg.mxu0
    %v8793 = vsel %vm1998, %v8553, 0
    %v8796 = vsel %vm1998, %v8558, 0
    %v8799 = vsel %vm1998, %v8563, 0
    %v8802 = vsel %vm1998, %v8568, 0
    %v8805 = vsel %vm1998, %v8573, 0
    %v8808 = vsel %vm1998, %v8578, 0
    %v8811 = vsel %vm2017, %v8466, 0
    %8813 = vmatprep.subr.mxu0 0.0
    %8814 = vmatpush1.msra.mxu0 %v8460
    %8815 = vmatprep.subr.mxu0 0.0
    %8816 = vmatpush1.msra.mxu0 %v8461
    %8817 = vmatprep.subr.mxu0 0.0
    %8818 = vmatpush1.msra.mxu0 %v8462
    %8819 = vmatprep.subr.mxu0 0.0
    %8820 = vmatpush1.msra.mxu0 %v8463
    %8821 = vmatprep.subr.mxu0 0.0
    %8822 = vmatpush1.msra.mxu0 %v8464
    %8823 = vmatprep.subr.mxu0 0.0
    %8824 = vmatpush1.msra.mxu0 %v8465
    %8825 = vmatprep.subr.mxu0 0.0
    %8826 = vmatpush1.msra.mxu0 %v8811
    %8827 = vmatprep.subr.mxu0 0.0
    %8828 = vmatpush1.msra.mxu0 0.0
    %8829 = vmatprep.subr.mxu0 0.0
    %8830 = vmatpush1.msra.mxu0 0.0
    %8831 = vmatprep.subr.mxu0 0.0
    %8832 = vmatpush1.msra.mxu0 0.0
    %8833 = vmatprep.subr.mxu0 0.0
    %8834 = vmatpush1.msra.mxu0 0.0
    %8835 = vmatprep.subr.mxu0 0.0
    %8836 = vmatpush1.msra.mxu0 0.0
    %8837 = vmatprep.subr.mxu0 0.0
    %8838 = vmatpush1.msra.mxu0 0.0
    %8839 = vmatprep.subr.mxu0 0.0
    %8840 = vmatpush1.msra.mxu0 0.0
    %8841 = vmatprep.subr.mxu0 0.0
    %8842 = vmatpush1.msra.mxu0 0.0
    %8843 = vmatprep.subr.mxu0 0.0
    %8844 = vmatpush1.msra.mxu0 0.0
    %8845 = vmatprep.subr.mxu0 0.0
    %8846 = vmatpush1.msra.mxu0 0.0
    %8847 = vmatprep.subr.mxu0 0.0
    %8848 = vmatpush1.msra.mxu0 0.0
    %8849 = vmatprep.subr.mxu0 0.0
    %8850 = vmatpush1.msra.mxu0 0.0
    %8851 = vmatprep.subr.mxu0 0.0
    %8852 = vmatpush1.msra.mxu0 0.0
    %8853 = vmatprep.subr.mxu0 0.0
    %8854 = vmatpush1.msra.mxu0 0.0
    %8855 = vmatprep.subr.mxu0 0.0
    %8856 = vmatpush1.msra.mxu0 0.0
    %8857 = vmatprep.subr.mxu0 0.0
    %8858 = vmatpush1.msra.mxu0 0.0
    %8859 = vmatprep.subr.mxu0 0.0
    %8860 = vmatpush1.msra.mxu0 0.0
    %8861 = vmatprep.subr.mxu0 0.0
    %8862 = vmatpush1.msra.mxu0 0.0
    %8863 = vmatprep.subr.mxu0 0.0
    %8864 = vmatpush1.msra.mxu0 0.0
    %8865 = vmatprep.subr.mxu0 0.0
    %8866 = vmatpush1.msra.mxu0 0.0
    %8867 = vmatprep.subr.mxu0 0.0
    %8868 = vmatpush1.msra.mxu0 0.0
    %8869 = vmatprep.subr.mxu0 0.0
    %8870 = vmatpush1.msra.mxu0 0.0
    %8871 = vmatprep.subr.mxu0 0.0
    %8872 = vmatpush1.msra.mxu0 0.0
    %8873 = vmatprep.subr.mxu0 0.0
    %8874 = vmatpush1.msra.mxu0 0.0
    %8875 = vmatprep.subr.mxu0 0.0
    %8876 = vmatpush1.msra.mxu0 0.0
    %8877 = vmatprep.mubr.f32.mxu0 0.0
    %8878 = vmatmul.mubr.f32.gmra.mrb[0].mxu0 %v8793
    %v8879 = vpop.f32.mrb[0].mxu0
    %v8880 = vadd.f32 %v8764, %v8879
    %v8881 = vpop.f32.mrb[0].mxu0
    %8882 = vmatprep.mubr.f32.mxu0 0.0
    %8883 = vmatmul.mubr.f32.gmra.mrb[0].mxu0 %v8796
    %v8884 = vpop.f32.mrb[0].mxu0
    %v8885 = vadd.f32 %v8769, %v8884
    %v8886 = vpop.f32.mrb[0].mxu0
    %8887 = vmatprep.mubr.f32.mxu0 0.0
    %8888 = vmatmul.mubr.f32.gmra.mrb[0].mxu0 %v8799
    %v8889 = vpop.f32.mrb[0].mxu0
    %v8890 = vadd.f32 %v8774, %v8889
    %v8891 = vpop.f32.mrb[0].mxu0
    %8892 = vmatprep.mubr.f32.mxu0 0.0
    %8893 = vmatmul.mubr.f32.gmra.mrb[0].mxu0 %v8802
    %v8894 = vpop.f32.mrb[0].mxu0
    %v8895 = vadd.f32 %v8779, %v8894
    %v8896 = vpop.f32.mrb[0].mxu0
    %8897 = vmatprep.mubr.f32.mxu0 0.0
    %8898 = vmatmul.mubr.f32.gmra.mrb[0].mxu0 %v8805
    %v8899 = vpop.f32.mrb[0].mxu0
    %v8900 = vadd.f32 %v8784, %v8899
    %v8901 = vpop.f32.mrb[0].mxu0
    %8902 = vmatprep.mubr.f32.mxu0 0.0
    %8903 = vmatmul.mubr.f32.gmra.mrb[0].mxu0 %v8808
    %v8904 = vpop.f32.mrb[0].mxu0
    %v8905 = vadd.f32 %v8789, %v8904
    %v8906 = vpop.f32.mrb[0].mxu0
    %8907 = vdwg.mxu0
    %8914 = vrot.lane.b32.xlu0 %v8328, 78
    %v8915 = vpop.permute.xlu0 %8914
    %8916 = vrot.lane.b32.xlu0 %v8329, 78
    %v8917 = vpop.permute.xlu0 %8916
    %8918 = vrot.lane.b32.xlu0 %v8330, 78
    %v8919 = vpop.permute.xlu0 %8918
    %8920 = vrot.lane.b32.xlu0 %v8331, 78
    %v8921 = vpop.permute.xlu0 %8920
    %8922 = vrot.lane.b32.xlu0 %v8332, 78
    %v8923 = vpop.permute.xlu0 %8922
    %8924 = vrot.lane.b32.xlu0 %v8333, 78
    %v8925 = vpop.permute.xlu0 %8924
    %v8926 = vsel %vm1998, %v8915, 0
    %v8928 = vsel %vm1998, %v8917, 0
    %v8930 = vsel %vm1998, %v8919, 0
    %v8932 = vsel %vm1998, %v8921, 0
    %v8934 = vsel %vm1998, %v8923, 0
    %v8936 = vsel %vm1998, %v8925, 0
    %v8939 = vsel %vm2017, %v8482, 0
    %8941 = vmatprep.subr.mxu0 0.0
    %8942 = vmatpush1.msra.mxu0 %v8476
    %8943 = vmatprep.subr.mxu0 0.0
    %8944 = vmatpush1.msra.mxu0 %v8477
    %8945 = vmatprep.subr.mxu0 0.0
    %8946 = vmatpush1.msra.mxu0 %v8478
    %8947 = vmatprep.subr.mxu0 0.0
    %8948 = vmatpush1.msra.mxu0 %v8479
    %8949 = vmatprep.subr.mxu0 0.0
    %8950 = vmatpush1.msra.mxu0 %v8480
    %8951 = vmatprep.subr.mxu0 0.0
    %8952 = vmatpush1.msra.mxu0 %v8481
    %8953 = vmatprep.subr.mxu0 0.0
    %8954 = vmatpush1.msra.mxu0 %v8939
    %8955 = vmatprep.subr.mxu0 0.0
    %8956 = vmatpush1.msra.mxu0 0.0
    %8957 = vmatprep.subr.mxu0 0.0
    %8958 = vmatpush1.msra.mxu0 0.0
    %8959 = vmatprep.subr.mxu0 0.0
    %8960 = vmatpush1.msra.mxu0 0.0
    %8961 = vmatprep.subr.mxu0 0.0
    %8962 = vmatpush1.msra.mxu0 0.0
    %8963 = vmatprep.subr.mxu0 0.0
    %8964 = vmatpush1.msra.mxu0 0.0
    %8965 = vmatprep.subr.mxu0 0.0
    %8966 = vmatpush1.msra.mxu0 0.0
    %8967 = vmatprep.subr.mxu0 0.0
    %8968 = vmatpush1.msra.mxu0 0.0
    %8969 = vmatprep.subr.mxu0 0.0
    %8970 = vmatpush1.msra.mxu0 0.0
    %8971 = vmatprep.subr.mxu0 0.0
    %8972 = vmatpush1.msra.mxu0 0.0
    %8973 = vmatprep.subr.mxu0 0.0
    %8974 = vmatpush1.msra.mxu0 0.0
    %8975 = vmatprep.subr.mxu0 0.0
    %8976 = vmatpush1.msra.mxu0 0.0
    %8977 = vmatprep.subr.mxu0 0.0
    %8978 = vmatpush1.msra.mxu0 0.0
    %8979 = vmatprep.subr.mxu0 0.0
    %8980 = vmatpush1.msra.mxu0 0.0
    %8981 = vmatprep.subr.mxu0 0.0
    %8982 = vmatpush1.msra.mxu0 0.0
    %8983 = vmatprep.subr.mxu0 0.0
    %8984 = vmatpush1.msra.mxu0 0.0
    %8985 = vmatprep.subr.mxu0 0.0
    %8986 = vmatpush1.msra.mxu0 0.0
    %8987 = vmatprep.subr.mxu0 0.0
    %8988 = vmatpush1.msra.mxu0 0.0
    %8989 = vmatprep.subr.mxu0 0.0
    %8990 = vmatpush1.msra.mxu0 0.0
    %8991 = vmatprep.subr.mxu0 0.0
    %8992 = vmatpush1.msra.mxu0 0.0
    %8993 = vmatprep.subr.mxu0 0.0
    %8994 = vmatpush1.msra.mxu0 0.0
    %8995 = vmatprep.subr.mxu0 0.0
    %8996 = vmatpush1.msra.mxu0 0.0
    %8997 = vmatprep.subr.mxu0 0.0
    %8998 = vmatpush1.msra.mxu0 0.0
    %8999 = vmatprep.subr.mxu0 0.0
    %9000 = vmatpush1.msra.mxu0 0.0
    %9001 = vmatprep.subr.mxu0 0.0
    %9002 = vmatpush1.msra.mxu0 0.0
    %9003 = vmatprep.subr.mxu0 0.0
    %9004 = vmatpush1.msra.mxu0 0.0
    %9005 = vmatprep.mubr.f32.mxu0 0.0
    %9006 = vmatmul.mubr.f32.gmra.mrb[0].mxu0 %v8926
    %v9007 = vpop.f32.mrb[0].mxu0
    %v9008 = vadd.f32 0.0, %v9007
    %v9009 = vpop.f32.mrb[0].mxu0
    %9010 = vmatprep.mubr.f32.mxu0 0.0
    %9011 = vmatmul.mubr.f32.gmra.mrb[0].mxu0 %v8928
    %v9012 = vpop.f32.mrb[0].mxu0
    %v9013 = vadd.f32 0.0, %v9012
    %v9014 = vpop.f32.mrb[0].mxu0
    %9015 = vmatprep.mubr.f32.mxu0 0.0
    %9016 = vmatmul.mubr.f32.gmra.mrb[0].mxu0 %v8930
    %v9017 = vpop.f32.mrb[0].mxu0
    %v9018 = vadd.f32 0.0, %v9017
    %v9019 = vpop.f32.mrb[0].mxu0
    %9020 = vmatprep.mubr.f32.mxu0 0.0
    %9021 = vmatmul.mubr.f32.gmra.mrb[0].mxu0 %v8932
    %v9022 = vpop.f32.mrb[0].mxu0
    %v9023 = vadd.f32 0.0, %v9022
    %v9024 = vpop.f32.mrb[0].mxu0
    %9025 = vmatprep.mubr.f32.mxu0 0.0
    %9026 = vmatmul.mubr.f32.gmra.mrb[0].mxu0 %v8934
    %v9027 = vpop.f32.mrb[0].mxu0
    %v9028 = vadd.f32 0.0, %v9027
    %v9029 = vpop.f32.mrb[0].mxu0
    %9030 = vmatprep.mubr.f32.mxu0 0.0
    %9031 = vmatmul.mubr.f32.gmra.mrb[0].mxu0 %v8936
    %v9032 = vpop.f32.mrb[0].mxu0
    %v9033 = vadd.f32 0.0, %v9032
    %v9034 = vpop.f32.mrb[0].mxu0
    %9035 = vdwg.mxu0
    %v9036 = vadd.f32 %v8880, %v9008
    %v9037 = vadd.f32 %v8885, %v9013
    %v9038 = vadd.f32 %v8890, %v9018
    %v9039 = vadd.f32 %v8895, %v9023
    %v9040 = vadd.f32 %v8900, %v9028
    %v9041 = vadd.f32 %v8905, %v9033
    %v9042 = vlaneseq
    %v9043 = vshrl.u32 %v9042, 7
    %v9044 = vsub.s32 0, %v9043
    %v9045 = vrot.slane %v8483, %v9044
    %v9046 = vadd.f32 %v9036, %v9045
    %v9047 = vadd.f32 %v9037, %v9045
    %v9048 = vadd.f32 %v9038, %v9045
    %v9049 = vadd.f32 %v9039, %v9045
    %v9050 = vadd.f32 %v9040, %v9045
    %v9051 = vadd.f32 %v9041, %v9045
    %9052 = vmatprep.subr.mxu0 0.0
    %9053 = vmatpush1.msra.mxu0 %v9046
    %9054 = vmatprep.subr.mxu0 0.0
    %9055 = vmatpush1.msra.mxu0 %v9047
    %9056 = vmatprep.subr.mxu0 0.0
    %9057 = vmatpush1.msra.mxu0 %v9048
    %9058 = vmatprep.subr.mxu0 0.0
    %9059 = vmatpush1.msra.mxu0 %v9049
    %9060 = vmatprep.subr.mxu0 0.0
    %9061 = vmatpush1.msra.mxu0 %v9050
    %9062 = vmatprep.subr.mxu0 0.0
    %9063 = vmatpush1.msra.mxu0 %v9051
    %9064 = vmatprep.subr.mxu0 0.0
    %9065 = vmatpush1.msra.mxu0 0.0
    %9066 = vmatprep.subr.mxu0 0.0
    %9067 = vmatpush1.msra.mxu0 0.0
    %9068 = vmatprep.subr.mxu0 0.0
    %9069 = vmatpush1.msra.mxu0 0.0
    %9070 = vmatprep.subr.mxu0 0.0
    %9071 = vmatpush1.msra.mxu0 0.0
    %9072 = vmatprep.subr.mxu0 0.0
    %9073 = vmatpush1.msra.mxu0 0.0
    %9074 = vmatprep.subr.mxu0 0.0
    %9075 = vmatpush1.msra.mxu0 0.0
    %9076 = vmatprep.subr.mxu0 0.0
    %9077 = vmatpush1.msra.mxu0 0.0
    %9078 = vmatprep.subr.mxu0 0.0
    %9079 = vmatpush1.msra.mxu0 0.0
    %9080 = vmatprep.subr.mxu0 0.0
    %9081 = vmatpush1.msra.mxu0 0.0
    %9082 = vmatprep.subr.mxu0 0.0
    %9083 = vmatpush1.msra.mxu0 0.0
    %9084 = vmatprep.subr.mxu0 0.0
    %9085 = vmatpush1.msra.mxu0 0.0
    %9086 = vmatprep.subr.mxu0 0.0
    %9087 = vmatpush1.msra.mxu0 0.0
    %9088 = vmatprep.subr.mxu0 0.0
    %9089 = vmatpush1.msra.mxu0 0.0
    %9090 = vmatprep.subr.mxu0 0.0
    %9091 = vmatpush1.msra.mxu0 0.0
    %9092 = vmatprep.subr.mxu0 0.0
    %9093 = vmatpush1.msra.mxu0 0.0
    %9094 = vmatprep.subr.mxu0 0.0
    %9095 = vmatpush1.msra.mxu0 0.0
    %9096 = vmatprep.subr.mxu0 0.0
    %9097 = vmatpush1.msra.mxu0 0.0
    %9098 = vmatprep.subr.mxu0 0.0
    %9099 = vmatpush1.msra.mxu0 0.0
    %9100 = vmatprep.subr.mxu0 0.0
    %9101 = vmatpush1.msra.mxu0 0.0
    %9102 = vmatprep.subr.mxu0 0.0
    %9103 = vmatpush1.msra.mxu0 0.0
    %9104 = vmatprep.subr.mxu0 0.0
    %9105 = vmatpush1.msra.mxu0 0.0
    %9106 = vmatprep.subr.mxu0 0.0
    %9107 = vmatpush1.msra.mxu0 0.0
    %9108 = vmatprep.subr.mxu0 0.0
    %9109 = vmatpush1.msra.mxu0 0.0
    %9110 = vmatprep.subr.mxu0 0.0
    %9111 = vmatpush1.msra.mxu0 0.0
    %9112 = vmatprep.subr.mxu0 0.0
    %9113 = vmatpush1.msra.mxu0 0.0
    %9114 = vmatprep.subr.mxu0 0.0
    %9115 = vmatpush1.msra.mxu0 0.0
    %9116 = vmatprep.mubr.f32.mxu0 0.0
    %9117 = vmatmul.mubr.f32.gmra.mrb[0].mxu0 %v1588
    %v9118 = vpop.f32.mrb[0].mxu0
    %v9119 = vadd.f32 0.0, %v9118
    %v9120 = vpop.f32.mrb[0].mxu0
    %9121 = vmatprep.mubr.f32.mxu0 0.0
    %9122 = vmatmul.mubr.f32.gmra.mrb[0].mxu0 %v1591
    %v9123 = vpop.f32.mrb[0].mxu0
    %v9124 = vadd.f32 0.0, %v9123
    %v9125 = vpop.f32.mrb[0].mxu0
    %9126 = vdwg.mxu0
    %v9127 = vsel %vm1998, %v9119, 0.0
    %v9128 = vsel %vm1998, %v9124, 0.0
    %v9129 = vadd.f32 %v9127, %v9128
    %v9130 = vrot.slane %v9129, 4
    %v9131 = vadd.f32 %v9129, %v9130
    %v9132 = vrot.slane %v9131, 2
    %v9133 = vadd.f32 %v9131, %v9132
    %v9134 = vrot.slane %v9133, 1
    %v9135 = vadd.f32 %v9133, %v9134
    %v9136 = vmul.f32 %v9135, %v1689
    %v9137 = vsub.f32 %v9119, %v9136
    %v9138 = vsub.f32 %v9124, %v9136
    %v9139 = vmul.f32 %v9137, %v9137
    %v9140 = vmul.f32 %v9138, %v9138
    %v9141 = vsel %vm1998, %v9139, 0.0
    %v9142 = vsel %vm1998, %v9140, 0.0
    %v9143 = vadd.f32 %v9141, %v9142
    %v9144 = vrot.slane %v9143, 4
    %v9145 = vadd.f32 %v9143, %v9144
    %v9146 = vrot.slane %v9145, 2
    %v9147 = vadd.f32 %v9145, %v9146
    %v9148 = vrot.slane %v9147, 1
    %v9149 = vadd.f32 %v9147, %v9148
    %v9150 = vmul.f32 %v9149, %v1689
    %v9151 = vadd.f32 %v9150, 1e-05
    %v9152 = vrsqrt.pop %v9151
    %v9153 = vmul.f32 %v9137, %v9152
    %v9154 = vmul.f32 %v9138, %v9152
    %v9155 = vlaneseq
    %v9156 = vshrl.u32 %v9155, 7
    %v9157 = vsub.s32 0, %v9156
    %v9158 = vrot.slane %v8484, %v9157
    %v9159 = vmul.f32 %v9153, %v9158
    %v9160 = vmul.f32 %v9154, %v9158
    %v9161 = vlaneseq
    %v9162 = vshrl.u32 %v9161, 7
    %v9163 = vsub.s32 0, %v9162
    %v9164 = vrot.slane %v8485, %v9163
    %v9165 = vadd.f32 %v9159, %v9164
    %v9166 = vadd.f32 %v9160, %v9164
    %vm9167 = vcmp.gt.f32.partialorder %v9165, 0.0
    %vm9168 = vcmp.gt.f32.partialorder %v9166, 0.0
    %v9169 = vmul.f32 %v9165, 1.442695
    %v9170 = vpow.pop %v9169
    %v9171 = vmul.f32 %v9166, 1.442695
    %v9172 = vpow.pop %v9171
    %v9173 = vsub.f32 %v9170, 1.0
    %v9174 = vsub.f32 %v9172, 1.0
    %v9175 = vsel %vm9167, %v9165, %v9173
    %v9176 = vsel %vm9168, %v9166, %v9174
    %v9177 = vld [vmem:[%s18] sm:$0x3]
    %v9178 = vld [vmem:[%s17] sm:$0xff]
    %v9179 = vld [vmem:[%s17 + $0x8] sm:$0xff]
    %v9180 = vld [vmem:[%s17 + $0x10] sm:$0xff]
    %v9181 = vld [vmem:[%s17 + $0x18] sm:$0xff]
    %v9182 = vld [vmem:[%s17 + $0x20] sm:$0xff]
    %v9183 = vld [vmem:[%s17 + $0x28] sm:$0xff]
    %v9184 = vld [vmem:[%s17 + $0x30] sm:$0xff]
    %v9185 = vld [vmem:[%s17 + $0x38] sm:$0xff]
    %v9186 = vld [vmem:[%s17 + $0x40] sm:$0xff]
    %v9187 = vld [vmem:[%s17 + $0x48] sm:$0xff]
    %v9188 = vld [vmem:[%s17 + $0x50] sm:$0xff]
    %v9189 = vld [vmem:[%s17 + $0x58] sm:$0xff]
    %v9190 = vld [vmem:[%s17 + $0x60] sm:$0x3]
    %v9191 = vld [vmem:[%s17 + $0x68] sm:$0x3]
    %v9192 = vsel %vm1998, %v1772, 0
    %v9194 = vsel %vm1998, %v1774, 0
    %v9197 = vsel %vm2017, %v9190, 0
    %v9200 = vsel %vm2017, %v9191, 0
    %9202 = vmatprep.subr.mxu0 %v9179
    %9203 = vmatpush1.msra.mxu0 %v9178
    %9204 = vmatprep.subr.mxu0 %v9181
    %9205 = vmatpush1.msra.mxu0 %v9180
    %9206 = vmatprep.subr.mxu0 %v9183
    %9207 = vmatpush1.msra.mxu0 %v9182
    %9208 = vmatprep.subr.mxu0 %v9185
    %9209 = vmatpush1.msra.mxu0 %v9184
    %9210 = vmatprep.subr.mxu0 %v9187
    %9211 = vmatpush1.msra.mxu0 %v9186
    %9212 = vmatprep.subr.mxu0 %v9189
    %9213 = vmatpush1.msra.mxu0 %v9188
    %9214 = vmatprep.subr.mxu0 %v9200
    %9215 = vmatpush1.msra.mxu0 %v9197
    %9216 = vmatprep.subr.mxu0 0.0
    %9217 = vmatpush1.msra.mxu0 0.0
    %9218 = vmatprep.subr.mxu0 0.0
    %9219 = vmatpush1.msra.mxu0 0.0
    %9220 = vmatprep.subr.mxu0 0.0
    %9221 = vmatpush1.msra.mxu0 0.0
    %9222 = vmatprep.subr.mxu0 0.0
    %9223 = vmatpush1.msra.mxu0 0.0
    %9224 = vmatprep.subr.mxu0 0.0
    %9225 = vmatpush1.msra.mxu0 0.0
    %9226 = vmatprep.subr.mxu0 0.0
    %9227 = vmatpush1.msra.mxu0 0.0
    %9228 = vmatprep.subr.mxu0 0.0
    %9229 = vmatpush1.msra.mxu0 0.0
    %9230 = vmatprep.subr.mxu0 0.0
    %9231 = vmatpush1.msra.mxu0 0.0
    %9232 = vmatprep.subr.mxu0 0.0
    %9233 = vmatpush1.msra.mxu0 0.0
    %9234 = vmatprep.subr.mxu0 0.0
    %9235 = vmatpush1.msra.mxu0 0.0
    %9236 = vmatprep.subr.mxu0 0.0
    %9237 = vmatpush1.msra.mxu0 0.0
    %9238 = vmatprep.subr.mxu0 0.0
    %9239 = vmatpush1.msra.mxu0 0.0
    %9240 = vmatprep.subr.mxu0 0.0
    %9241 = vmatpush1.msra.mxu0 0.0
    %9242 = vmatprep.subr.mxu0 0.0
    %9243 = vmatpush1.msra.mxu0 0.0
    %9244 = vmatprep.subr.mxu0 0.0
    %9245 = vmatpush1.msra.mxu0 0.0
    %9246 = vmatprep.subr.mxu0 0.0
    %9247 = vmatpush1.msra.mxu0 0.0
    %9248 = vmatprep.subr.mxu0 0.0
    %9249 = vmatpush1.msra.mxu0 0.0
    %9250 = vmatprep.subr.mxu0 0.0
    %9251 = vmatpush1.msra.mxu0 0.0
    %9252 = vmatprep.subr.mxu0 0.0
    %9253 = vmatpush1.msra.mxu0 0.0
    %9254 = vmatprep.subr.mxu0 0.0
    %9255 = vmatpush1.msra.mxu0 0.0
    %9256 = vmatprep.subr.mxu0 0.0
    %9257 = vmatpush1.msra.mxu0 0.0
    %9258 = vmatprep.subr.mxu0 0.0
    %9259 = vmatpush1.msra.mxu0 0.0
    %9260 = vmatprep.subr.mxu0 0.0
    %9261 = vmatpush1.msra.mxu0 0.0
    %9262 = vmatprep.subr.mxu0 0.0
    %9263 = vmatpush1.msra.mxu0 0.0
    %9264 = vmatprep.subr.mxu0 0.0
    %9265 = vmatpush1.msra.mxu0 0.0
    %9266 = vmatprep.mubr.f32.mxu0 0.0
    %9267 = vmatmul.mubr.f32.gmra.mrb[0].mxu0 %v9192
    %v9268 = vpop.f32.mrb[0].mxu0
    %v9269 = vadd.f32 0.0, %v9268
    %v9270 = vpop.f32.mrb[0].mxu0
    %v9271 = vadd.f32 0.0, %v9270
    %9272 = vmatprep.mubr.f32.mxu0 0.0
    %9273 = vmatmul.mubr.f32.gmra.mrb[0].mxu0 %v9194
    %v9274 = vpop.f32.mrb[0].mxu0
    %v9275 = vadd.f32 0.0, %v9274
    %v9276 = vpop.f32.mrb[0].mxu0
    %v9277 = vadd.f32 0.0, %v9276
    %9278 = vdwg.mxu0
    %v9280 = vlaneseq
    %v9281 = vshrl.u32 %v9280, 7
    %v9282 = vsub.s32 0, %v9281
    %v9283 = vrot.slane %v9177, %v9282
    %v9284 = vlaneseq
    %v9285 = vshrl.u32 %v9284, 7
    %v9286 = vsub.s32 1, %v9285
    %v9287 = vrot.slane %v9177, %v9286
    %v9290 = vadd.f32 %v9283, %v9269
    %v9291 = vadd.f32 %v9287, %v9271
    %v9292 = vadd.f32 %v9283, %v9275
    %v9293 = vadd.f32 %v9287, %v9277
    %s9294 = scalar_lea.vmem %s17, 112
    %v9295 = vld [vmem:[%s9294] sm:$0xff]
    %v9296 = vld [vmem:[%s9294 + $0x8] sm:$0xff]
    %v9297 = vld [vmem:[%s9294 + $0x10] sm:$0xff]
    %v9298 = vld [vmem:[%s9294 + $0x18] sm:$0xff]
    %v9299 = vld [vmem:[%s9294 + $0x20] sm:$0xff]
    %v9300 = vld [vmem:[%s9294 + $0x28] sm:$0xff]
    %v9301 = vld [vmem:[%s9294 + $0x30] sm:$0xff]
    %v9302 = vld [vmem:[%s9294 + $0x38] sm:$0xff]
    %v9303 = vld [vmem:[%s9294 + $0x40] sm:$0xff]
    %v9304 = vld [vmem:[%s9294 + $0x48] sm:$0xff]
    %v9305 = vld [vmem:[%s9294 + $0x50] sm:$0xff]
    %v9306 = vld [vmem:[%s9294 + $0x58] sm:$0xff]
    %v9307 = vld [vmem:[%s9294 + $0x60] sm:$0x3]
    %v9308 = vld [vmem:[%s9294 + $0x68] sm:$0x3]
    %v9310 = vsel %vm1998, %v2499, 0
    %v9313 = vsel %vm1998, %v2500, 0
    %v9316 = vsel %vm2017, %v9307, 0
    %v9319 = vsel %vm2017, %v9308, 0
    %9321 = vmatprep.subr.mxu0 %v9296
    %9322 = vmatpush1.msra.mxu0 %v9295
    %9323 = vmatprep.subr.mxu0 %v9298
    %9324 = vmatpush1.msra.mxu0 %v9297
    %9325 = vmatprep.subr.mxu0 %v9300
    %9326 = vmatpush1.msra.mxu0 %v9299
    %9327 = vmatprep.subr.mxu0 %v9302
    %9328 = vmatpush1.msra.mxu0 %v9301
    %9329 = vmatprep.subr.mxu0 %v9304
    %9330 = vmatpush1.msra.mxu0 %v9303
    %9331 = vmatprep.subr.mxu0 %v9306
    %9332 = vmatpush1.msra.mxu0 %v9305
    %9333 = vmatprep.subr.mxu0 %v9319
    %9334 = vmatpush1.msra.mxu0 %v9316
    %9335 = vmatprep.subr.mxu0 0.0
    %9336 = vmatpush1.msra.mxu0 0.0
    %9337 = vmatprep.subr.mxu0 0.0
    %9338 = vmatpush1.msra.mxu0 0.0
    %9339 = vmatprep.subr.mxu0 0.0
    %9340 = vmatpush1.msra.mxu0 0.0
    %9341 = vmatprep.subr.mxu0 0.0
    %9342 = vmatpush1.msra.mxu0 0.0
    %9343 = vmatprep.subr.mxu0 0.0
    %9344 = vmatpush1.msra.mxu0 0.0
    %9345 = vmatprep.subr.mxu0 0.0
    %9346 = vmatpush1.msra.mxu0 0.0
    %9347 = vmatprep.subr.mxu0 0.0
    %9348 = vmatpush1.msra.mxu0 0.0
    %9349 = vmatprep.subr.mxu0 0.0
    %9350 = vmatpush1.msra.mxu0 0.0
    %9351 = vmatprep.subr.mxu0 0.0
    %9352 = vmatpush1.msra.mxu0 0.0
    %9353 = vmatprep.subr.mxu0 0.0
    %9354 = vmatpush1.msra.mxu0 0.0
    %9355 = vmatprep.subr.mxu0 0.0
    %9356 = vmatpush1.msra.mxu0 0.0
    %9357 = vmatprep.subr.mxu0 0.0
    %9358 = vmatpush1.msra.mxu0 0.0
    %9359 = vmatprep.subr.mxu0 0.0
    %9360 = vmatpush1.msra.mxu0 0.0
    %9361 = vmatprep.subr.mxu0 0.0
    %9362 = vmatpush1.msra.mxu0 0.0
    %9363 = vmatprep.subr.mxu0 0.0
    %9364 = vmatpush1.msra.mxu0 0.0
    %9365 = vmatprep.subr.mxu0 0.0
    %9366 = vmatpush1.msra.mxu0 0.0
    %9367 = vmatprep.subr.mxu0 0.0
    %9368 = vmatpush1.msra.mxu0 0.0
    %9369 = vmatprep.subr.mxu0 0.0
    %9370 = vmatpush1.msra.mxu0 0.0
    %9371 = vmatprep.subr.mxu0 0.0
    %9372 = vmatpush1.msra.mxu0 0.0
    %9373 = vmatprep.subr.mxu0 0.0
    %9374 = vmatpush1.msra.mxu0 0.0
    %9375 = vmatprep.subr.mxu0 0.0
    %9376 = vmatpush1.msra.mxu0 0.0
    %9377 = vmatprep.subr.mxu0 0.0
    %9378 = vmatpush1.msra.mxu0 0.0
    %9379 = vmatprep.subr.mxu0 0.0
    %9380 = vmatpush1.msra.mxu0 0.0
    %9381 = vmatprep.subr.mxu0 0.0
    %9382 = vmatpush1.msra.mxu0 0.0
    %9383 = vmatprep.subr.mxu0 0.0
    %9384 = vmatpush1.msra.mxu0 0.0
    %9385 = vmatprep.mubr.f32.mxu0 0.0
    %9386 = vmatmul.mubr.f32.gmra.mrb[0].mxu0 %v9310
    %v9387 = vpop.f32.mrb[0].mxu0
    %v9388 = vadd.f32 0.0, %v9387
    %v9389 = vpop.f32.mrb[0].mxu0
    %v9390 = vadd.f32 0.0, %v9389
    %9391 = vmatprep.mubr.f32.mxu0 0.0
    %9392 = vmatmul.mubr.f32.gmra.mrb[0].mxu0 %v9313
    %v9393 = vpop.f32.mrb[0].mxu0
    %v9394 = vadd.f32 0.0, %v9393
    %v9395 = vpop.f32.mrb[0].mxu0
    %v9396 = vadd.f32 0.0, %v9395
    %9397 = vdwg.mxu0
    %v9398 = vadd.f32 %v9290, %v9388
    %v9399 = vadd.f32 %v9291, %v9390
    %v9400 = vadd.f32 %v9292, %v9394
    %v9401 = vadd.f32 %v9293, %v9396
    %s9402 = scalar_lea.vmem %s17, 224
    %v9403 = vld [vmem:[%s9402] sm:$0xff]
    %v9404 = vld [vmem:[%s9402 + $0x8] sm:$0xff]
    %v9405 = vld [vmem:[%s9402 + $0x10] sm:$0xff]
    %v9406 = vld [vmem:[%s9402 + $0x18] sm:$0xff]
    %v9407 = vld [vmem:[%s9402 + $0x20] sm:$0xff]
    %v9408 = vld [vmem:[%s9402 + $0x28] sm:$0xff]
    %v9409 = vld [vmem:[%s9402 + $0x30] sm:$0xff]
    %v9410 = vld [vmem:[%s9402 + $0x38] sm:$0xff]
    %v9411 = vld [vmem:[%s9402 + $0x40] sm:$0xff]
    %v9412 = vld [vmem:[%s9402 + $0x48] sm:$0xff]
    %v9413 = vld [vmem:[%s9402 + $0x50] sm:$0xff]
    %v9414 = vld [vmem:[%s9402 + $0x58] sm:$0xff]
    %v9415 = vld [vmem:[%s9402 + $0x60] sm:$0x3]
    %v9416 = vld [vmem:[%s9402 + $0x68] sm:$0x3]
    %v9418 = vsel %vm1998, %v3999, 0
    %v9421 = vsel %vm1998, %v4000, 0
    %v9424 = vsel %vm2017, %v9415, 0
    %v9427 = vsel %vm2017, %v9416, 0
    %9429 = vmatprep.subr.mxu0 %v9404
    %9430 = vmatpush1.msra.mxu0 %v9403
    %9431 = vmatprep.subr.mxu0 %v9406
    %9432 = vmatpush1.msra.mxu0 %v9405
    %9433 = vmatprep.subr.mxu0 %v9408
    %9434 = vmatpush1.msra.mxu0 %v9407
    %9435 = vmatprep.subr.mxu0 %v9410
    %9436 = vmatpush1.msra.mxu0 %v9409
    %9437 = vmatprep.subr.mxu0 %v9412
    %9438 = vmatpush1.msra.mxu0 %v9411
    %9439 = vmatprep.subr.mxu0 %v9414
    %9440 = vmatpush1.msra.mxu0 %v9413
    %9441 = vmatprep.subr.mxu0 %v9427
    %9442 = vmatpush1.msra.mxu0 %v9424
    %9443 = vmatprep.subr.mxu0 0.0
    %9444 = vmatpush1.msra.mxu0 0.0
    %9445 = vmatprep.subr.mxu0 0.0
    %9446 = vmatpush1.msra.mxu0 0.0
    %9447 = vmatprep.subr.mxu0 0.0
    %9448 = vmatpush1.msra.mxu0 0.0
    %9449 = vmatprep.subr.mxu0 0.0
    %9450 = vmatpush1.msra.mxu0 0.0
    %9451 = vmatprep.subr.mxu0 0.0
    %9452 = vmatpush1.msra.mxu0 0.0
    %9453 = vmatprep.subr.mxu0 0.0
    %9454 = vmatpush1.msra.mxu0 0.0
    %9455 = vmatprep.subr.mxu0 0.0
    %9456 = vmatpush1.msra.mxu0 0.0
    %9457 = vmatprep.subr.mxu0 0.0
    %9458 = vmatpush1.msra.mxu0 0.0
    %9459 = vmatprep.subr.mxu0 0.0
    %9460 = vmatpush1.msra.mxu0 0.0
    %9461 = vmatprep.subr.mxu0 0.0
    %9462 = vmatpush1.msra.mxu0 0.0
    %9463 = vmatprep.subr.mxu0 0.0
    %9464 = vmatpush1.msra.mxu0 0.0
    %9465 = vmatprep.subr.mxu0 0.0
    %9466 = vmatpush1.msra.mxu0 0.0
    %9467 = vmatprep.subr.mxu0 0.0
    %9468 = vmatpush1.msra.mxu0 0.0
    %9469 = vmatprep.subr.mxu0 0.0
    %9470 = vmatpush1.msra.mxu0 0.0
    %9471 = vmatprep.subr.mxu0 0.0
    %9472 = vmatpush1.msra.mxu0 0.0
    %9473 = vmatprep.subr.mxu0 0.0
    %9474 = vmatpush1.msra.mxu0 0.0
    %9475 = vmatprep.subr.mxu0 0.0
    %9476 = vmatpush1.msra.mxu0 0.0
    %9477 = vmatprep.subr.mxu0 0.0
    %9478 = vmatpush1.msra.mxu0 0.0
    %9479 = vmatprep.subr.mxu0 0.0
    %9480 = vmatpush1.msra.mxu0 0.0
    %9481 = vmatprep.subr.mxu0 0.0
    %9482 = vmatpush1.msra.mxu0 0.0
    %9483 = vmatprep.subr.mxu0 0.0
    %9484 = vmatpush1.msra.mxu0 0.0
    %9485 = vmatprep.subr.mxu0 0.0
    %9486 = vmatpush1.msra.mxu0 0.0
    %9487 = vmatprep.subr.mxu0 0.0
    %9488 = vmatpush1.msra.mxu0 0.0
    %9489 = vmatprep.subr.mxu0 0.0
    %9490 = vmatpush1.msra.mxu0 0.0
    %9491 = vmatprep.subr.mxu0 0.0
    %9492 = vmatpush1.msra.mxu0 0.0
    %9493 = vmatprep.mubr.f32.mxu0 0.0
    %9494 = vmatmul.mubr.f32.gmra.mrb[0].mxu0 %v9418
    %v9495 = vpop.f32.mrb[0].mxu0
    %v9496 = vadd.f32 0.0, %v9495
    %v9497 = vpop.f32.mrb[0].mxu0
    %v9498 = vadd.f32 0.0, %v9497
    %9499 = vmatprep.mubr.f32.mxu0 0.0
    %9500 = vmatmul.mubr.f32.gmra.mrb[0].mxu0 %v9421
    %v9501 = vpop.f32.mrb[0].mxu0
    %v9502 = vadd.f32 0.0, %v9501
    %v9503 = vpop.f32.mrb[0].mxu0
    %v9504 = vadd.f32 0.0, %v9503
    %9505 = vdwg.mxu0
    %v9506 = vadd.f32 %v9398, %v9496
    %v9507 = vadd.f32 %v9399, %v9498
    %v9508 = vadd.f32 %v9400, %v9502
    %v9509 = vadd.f32 %v9401, %v9504
    %s9510 = scalar_lea.vmem %s17, 336
    %v9511 = vld [vmem:[%s9510] sm:$0xff]
    %v9512 = vld [vmem:[%s9510 + $0x8] sm:$0xff]
    %v9513 = vld [vmem:[%s9510 + $0x10] sm:$0xff]
    %v9514 = vld [vmem:[%s9510 + $0x18] sm:$0xff]
    %v9515 = vld [vmem:[%s9510 + $0x20] sm:$0xff]
    %v9516 = vld [vmem:[%s9510 + $0x28] sm:$0xff]
    %v9517 = vld [vmem:[%s9510 + $0x30] sm:$0xff]
    %v9518 = vld [vmem:[%s9510 + $0x38] sm:$0xff]
    %v9519 = vld [vmem:[%s9510 + $0x40] sm:$0xff]
    %v9520 = vld [vmem:[%s9510 + $0x48] sm:$0xff]
    %v9521 = vld [vmem:[%s9510 + $0x50] sm:$0xff]
    %v9522 = vld [vmem:[%s9510 + $0x58] sm:$0xff]
    %v9523 = vld [vmem:[%s9510 + $0x60] sm:$0x3]
    %v9524 = vld [vmem:[%s9510 + $0x68] sm:$0x3]
    %v9526 = vsel %vm1998, %v6213, 0
    %v9529 = vsel %vm1998, %v6214, 0
    %v9532 = vsel %vm2017, %v9523, 0
    %v9535 = vsel %vm2017, %v9524, 0
    %9537 = vmatprep.subr.mxu0 %v9512
    %9538 = vmatpush1.msra.mxu0 %v9511
    %9539 = vmatprep.subr.mxu0 %v9514
    %9540 = vmatpush1.msra.mxu0 %v9513
    %9541 = vmatprep.subr.mxu0 %v9516
    %9542 = vmatpush1.msra.mxu0 %v9515
    %9543 = vmatprep.subr.mxu0 %v9518
    %9544 = vmatpush1.msra.mxu0 %v9517
    %9545 = vmatprep.subr.mxu0 %v9520
    %9546 = vmatpush1.msra.mxu0 %v9519
    %9547 = vmatprep.subr.mxu0 %v9522
    %9548 = vmatpush1.msra.mxu0 %v9521
    %9549 = vmatprep.subr.mxu0 %v9535
    %9550 = vmatpush1.msra.mxu0 %v9532
    %9551 = vmatprep.subr.mxu0 0.0
    %9552 = vmatpush1.msra.mxu0 0.0
    %9553 = vmatprep.subr.mxu0 0.0
    %9554 = vmatpush1.msra.mxu0 0.0
    %9555 = vmatprep.subr.mxu0 0.0
    %9556 = vmatpush1.msra.mxu0 0.0
    %9557 = vmatprep.subr.mxu0 0.0
    %9558 = vmatpush1.msra.mxu0 0.0
    %9559 = vmatprep.subr.mxu0 0.0
    %9560 = vmatpush1.msra.mxu0 0.0
    %9561 = vmatprep.subr.mxu0 0.0
    %9562 = vmatpush1.msra.mxu0 0.0
    %9563 = vmatprep.subr.mxu0 0.0
    %9564 = vmatpush1.msra.mxu0 0.0
    %9565 = vmatprep.subr.mxu0 0.0
    %9566 = vmatpush1.msra.mxu0 0.0
    %9567 = vmatprep.subr.mxu0 0.0
    %9568 = vmatpush1.msra.mxu0 0.0
    %9569 = vmatprep.subr.mxu0 0.0
    %9570 = vmatpush1.msra.mxu0 0.0
    %9571 = vmatprep.subr.mxu0 0.0
    %9572 = vmatpush1.msra.mxu0 0.0
    %9573 = vmatprep.subr.mxu0 0.0
    %9574 = vmatpush1.msra.mxu0 0.0
    %9575 = vmatprep.subr.mxu0 0.0
    %9576 = vmatpush1.msra.mxu0 0.0
    %9577 = vmatprep.subr.mxu0 0.0
    %9578 = vmatpush1.msra.mxu0 0.0
    %9579 = vmatprep.subr.mxu0 0.0
    %9580 = vmatpush1.msra.mxu0 0.0
    %9581 = vmatprep.subr.mxu0 0.0
    %9582 = vmatpush1.msra.mxu0 0.0
    %9583 = vmatprep.subr.mxu0 0.0
    %9584 = vmatpush1.msra.mxu0 0.0
    %9585 = vmatprep.subr.mxu0 0.0
    %9586 = vmatpush1.msra.mxu0 0.0
    %9587 = vmatprep.subr.mxu0 0.0
    %9588 = vmatpush1.msra.mxu0 0.0
    %9589 = vmatprep.subr.mxu0 0.0
    %9590 = vmatpush1.msra.mxu0 0.0
    %9591 = vmatprep.subr.mxu0 0.0
    %9592 = vmatpush1.msra.mxu0 0.0
    %9593 = vmatprep.subr.mxu0 0.0
    %9594 = vmatpush1.msra.mxu0 0.0
    %9595 = vmatprep.subr.mxu0 0.0
    %9596 = vmatpush1.msra.mxu0 0.0
    %9597 = vmatprep.subr.mxu0 0.0
    %9598 = vmatpush1.msra.mxu0 0.0
    %9599 = vmatprep.subr.mxu0 0.0
    %9600 = vmatpush1.msra.mxu0 0.0
    %9601 = vmatprep.mubr.f32.mxu0 0.0
    %9602 = vmatmul.mubr.f32.gmra.mrb[0].mxu0 %v9526
    %v9603 = vpop.f32.mrb[0].mxu0
    %v9604 = vadd.f32 0.0, %v9603
    %v9605 = vpop.f32.mrb[0].mxu0
    %v9606 = vadd.f32 0.0, %v9605
    %9607 = vmatprep.mubr.f32.mxu0 0.0
    %9608 = vmatmul.mubr.f32.gmra.mrb[0].mxu0 %v9529
    %v9609 = vpop.f32.mrb[0].mxu0
    %v9610 = vadd.f32 0.0, %v9609
    %v9611 = vpop.f32.mrb[0].mxu0
    %v9612 = vadd.f32 0.0, %v9611
    %9613 = vdwg.mxu0
    %v9614 = vadd.f32 %v9506, %v9604
    %v9615 = vadd.f32 %v9507, %v9606
    %v9616 = vadd.f32 %v9508, %v9610
    %v9617 = vadd.f32 %v9509, %v9612
    %s9618 = scalar_lea.vmem %s17, 448
    %v9619 = vld [vmem:[%s9618] sm:$0xff]
    %v9620 = vld [vmem:[%s9618 + $0x8] sm:$0xff]
    %v9621 = vld [vmem:[%s9618 + $0x10] sm:$0xff]
    %v9622 = vld [vmem:[%s9618 + $0x18] sm:$0xff]
    %v9623 = vld [vmem:[%s9618 + $0x20] sm:$0xff]
    %v9624 = vld [vmem:[%s9618 + $0x28] sm:$0xff]
    %v9625 = vld [vmem:[%s9618 + $0x30] sm:$0xff]
    %v9626 = vld [vmem:[%s9618 + $0x38] sm:$0xff]
    %v9627 = vld [vmem:[%s9618 + $0x40] sm:$0xff]
    %v9628 = vld [vmem:[%s9618 + $0x48] sm:$0xff]
    %v9629 = vld [vmem:[%s9618 + $0x50] sm:$0xff]
    %v9630 = vld [vmem:[%s9618 + $0x58] sm:$0xff]
    %v9631 = vld [vmem:[%s9618 + $0x60] sm:$0x3]
    %v9632 = vld [vmem:[%s9618 + $0x68] sm:$0x3]
    %v9634 = vsel %vm1998, %v9175, 0
    %v9637 = vsel %vm1998, %v9176, 0
    %v9640 = vsel %vm2017, %v9631, 0
    %v9643 = vsel %vm2017, %v9632, 0
    %9645 = vmatprep.subr.mxu0 %v9620
    %9646 = vmatpush1.msra.mxu0 %v9619
    %9647 = vmatprep.subr.mxu0 %v9622
    %9648 = vmatpush1.msra.mxu0 %v9621
    %9649 = vmatprep.subr.mxu0 %v9624
    %9650 = vmatpush1.msra.mxu0 %v9623
    %9651 = vmatprep.subr.mxu0 %v9626
    %9652 = vmatpush1.msra.mxu0 %v9625
    %9653 = vmatprep.subr.mxu0 %v9628
    %9654 = vmatpush1.msra.mxu0 %v9627
    %9655 = vmatprep.subr.mxu0 %v9630
    %9656 = vmatpush1.msra.mxu0 %v9629
    %9657 = vmatprep.subr.mxu0 %v9643
    %9658 = vmatpush1.msra.mxu0 %v9640
    %9659 = vmatprep.subr.mxu0 0.0
    %9660 = vmatpush1.msra.mxu0 0.0
    %9661 = vmatprep.subr.mxu0 0.0
    %9662 = vmatpush1.msra.mxu0 0.0
    %9663 = vmatprep.subr.mxu0 0.0
    %9664 = vmatpush1.msra.mxu0 0.0
    %9665 = vmatprep.subr.mxu0 0.0
    %9666 = vmatpush1.msra.mxu0 0.0
    %9667 = vmatprep.subr.mxu0 0.0
    %9668 = vmatpush1.msra.mxu0 0.0
    %9669 = vmatprep.subr.mxu0 0.0
    %9670 = vmatpush1.msra.mxu0 0.0
    %9671 = vmatprep.subr.mxu0 0.0
    %9672 = vmatpush1.msra.mxu0 0.0
    %9673 = vmatprep.subr.mxu0 0.0
    %9674 = vmatpush1.msra.mxu0 0.0
    %9675 = vmatprep.subr.mxu0 0.0
    %9676 = vmatpush1.msra.mxu0 0.0
    %9677 = vmatprep.subr.mxu0 0.0
    %9678 = vmatpush1.msra.mxu0 0.0
    %9679 = vmatprep.subr.mxu0 0.0
    %9680 = vmatpush1.msra.mxu0 0.0
    %9681 = vmatprep.subr.mxu0 0.0
    %9682 = vmatpush1.msra.mxu0 0.0
    %9683 = vmatprep.subr.mxu0 0.0
    %9684 = vmatpush1.msra.mxu0 0.0
    %9685 = vmatprep.subr.mxu0 0.0
    %9686 = vmatpush1.msra.mxu0 0.0
    %9687 = vmatprep.subr.mxu0 0.0
    %9688 = vmatpush1.msra.mxu0 0.0
    %9689 = vmatprep.subr.mxu0 0.0
    %9690 = vmatpush1.msra.mxu0 0.0
    %9691 = vmatprep.subr.mxu0 0.0
    %9692 = vmatpush1.msra.mxu0 0.0
    %9693 = vmatprep.subr.mxu0 0.0
    %9694 = vmatpush1.msra.mxu0 0.0
    %9695 = vmatprep.subr.mxu0 0.0
    %9696 = vmatpush1.msra.mxu0 0.0
    %9697 = vmatprep.subr.mxu0 0.0
    %9698 = vmatpush1.msra.mxu0 0.0
    %9699 = vmatprep.subr.mxu0 0.0
    %9700 = vmatpush1.msra.mxu0 0.0
    %9701 = vmatprep.subr.mxu0 0.0
    %9702 = vmatpush1.msra.mxu0 0.0
    %9703 = vmatprep.subr.mxu0 0.0
    %9704 = vmatpush1.msra.mxu0 0.0
    %9705 = vmatprep.subr.mxu0 0.0
    %9706 = vmatpush1.msra.mxu0 0.0
    %9707 = vmatprep.subr.mxu0 0.0
    %9708 = vmatpush1.msra.mxu0 0.0
    %9709 = vmatprep.mubr.f32.mxu0 0.0
    %9710 = vmatmul.mubr.f32.gmra.mrb[0].mxu0 %v9634
    %v9711 = vpop.f32.mrb[0].mxu0
    %v9712 = vadd.f32 0.0, %v9711
    %v9713 = vpop.f32.mrb[0].mxu0
    %v9714 = vadd.f32 0.0, %v9713
    %9715 = vmatprep.mubr.f32.mxu0 0.0
    %9716 = vmatmul.mubr.f32.gmra.mrb[0].mxu0 %v9637
    %v9717 = vpop.f32.mrb[0].mxu0
    %v9718 = vadd.f32 0.0, %v9717
    %v9719 = vpop.f32.mrb[0].mxu0
    %v9720 = vadd.f32 0.0, %v9719
    %9721 = vdwg.mxu0
    %v9722 = vadd.f32 %v9614, %v9712
    %v9723 = vadd.f32 %v9615, %v9714
    %v9724 = vadd.f32 %v9616, %v9718
    %v9725 = vadd.f32 %v9617, %v9720
    %v9726 = vld [vmem:[%s19] sm:$0x3]
    %v9727 = vld [vmem:[%s20] sm:$0x3]
    %v9728 = vadd.f32 %v9722, %v9724
    %v9729 = vrot.slane %v9728, 4
    %v9730 = vadd.f32 %v9728, %v9729
    %v9731 = vrot.slane %v9730, 2
    %v9732 = vadd.f32 %v9730, %v9731
    %v9733 = vrot.slane %v9732, 1
    %v9734 = vadd.f32 %v9732, %v9733
    %vm9735 = vcmask 556032
    %v9736 = vsel %vm9735, %v9723, 0.0
    %v9737 = vsel %vm9735, %v9725, 0.0
    %v9738 = vadd.f32 %v9736, %v9737
    %v9739 = vrot.slane %v9738, 4
    %v9740 = vadd.f32 %v9738, %v9739
    %v9741 = vrot.slane %v9740, 2
    %v9742 = vadd.f32 %v9740, %v9741
    %v9743 = vrot.slane %v9742, 1
    %v9744 = vadd.f32 %v9742, %v9743
    %v9745 = vmul.f32 %v9734, %v1689
    %v9746 = vmul.f32 %v9744, %v1689
    %v9747 = vsub.f32 %v9722, %v9745
    %v9748 = vsub.f32 %v9723, %v9746
    %v9749 = vsub.f32 %v9724, %v9745
    %v9750 = vsub.f32 %v9725, %v9746
    %v9751 = vmul.f32 %v9747, %v9747
    %v9752 = vmul.f32 %v9748, %v9748
    %v9753 = vmul.f32 %v9749, %v9749
    %v9754 = vmul.f32 %v9750, %v9750
    %v9755 = vadd.f32 %v9751, %v9753
    %v9756 = vrot.slane %v9755, 4
    %v9757 = vadd.f32 %v9755, %v9756
    %v9758 = vrot.slane %v9757, 2
    %v9759 = vadd.f32 %v9757, %v9758
    %v9760 = vrot.slane %v9759, 1
    %v9761 = vadd.f32 %v9759, %v9760
    %v9762 = vsel %vm9735, %v9752, 0.0
    %v9763 = vsel %vm9735, %v9754, 0.0
    %v9764 = vadd.f32 %v9762, %v9763
    %v9765 = vrot.slane %v9764, 4
    %v9766 = vadd.f32 %v9764, %v9765
    %v9767 = vrot.slane %v9766, 2
    %v9768 = vadd.f32 %v9766, %v9767
    %v9769 = vrot.slane %v9768, 1
    %v9770 = vadd.f32 %v9768, %v9769
    %v9771 = vmul.f32 %v9761, %v1689
    %v9772 = vmul.f32 %v9770, %v1689
    %v9773 = vadd.f32 %v9771, 1e-05
    %v9774 = vadd.f32 %v9772, 1e-05
    %v9775 = vrsqrt.pop %v9773
    %v9776 = vrsqrt.pop %v9774
    %v9777 = vmul.f32 %v9747, %v9775
    %v9778 = vmul.f32 %v9748, %v9776
    %v9779 = vmul.f32 %v9749, %v9775
    %v9780 = vmul.f32 %v9750, %v9776
    %v9782 = vlaneseq
    %v9783 = vshrl.u32 %v9782, 7
    %v9784 = vsub.s32 0, %v9783
    %v9785 = vrot.slane %v9726, %v9784
    %v9786 = vlaneseq
    %v9787 = vshrl.u32 %v9786, 7
    %v9788 = vsub.s32 1, %v9787
    %v9789 = vrot.slane %v9726, %v9788
    %v9792 = vmul.f32 %v9777, %v9785
    %v9793 = vmul.f32 %v9778, %v9789
    %v9794 = vmul.f32 %v9779, %v9785
    %v9795 = vmul.f32 %v9780, %v9789
    %v9797 = vlaneseq
    %v9798 = vshrl.u32 %v9797, 7
    %v9799 = vsub.s32 0, %v9798
    %v9800 = vrot.slane %v9727, %v9799
    %v9801 = vlaneseq
    %v9802 = vshrl.u32 %v9801, 7
    %v9803 = vsub.s32 1, %v9802
    %v9804 = vrot.slane %v9727, %v9803
    %v9807 = vadd.f32 %v9792, %v9800
    %v9808 = vadd.f32 %v9793, %v9804
    %v9809 = vadd.f32 %v9794, %v9800
    %v9810 = vadd.f32 %v9795, %v9804
    %9811 = vst [vmem:[#allocation2] sm:$0xff] %v9807
    %9812 = vst.msk [vmem:[#allocation2 + $0x8] sm:$0xff] %vm9735, %v9808
    %9813 = vst [vmem:[#allocation2 + $0x10] sm:$0xff] %v9809
    %9814 = vst.msk [vmem:[#allocation2 + $0x18] sm:$0xff] %vm9735, %v9810
    // Predicated region
    $region86: #{_forward_impl.1} parent=1 // pred_check
      _
    $region87: #{_forward_impl.1} parent=1 // pred_check_branch
      %9816 = sbr.rel (0) target = $region89
    $region88: #{_forward_impl.1} parent=1 // pred_region
      %s9818 = ssub.s32 512, 512
      %9819 = vsyncadd [#allocation3], %s9818
      %s9820 = sshll.u32 [#allocation2], 4
      %s9821 = int_to_ptr.vmem [resolvable:$true] %s9820
      %9826 = dma.vmem_to_hbm [thread:$0]  %s9821, 512, %s21, [#allocation3], 256, 256, 16
    $region89: #{_forward_impl.1} parent=1 // pred_fallthru
      _
    // Predicated region
    $region90: #{_forward_impl.1} parent=1 // pred_check
      _
    $region91: #{_forward_impl.1} parent=1 // pred_check_branch
      %9828 = sbr.rel (0) target = $region93
    $region92: #{_forward_impl.1} parent=1 // pred_region
      %9829 = dma.done [#allocation3], 512
    $region93: #{_forward_impl.1} parent=1 // pred_fallthru
      _
    %9830 = vsyncpa [#allocation3], 1

</llo_original>
